<compile_context>
chip_gen: v5e
topology: v5e:2x2
jax: 0.10.0
libtpu: 0.0.40
codegen_flags: <defaults>
</compile_context>

<pallas_src>
import functools
import math

import numpy as np
import jax
import jax.numpy as jnp
from jax.experimental import pallas as pl
from jax.experimental.pallas import tpu as pltpu

NHEAD_MAIN = 8     # nn.TransformerEncoderLayer(d_model=hidden_dim, nhead=8)
LN_EPS = 1e-5
LANE = 128


# ----------------------------- kernel helpers --------------------------------

def _layer_norm(x, g, b):
    mu = jnp.mean(x, axis=-1, keepdims=True)
    xc = x - mu
    var = jnp.mean(xc * xc, axis=-1, keepdims=True)
    return xc * jax.lax.rsqrt(var + LN_EPS) * g + b


def _unit(x):
    # vec / vec.norm(dim=-1, keepdim=True) with a tiny eps to avoid NaN on zeros
    return x * jax.lax.rsqrt(jnp.sum(x * x, axis=-1, keepdims=True) + 1e-12)


# ------------------------------ fused kernel ----------------------------------

def fused_kernel(
        h0_ref, a_ref, tvec_ref, lvec_ref,
        negh_ref, ntvec_ref, nlvec_ref,
        hmask_ref, fold_ref, tlblk_ref,
        ws1_ref, wn1_ref, sb1_ref, ws2_ref, wn2_ref, sb2_ref,
        wiu_ref, wit_ref, wil_ref, wia_ref, bin_ref,
        m_wq_ref, m_wk_ref, m_wv_ref, m_bq_ref, m_bk_ref, m_bv_ref,
        m_wo_ref, m_bo_ref, m_w1_ref, m_bf1_ref, m_w2_ref, m_bf2_ref,
        m_g1_ref, m_be1_ref, m_g2_ref, m_be2_ref,
        t_wq_ref, t_wk_ref, t_wv_ref, t_bq_ref, t_bk_ref, t_bv_ref,
        t_wo_ref, t_bo_ref, t_w1_ref, t_bf1_ref, t_w2_ref, t_bf2_ref,
        t_g1_ref, t_be1_ref, t_g2_ref, t_be2_ref,
        btl_ref, wc_ref, bc_ref,
        score_ref, logits_ref, hyper_ref):
    dot = functools.partial(jnp.dot, preferred_element_type=jnp.float32)

    B, _ = tvec_ref.shape
    S = fold_ref.shape[0]
    nh = hmask_ref.shape[0] // S
    H = hmask_ref.shape[1]

    # ---------------- SAGEConv('mean') x2 + ReLU + u.v edge scores ------------
    h0 = h0_ref[...]                                   # (N, dim)
    a = a_ref[...]                                     # (N, N) row-normalised
    h1 = dot(h0, ws1_ref[...]) + dot(dot(a, h0), wn1_ref[...]) + sb1_ref[...]
    h1 = jnp.maximum(h1, 0.0)
    hg = dot(h1, ws2_ref[...]) + dot(dot(a, h1), wn2_ref[...]) + sb2_ref[...]
    hg = jnp.maximum(hg, 0.0)                          # (N, dim)
    score_ref[...] = dot(hg, hg.T)                     # all-pairs u.v scores

    # ---------------- input_layer on split weight blocks ----------------------
    # xg[b,s,:] = user_g[b]@Wu + time[b]@Wt + loc[b]@Wl + app_g[b,s]@Wa + b_in
    tvec = tvec_ref[...]
    lvec = lvec_ref[...]
    wiu, wit = wiu_ref[...], wit_ref[...]
    wil, wia = wil_ref[...], wia_ref[...]
    bin_ = bin_ref[...]
    xg_rows = []
    for b in range(B):                                 # B=2, unrolled in-kernel
        r0 = b * (S + 1)
        user_g = hg[r0:r0 + 1, :]                      # (1, dim)
        app_g = hg[r0 + 1:r0 + 1 + S, :]               # (S, dim)
        base = (dot(user_g, wiu) + dot(tvec[b:b + 1, :], wit)
                + dot(lvec[b:b + 1, :], wil) + bin_)   # (1, H)
        xg_rows.append(dot(app_g, wia) + base)         # (S, H)
    xg = jnp.concatenate(xg_rows, axis=0)              # (B*S, H)

    # ---------------- main encoder layer (d_model=H, nhead=8, post-norm) ------
    hmask = hmask_ref[...]                             # (nh*S, H) head column mask
    fold = fold_ref[...]                               # (S, nh*S) head fold matrix
    scale = 1.0 / math.sqrt(H // nh)
    q = dot(xg, m_wq_ref[...]) + m_bq_ref[...]         # (B*S, H) aligned matmuls
    k = dot(xg, m_wk_ref[...]) + m_bk_ref[...]
    v = dot(xg, m_wv_ref[...]) + m_bv_ref[...]
    ctx_rows = []
    for b in range(B):
        rs = b * S
        qb, kb, vb = q[rs:rs + S, :], k[rs:rs + S, :], v[rs:rs + S, :]
        qexp = jnp.concatenate([qb] * nh, axis=0) * hmask   # (nh*S, H), per-head q
        sc = dot(qexp, kb.T) * scale                        # (nh*S, S) all-head scores
        sc = sc - jnp.max(sc, axis=-1, keepdims=True)
        e = jnp.exp(sc)
        p = e / jnp.sum(e, axis=-1, keepdims=True)
        cm = dot(p, vb) * hmask                             # per-head context, masked
        ctx_rows.append(dot(fold, cm))                      # (S, H) concat-of-heads
    ctx = jnp.concatenate(ctx_rows, axis=0)                 # (B*S, H)
    attn = dot(ctx, m_wo_ref[...]) + m_bo_ref[...]
    x1 = _layer_norm(xg + attn, m_g1_ref[...], m_be1_ref[...])
    hid = jnp.maximum(dot(x1, m_w1_ref[...]) + m_bf1_ref[...], 0.0)
    ff = dot(hid, m_w2_ref[...]) + m_bf2_ref[...]
    x1 = _layer_norm(x1 + ff, m_g2_ref[...], m_be2_ref[...])     # (B*S, H)

    # ---------------- time encoder layer (d_model=S, nhead=1, dff=S) ----------
    t_wq, t_wk, t_wv = t_wq_ref[...], t_wk_ref[...], t_wv_ref[...]
    t_bq, t_bk, t_bv = t_bq_ref[...], t_bk_ref[...], t_bv_ref[...]
    t_wo, t_bo = t_wo_ref[...], t_bo_ref[...]
    t_w1, t_bf1 = t_w1_ref[...], t_bf1_ref[...]
    t_w2, t_bf2 = t_w2_ref[...], t_bf2_ref[...]
    t_g1, t_be1 = t_g1_ref[...], t_be1_ref[...]
    t_g2, t_be2 = t_g2_ref[...], t_be2_ref[...]
    tscale = 1.0 / math.sqrt(S)
    x2_rows = []
    for b in range(B):
        y = x1[b * S:(b + 1) * S, :].T                 # (H, S): per-batch permute
        tq = dot(y, t_wq) + t_bq
        tk = dot(y, t_wk) + t_bk
        tv = dot(y, t_wv) + t_bv
        sc = dot(tq, tk.T) * tscale                    # (H, H) single head
        sc = sc - jnp.max(sc, axis=-1, keepdims=True)
        e = jnp.exp(sc)
        p = e / jnp.sum(e, axis=-1, keepdims=True)
        at = dot(dot(p, tv), t_wo) + t_bo
        z = _layer_norm(y + at, t_g1, t_be1)
        ht = jnp.maximum(dot(z, t_w1) + t_bf1, 0.0)
        z = _layer_norm(z + dot(ht, t_w2) + t_bf2, t_g2, t_be2)
        x2_rows.append(z.T)                            # back to (S, H)
    x2 = jnp.concatenate(x2_rows, axis=0)              # (B*S, H)

    # ---------------- residuals -> time_linear -> classifier ------------------
    xs = x1 + x2 + xg                                  # (B*S, H)
    feat = dot(tlblk_ref[...], xs) + btl_ref[...]      # (B, H) block-diag time_linear
    logits_ref[...] = dot(feat, wc_ref[...]) + bc_ref[...]   # (B, lane-padded)

    # ---------------- hyperEageLoss (pos + neg in the same kernel) -------------
    def hyper_score(hmat, tv, lv):
        total = 0.0
        for b in range(B):
            r0 = b * (S + 1)
            u = _unit(hmat[r0:r0 + 1, :])              # (1, dim)
            t = _unit(tv[b:b + 1, :])
            l = _unit(lv[b:b + 1, :])
            aseq = _unit(hmat[r0 + 1:r0 + 1 + S, :])   # (S, dim)
            best = _unit((u + t + l + aseq) * 0.25)    # (S, dim)
            cs = (jnp.sum(u * best, axis=-1, keepdims=True)
                  + jnp.sum(t * best, axis=-1, keepdims=True)
                  + jnp.sum(l * best, axis=-1, keepdims=True)
                  + jnp.sum(aseq * best, axis=-1, keepdims=True))   # (S, 1)
            total = total + jnp.sum(cs)
        return total * 0.25

    hyper_ref[0] = hyper_score(h0, tvec, lvec)
    hyper_ref[1] = hyper_score(negh_ref[...], ntvec_ref[...], nlvec_ref[...])


# --------------------------------- wrapper -------------------------------------

@functools.partial(jax.jit, static_argnames=("n_apps", "neg_k"))
def graph_tf_int_loc_forward(p, users, times, locs, app_seq,
                             a_norm, src, dst, neg_dst,
                             neg_u, neg_t, neg_l, neg_a,
                             n_apps, neg_k=5):
    B, S = app_seq.shape
    dim = p['user_app_emb'].shape[1]
    H = p['w_in'].shape[1]
    nh = NHEAD_MAIN
    N = B * (S + 1)
    pad_n = max(LANE, ((n_apps + LANE - 1) // LANE) * LANE)

    # embedding gathers (data-dependent) stay in XLA
    nodes_idx = jnp.concatenate([users + n_apps, app_seq], axis=1).reshape(-1)
    h0 = jnp.take(p['user_app_emb'], nodes_idx, axis=0)              # (N, dim)
    tvec = jnp.take(p['time_emb'], times.reshape(-1), axis=0)        # (B, dim)
    lvec = jnp.take(p['loc_emb'], locs.reshape(-1), axis=0)          # (B, dim)

    neg_nodes = jnp.concatenate([neg_u + n_apps, neg_a], axis=1).reshape(-1)
    neg_h = jnp.take(p['user_app_emb'], neg_nodes, axis=0)           # (N, dim)
    ntvec = jnp.take(p['time_emb'], neg_t.reshape(-1), axis=0)
    nlvec = jnp.take(p['loc_emb'], neg_l.reshape(-1), axis=0)

    # static helper constants for the head-mask attention formulation
    hd = H // nh
    r_head = np.arange(nh * S) // S
    c_head = np.arange(H) // hd
    head_mask = jnp.asarray((r_head[:, None] == c_head[None, :]).astype(np.float32))
    fold = jnp.asarray(np.tile(np.eye(S, dtype=np.float32), (1, nh)))    # (S, nh*S)
    tl_block = jnp.kron(jnp.eye(B, dtype=jnp.float32), p['w_tl'])        # (B, B*S)

    # host-side weight re-layouts (cheap, once per call)
    wiu = p['w_in'][0:dim];            wit = p['w_in'][dim:2 * dim]
    wil = p['w_in'][2 * dim:3 * dim];  wia = p['w_in'][3 * dim:4 * dim]
    m_wq = p['m_wqkv'][:, 0:H];  m_wk = p['m_wqkv'][:, H:2 * H];  m_wv = p['m_wqkv'][:, 2 * H:3 * H]
    m_bq = p['m_bqkv'][:, 0:H];  m_bk = p['m_bqkv'][:, H:2 * H];  m_bv = p['m_bqkv'][:, 2 * H:3 * H]
    t_wq = p['t_wqkv'][:, 0:S];  t_wk = p['t_wqkv'][:, S:2 * S];  t_wv = p['t_wqkv'][:, 2 * S:3 * S]
    t_bq = p['t_bqkv'][:, 0:S];  t_bk = p['t_bqkv'][:, S:2 * S];  t_bv = p['t_bqkv'][:, 2 * S:3 * S]
    wc_pad = jnp.zeros((H, pad_n), jnp.float32).at[:, :n_apps].set(p['w_cls'])
    bc_pad = jnp.zeros((1, pad_n), jnp.float32).at[:, :n_apps].set(p['b_cls'])

    inputs = (h0, a_norm, tvec, lvec, neg_h, ntvec, nlvec,
              head_mask, fold, tl_block,
              p['sage1_ws'], p['sage1_wn'], p['sage1_b'],
              p['sage2_ws'], p['sage2_wn'], p['sage2_b'],
              wiu, wit, wil, wia, p['b_in'],
              m_wq, m_wk, m_wv, m_bq, m_bk, m_bv,
              p['m_wo'], p['m_bo'], p['m_w1'], p['m_bf1'], p['m_w2'], p['m_bf2'],
              p['m_g1'], p['m_be1'], p['m_g2'], p['m_be2'],
              t_wq, t_wk, t_wv, t_bq, t_bk, t_bv,
              p['t_wo'], p['t_bo'], p['t_w1'], p['t_bf1'], p['t_w2'], p['t_bf2'],
              p['t_g1'], p['t_be1'], p['t_g2'], p['t_be2'],
              p['b_tl'], wc_pad, bc_pad)

    vmem = pl.BlockSpec(memory_space=pltpu.MemorySpace.VMEM)
    smem = pl.BlockSpec(memory_space=pltpu.MemorySpace.SMEM)
    score_mat, logits_pad, hyper = pl.pallas_call(
        fused_kernel,
        out_shape=(jax.ShapeDtypeStruct((N, N), jnp.float32),
                   jax.ShapeDtypeStruct((B, pad_n), jnp.float32),
                   jax.ShapeDtypeStruct((2,), jnp.float32)),
        in_specs=[vmem] * len(inputs),
        out_specs=(vmem, vmem, smem),
    )(*inputs)

    logits = logits_pad[:, :n_apps]                                  # (B, n_apps)
    pos_score = score_mat[src, dst][:, None]                         # (E, 1)
    neg_src = jnp.repeat(src, neg_k)                                 # repeat_interleave
    neg_score = score_mat[neg_src, neg_dst][:, None]                 # (k*E, 1)
    return logits, pos_score, neg_score, hyper[0], hyper[1]


# ------------------------------ parameters -----------------------------------

def init_params(key, n_users, n_times, n_locs, n_apps, hidden_dim, dim, seq_length):
    dff = 2048                      # nn.TransformerEncoderLayer default dim_feedforward
    keys = iter(jax.random.split(key, 24))

    def w(shape, scale=0.1):
        return (scale * jax.random.normal(next(keys), shape)).astype(jnp.float32)

    def zeros(shape):
        return jnp.zeros(shape, jnp.float32)

    def ones(shape):
        return jnp.ones(shape, jnp.float32)

    return {
        'user_app_emb': w((n_users + n_apps, dim), 1.0),
        'time_emb': w((n_times, dim), 1.0),
        'loc_emb': w((n_locs, dim), 1.0),
        # SAGEConv(dim, dim, 'mean') x2 : W_self, W_neigh stored as (in, out)
        'sage1_ws': w((dim, dim)), 'sage1_wn': w((dim, dim)), 'sage1_b': zeros((1, dim)),
        'sage2_ws': w((dim, dim)), 'sage2_wn': w((dim, dim)), 'sage2_b': zeros((1, dim)),
        # input_layer: Linear(4*dim, hidden)
        'w_in': w((4 * dim, hidden_dim)), 'b_in': zeros((1, hidden_dim)),
        # main encoder layer (d_model=hidden, nhead=8, dff=2048)
        'm_wqkv': w((hidden_dim, 3 * hidden_dim)), 'm_bqkv': zeros((1, 3 * hidden_dim)),
        'm_wo': w((hidden_dim, hidden_dim)), 'm_bo': zeros((1, hidden_dim)),
        'm_w1': w((hidden_dim, dff)), 'm_bf1': zeros((1, dff)),
        'm_w2': w((dff, hidden_dim)), 'm_bf2': zeros((1, hidden_dim)),
        'm_g1': ones((1, hidden_dim)), 'm_be1': zeros((1, hidden_dim)),
        'm_g2': ones((1, hidden_dim)), 'm_be2': zeros((1, hidden_dim)),
        # time encoder layer (d_model=seq_length, nhead=1, dim_feedforward=seq_length)
        't_wqkv': w((seq_length, 3 * seq_length)), 't_bqkv': zeros((1, 3 * seq_length)),
        't_wo': w((seq_length, seq_length)), 't_bo': zeros((1, seq_length)),
        't_w1': w((seq_length, seq_length)), 't_bf1': zeros((1, seq_length)),
        't_w2': w((seq_length, seq_length)), 't_bf2': zeros((1, seq_length)),
        't_g1': ones((1, seq_length)), 't_be1': zeros((1, seq_length)),
        't_g2': ones((1, seq_length)), 't_be2': zeros((1, seq_length)),
        # time_linear: Linear(seq_length, 1) — weight kept in native (1, S) layout
        'w_tl': w((1, seq_length)), 'b_tl': zeros((1, 1)),
        # classifier: Linear(hidden, n_apps)
        'w_cls': w((hidden_dim, n_apps)), 'b_cls': zeros((1, n_apps)),
    }


# --------------------------------- main ---------------------------------------

if __name__ == "__main__":
    n_users, n_times, n_locs, n_apps = 20, 24, 10, 12
    hidden_dim, dim, seq_length = 32, 16, 8
    B = 2
    neg_k = 5

    root = jax.random.PRNGKey(0)
    (kp, ku, kt, kl, ka, knu, knt, knl, kna, knd) = jax.random.split(root, 10)

    params = init_params(kp, n_users, n_times, n_locs, n_apps,
                         hidden_dim, dim, seq_length)

    users = jax.random.randint(ku, (B, 1), 0, n_users)
    times = jax.random.randint(kt, (B, 1), 0, n_times)
    locs = jax.random.randint(kl, (B, 1), 0, n_locs)
    app_seq = jax.random.randint(ka, (B, seq_length), 0, n_apps)

    # ---- deterministic synthetic stand-in for the DGL graph ------------------
    # TODO(synk): dgl.node_subgraph / dgl.graph edge bookkeeping replaced by a
    # deterministic dense adjacency built host-side (node feature = node id).
    n_total = n_users + n_apps
    rs = np.random.RandomState(0)
    G = (rs.rand(n_total, n_total) < 0.3).astype(np.float32)
    G = np.maximum(G, G.T)
    np.fill_diagonal(G, 0.0)

    users_np = np.asarray(users)
    app_np = np.asarray(app_seq)
    nodes_idx_np = np.concatenate([users_np + n_apps, app_np], axis=1).reshape(-1)
    sub_adj = G[np.ix_(nodes_idx_np, nodes_idx_np)]      # subgraph induced on nodes_idx
    in_adj = sub_adj.T                                   # in-neighbour adjacency
    deg = in_adj.sum(axis=1, keepdims=True)
    a_norm = jnp.asarray(in_adj / np.maximum(deg, 1.0), dtype=jnp.float32)

    src_np, dst_np = np.nonzero(sub_adj)
    src = jnp.asarray(src_np, dtype=jnp.int32)
    dst = jnp.asarray(dst_np, dtype=jnp.int32)
    n_sub = nodes_idx_np.shape[0]
    # TODO(synk): torch.randint negative sampling replaced by deterministic jax.random.
    neg_dst = jax.random.randint(knd, (src_np.shape[0] * neg_k,), 0, n_sub)

    neg_u = jax.random.randint(knu, (B, 1), 0, n_users)
    neg_t = jax.random.randint(knt, (B, 1), 0, n_times)
    neg_l = jax.random.randint(knl, (B, 1), 0, n_locs)
    neg_a = jax.random.randint(kna, (B, seq_length), 0, n_apps)

    outs = graph_tf_int_loc_forward(params, users, times, locs, app_seq,
                                    a_norm, src, dst, neg_dst,
                                    neg_u, neg_t, neg_l, neg_a,
                                    n_apps=n_apps, neg_k=neg_k)
    outs = jax.block_until_ready(outs)
    logits, pos_score, neg_score, pos_hyper, neg_hyper = outs
    assert logits.shape == (B, n_apps)
    assert pos_score.shape == (src_np.shape[0], 1)
    assert neg_score.shape == (src_np.shape[0] * neg_k, 1)
    assert np.isfinite(np.asarray(pos_hyper)) and np.isfinite(np.asarray(neg_hyper))
    print("KERNEL_OK")
</pallas_src>

<mosaic_0001>
module attributes {stable_mosaic.version = 11 : i64} {
  func.func @fused_kernel(%arg0: memref<18x16xf32, #tpu.memory_space<vmem>>, %arg1: memref<18x18xf32, #tpu.memory_space<vmem>>, %arg2: memref<2x16xf32, #tpu.memory_space<vmem>>, %arg3: memref<2x16xf32, #tpu.memory_space<vmem>>, %arg4: memref<18x16xf32, #tpu.memory_space<vmem>>, %arg5: memref<2x16xf32, #tpu.memory_space<vmem>>, %arg6: memref<2x16xf32, #tpu.memory_space<vmem>>, %arg7: memref<64x32xf32, #tpu.memory_space<vmem>>, %arg8: memref<8x64xf32, #tpu.memory_space<vmem>>, %arg9: memref<2x16xf32, #tpu.memory_space<vmem>>, %arg10: memref<16x16xf32, #tpu.memory_space<vmem>>, %arg11: memref<16x16xf32, #tpu.memory_space<vmem>>, %arg12: memref<1x16xf32, #tpu.memory_space<vmem>>, %arg13: memref<16x16xf32, #tpu.memory_space<vmem>>, %arg14: memref<16x16xf32, #tpu.memory_space<vmem>>, %arg15: memref<1x16xf32, #tpu.memory_space<vmem>>, %arg16: memref<16x32xf32, #tpu.memory_space<vmem>>, %arg17: memref<16x32xf32, #tpu.memory_space<vmem>>, %arg18: memref<16x32xf32, #tpu.memory_space<vmem>>, %arg19: memref<16x32xf32, #tpu.memory_space<vmem>>, %arg20: memref<1x32xf32, #tpu.memory_space<vmem>>, %arg21: memref<32x32xf32, #tpu.memory_space<vmem>>, %arg22: memref<32x32xf32, #tpu.memory_space<vmem>>, %arg23: memref<32x32xf32, #tpu.memory_space<vmem>>, %arg24: memref<1x32xf32, #tpu.memory_space<vmem>>, %arg25: memref<1x32xf32, #tpu.memory_space<vmem>>, %arg26: memref<1x32xf32, #tpu.memory_space<vmem>>, %arg27: memref<32x32xf32, #tpu.memory_space<vmem>>, %arg28: memref<1x32xf32, #tpu.memory_space<vmem>>, %arg29: memref<32x2048xf32, #tpu.memory_space<vmem>>, %arg30: memref<1x2048xf32, #tpu.memory_space<vmem>>, %arg31: memref<2048x32xf32, #tpu.memory_space<vmem>>, %arg32: memref<1x32xf32, #tpu.memory_space<vmem>>, %arg33: memref<1x32xf32, #tpu.memory_space<vmem>>, %arg34: memref<1x32xf32, #tpu.memory_space<vmem>>, %arg35: memref<1x32xf32, #tpu.memory_space<vmem>>, %arg36: memref<1x32xf32, #tpu.memory_space<vmem>>, %arg37: memref<8x8xf32, #tpu.memory_space<vmem>>, %arg38: memref<8x8xf32, #tpu.memory_space<vmem>>, %arg39: memref<8x8xf32, #tpu.memory_space<vmem>>, %arg40: memref<1x8xf32, #tpu.memory_space<vmem>>, %arg41: memref<1x8xf32, #tpu.memory_space<vmem>>, %arg42: memref<1x8xf32, #tpu.memory_space<vmem>>, %arg43: memref<8x8xf32, #tpu.memory_space<vmem>>, %arg44: memref<1x8xf32, #tpu.memory_space<vmem>>, %arg45: memref<8x8xf32, #tpu.memory_space<vmem>>, %arg46: memref<1x8xf32, #tpu.memory_space<vmem>>, %arg47: memref<8x8xf32, #tpu.memory_space<vmem>>, %arg48: memref<1x8xf32, #tpu.memory_space<vmem>>, %arg49: memref<1x8xf32, #tpu.memory_space<vmem>>, %arg50: memref<1x8xf32, #tpu.memory_space<vmem>>, %arg51: memref<1x8xf32, #tpu.memory_space<vmem>>, %arg52: memref<1x8xf32, #tpu.memory_space<vmem>>, %arg53: memref<1x1xf32, #tpu.memory_space<vmem>>, %arg54: memref<32x128xf32, #tpu.memory_space<vmem>>, %arg55: memref<1x128xf32, #tpu.memory_space<vmem>>, %arg56: memref<18x18xf32, #tpu.memory_space<vmem>>, %arg57: memref<2x128xf32, #tpu.memory_space<vmem>>, %arg58: memref<2xf32, #tpu.memory_space<smem>>) attributes {dimension_semantics = [], scalar_prefetch = 0 : i64, scratch_operands = 0 : i64, tpu.core_type = #tpu.core_type<tc>} {
    %c0 = arith.constant 0 : index
    %c0_0 = arith.constant 0 : index
    %0 = vector.load %arg0[%c0, %c0_0] : memref<18x16xf32, #tpu.memory_space<vmem>>, vector<18x16xf32>
    %c0_1 = arith.constant 0 : index
    %c0_2 = arith.constant 0 : index
    %1 = vector.load %arg1[%c0_1, %c0_2] : memref<18x18xf32, #tpu.memory_space<vmem>>, vector<18x18xf32>
    %c0_3 = arith.constant 0 : index
    %c0_4 = arith.constant 0 : index
    %2 = vector.load %arg10[%c0_3, %c0_4] : memref<16x16xf32, #tpu.memory_space<vmem>>, vector<16x16xf32>
    %cst = arith.constant dense<0.000000e+00> : vector<18x16xf32>
    %3 = tpu.matmul %0, %2, %cst {dimension_numbers = #tpu.dot_dimension_numbers<[1], [0], [0], [1], [0, 0, 1, 1], [], []>} : vector<18x16xf32>, vector<16x16xf32>, vector<18x16xf32> -> vector<18x16xf32>
    %cst_5 = arith.constant dense<0.000000e+00> : vector<18x16xf32>
    %4 = tpu.matmul %1, %0, %cst_5 {dimension_numbers = #tpu.dot_dimension_numbers<[1], [0], [0], [1], [0, 0, 1, 1], [], []>} : vector<18x18xf32>, vector<18x16xf32>, vector<18x16xf32> -> vector<18x16xf32>
    %c0_6 = arith.constant 0 : index
    %c0_7 = arith.constant 0 : index
    %5 = vector.load %arg11[%c0_6, %c0_7] : memref<16x16xf32, #tpu.memory_space<vmem>>, vector<16x16xf32>
    %cst_8 = arith.constant dense<0.000000e+00> : vector<18x16xf32>
    %6 = tpu.matmul %4, %5, %cst_8 {dimension_numbers = #tpu.dot_dimension_numbers<[1], [0], [0], [1], [0, 0, 1, 1], [], []>} : vector<18x16xf32>, vector<16x16xf32>, vector<18x16xf32> -> vector<18x16xf32>
    %7 = arith.addf %3, %6 : vector<18x16xf32>
    %c0_9 = arith.constant 0 : index
    %c0_10 = arith.constant 0 : index
    %8 = vector.load %arg12[%c0_9, %c0_10] : memref<1x16xf32, #tpu.memory_space<vmem>>, vector<1x16xf32>
    %9 = vector.broadcast %8 : vector<1x16xf32> to vector<18x16xf32>
    %10 = arith.addf %7, %9 : vector<18x16xf32>
    %cst_11 = arith.constant 0.000000e+00 : f32
    %11 = vector.broadcast %cst_11 : f32 to vector<18x16xf32>
    %12 = arith.maximumf %10, %11 : vector<18x16xf32>
    %c0_12 = arith.constant 0 : index
    %c0_13 = arith.constant 0 : index
    %13 = vector.load %arg13[%c0_12, %c0_13] : memref<16x16xf32, #tpu.memory_space<vmem>>, vector<16x16xf32>
    %cst_14 = arith.constant dense<0.000000e+00> : vector<18x16xf32>
    %14 = tpu.matmul %12, %13, %cst_14 {dimension_numbers = #tpu.dot_dimension_numbers<[1], [0], [0], [1], [0, 0, 1, 1], [], []>} : vector<18x16xf32>, vector<16x16xf32>, vector<18x16xf32> -> vector<18x16xf32>
    %cst_15 = arith.constant dense<0.000000e+00> : vector<18x16xf32>
    %15 = tpu.matmul %1, %12, %cst_15 {dimension_numbers = #tpu.dot_dimension_numbers<[1], [0], [0], [1], [0, 0, 1, 1], [], []>} : vector<18x18xf32>, vector<18x16xf32>, vector<18x16xf32> -> vector<18x16xf32>
    %c0_16 = arith.constant 0 : index
    %c0_17 = arith.constant 0 : index
    %16 = vector.load %arg14[%c0_16, %c0_17] : memref<16x16xf32, #tpu.memory_space<vmem>>, vector<16x16xf32>
    %cst_18 = arith.constant dense<0.000000e+00> : vector<18x16xf32>
    %17 = tpu.matmul %15, %16, %cst_18 {dimension_numbers = #tpu.dot_dimension_numbers<[1], [0], [0], [1], [0, 0, 1, 1], [], []>} : vector<18x16xf32>, vector<16x16xf32>, vector<18x16xf32> -> vector<18x16xf32>
    %18 = arith.addf %14, %17 : vector<18x16xf32>
    %c0_19 = arith.constant 0 : index
    %c0_20 = arith.constant 0 : index
    %19 = vector.load %arg15[%c0_19, %c0_20] : memref<1x16xf32, #tpu.memory_space<vmem>>, vector<1x16xf32>
    %20 = vector.broadcast %19 : vector<1x16xf32> to vector<18x16xf32>
    %21 = arith.addf %18, %20 : vector<18x16xf32>
    %cst_21 = arith.constant 0.000000e+00 : f32
    %22 = vector.broadcast %cst_21 : f32 to vector<18x16xf32>
    %23 = arith.maximumf %21, %22 : vector<18x16xf32>
    %24 = tpu.transpose %23, [1, 0] : vector<18x16xf32> -> vector<16x18xf32>
    %cst_22 = arith.constant dense<0.000000e+00> : vector<18x18xf32>
    %25 = tpu.matmul %23, %24, %cst_22 {dimension_numbers = #tpu.dot_dimension_numbers<[1], [0], [0], [1], [0, 0, 1, 1], [], []>} : vector<18x16xf32>, vector<16x18xf32>, vector<18x18xf32> -> vector<18x18xf32>
    %c0_23 = arith.constant 0 : index
    %c0_24 = arith.constant 0 : index
    %26 = vector.load %arg56[%c0_23, %c0_24] : memref<18x18xf32, #tpu.memory_space<vmem>>, vector<18x18xf32>
    tpu.vector_store %arg56[%c0_23, %c0_24], %25 {strides = array<i32>} : memref<18x18xf32, #tpu.memory_space<vmem>>, vector<18x18xf32>,
    %c0_25 = arith.constant 0 : index
    %c0_26 = arith.constant 0 : index
    %27 = vector.load %arg2[%c0_25, %c0_26] : memref<2x16xf32, #tpu.memory_space<vmem>>, vector<2x16xf32>
    %c0_27 = arith.constant 0 : index
    %c0_28 = arith.constant 0 : index
    %28 = vector.load %arg3[%c0_27, %c0_28] : memref<2x16xf32, #tpu.memory_space<vmem>>, vector<2x16xf32>
    %c0_29 = arith.constant 0 : index
    %c0_30 = arith.constant 0 : index
    %29 = vector.load %arg16[%c0_29, %c0_30] : memref<16x32xf32, #tpu.memory_space<vmem>>, vector<16x32xf32>
    %c0_31 = arith.constant 0 : index
    %c0_32 = arith.constant 0 : index
    %30 = vector.load %arg17[%c0_31, %c0_32] : memref<16x32xf32, #tpu.memory_space<vmem>>, vector<16x32xf32>
    %c0_33 = arith.constant 0 : index
    %c0_34 = arith.constant 0 : index
    %31 = vector.load %arg18[%c0_33, %c0_34] : memref<16x32xf32, #tpu.memory_space<vmem>>, vector<16x32xf32>
    %c0_35 = arith.constant 0 : index
    %c0_36 = arith.constant 0 : index
    %32 = vector.load %arg19[%c0_35, %c0_36] : memref<16x32xf32, #tpu.memory_space<vmem>>, vector<16x32xf32>
    %c0_37 = arith.constant 0 : index
    %c0_38 = arith.constant 0 : index
    %33 = vector.load %arg20[%c0_37, %c0_38] : memref<1x32xf32, #tpu.memory_space<vmem>>, vector<1x32xf32>
    %34 = vector.extract_strided_slice %23 {offsets = [0, 0], sizes = [1, 16], strides = [1, 1]} : vector<18x16xf32> to vector<1x16xf32>
    %35 = vector.extract_strided_slice %23 {offsets = [1, 0], sizes = [8, 16], strides = [1, 1]} : vector<18x16xf32> to vector<8x16xf32>
    %cst_39 = arith.constant dense<0.000000e+00> : vector<1x32xf32>
    %36 = tpu.matmul %34, %29, %cst_39 {dimension_numbers = #tpu.dot_dimension_numbers<[1], [0], [0], [1], [0, 0, 1, 1], [], []>} : vector<1x16xf32>, vector<16x32xf32>, vector<1x32xf32> -> vector<1x32xf32>
    %37 = vector.extract_strided_slice %27 {offsets = [0, 0], sizes = [1, 16], strides = [1, 1]} : vector<2x16xf32> to vector<1x16xf32>
    %cst_40 = arith.constant dense<0.000000e+00> : vector<1x32xf32>
    %38 = tpu.matmul %37, %30, %cst_40 {dimension_numbers = #tpu.dot_dimension_numbers<[1], [0], [0], [1], [0, 0, 1, 1], [], []>} : vector<1x16xf32>, vector<16x32xf32>, vector<1x32xf32> -> vector<1x32xf32>
    %39 = arith.addf %36, %38 : vector<1x32xf32>
    %40 = vector.extract_strided_slice %28 {offsets = [0, 0], sizes = [1, 16], strides = [1, 1]} : vector<2x16xf32> to vector<1x16xf32>
    %cst_41 = arith.constant dense<0.000000e+00> : vector<1x32xf32>
    %41 = tpu.matmul %40, %31, %cst_41 {dimension_numbers = #tpu.dot_dimension_numbers<[1], [0], [0], [1], [0, 0, 1, 1], [], []>} : vector<1x16xf32>, vector<16x32xf32>, vector<1x32xf32> -> vector<1x32xf32>
    %42 = arith.addf %39, %41 : vector<1x32xf32>
    %43 = arith.addf %42, %33 : vector<1x32xf32>
    %cst_42 = arith.constant dense<0.000000e+00> : vector<8x32xf32>
    %44 = tpu.matmul %35, %32, %cst_42 {dimension_numbers = #tpu.dot_dimension_numbers<[1], [0], [0], [1], [0, 0, 1, 1], [], []>} : vector<8x16xf32>, vector<16x32xf32>, vector<8x32xf32> -> vector<8x32xf32>
    %45 = vector.broadcast %43 : vector<1x32xf32> to vector<8x32xf32>
    %46 = arith.addf %44, %45 : vector<8x32xf32>
    %47 = vector.extract_strided_slice %23 {offsets = [9, 0], sizes = [1, 16], strides = [1, 1]} : vector<18x16xf32> to vector<1x16xf32>
    %48 = vector.extract_strided_slice %23 {offsets = [10, 0], sizes = [8, 16], strides = [1, 1]} : vector<18x16xf32> to vector<8x16xf32>
    %cst_43 = arith.constant dense<0.000000e+00> : vector<1x32xf32>
    %49 = tpu.matmul %47, %29, %cst_43 {dimension_numbers = #tpu.dot_dimension_numbers<[1], [0], [0], [1], [0, 0, 1, 1], [], []>} : vector<1x16xf32>, vector<16x32xf32>, vector<1x32xf32> -> vector<1x32xf32>
    %50 = vector.extract_strided_slice %27 {offsets = [1, 0], sizes = [1, 16], strides = [1, 1]} : vector<2x16xf32> to vector<1x16xf32>
    %cst_44 = arith.constant dense<0.000000e+00> : vector<1x32xf32>
    %51 = tpu.matmul %50, %30, %cst_44 {dimension_numbers = #tpu.dot_dimension_numbers<[1], [0], [0], [1], [0, 0, 1, 1], [], []>} : vector<1x16xf32>, vector<16x32xf32>, vector<1x32xf32> -> vector<1x32xf32>
    %52 = arith.addf %49, %51 : vector<1x32xf32>
    %53 = vector.extract_strided_slice %28 {offsets = [1, 0], sizes = [1, 16], strides = [1, 1]} : vector<2x16xf32> to vector<1x16xf32>
    %cst_45 = arith.constant dense<0.000000e+00> : vector<1x32xf32>
    %54 = tpu.matmul %53, %31, %cst_45 {dimension_numbers = #tpu.dot_dimension_numbers<[1], [0], [0], [1], [0, 0, 1, 1], [], []>} : vector<1x16xf32>, vector<16x32xf32>, vector<1x32xf32> -> vector<1x32xf32>
    %55 = arith.addf %52, %54 : vector<1x32xf32>
    %56 = arith.addf %55, %33 : vector<1x32xf32>
    %cst_46 = arith.constant dense<0.000000e+00> : vector<8x32xf32>
    %57 = tpu.matmul %48, %32, %cst_46 {dimension_numbers = #tpu.dot_dimension_numbers<[1], [0], [0], [1], [0, 0, 1, 1], [], []>} : vector<8x16xf32>, vector<16x32xf32>, vector<8x32xf32> -> vector<8x32xf32>
    %58 = vector.broadcast %56 : vector<1x32xf32> to vector<8x32xf32>
    %59 = arith.addf %57, %58 : vector<8x32xf32>
    %60 = tpu.concatenate %46, %59 in 0 : vector<8x32xf32>, vector<8x32xf32> -> vector<16x32xf32>
    %c0_47 = arith.constant 0 : index
    %c0_48 = arith.constant 0 : index
    %61 = vector.load %arg7[%c0_47, %c0_48] : memref<64x32xf32, #tpu.memory_space<vmem>>, vector<64x32xf32>
    %c0_49 = arith.constant 0 : index
    %c0_50 = arith.constant 0 : index
    %62 = vector.load %arg8[%c0_49, %c0_50] : memref<8x64xf32, #tpu.memory_space<vmem>>, vector<8x64xf32>
    %c0_51 = arith.constant 0 : index
    %c0_52 = arith.constant 0 : index
    %63 = vector.load %arg21[%c0_51, %c0_52] : memref<32x32xf32, #tpu.memory_space<vmem>>, vector<32x32xf32>
    %cst_53 = arith.constant dense<0.000000e+00> : vector<16x32xf32>
    %64 = tpu.matmul %60, %63, %cst_53 {dimension_numbers = #tpu.dot_dimension_numbers<[1], [0], [0], [1], [0, 0, 1, 1], [], []>} : vector<16x32xf32>, vector<32x32xf32>, vector<16x32xf32> -> vector<16x32xf32>
    %c0_54 = arith.constant 0 : index
    %c0_55 = arith.constant 0 : index
    %65 = vector.load %arg24[%c0_54, %c0_55] : memref<1x32xf32, #tpu.memory_space<vmem>>, vector<1x32xf32>
    %66 = vector.broadcast %65 : vector<1x32xf32> to vector<16x32xf32>
    %67 = arith.addf %64, %66 : vector<16x32xf32>
    %c0_56 = arith.constant 0 : index
    %c0_57 = arith.constant 0 : index
    %68 = vector.load %arg22[%c0_56, %c0_57] : memref<32x32xf32, #tpu.memory_space<vmem>>, vector<32x32xf32>
    %cst_58 = arith.constant dense<0.000000e+00> : vector<16x32xf32>
    %69 = tpu.matmul %60, %68, %cst_58 {dimension_numbers = #tpu.dot_dimension_numbers<[1], [0], [0], [1], [0, 0, 1, 1], [], []>} : vector<16x32xf32>, vector<32x32xf32>, vector<16x32xf32> -> vector<16x32xf32>
    %c0_59 = arith.constant 0 : index
    %c0_60 = arith.constant 0 : index
    %70 = vector.load %arg25[%c0_59, %c0_60] : memref<1x32xf32, #tpu.memory_space<vmem>>, vector<1x32xf32>
    %71 = vector.broadcast %70 : vector<1x32xf32> to vector<16x32xf32>
    %72 = arith.addf %69, %71 : vector<16x32xf32>
    %c0_61 = arith.constant 0 : index
    %c0_62 = arith.constant 0 : index
    %73 = vector.load %arg23[%c0_61, %c0_62] : memref<32x32xf32, #tpu.memory_space<vmem>>, vector<32x32xf32>
    %cst_63 = arith.constant dense<0.000000e+00> : vector<16x32xf32>
    %74 = tpu.matmul %60, %73, %cst_63 {dimension_numbers = #tpu.dot_dimension_numbers<[1], [0], [0], [1], [0, 0, 1, 1], [], []>} : vector<16x32xf32>, vector<32x32xf32>, vector<16x32xf32> -> vector<16x32xf32>
    %c0_64 = arith.constant 0 : index
    %c0_65 = arith.constant 0 : index
    %75 = vector.load %arg26[%c0_64, %c0_65] : memref<1x32xf32, #tpu.memory_space<vmem>>, vector<1x32xf32>
    %76 = vector.broadcast %75 : vector<1x32xf32> to vector<16x32xf32>
    %77 = arith.addf %74, %76 : vector<16x32xf32>
    %78 = vector.extract_strided_slice %67 {offsets = [0, 0], sizes = [8, 32], strides = [1, 1]} : vector<16x32xf32> to vector<8x32xf32>
    %79 = vector.extract_strided_slice %72 {offsets = [0, 0], sizes = [8, 32], strides = [1, 1]} : vector<16x32xf32> to vector<8x32xf32>
    %80 = vector.extract_strided_slice %77 {offsets = [0, 0], sizes = [8, 32], strides = [1, 1]} : vector<16x32xf32> to vector<8x32xf32>
    %81 = tpu.concatenate %78, %78, %78, %78, %78, %78, %78, %78 in 0 : vector<8x32xf32>, vector<8x32xf32>, vector<8x32xf32>, vector<8x32xf32>, vector<8x32xf32>, vector<8x32xf32>, vector<8x32xf32>, vector<8x32xf32> -> vector<64x32xf32>
    %82 = arith.mulf %81, %61 : vector<64x32xf32>
    %83 = tpu.transpose %79, [1, 0] : vector<8x32xf32> -> vector<32x8xf32>
    %cst_66 = arith.constant dense<0.000000e+00> : vector<64x8xf32>
    %84 = tpu.matmul %82, %83, %cst_66 {dimension_numbers = #tpu.dot_dimension_numbers<[1], [0], [0], [1], [0, 0, 1, 1], [], []>} : vector<64x32xf32>, vector<32x8xf32>, vector<64x8xf32> -> vector<64x8xf32>
    %cst_67 = arith.constant 5.000000e-01 : f32
    %85 = vector.broadcast %cst_67 : f32 to vector<64x8xf32>
    %86 = arith.mulf %84, %85 : vector<64x8xf32>
    %cst_68 = arith.constant dense<0xFF800000> : vector<64xf32>
    %87 = vector.multi_reduction <maximumf>, %86, %cst_68 [1] : vector<64x8xf32> to vector<64xf32>
    %88 = vector.shape_cast %87 : vector<64xf32> to vector<64x1xf32>
    %89 = vector.broadcast %88 : vector<64x1xf32> to vector<64x8xf32>
    %90 = arith.subf %86, %89 : vector<64x8xf32>
    %91 = math.exp %90 : vector<64x8xf32>
    %cst_69 = arith.constant dense<0.000000e+00> : vector<64xf32>
    %92 = vector.multi_reduction <add>, %91, %cst_69 [1] : vector<64x8xf32> to vector<64xf32>
    %93 = vector.shape_cast %92 : vector<64xf32> to vector<64x1xf32>
    %94 = vector.broadcast %93 : vector<64x1xf32> to vector<64x8xf32>
    %95 = arith.divf %91, %94 : vector<64x8xf32>
    %cst_70 = arith.constant dense<0.000000e+00> : vector<64x32xf32>
    %96 = tpu.matmul %95, %80, %cst_70 {dimension_numbers = #tpu.dot_dimension_numbers<[1], [0], [0], [1], [0, 0, 1, 1], [], []>} : vector<64x8xf32>, vector<8x32xf32>, vector<64x32xf32> -> vector<64x32xf32>
    %97 = arith.mulf %96, %61 : vector<64x32xf32>
    %cst_71 = arith.constant dense<0.000000e+00> : vector<8x32xf32>
    %98 = tpu.matmul %62, %97, %cst_71 {dimension_numbers = #tpu.dot_dimension_numbers<[1], [0], [0], [1], [0, 0, 1, 1], [], []>} : vector<8x64xf32>, vector<64x32xf32>, vector<8x32xf32> -> vector<8x32xf32>
    %99 = vector.extract_strided_slice %67 {offsets = [8, 0], sizes = [8, 32], strides = [1, 1]} : vector<16x32xf32> to vector<8x32xf32>
    %100 = vector.extract_strided_slice %72 {offsets = [8, 0], sizes = [8, 32], strides = [1, 1]} : vector<16x32xf32> to vector<8x32xf32>
    %101 = vector.extract_strided_slice %77 {offsets = [8, 0], sizes = [8, 32], strides = [1, 1]} : vector<16x32xf32> to vector<8x32xf32>
    %102 = tpu.concatenate %99, %99, %99, %99, %99, %99, %99, %99 in 0 : vector<8x32xf32>, vector<8x32xf32>, vector<8x32xf32>, vector<8x32xf32>, vector<8x32xf32>, vector<8x32xf32>, vector<8x32xf32>, vector<8x32xf32> -> vector<64x32xf32>
    %103 = arith.mulf %102, %61 : vector<64x32xf32>
    %104 = tpu.transpose %100, [1, 0] : vector<8x32xf32> -> vector<32x8xf32>
    %cst_72 = arith.constant dense<0.000000e+00> : vector<64x8xf32>
    %105 = tpu.matmul %103, %104, %cst_72 {dimension_numbers = #tpu.dot_dimension_numbers<[1], [0], [0], [1], [0, 0, 1, 1], [], []>} : vector<64x32xf32>, vector<32x8xf32>, vector<64x8xf32> -> vector<64x8xf32>
    %cst_73 = arith.constant 5.000000e-01 : f32
    %106 = vector.broadcast %cst_73 : f32 to vector<64x8xf32>
    %107 = arith.mulf %105, %106 : vector<64x8xf32>
    %cst_74 = arith.constant dense<0xFF800000> : vector<64xf32>
    %108 = vector.multi_reduction <maximumf>, %107, %cst_74 [1] : vector<64x8xf32> to vector<64xf32>
    %109 = vector.shape_cast %108 : vector<64xf32> to vector<64x1xf32>
    %110 = vector.broadcast %109 : vector<64x1xf32> to vector<64x8xf32>
    %111 = arith.subf %107, %110 : vector<64x8xf32>
    %112 = math.exp %111 : vector<64x8xf32>
    %cst_75 = arith.constant dense<0.000000e+00> : vector<64xf32>
    %113 = vector.multi_reduction <add>, %112, %cst_75 [1] : vector<64x8xf32> to vector<64xf32>
    %114 = vector.shape_cast %113 : vector<64xf32> to vector<64x1xf32>
    %115 = vector.broadcast %114 : vector<64x1xf32> to vector<64x8xf32>
    %116 = arith.divf %112, %115 : vector<64x8xf32>
    %cst_76 = arith.constant dense<0.000000e+00> : vector<64x32xf32>
    %117 = tpu.matmul %116, %101, %cst_76 {dimension_numbers = #tpu.dot_dimension_numbers<[1], [0], [0], [1], [0, 0, 1, 1], [], []>} : vector<64x8xf32>, vector<8x32xf32>, vector<64x32xf32> -> vector<64x32xf32>
    %118 = arith.mulf %117, %61 : vector<64x32xf32>
    %cst_77 = arith.constant dense<0.000000e+00> : vector<8x32xf32>
    %119 = tpu.matmul %62, %118, %cst_77 {dimension_numbers = #tpu.dot_dimension_numbers<[1], [0], [0], [1], [0, 0, 1, 1], [], []>} : vector<8x64xf32>, vector<64x32xf32>, vector<8x32xf32> -> vector<8x32xf32>
    %120 = tpu.concatenate %98, %119 in 0 : vector<8x32xf32>, vector<8x32xf32> -> vector<16x32xf32>
    %c0_78 = arith.constant 0 : index
    %c0_79 = arith.constant 0 : index
    %121 = vector.load %arg27[%c0_78, %c0_79] : memref<32x32xf32, #tpu.memory_space<vmem>>, vector<32x32xf32>
    %cst_80 = arith.constant dense<0.000000e+00> : vector<16x32xf32>
    %122 = tpu.matmul %120, %121, %cst_80 {dimension_numbers = #tpu.dot_dimension_numbers<[1], [0], [0], [1], [0, 0, 1, 1], [], []>} : vector<16x32xf32>, vector<32x32xf32>, vector<16x32xf32> -> vector<16x32xf32>
    %c0_81 = arith.constant 0 : index
    %c0_82 = arith.constant 0 : index
    %123 = vector.load %arg28[%c0_81, %c0_82] : memref<1x32xf32, #tpu.memory_space<vmem>>, vector<1x32xf32>
    %124 = vector.broadcast %123 : vector<1x32xf32> to vector<16x32xf32>
    %125 = arith.addf %122, %124 : vector<16x32xf32>
    %126 = arith.addf %60, %125 : vector<16x32xf32>
    %c0_83 = arith.constant 0 : index
    %c0_84 = arith.constant 0 : index
    %127 = vector.load %arg33[%c0_83, %c0_84] : memref<1x32xf32, #tpu.memory_space<vmem>>, vector<1x32xf32>
    %c0_85 = arith.constant 0 : index
    %c0_86 = arith.constant 0 : index
    %128 = vector.load %arg34[%c0_85, %c0_86] : memref<1x32xf32, #tpu.memory_space<vmem>>, vector<1x32xf32>
    %cst_87 = arith.constant dense<0.000000e+00> : vector<16xf32>
    %129 = vector.multi_reduction <add>, %126, %cst_87 [1] : vector<16x32xf32> to vector<16xf32>
    %130 = vector.shape_cast %129 : vector<16xf32> to vector<16x1xf32>
    %cst_88 = arith.constant 3.200000e+01 : f32
    %131 = vector.broadcast %cst_88 : f32 to vector<16x1xf32>
    %132 = arith.divf %130, %131 : vector<16x1xf32>
    %133 = vector.broadcast %132 : vector<16x1xf32> to vector<16x32xf32>
    %134 = arith.subf %126, %133 : vector<16x32xf32>
    %135 = arith.mulf %134, %134 : vector<16x32xf32>
    %cst_89 = arith.constant dense<0.000000e+00> : vector<16xf32>
    %136 = vector.multi_reduction <add>, %135, %cst_89 [1] : vector<16x32xf32> to vector<16xf32>
    %137 = vector.shape_cast %136 : vector<16xf32> to vector<16x1xf32>
    %cst_90 = arith.constant 3.200000e+01 : f32
    %138 = vector.broadcast %cst_90 : f32 to vector<16x1xf32>
    %139 = arith.divf %137, %138 : vector<16x1xf32>
    %cst_91 = arith.constant 9.99999974E-6 : f32
    %140 = vector.broadcast %cst_91 : f32 to vector<16x1xf32>
    %141 = arith.addf %139, %140 : vector<16x1xf32>
    %142 = math.rsqrt %141 : vector<16x1xf32>
    %143 = vector.broadcast %142 : vector<16x1xf32> to vector<16x32xf32>
    %144 = arith.mulf %134, %143 : vector<16x32xf32>
    %145 = vector.broadcast %127 : vector<1x32xf32> to vector<16x32xf32>
    %146 = arith.mulf %144, %145 : vector<16x32xf32>
    %147 = vector.broadcast %128 : vector<1x32xf32> to vector<16x32xf32>
    %148 = arith.addf %146, %147 : vector<16x32xf32>
    %c0_92 = arith.constant 0 : index
    %c0_93 = arith.constant 0 : index
    %149 = vector.load %arg29[%c0_92, %c0_93] : memref<32x2048xf32, #tpu.memory_space<vmem>>, vector<32x2048xf32>
    %cst_94 = arith.constant dense<0.000000e+00> : vector<16x2048xf32>
    %150 = tpu.matmul %148, %149, %cst_94 {dimension_numbers = #tpu.dot_dimension_numbers<[1], [0], [0], [1], [0, 0, 1, 1], [], []>} : vector<16x32xf32>, vector<32x2048xf32>, vector<16x2048xf32> -> vector<16x2048xf32>
    %c0_95 = arith.constant 0 : index
    %c0_96 = arith.constant 0 : index
    %151 = vector.load %arg30[%c0_95, %c0_96] : memref<1x2048xf32, #tpu.memory_space<vmem>>, vector<1x2048xf32>
    %152 = vector.broadcast %151 : vector<1x2048xf32> to vector<16x2048xf32>
    %153 = arith.addf %150, %152 : vector<16x2048xf32>
    %cst_97 = arith.constant 0.000000e+00 : f32
    %154 = vector.broadcast %cst_97 : f32 to vector<16x2048xf32>
    %155 = arith.maximumf %153, %154 : vector<16x2048xf32>
    %c0_98 = arith.constant 0 : index
    %c0_99 = arith.constant 0 : index
    %156 = vector.load %arg31[%c0_98, %c0_99] : memref<2048x32xf32, #tpu.memory_space<vmem>>, vector<2048x32xf32>
    %cst_100 = arith.constant dense<0.000000e+00> : vector<16x32xf32>
    %157 = tpu.matmul %155, %156, %cst_100 {dimension_numbers = #tpu.dot_dimension_numbers<[1], [0], [0], [1], [0, 0, 1, 1], [], []>} : vector<16x2048xf32>, vector<2048x32xf32>, vector<16x32xf32> -> vector<16x32xf32>
    %c0_101 = arith.constant 0 : index
    %c0_102 = arith.constant 0 : index
    %158 = vector.load %arg32[%c0_101, %c0_102] : memref<1x32xf32, #tpu.memory_space<vmem>>, vector<1x32xf32>
    %159 = vector.broadcast %158 : vector<1x32xf32> to vector<16x32xf32>
    %160 = arith.addf %157, %159 : vector<16x32xf32>
    %161 = arith.addf %148, %160 : vector<16x32xf32>
    %c0_103 = arith.constant 0 : index
    %c0_104 = arith.constant 0 : index
    %162 = vector.load %arg35[%c0_103, %c0_104] : memref<1x32xf32, #tpu.memory_space<vmem>>, vector<1x32xf32>
    %c0_105 = arith.constant 0 : index
    %c0_106 = arith.constant 0 : index
    %163 = vector.load %arg36[%c0_105, %c0_106] : memref<1x32xf32, #tpu.memory_space<vmem>>, vector<1x32xf32>
    %cst_107 = arith.constant dense<0.000000e+00> : vector<16xf32>
    %164 = vector.multi_reduction <add>, %161, %cst_107 [1] : vector<16x32xf32> to vector<16xf32>
    %165 = vector.shape_cast %164 : vector<16xf32> to vector<16x1xf32>
    %cst_108 = arith.constant 3.200000e+01 : f32
    %166 = vector.broadcast %cst_108 : f32 to vector<16x1xf32>
    %167 = arith.divf %165, %166 : vector<16x1xf32>
    %168 = vector.broadcast %167 : vector<16x1xf32> to vector<16x32xf32>
    %169 = arith.subf %161, %168 : vector<16x32xf32>
    %170 = arith.mulf %169, %169 : vector<16x32xf32>
    %cst_109 = arith.constant dense<0.000000e+00> : vector<16xf32>
    %171 = vector.multi_reduction <add>, %170, %cst_109 [1] : vector<16x32xf32> to vector<16xf32>
    %172 = vector.shape_cast %171 : vector<16xf32> to vector<16x1xf32>
    %cst_110 = arith.constant 3.200000e+01 : f32
    %173 = vector.broadcast %cst_110 : f32 to vector<16x1xf32>
    %174 = arith.divf %172, %173 : vector<16x1xf32>
    %cst_111 = arith.constant 9.99999974E-6 : f32
    %175 = vector.broadcast %cst_111 : f32 to vector<16x1xf32>
    %176 = arith.addf %174, %175 : vector<16x1xf32>
    %177 = math.rsqrt %176 : vector<16x1xf32>
    %178 = vector.broadcast %177 : vector<16x1xf32> to vector<16x32xf32>
    %179 = arith.mulf %169, %178 : vector<16x32xf32>
    %180 = vector.broadcast %162 : vector<1x32xf32> to vector<16x32xf32>
    %181 = arith.mulf %179, %180 : vector<16x32xf32>
    %182 = vector.broadcast %163 : vector<1x32xf32> to vector<16x32xf32>
    %183 = arith.addf %181, %182 : vector<16x32xf32>
    %c0_112 = arith.constant 0 : index
    %c0_113 = arith.constant 0 : index
    %184 = vector.load %arg37[%c0_112, %c0_113] : memref<8x8xf32, #tpu.memory_space<vmem>>, vector<8x8xf32>
    %c0_114 = arith.constant 0 : index
    %c0_115 = arith.constant 0 : index
    %185 = vector.load %arg38[%c0_114, %c0_115] : memref<8x8xf32, #tpu.memory_space<vmem>>, vector<8x8xf32>
    %c0_116 = arith.constant 0 : index
    %c0_117 = arith.constant 0 : index
    %186 = vector.load %arg39[%c0_116, %c0_117] : memref<8x8xf32, #tpu.memory_space<vmem>>, vector<8x8xf32>
    %c0_118 = arith.constant 0 : index
    %c0_119 = arith.constant 0 : index
    %187 = vector.load %arg40[%c0_118, %c0_119] : memref<1x8xf32, #tpu.memory_space<vmem>>, vector<1x8xf32>
    %c0_120 = arith.constant 0 : index
    %c0_121 = arith.constant 0 : index
    %188 = vector.load %arg41[%c0_120, %c0_121] : memref<1x8xf32, #tpu.memory_space<vmem>>, vector<1x8xf32>
    %c0_122 = arith.constant 0 : index
    %c0_123 = arith.constant 0 : index
    %189 = vector.load %arg42[%c0_122, %c0_123] : memref<1x8xf32, #tpu.memory_space<vmem>>, vector<1x8xf32>
    %c0_124 = arith.constant 0 : index
    %c0_125 = arith.constant 0 : index
    %190 = vector.load %arg43[%c0_124, %c0_125] : memref<8x8xf32, #tpu.memory_space<vmem>>, vector<8x8xf32>
    %c0_126 = arith.constant 0 : index
    %c0_127 = arith.constant 0 : index
    %191 = vector.load %arg44[%c0_126, %c0_127] : memref<1x8xf32, #tpu.memory_space<vmem>>, vector<1x8xf32>
    %c0_128 = arith.constant 0 : index
    %c0_129 = arith.constant 0 : index
    %192 = vector.load %arg45[%c0_128, %c0_129] : memref<8x8xf32, #tpu.memory_space<vmem>>, vector<8x8xf32>
    %c0_130 = arith.constant 0 : index
    %c0_131 = arith.constant 0 : index
    %193 = vector.load %arg46[%c0_130, %c0_131] : memref<1x8xf32, #tpu.memory_space<vmem>>, vector<1x8xf32>
    %c0_132 = arith.constant 0 : index
    %c0_133 = arith.constant 0 : index
    %194 = vector.load %arg47[%c0_132, %c0_133] : memref<8x8xf32, #tpu.memory_space<vmem>>, vector<8x8xf32>
    %c0_134 = arith.constant 0 : index
    %c0_135 = arith.constant 0 : index
    %195 = vector.load %arg48[%c0_134, %c0_135] : memref<1x8xf32, #tpu.memory_space<vmem>>, vector<1x8xf32>
    %c0_136 = arith.constant 0 : index
    %c0_137 = arith.constant 0 : index
    %196 = vector.load %arg49[%c0_136, %c0_137] : memref<1x8xf32, #tpu.memory_space<vmem>>, vector<1x8xf32>
    %c0_138 = arith.constant 0 : index
    %c0_139 = arith.constant 0 : index
    %197 = vector.load %arg50[%c0_138, %c0_139] : memref<1x8xf32, #tpu.memory_space<vmem>>, vector<1x8xf32>
    %c0_140 = arith.constant 0 : index
    %c0_141 = arith.constant 0 : index
    %198 = vector.load %arg51[%c0_140, %c0_141] : memref<1x8xf32, #tpu.memory_space<vmem>>, vector<1x8xf32>
    %c0_142 = arith.constant 0 : index
    %c0_143 = arith.constant 0 : index
    %199 = vector.load %arg52[%c0_142, %c0_143] : memref<1x8xf32, #tpu.memory_space<vmem>>, vector<1x8xf32>
    %200 = vector.extract_strided_slice %183 {offsets = [0, 0], sizes = [8, 32], strides = [1, 1]} : vector<16x32xf32> to vector<8x32xf32>
    %201 = tpu.transpose %200, [1, 0] : vector<8x32xf32> -> vector<32x8xf32>
    %cst_144 = arith.constant dense<0.000000e+00> : vector<32x8xf32>
    %202 = tpu.matmul %201, %184, %cst_144 {dimension_numbers = #tpu.dot_dimension_numbers<[1], [0], [0], [1], [0, 0, 1, 1], [], []>} : vector<32x8xf32>, vector<8x8xf32>, vector<32x8xf32> -> vector<32x8xf32>
    %203 = vector.broadcast %187 : vector<1x8xf32> to vector<32x8xf32>
    %204 = arith.addf %202, %203 : vector<32x8xf32>
    %cst_145 = arith.constant dense<0.000000e+00> : vector<32x8xf32>
    %205 = tpu.matmul %201, %185, %cst_145 {dimension_numbers = #tpu.dot_dimension_numbers<[1], [0], [0], [1], [0, 0, 1, 1], [], []>} : vector<32x8xf32>, vector<8x8xf32>, vector<32x8xf32> -> vector<32x8xf32>
    %206 = vector.broadcast %188 : vector<1x8xf32> to vector<32x8xf32>
    %207 = arith.addf %205, %206 : vector<32x8xf32>
    %cst_146 = arith.constant dense<0.000000e+00> : vector<32x8xf32>
    %208 = tpu.matmul %201, %186, %cst_146 {dimension_numbers = #tpu.dot_dimension_numbers<[1], [0], [0], [1], [0, 0, 1, 1], [], []>} : vector<32x8xf32>, vector<8x8xf32>, vector<32x8xf32> -> vector<32x8xf32>
    %209 = vector.broadcast %189 : vector<1x8xf32> to vector<32x8xf32>
    %210 = arith.addf %208, %209 : vector<32x8xf32>
    %211 = tpu.transpose %207, [1, 0] : vector<32x8xf32> -> vector<8x32xf32>
    %cst_147 = arith.constant dense<0.000000e+00> : vector<32x32xf32>
    %212 = tpu.matmul %204, %211, %cst_147 {dimension_numbers = #tpu.dot_dimension_numbers<[1], [0], [0], [1], [0, 0, 1, 1], [], []>} : vector<32x8xf32>, vector<8x32xf32>, vector<32x32xf32> -> vector<32x32xf32>
    %cst_148 = arith.constant 0.353553385 : f32
    %213 = vector.broadcast %cst_148 : f32 to vector<32x32xf32>
    %214 = arith.mulf %212, %213 : vector<32x32xf32>
    %cst_149 = arith.constant dense<0xFF800000> : vector<32xf32>
    %215 = vector.multi_reduction <maximumf>, %214, %cst_149 [1] : vector<32x32xf32> to vector<32xf32>
    %216 = vector.shape_cast %215 : vector<32xf32> to vector<32x1xf32>
    %217 = vector.broadcast %216 : vector<32x1xf32> to vector<32x32xf32>
    %218 = arith.subf %214, %217 : vector<32x32xf32>
    %219 = math.exp %218 : vector<32x32xf32>
    %cst_150 = arith.constant dense<0.000000e+00> : vector<32xf32>
    %220 = vector.multi_reduction <add>, %219, %cst_150 [1] : vector<32x32xf32> to vector<32xf32>
    %221 = vector.shape_cast %220 : vector<32xf32> to vector<32x1xf32>
    %222 = vector.broadcast %221 : vector<32x1xf32> to vector<32x32xf32>
    %223 = arith.divf %219, %222 : vector<32x32xf32>
    %cst_151 = arith.constant dense<0.000000e+00> : vector<32x8xf32>
    %224 = tpu.matmul %223, %210, %cst_151 {dimension_numbers = #tpu.dot_dimension_numbers<[1], [0], [0], [1], [0, 0, 1, 1], [], []>} : vector<32x32xf32>, vector<32x8xf32>, vector<32x8xf32> -> vector<32x8xf32>
    %cst_152 = arith.constant dense<0.000000e+00> : vector<32x8xf32>
    %225 = tpu.matmul %224, %190, %cst_152 {dimension_numbers = #tpu.dot_dimension_numbers<[1], [0], [0], [1], [0, 0, 1, 1], [], []>} : vector<32x8xf32>, vector<8x8xf32>, vector<32x8xf32> -> vector<32x8xf32>
    %226 = vector.broadcast %191 : vector<1x8xf32> to vector<32x8xf32>
    %227 = arith.addf %225, %226 : vector<32x8xf32>
    %228 = arith.addf %201, %227 : vector<32x8xf32>
    %cst_153 = arith.constant dense<0.000000e+00> : vector<32xf32>
    %229 = vector.multi_reduction <add>, %228, %cst_153 [1] : vector<32x8xf32> to vector<32xf32>
    %230 = vector.shape_cast %229 : vector<32xf32> to vector<32x1xf32>
    %cst_154 = arith.constant 8.000000e+00 : f32
    %231 = vector.broadcast %cst_154 : f32 to vector<32x1xf32>
    %232 = arith.divf %230, %231 : vector<32x1xf32>
    %233 = vector.broadcast %232 : vector<32x1xf32> to vector<32x8xf32>
    %234 = arith.subf %228, %233 : vector<32x8xf32>
    %235 = arith.mulf %234, %234 : vector<32x8xf32>
    %cst_155 = arith.constant dense<0.000000e+00> : vector<32xf32>
    %236 = vector.multi_reduction <add>, %235, %cst_155 [1] : vector<32x8xf32> to vector<32xf32>
    %237 = vector.shape_cast %236 : vector<32xf32> to vector<32x1xf32>
    %cst_156 = arith.constant 8.000000e+00 : f32
    %238 = vector.broadcast %cst_156 : f32 to vector<32x1xf32>
    %239 = arith.divf %237, %238 : vector<32x1xf32>
    %cst_157 = arith.constant 9.99999974E-6 : f32
    %240 = vector.broadcast %cst_157 : f32 to vector<32x1xf32>
    %241 = arith.addf %239, %240 : vector<32x1xf32>
    %242 = math.rsqrt %241 : vector<32x1xf32>
    %243 = vector.broadcast %242 : vector<32x1xf32> to vector<32x8xf32>
    %244 = arith.mulf %234, %243 : vector<32x8xf32>
    %245 = vector.broadcast %196 : vector<1x8xf32> to vector<32x8xf32>
    %246 = arith.mulf %244, %245 : vector<32x8xf32>
    %247 = vector.broadcast %197 : vector<1x8xf32> to vector<32x8xf32>
    %248 = arith.addf %246, %247 : vector<32x8xf32>
    %cst_158 = arith.constant dense<0.000000e+00> : vector<32x8xf32>
    %249 = tpu.matmul %248, %192, %cst_158 {dimension_numbers = #tpu.dot_dimension_numbers<[1], [0], [0], [1], [0, 0, 1, 1], [], []>} : vector<32x8xf32>, vector<8x8xf32>, vector<32x8xf32> -> vector<32x8xf32>
    %250 = vector.broadcast %193 : vector<1x8xf32> to vector<32x8xf32>
    %251 = arith.addf %249, %250 : vector<32x8xf32>
    %cst_159 = arith.constant 0.000000e+00 : f32
    %252 = vector.broadcast %cst_159 : f32 to vector<32x8xf32>
    %253 = arith.maximumf %251, %252 : vector<32x8xf32>
    %cst_160 = arith.constant dense<0.000000e+00> : vector<32x8xf32>
    %254 = tpu.matmul %253, %194, %cst_160 {dimension_numbers = #tpu.dot_dimension_numbers<[1], [0], [0], [1], [0, 0, 1, 1], [], []>} : vector<32x8xf32>, vector<8x8xf32>, vector<32x8xf32> -> vector<32x8xf32>
    %255 = arith.addf %248, %254 : vector<32x8xf32>
    %256 = vector.broadcast %195 : vector<1x8xf32> to vector<32x8xf32>
    %257 = arith.addf %255, %256 : vector<32x8xf32>
    %cst_161 = arith.constant dense<0.000000e+00> : vector<32xf32>
    %258 = vector.multi_reduction <add>, %257, %cst_161 [1] : vector<32x8xf32> to vector<32xf32>
    %259 = vector.shape_cast %258 : vector<32xf32> to vector<32x1xf32>
    %cst_162 = arith.constant 8.000000e+00 : f32
    %260 = vector.broadcast %cst_162 : f32 to vector<32x1xf32>
    %261 = arith.divf %259, %260 : vector<32x1xf32>
    %262 = vector.broadcast %261 : vector<32x1xf32> to vector<32x8xf32>
    %263 = arith.subf %257, %262 : vector<32x8xf32>
    %264 = arith.mulf %263, %263 : vector<32x8xf32>
    %cst_163 = arith.constant dense<0.000000e+00> : vector<32xf32>
    %265 = vector.multi_reduction <add>, %264, %cst_163 [1] : vector<32x8xf32> to vector<32xf32>
    %266 = vector.shape_cast %265 : vector<32xf32> to vector<32x1xf32>
    %cst_164 = arith.constant 8.000000e+00 : f32
    %267 = vector.broadcast %cst_164 : f32 to vector<32x1xf32>
    %268 = arith.divf %266, %267 : vector<32x1xf32>
    %cst_165 = arith.constant 9.99999974E-6 : f32
    %269 = vector.broadcast %cst_165 : f32 to vector<32x1xf32>
    %270 = arith.addf %268, %269 : vector<32x1xf32>
    %271 = math.rsqrt %270 : vector<32x1xf32>
    %272 = vector.broadcast %271 : vector<32x1xf32> to vector<32x8xf32>
    %273 = arith.mulf %263, %272 : vector<32x8xf32>
    %274 = vector.broadcast %198 : vector<1x8xf32> to vector<32x8xf32>
    %275 = arith.mulf %273, %274 : vector<32x8xf32>
    %276 = vector.broadcast %199 : vector<1x8xf32> to vector<32x8xf32>
    %277 = arith.addf %275, %276 : vector<32x8xf32>
    %278 = tpu.transpose %277, [1, 0] : vector<32x8xf32> -> vector<8x32xf32>
    %279 = vector.extract_strided_slice %183 {offsets = [8, 0], sizes = [8, 32], strides = [1, 1]} : vector<16x32xf32> to vector<8x32xf32>
    %280 = tpu.transpose %279, [1, 0] : vector<8x32xf32> -> vector<32x8xf32>
    %cst_166 = arith.constant dense<0.000000e+00> : vector<32x8xf32>
    %281 = tpu.matmul %280, %184, %cst_166 {dimension_numbers = #tpu.dot_dimension_numbers<[1], [0], [0], [1], [0, 0, 1, 1], [], []>} : vector<32x8xf32>, vector<8x8xf32>, vector<32x8xf32> -> vector<32x8xf32>
    %282 = vector.broadcast %187 : vector<1x8xf32> to vector<32x8xf32>
    %283 = arith.addf %281, %282 : vector<32x8xf32>
    %cst_167 = arith.constant dense<0.000000e+00> : vector<32x8xf32>
    %284 = tpu.matmul %280, %185, %cst_167 {dimension_numbers = #tpu.dot_dimension_numbers<[1], [0], [0], [1], [0, 0, 1, 1], [], []>} : vector<32x8xf32>, vector<8x8xf32>, vector<32x8xf32> -> vector<32x8xf32>
    %285 = vector.broadcast %188 : vector<1x8xf32> to vector<32x8xf32>
    %286 = arith.addf %284, %285 : vector<32x8xf32>
    %cst_168 = arith.constant dense<0.000000e+00> : vector<32x8xf32>
    %287 = tpu.matmul %280, %186, %cst_168 {dimension_numbers = #tpu.dot_dimension_numbers<[1], [0], [0], [1], [0, 0, 1, 1], [], []>} : vector<32x8xf32>, vector<8x8xf32>, vector<32x8xf32> -> vector<32x8xf32>
    %288 = vector.broadcast %189 : vector<1x8xf32> to vector<32x8xf32>
    %289 = arith.addf %287, %288 : vector<32x8xf32>
    %290 = tpu.transpose %286, [1, 0] : vector<32x8xf32> -> vector<8x32xf32>
    %cst_169 = arith.constant dense<0.000000e+00> : vector<32x32xf32>
    %291 = tpu.matmul %283, %290, %cst_169 {dimension_numbers = #tpu.dot_dimension_numbers<[1], [0], [0], [1], [0, 0, 1, 1], [], []>} : vector<32x8xf32>, vector<8x32xf32>, vector<32x32xf32> -> vector<32x32xf32>
    %cst_170 = arith.constant 0.353553385 : f32
    %292 = vector.broadcast %cst_170 : f32 to vector<32x32xf32>
    %293 = arith.mulf %291, %292 : vector<32x32xf32>
    %cst_171 = arith.constant dense<0xFF800000> : vector<32xf32>
    %294 = vector.multi_reduction <maximumf>, %293, %cst_171 [1] : vector<32x32xf32> to vector<32xf32>
    %295 = vector.shape_cast %294 : vector<32xf32> to vector<32x1xf32>
    %296 = vector.broadcast %295 : vector<32x1xf32> to vector<32x32xf32>
    %297 = arith.subf %293, %296 : vector<32x32xf32>
    %298 = math.exp %297 : vector<32x32xf32>
    %cst_172 = arith.constant dense<0.000000e+00> : vector<32xf32>
    %299 = vector.multi_reduction <add>, %298, %cst_172 [1] : vector<32x32xf32> to vector<32xf32>
    %300 = vector.shape_cast %299 : vector<32xf32> to vector<32x1xf32>
    %301 = vector.broadcast %300 : vector<32x1xf32> to vector<32x32xf32>
    %302 = arith.divf %298, %301 : vector<32x32xf32>
    %cst_173 = arith.constant dense<0.000000e+00> : vector<32x8xf32>
    %303 = tpu.matmul %302, %289, %cst_173 {dimension_numbers = #tpu.dot_dimension_numbers<[1], [0], [0], [1], [0, 0, 1, 1], [], []>} : vector<32x32xf32>, vector<32x8xf32>, vector<32x8xf32> -> vector<32x8xf32>
    %cst_174 = arith.constant dense<0.000000e+00> : vector<32x8xf32>
    %304 = tpu.matmul %303, %190, %cst_174 {dimension_numbers = #tpu.dot_dimension_numbers<[1], [0], [0], [1], [0, 0, 1, 1], [], []>} : vector<32x8xf32>, vector<8x8xf32>, vector<32x8xf32> -> vector<32x8xf32>
    %305 = vector.broadcast %191 : vector<1x8xf32> to vector<32x8xf32>
    %306 = arith.addf %304, %305 : vector<32x8xf32>
    %307 = arith.addf %280, %306 : vector<32x8xf32>
    %cst_175 = arith.constant dense<0.000000e+00> : vector<32xf32>
    %308 = vector.multi_reduction <add>, %307, %cst_175 [1] : vector<32x8xf32> to vector<32xf32>
    %309 = vector.shape_cast %308 : vector<32xf32> to vector<32x1xf32>
    %cst_176 = arith.constant 8.000000e+00 : f32
    %310 = vector.broadcast %cst_176 : f32 to vector<32x1xf32>
    %311 = arith.divf %309, %310 : vector<32x1xf32>
    %312 = vector.broadcast %311 : vector<32x1xf32> to vector<32x8xf32>
    %313 = arith.subf %307, %312 : vector<32x8xf32>
    %314 = arith.mulf %313, %313 : vector<32x8xf32>
    %cst_177 = arith.constant dense<0.000000e+00> : vector<32xf32>
    %315 = vector.multi_reduction <add>, %314, %cst_177 [1] : vector<32x8xf32> to vector<32xf32>
    %316 = vector.shape_cast %315 : vector<32xf32> to vector<32x1xf32>
    %cst_178 = arith.constant 8.000000e+00 : f32
    %317 = vector.broadcast %cst_178 : f32 to vector<32x1xf32>
    %318 = arith.divf %316, %317 : vector<32x1xf32>
    %cst_179 = arith.constant 9.99999974E-6 : f32
    %319 = vector.broadcast %cst_179 : f32 to vector<32x1xf32>
    %320 = arith.addf %318, %319 : vector<32x1xf32>
    %321 = math.rsqrt %320 : vector<32x1xf32>
    %322 = vector.broadcast %321 : vector<32x1xf32> to vector<32x8xf32>
    %323 = arith.mulf %313, %322 : vector<32x8xf32>
    %324 = vector.broadcast %196 : vector<1x8xf32> to vector<32x8xf32>
    %325 = arith.mulf %323, %324 : vector<32x8xf32>
    %326 = vector.broadcast %197 : vector<1x8xf32> to vector<32x8xf32>
    %327 = arith.addf %325, %326 : vector<32x8xf32>
    %cst_180 = arith.constant dense<0.000000e+00> : vector<32x8xf32>
    %328 = tpu.matmul %327, %192, %cst_180 {dimension_numbers = #tpu.dot_dimension_numbers<[1], [0], [0], [1], [0, 0, 1, 1], [], []>} : vector<32x8xf32>, vector<8x8xf32>, vector<32x8xf32> -> vector<32x8xf32>
    %329 = vector.broadcast %193 : vector<1x8xf32> to vector<32x8xf32>
    %330 = arith.addf %328, %329 : vector<32x8xf32>
    %cst_181 = arith.constant 0.000000e+00 : f32
    %331 = vector.broadcast %cst_181 : f32 to vector<32x8xf32>
    %332 = arith.maximumf %330, %331 : vector<32x8xf32>
    %cst_182 = arith.constant dense<0.000000e+00> : vector<32x8xf32>
    %333 = tpu.matmul %332, %194, %cst_182 {dimension_numbers = #tpu.dot_dimension_numbers<[1], [0], [0], [1], [0, 0, 1, 1], [], []>} : vector<32x8xf32>, vector<8x8xf32>, vector<32x8xf32> -> vector<32x8xf32>
    %334 = arith.addf %327, %333 : vector<32x8xf32>
    %335 = vector.broadcast %195 : vector<1x8xf32> to vector<32x8xf32>
    %336 = arith.addf %334, %335 : vector<32x8xf32>
    %cst_183 = arith.constant dense<0.000000e+00> : vector<32xf32>
    %337 = vector.multi_reduction <add>, %336, %cst_183 [1] : vector<32x8xf32> to vector<32xf32>
    %338 = vector.shape_cast %337 : vector<32xf32> to vector<32x1xf32>
    %cst_184 = arith.constant 8.000000e+00 : f32
    %339 = vector.broadcast %cst_184 : f32 to vector<32x1xf32>
    %340 = arith.divf %338, %339 : vector<32x1xf32>
    %341 = vector.broadcast %340 : vector<32x1xf32> to vector<32x8xf32>
    %342 = arith.subf %336, %341 : vector<32x8xf32>
    %343 = arith.mulf %342, %342 : vector<32x8xf32>
    %cst_185 = arith.constant dense<0.000000e+00> : vector<32xf32>
    %344 = vector.multi_reduction <add>, %343, %cst_185 [1] : vector<32x8xf32> to vector<32xf32>
    %345 = vector.shape_cast %344 : vector<32xf32> to vector<32x1xf32>
    %cst_186 = arith.constant 8.000000e+00 : f32
    %346 = vector.broadcast %cst_186 : f32 to vector<32x1xf32>
    %347 = arith.divf %345, %346 : vector<32x1xf32>
    %cst_187 = arith.constant 9.99999974E-6 : f32
    %348 = vector.broadcast %cst_187 : f32 to vector<32x1xf32>
    %349 = arith.addf %347, %348 : vector<32x1xf32>
    %350 = math.rsqrt %349 : vector<32x1xf32>
    %351 = vector.broadcast %350 : vector<32x1xf32> to vector<32x8xf32>
    %352 = arith.mulf %342, %351 : vector<32x8xf32>
    %353 = vector.broadcast %198 : vector<1x8xf32> to vector<32x8xf32>
    %354 = arith.mulf %352, %353 : vector<32x8xf32>
    %355 = vector.broadcast %199 : vector<1x8xf32> to vector<32x8xf32>
    %356 = arith.addf %354, %355 : vector<32x8xf32>
    %357 = tpu.transpose %356, [1, 0] : vector<32x8xf32> -> vector<8x32xf32>
    %358 = tpu.concatenate %278, %357 in 0 : vector<8x32xf32>, vector<8x32xf32> -> vector<16x32xf32>
    %359 = arith.addf %183, %358 : vector<16x32xf32>
    %360 = arith.addf %359, %60 : vector<16x32xf32>
    %c0_188 = arith.constant 0 : index
    %c0_189 = arith.constant 0 : index
    %361 = vector.load %arg9[%c0_188, %c0_189] : memref<2x16xf32, #tpu.memory_space<vmem>>, vector<2x16xf32>
    %cst_190 = arith.constant dense<0.000000e+00> : vector<2x32xf32>
    %362 = tpu.matmul %361, %360, %cst_190 {dimension_numbers = #tpu.dot_dimension_numbers<[1], [0], [0], [1], [0, 0, 1, 1], [], []>} : vector<2x16xf32>, vector<16x32xf32>, vector<2x32xf32> -> vector<2x32xf32>
    %c0_191 = arith.constant 0 : index
    %c0_192 = arith.constant 0 : index
    %363 = vector.load %arg53[%c0_191, %c0_192] : memref<1x1xf32, #tpu.memory_space<vmem>>, vector<1x1xf32>
    %364 = vector.broadcast %363 : vector<1x1xf32> to vector<2x32xf32>
    %365 = arith.addf %362, %364 : vector<2x32xf32>
    %c0_193 = arith.constant 0 : index
    %c0_194 = arith.constant 0 : index
    %366 = vector.load %arg54[%c0_193, %c0_194] : memref<32x128xf32, #tpu.memory_space<vmem>>, vector<32x128xf32>
    %cst_195 = arith.constant dense<0.000000e+00> : vector<2x128xf32>
    %367 = tpu.matmul %365, %366, %cst_195 {dimension_numbers = #tpu.dot_dimension_numbers<[1], [0], [0], [1], [0, 0, 1, 1], [], []>} : vector<2x32xf32>, vector<32x128xf32>, vector<2x128xf32> -> vector<2x128xf32>
    %c0_196 = arith.constant 0 : index
    %c0_197 = arith.constant 0 : index
    %368 = vector.load %arg55[%c0_196, %c0_197] : memref<1x128xf32, #tpu.memory_space<vmem>>, vector<1x128xf32>
    %369 = vector.broadcast %368 : vector<1x128xf32> to vector<2x128xf32>
    %370 = arith.addf %367, %369 : vector<2x128xf32>
    %c0_198 = arith.constant 0 : index
    %c0_199 = arith.constant 0 : index
    %371 = vector.load %arg57[%c0_198, %c0_199] : memref<2x128xf32, #tpu.memory_space<vmem>>, vector<2x128xf32>
    tpu.vector_store %arg57[%c0_198, %c0_199], %370 {strides = array<i32>} : memref<2x128xf32, #tpu.memory_space<vmem>>, vector<2x128xf32>,
    %372 = vector.extract_strided_slice %0 {offsets = [0, 0], sizes = [1, 16], strides = [1, 1]} : vector<18x16xf32> to vector<1x16xf32>
    %373 = arith.mulf %372, %372 : vector<1x16xf32>
    %cst_200 = arith.constant dense<0.000000e+00> : vector<1xf32>
    %374 = vector.multi_reduction <add>, %373, %cst_200 [1] : vector<1x16xf32> to vector<1xf32>
    %375 = vector.shape_cast %374 : vector<1xf32> to vector<1x1xf32>
    %cst_201 = arith.constant 9.99999996E-13 : f32
    %376 = vector.broadcast %cst_201 : f32 to vector<1x1xf32>
    %377 = arith.addf %375, %376 : vector<1x1xf32>
    %378 = math.rsqrt %377 : vector<1x1xf32>
    %379 = vector.broadcast %378 : vector<1x1xf32> to vector<1x16xf32>
    %380 = arith.mulf %372, %379 : vector<1x16xf32>
    %381 = vector.extract_strided_slice %27 {offsets = [0, 0], sizes = [1, 16], strides = [1, 1]} : vector<2x16xf32> to vector<1x16xf32>
    %382 = arith.mulf %381, %381 : vector<1x16xf32>
    %cst_202 = arith.constant dense<0.000000e+00> : vector<1xf32>
    %383 = vector.multi_reduction <add>, %382, %cst_202 [1] : vector<1x16xf32> to vector<1xf32>
    %384 = vector.shape_cast %383 : vector<1xf32> to vector<1x1xf32>
    %cst_203 = arith.constant 9.99999996E-13 : f32
    %385 = vector.broadcast %cst_203 : f32 to vector<1x1xf32>
    %386 = arith.addf %384, %385 : vector<1x1xf32>
    %387 = math.rsqrt %386 : vector<1x1xf32>
    %388 = vector.broadcast %387 : vector<1x1xf32> to vector<1x16xf32>
    %389 = arith.mulf %381, %388 : vector<1x16xf32>
    %390 = vector.extract_strided_slice %28 {offsets = [0, 0], sizes = [1, 16], strides = [1, 1]} : vector<2x16xf32> to vector<1x16xf32>
    %391 = arith.mulf %390, %390 : vector<1x16xf32>
    %cst_204 = arith.constant dense<0.000000e+00> : vector<1xf32>
    %392 = vector.multi_reduction <add>, %391, %cst_204 [1] : vector<1x16xf32> to vector<1xf32>
    %393 = vector.shape_cast %392 : vector<1xf32> to vector<1x1xf32>
    %cst_205 = arith.constant 9.99999996E-13 : f32
    %394 = vector.broadcast %cst_205 : f32 to vector<1x1xf32>
    %395 = arith.addf %393, %394 : vector<1x1xf32>
    %396 = math.rsqrt %395 : vector<1x1xf32>
    %397 = vector.broadcast %396 : vector<1x1xf32> to vector<1x16xf32>
    %398 = arith.mulf %390, %397 : vector<1x16xf32>
    %399 = vector.extract_strided_slice %0 {offsets = [1, 0], sizes = [8, 16], strides = [1, 1]} : vector<18x16xf32> to vector<8x16xf32>
    %400 = arith.mulf %399, %399 : vector<8x16xf32>
    %cst_206 = arith.constant dense<0.000000e+00> : vector<8xf32>
    %401 = vector.multi_reduction <add>, %400, %cst_206 [1] : vector<8x16xf32> to vector<8xf32>
    %402 = vector.shape_cast %401 : vector<8xf32> to vector<8x1xf32>
    %cst_207 = arith.constant 9.99999996E-13 : f32
    %403 = vector.broadcast %cst_207 : f32 to vector<8x1xf32>
    %404 = arith.addf %402, %403 : vector<8x1xf32>
    %405 = math.rsqrt %404 : vector<8x1xf32>
    %406 = vector.broadcast %405 : vector<8x1xf32> to vector<8x16xf32>
    %407 = arith.mulf %399, %406 : vector<8x16xf32>
    %408 = arith.addf %380, %389 : vector<1x16xf32>
    %409 = arith.addf %408, %398 : vector<1x16xf32>
    %410 = vector.broadcast %409 : vector<1x16xf32> to vector<8x16xf32>
    %411 = arith.addf %410, %407 : vector<8x16xf32>
    %cst_208 = arith.constant 2.500000e-01 : f32
    %412 = vector.broadcast %cst_208 : f32 to vector<8x16xf32>
    %413 = arith.mulf %411, %412 : vector<8x16xf32>
    %414 = arith.mulf %413, %413 : vector<8x16xf32>
    %cst_209 = arith.constant dense<0.000000e+00> : vector<8xf32>
    %415 = vector.multi_reduction <add>, %414, %cst_209 [1] : vector<8x16xf32> to vector<8xf32>
    %416 = vector.shape_cast %415 : vector<8xf32> to vector<8x1xf32>
    %cst_210 = arith.constant 9.99999996E-13 : f32
    %417 = vector.broadcast %cst_210 : f32 to vector<8x1xf32>
    %418 = arith.addf %416, %417 : vector<8x1xf32>
    %419 = math.rsqrt %418 : vector<8x1xf32>
    %420 = vector.broadcast %419 : vector<8x1xf32> to vector<8x16xf32>
    %421 = arith.mulf %413, %420 : vector<8x16xf32>
    %422 = vector.broadcast %380 : vector<1x16xf32> to vector<8x16xf32>
    %423 = arith.mulf %422, %421 : vector<8x16xf32>
    %cst_211 = arith.constant dense<0.000000e+00> : vector<8xf32>
    %424 = vector.multi_reduction <add>, %423, %cst_211 [1] : vector<8x16xf32> to vector<8xf32>
    %425 = vector.shape_cast %424 : vector<8xf32> to vector<8x1xf32>
    %426 = vector.broadcast %389 : vector<1x16xf32> to vector<8x16xf32>
    %427 = arith.mulf %426, %421 : vector<8x16xf32>
    %cst_212 = arith.constant dense<0.000000e+00> : vector<8xf32>
    %428 = vector.multi_reduction <add>, %427, %cst_212 [1] : vector<8x16xf32> to vector<8xf32>
    %429 = vector.shape_cast %428 : vector<8xf32> to vector<8x1xf32>
    %430 = arith.addf %425, %429 : vector<8x1xf32>
    %431 = vector.broadcast %398 : vector<1x16xf32> to vector<8x16xf32>
    %432 = arith.mulf %431, %421 : vector<8x16xf32>
    %cst_213 = arith.constant dense<0.000000e+00> : vector<8xf32>
    %433 = vector.multi_reduction <add>, %432, %cst_213 [1] : vector<8x16xf32> to vector<8xf32>
    %434 = vector.shape_cast %433 : vector<8xf32> to vector<8x1xf32>
    %435 = arith.addf %430, %434 : vector<8x1xf32>
    %436 = arith.mulf %407, %421 : vector<8x16xf32>
    %cst_214 = arith.constant dense<0.000000e+00> : vector<8xf32>
    %437 = vector.multi_reduction <add>, %436, %cst_214 [1] : vector<8x16xf32> to vector<8xf32>
    %438 = vector.shape_cast %437 : vector<8xf32> to vector<8x1xf32>
    %439 = arith.addf %435, %438 : vector<8x1xf32>
    %440 = vector.shape_cast %439 : vector<8x1xf32> to vector<1x8x1xf32>
    %cst_215 = arith.constant dense<0.000000e+00> : vector<1xf32>
    %441 = vector.multi_reduction <add>, %440, %cst_215 [1, 2] : vector<1x8x1xf32> to vector<1xf32>
    %442 = vector.shape_cast %441 : vector<1xf32> to vector<1x1x1xf32>
    %443 = vector.extract %442[0, 0, 0] : f32 from vector<1x1x1xf32>
    %cst_216 = arith.constant 0.000000e+00 : f32
    %444 = arith.addf %cst_216, %443 : f32
    %445 = vector.extract_strided_slice %0 {offsets = [9, 0], sizes = [1, 16], strides = [1, 1]} : vector<18x16xf32> to vector<1x16xf32>
    %446 = arith.mulf %445, %445 : vector<1x16xf32>
    %cst_217 = arith.constant dense<0.000000e+00> : vector<1xf32>
    %447 = vector.multi_reduction <add>, %446, %cst_217 [1] : vector<1x16xf32> to vector<1xf32>
    %448 = vector.shape_cast %447 : vector<1xf32> to vector<1x1xf32>
    %cst_218 = arith.constant 9.99999996E-13 : f32
    %449 = vector.broadcast %cst_218 : f32 to vector<1x1xf32>
    %450 = arith.addf %448, %449 : vector<1x1xf32>
    %451 = math.rsqrt %450 : vector<1x1xf32>
    %452 = vector.broadcast %451 : vector<1x1xf32> to vector<1x16xf32>
    %453 = arith.mulf %445, %452 : vector<1x16xf32>
    %454 = vector.extract_strided_slice %27 {offsets = [1, 0], sizes = [1, 16], strides = [1, 1]} : vector<2x16xf32> to vector<1x16xf32>
    %455 = arith.mulf %454, %454 : vector<1x16xf32>
    %cst_219 = arith.constant dense<0.000000e+00> : vector<1xf32>
    %456 = vector.multi_reduction <add>, %455, %cst_219 [1] : vector<1x16xf32> to vector<1xf32>
    %457 = vector.shape_cast %456 : vector<1xf32> to vector<1x1xf32>
    %cst_220 = arith.constant 9.99999996E-13 : f32
    %458 = vector.broadcast %cst_220 : f32 to vector<1x1xf32>
    %459 = arith.addf %457, %458 : vector<1x1xf32>
    %460 = math.rsqrt %459 : vector<1x1xf32>
    %461 = vector.broadcast %460 : vector<1x1xf32> to vector<1x16xf32>
    %462 = arith.mulf %454, %461 : vector<1x16xf32>
    %463 = vector.extract_strided_slice %28 {offsets = [1, 0], sizes = [1, 16], strides = [1, 1]} : vector<2x16xf32> to vector<1x16xf32>
    %464 = arith.mulf %463, %463 : vector<1x16xf32>
    %cst_221 = arith.constant dense<0.000000e+00> : vector<1xf32>
    %465 = vector.multi_reduction <add>, %464, %cst_221 [1] : vector<1x16xf32> to vector<1xf32>
    %466 = vector.shape_cast %465 : vector<1xf32> to vector<1x1xf32>
    %cst_222 = arith.constant 9.99999996E-13 : f32
    %467 = vector.broadcast %cst_222 : f32 to vector<1x1xf32>
    %468 = arith.addf %466, %467 : vector<1x1xf32>
    %469 = math.rsqrt %468 : vector<1x1xf32>
    %470 = vector.broadcast %469 : vector<1x1xf32> to vector<1x16xf32>
    %471 = arith.mulf %463, %470 : vector<1x16xf32>
    %472 = vector.extract_strided_slice %0 {offsets = [10, 0], sizes = [8, 16], strides = [1, 1]} : vector<18x16xf32> to vector<8x16xf32>
    %473 = arith.mulf %472, %472 : vector<8x16xf32>
    %cst_223 = arith.constant dense<0.000000e+00> : vector<8xf32>
    %474 = vector.multi_reduction <add>, %473, %cst_223 [1] : vector<8x16xf32> to vector<8xf32>
    %475 = vector.shape_cast %474 : vector<8xf32> to vector<8x1xf32>
    %cst_224 = arith.constant 9.99999996E-13 : f32
    %476 = vector.broadcast %cst_224 : f32 to vector<8x1xf32>
    %477 = arith.addf %475, %476 : vector<8x1xf32>
    %478 = math.rsqrt %477 : vector<8x1xf32>
    %479 = vector.broadcast %478 : vector<8x1xf32> to vector<8x16xf32>
    %480 = arith.mulf %472, %479 : vector<8x16xf32>
    %481 = arith.addf %453, %462 : vector<1x16xf32>
    %482 = arith.addf %481, %471 : vector<1x16xf32>
    %483 = vector.broadcast %482 : vector<1x16xf32> to vector<8x16xf32>
    %484 = arith.addf %483, %480 : vector<8x16xf32>
    %cst_225 = arith.constant 2.500000e-01 : f32
    %485 = vector.broadcast %cst_225 : f32 to vector<8x16xf32>
    %486 = arith.mulf %484, %485 : vector<8x16xf32>
    %487 = arith.mulf %486, %486 : vector<8x16xf32>
    %cst_226 = arith.constant dense<0.000000e+00> : vector<8xf32>
    %488 = vector.multi_reduction <add>, %487, %cst_226 [1] : vector<8x16xf32> to vector<8xf32>
    %489 = vector.shape_cast %488 : vector<8xf32> to vector<8x1xf32>
    %cst_227 = arith.constant 9.99999996E-13 : f32
    %490 = vector.broadcast %cst_227 : f32 to vector<8x1xf32>
    %491 = arith.addf %489, %490 : vector<8x1xf32>
    %492 = math.rsqrt %491 : vector<8x1xf32>
    %493 = vector.broadcast %492 : vector<8x1xf32> to vector<8x16xf32>
    %494 = arith.mulf %486, %493 : vector<8x16xf32>
    %495 = vector.broadcast %453 : vector<1x16xf32> to vector<8x16xf32>
    %496 = arith.mulf %495, %494 : vector<8x16xf32>
    %cst_228 = arith.constant dense<0.000000e+00> : vector<8xf32>
    %497 = vector.multi_reduction <add>, %496, %cst_228 [1] : vector<8x16xf32> to vector<8xf32>
    %498 = vector.shape_cast %497 : vector<8xf32> to vector<8x1xf32>
    %499 = vector.broadcast %462 : vector<1x16xf32> to vector<8x16xf32>
    %500 = arith.mulf %499, %494 : vector<8x16xf32>
    %cst_229 = arith.constant dense<0.000000e+00> : vector<8xf32>
    %501 = vector.multi_reduction <add>, %500, %cst_229 [1] : vector<8x16xf32> to vector<8xf32>
    %502 = vector.shape_cast %501 : vector<8xf32> to vector<8x1xf32>
    %503 = arith.addf %498, %502 : vector<8x1xf32>
    %504 = vector.broadcast %471 : vector<1x16xf32> to vector<8x16xf32>
    %505 = arith.mulf %504, %494 : vector<8x16xf32>
    %cst_230 = arith.constant dense<0.000000e+00> : vector<8xf32>
    %506 = vector.multi_reduction <add>, %505, %cst_230 [1] : vector<8x16xf32> to vector<8xf32>
    %507 = vector.shape_cast %506 : vector<8xf32> to vector<8x1xf32>
    %508 = arith.addf %503, %507 : vector<8x1xf32>
    %509 = arith.mulf %480, %494 : vector<8x16xf32>
    %cst_231 = arith.constant dense<0.000000e+00> : vector<8xf32>
    %510 = vector.multi_reduction <add>, %509, %cst_231 [1] : vector<8x16xf32> to vector<8xf32>
    %511 = vector.shape_cast %510 : vector<8xf32> to vector<8x1xf32>
    %512 = arith.addf %508, %511 : vector<8x1xf32>
    %513 = vector.shape_cast %512 : vector<8x1xf32> to vector<1x8x1xf32>
    %cst_232 = arith.constant dense<0.000000e+00> : vector<1xf32>
    %514 = vector.multi_reduction <add>, %513, %cst_232 [1, 2] : vector<1x8x1xf32> to vector<1xf32>
    %515 = vector.shape_cast %514 : vector<1xf32> to vector<1x1x1xf32>
    %516 = vector.extract %515[0, 0, 0] : f32 from vector<1x1x1xf32>
    %517 = arith.addf %444, %516 : f32
    %cst_233 = arith.constant 2.500000e-01 : f32
    %518 = arith.mulf %517, %cst_233 : f32
    %c0_234 = arith.constant 0 : index
    %519 = memref.load %arg58[%c0_234] : memref<2xf32, #tpu.memory_space<smem>>
    memref.store %518, %arg58[%c0_234] : memref<2xf32, #tpu.memory_space<smem>>
    %c0_235 = arith.constant 0 : index
    %c0_236 = arith.constant 0 : index
    %520 = vector.load %arg4[%c0_235, %c0_236] : memref<18x16xf32, #tpu.memory_space<vmem>>, vector<18x16xf32>
    %c0_237 = arith.constant 0 : index
    %c0_238 = arith.constant 0 : index
    %521 = vector.load %arg5[%c0_237, %c0_238] : memref<2x16xf32, #tpu.memory_space<vmem>>, vector<2x16xf32>
    %c0_239 = arith.constant 0 : index
    %c0_240 = arith.constant 0 : index
    %522 = vector.load %arg6[%c0_239, %c0_240] : memref<2x16xf32, #tpu.memory_space<vmem>>, vector<2x16xf32>
    %523 = vector.extract_strided_slice %520 {offsets = [0, 0], sizes = [1, 16], strides = [1, 1]} : vector<18x16xf32> to vector<1x16xf32>
    %524 = arith.mulf %523, %523 : vector<1x16xf32>
    %cst_241 = arith.constant dense<0.000000e+00> : vector<1xf32>
    %525 = vector.multi_reduction <add>, %524, %cst_241 [1] : vector<1x16xf32> to vector<1xf32>
    %526 = vector.shape_cast %525 : vector<1xf32> to vector<1x1xf32>
    %cst_242 = arith.constant 9.99999996E-13 : f32
    %527 = vector.broadcast %cst_242 : f32 to vector<1x1xf32>
    %528 = arith.addf %526, %527 : vector<1x1xf32>
    %529 = math.rsqrt %528 : vector<1x1xf32>
    %530 = vector.broadcast %529 : vector<1x1xf32> to vector<1x16xf32>
    %531 = arith.mulf %523, %530 : vector<1x16xf32>
    %532 = vector.extract_strided_slice %521 {offsets = [0, 0], sizes = [1, 16], strides = [1, 1]} : vector<2x16xf32> to vector<1x16xf32>
    %533 = arith.mulf %532, %532 : vector<1x16xf32>
    %cst_243 = arith.constant dense<0.000000e+00> : vector<1xf32>
    %534 = vector.multi_reduction <add>, %533, %cst_243 [1] : vector<1x16xf32> to vector<1xf32>
    %535 = vector.shape_cast %534 : vector<1xf32> to vector<1x1xf32>
    %cst_244 = arith.constant 9.99999996E-13 : f32
    %536 = vector.broadcast %cst_244 : f32 to vector<1x1xf32>
    %537 = arith.addf %535, %536 : vector<1x1xf32>
    %538 = math.rsqrt %537 : vector<1x1xf32>
    %539 = vector.broadcast %538 : vector<1x1xf32> to vector<1x16xf32>
    %540 = arith.mulf %532, %539 : vector<1x16xf32>
    %541 = vector.extract_strided_slice %522 {offsets = [0, 0], sizes = [1, 16], strides = [1, 1]} : vector<2x16xf32> to vector<1x16xf32>
    %542 = arith.mulf %541, %541 : vector<1x16xf32>
    %cst_245 = arith.constant dense<0.000000e+00> : vector<1xf32>
    %543 = vector.multi_reduction <add>, %542, %cst_245 [1] : vector<1x16xf32> to vector<1xf32>
    %544 = vector.shape_cast %543 : vector<1xf32> to vector<1x1xf32>
    %cst_246 = arith.constant 9.99999996E-13 : f32
    %545 = vector.broadcast %cst_246 : f32 to vector<1x1xf32>
    %546 = arith.addf %544, %545 : vector<1x1xf32>
    %547 = math.rsqrt %546 : vector<1x1xf32>
    %548 = vector.broadcast %547 : vector<1x1xf32> to vector<1x16xf32>
    %549 = arith.mulf %541, %548 : vector<1x16xf32>
    %550 = vector.extract_strided_slice %520 {offsets = [1, 0], sizes = [8, 16], strides = [1, 1]} : vector<18x16xf32> to vector<8x16xf32>
    %551 = arith.mulf %550, %550 : vector<8x16xf32>
    %cst_247 = arith.constant dense<0.000000e+00> : vector<8xf32>
    %552 = vector.multi_reduction <add>, %551, %cst_247 [1] : vector<8x16xf32> to vector<8xf32>
    %553 = vector.shape_cast %552 : vector<8xf32> to vector<8x1xf32>
    %cst_248 = arith.constant 9.99999996E-13 : f32
    %554 = vector.broadcast %cst_248 : f32 to vector<8x1xf32>
    %555 = arith.addf %553, %554 : vector<8x1xf32>
    %556 = math.rsqrt %555 : vector<8x1xf32>
    %557 = vector.broadcast %556 : vector<8x1xf32> to vector<8x16xf32>
    %558 = arith.mulf %550, %557 : vector<8x16xf32>
    %559 = arith.addf %531, %540 : vector<1x16xf32>
    %560 = arith.addf %559, %549 : vector<1x16xf32>
    %561 = vector.broadcast %560 : vector<1x16xf32> to vector<8x16xf32>
    %562 = arith.addf %561, %558 : vector<8x16xf32>
    %cst_249 = arith.constant 2.500000e-01 : f32
    %563 = vector.broadcast %cst_249 : f32 to vector<8x16xf32>
    %564 = arith.mulf %562, %563 : vector<8x16xf32>
    %565 = arith.mulf %564, %564 : vector<8x16xf32>
    %cst_250 = arith.constant dense<0.000000e+00> : vector<8xf32>
    %566 = vector.multi_reduction <add>, %565, %cst_250 [1] : vector<8x16xf32> to vector<8xf32>
    %567 = vector.shape_cast %566 : vector<8xf32> to vector<8x1xf32>
    %cst_251 = arith.constant 9.99999996E-13 : f32
    %568 = vector.broadcast %cst_251 : f32 to vector<8x1xf32>
    %569 = arith.addf %567, %568 : vector<8x1xf32>
    %570 = math.rsqrt %569 : vector<8x1xf32>
    %571 = vector.broadcast %570 : vector<8x1xf32> to vector<8x16xf32>
    %572 = arith.mulf %564, %571 : vector<8x16xf32>
    %573 = vector.broadcast %531 : vector<1x16xf32> to vector<8x16xf32>
    %574 = arith.mulf %573, %572 : vector<8x16xf32>
    %cst_252 = arith.constant dense<0.000000e+00> : vector<8xf32>
    %575 = vector.multi_reduction <add>, %574, %cst_252 [1] : vector<8x16xf32> to vector<8xf32>
    %576 = vector.shape_cast %575 : vector<8xf32> to vector<8x1xf32>
    %577 = vector.broadcast %540 : vector<1x16xf32> to vector<8x16xf32>
    %578 = arith.mulf %577, %572 : vector<8x16xf32>
    %cst_253 = arith.constant dense<0.000000e+00> : vector<8xf32>
    %579 = vector.multi_reduction <add>, %578, %cst_253 [1] : vector<8x16xf32> to vector<8xf32>
    %580 = vector.shape_cast %579 : vector<8xf32> to vector<8x1xf32>
    %581 = arith.addf %576, %580 : vector<8x1xf32>
    %582 = vector.broadcast %549 : vector<1x16xf32> to vector<8x16xf32>
    %583 = arith.mulf %582, %572 : vector<8x16xf32>
    %cst_254 = arith.constant dense<0.000000e+00> : vector<8xf32>
    %584 = vector.multi_reduction <add>, %583, %cst_254 [1] : vector<8x16xf32> to vector<8xf32>
    %585 = vector.shape_cast %584 : vector<8xf32> to vector<8x1xf32>
    %586 = arith.addf %581, %585 : vector<8x1xf32>
    %587 = arith.mulf %558, %572 : vector<8x16xf32>
    %cst_255 = arith.constant dense<0.000000e+00> : vector<8xf32>
    %588 = vector.multi_reduction <add>, %587, %cst_255 [1] : vector<8x16xf32> to vector<8xf32>
    %589 = vector.shape_cast %588 : vector<8xf32> to vector<8x1xf32>
    %590 = arith.addf %586, %589 : vector<8x1xf32>
    %591 = vector.shape_cast %590 : vector<8x1xf32> to vector<1x8x1xf32>
    %cst_256 = arith.constant dense<0.000000e+00> : vector<1xf32>
    %592 = vector.multi_reduction <add>, %591, %cst_256 [1, 2] : vector<1x8x1xf32> to vector<1xf32>
    %593 = vector.shape_cast %592 : vector<1xf32> to vector<1x1x1xf32>
    %594 = vector.extract %593[0, 0, 0] : f32 from vector<1x1x1xf32>
    %cst_257 = arith.constant 0.000000e+00 : f32
    %595 = arith.addf %cst_257, %594 : f32
    %596 = vector.extract_strided_slice %520 {offsets = [9, 0], sizes = [1, 16], strides = [1, 1]} : vector<18x16xf32> to vector<1x16xf32>
    %597 = arith.mulf %596, %596 : vector<1x16xf32>
    %cst_258 = arith.constant dense<0.000000e+00> : vector<1xf32>
    %598 = vector.multi_reduction <add>, %597, %cst_258 [1] : vector<1x16xf32> to vector<1xf32>
    %599 = vector.shape_cast %598 : vector<1xf32> to vector<1x1xf32>
    %cst_259 = arith.constant 9.99999996E-13 : f32
    %600 = vector.broadcast %cst_259 : f32 to vector<1x1xf32>
    %601 = arith.addf %599, %600 : vector<1x1xf32>
    %602 = math.rsqrt %601 : vector<1x1xf32>
    %603 = vector.broadcast %602 : vector<1x1xf32> to vector<1x16xf32>
    %604 = arith.mulf %596, %603 : vector<1x16xf32>
    %605 = vector.extract_strided_slice %521 {offsets = [1, 0], sizes = [1, 16], strides = [1, 1]} : vector<2x16xf32> to vector<1x16xf32>
    %606 = arith.mulf %605, %605 : vector<1x16xf32>
    %cst_260 = arith.constant dense<0.000000e+00> : vector<1xf32>
    %607 = vector.multi_reduction <add>, %606, %cst_260 [1] : vector<1x16xf32> to vector<1xf32>
    %608 = vector.shape_cast %607 : vector<1xf32> to vector<1x1xf32>
    %cst_261 = arith.constant 9.99999996E-13 : f32
    %609 = vector.broadcast %cst_261 : f32 to vector<1x1xf32>
    %610 = arith.addf %608, %609 : vector<1x1xf32>
    %611 = math.rsqrt %610 : vector<1x1xf32>
    %612 = vector.broadcast %611 : vector<1x1xf32> to vector<1x16xf32>
    %613 = arith.mulf %605, %612 : vector<1x16xf32>
    %614 = vector.extract_strided_slice %522 {offsets = [1, 0], sizes = [1, 16], strides = [1, 1]} : vector<2x16xf32> to vector<1x16xf32>
    %615 = arith.mulf %614, %614 : vector<1x16xf32>
    %cst_262 = arith.constant dense<0.000000e+00> : vector<1xf32>
    %616 = vector.multi_reduction <add>, %615, %cst_262 [1] : vector<1x16xf32> to vector<1xf32>
    %617 = vector.shape_cast %616 : vector<1xf32> to vector<1x1xf32>
    %cst_263 = arith.constant 9.99999996E-13 : f32
    %618 = vector.broadcast %cst_263 : f32 to vector<1x1xf32>
    %619 = arith.addf %617, %618 : vector<1x1xf32>
    %620 = math.rsqrt %619 : vector<1x1xf32>
    %621 = vector.broadcast %620 : vector<1x1xf32> to vector<1x16xf32>
    %622 = arith.mulf %614, %621 : vector<1x16xf32>
    %623 = vector.extract_strided_slice %520 {offsets = [10, 0], sizes = [8, 16], strides = [1, 1]} : vector<18x16xf32> to vector<8x16xf32>
    %624 = arith.mulf %623, %623 : vector<8x16xf32>
    %cst_264 = arith.constant dense<0.000000e+00> : vector<8xf32>
    %625 = vector.multi_reduction <add>, %624, %cst_264 [1] : vector<8x16xf32> to vector<8xf32>
    %626 = vector.shape_cast %625 : vector<8xf32> to vector<8x1xf32>
    %cst_265 = arith.constant 9.99999996E-13 : f32
    %627 = vector.broadcast %cst_265 : f32 to vector<8x1xf32>
    %628 = arith.addf %626, %627 : vector<8x1xf32>
    %629 = math.rsqrt %628 : vector<8x1xf32>
    %630 = vector.broadcast %629 : vector<8x1xf32> to vector<8x16xf32>
    %631 = arith.mulf %623, %630 : vector<8x16xf32>
    %632 = arith.addf %604, %613 : vector<1x16xf32>
    %633 = arith.addf %632, %622 : vector<1x16xf32>
    %634 = vector.broadcast %633 : vector<1x16xf32> to vector<8x16xf32>
    %635 = arith.addf %634, %631 : vector<8x16xf32>
    %cst_266 = arith.constant 2.500000e-01 : f32
    %636 = vector.broadcast %cst_266 : f32 to vector<8x16xf32>
    %637 = arith.mulf %635, %636 : vector<8x16xf32>
    %638 = arith.mulf %637, %637 : vector<8x16xf32>
    %cst_267 = arith.constant dense<0.000000e+00> : vector<8xf32>
    %639 = vector.multi_reduction <add>, %638, %cst_267 [1] : vector<8x16xf32> to vector<8xf32>
    %640 = vector.shape_cast %639 : vector<8xf32> to vector<8x1xf32>
    %cst_268 = arith.constant 9.99999996E-13 : f32
    %641 = vector.broadcast %cst_268 : f32 to vector<8x1xf32>
    %642 = arith.addf %640, %641 : vector<8x1xf32>
    %643 = math.rsqrt %642 : vector<8x1xf32>
    %644 = vector.broadcast %643 : vector<8x1xf32> to vector<8x16xf32>
    %645 = arith.mulf %637, %644 : vector<8x16xf32>
    %646 = vector.broadcast %604 : vector<1x16xf32> to vector<8x16xf32>
    %647 = arith.mulf %646, %645 : vector<8x16xf32>
    %cst_269 = arith.constant dense<0.000000e+00> : vector<8xf32>
    %648 = vector.multi_reduction <add>, %647, %cst_269 [1] : vector<8x16xf32> to vector<8xf32>
    %649 = vector.shape_cast %648 : vector<8xf32> to vector<8x1xf32>
    %650 = vector.broadcast %613 : vector<1x16xf32> to vector<8x16xf32>
    %651 = arith.mulf %650, %645 : vector<8x16xf32>
    %cst_270 = arith.constant dense<0.000000e+00> : vector<8xf32>
    %652 = vector.multi_reduction <add>, %651, %cst_270 [1] : vector<8x16xf32> to vector<8xf32>
    %653 = vector.shape_cast %652 : vector<8xf32> to vector<8x1xf32>
    %654 = arith.addf %649, %653 : vector<8x1xf32>
    %655 = vector.broadcast %622 : vector<1x16xf32> to vector<8x16xf32>
    %656 = arith.mulf %655, %645 : vector<8x16xf32>
    %cst_271 = arith.constant dense<0.000000e+00> : vector<8xf32>
    %657 = vector.multi_reduction <add>, %656, %cst_271 [1] : vector<8x16xf32> to vector<8xf32>
    %658 = vector.shape_cast %657 : vector<8xf32> to vector<8x1xf32>
    %659 = arith.addf %654, %658 : vector<8x1xf32>
    %660 = arith.mulf %631, %645 : vector<8x16xf32>
    %cst_272 = arith.constant dense<0.000000e+00> : vector<8xf32>
    %661 = vector.multi_reduction <add>, %660, %cst_272 [1] : vector<8x16xf32> to vector<8xf32>
    %662 = vector.shape_cast %661 : vector<8xf32> to vector<8x1xf32>
    %663 = arith.addf %659, %662 : vector<8x1xf32>
    %664 = vector.shape_cast %663 : vector<8x1xf32> to vector<1x8x1xf32>
    %cst_273 = arith.constant dense<0.000000e+00> : vector<1xf32>
    %665 = vector.multi_reduction <add>, %664, %cst_273 [1, 2] : vector<1x8x1xf32> to vector<1xf32>
    %666 = vector.shape_cast %665 : vector<1xf32> to vector<1x1x1xf32>
    %667 = vector.extract %666[0, 0, 0] : f32 from vector<1x1x1xf32>
    %668 = arith.addf %595, %667 : f32
    %cst_274 = arith.constant 2.500000e-01 : f32
    %669 = arith.mulf %668, %cst_274 : f32
    %c1 = arith.constant 1 : index
    %670 = memref.load %arg58[%c1] : memref<2xf32, #tpu.memory_space<smem>>
    memref.store %669, %arg58[%c1] : memref<2xf32, #tpu.memory_space<smem>>
    return
  }
}

</mosaic_0001>

<llo_original>
// kernel: graph_tf_int_loc_forward.1
$region0: #{graph_tf_int_loc_forward.1}
  #allocation0 [shape = 'u32[]', space=smem, size = 0x4, offset = 0x4, fixed_abs, tag = 'smem constant byte address 0x4 - core index']
  #allocation1 [shape = 'u32[72,128]{1,0:T(1,128)}', space=vmem, size = 0x9000, scoped, tag = 'internal scratch']
  #allocation2 [shape = 'f32[1,1]{1,0:T(1,128)S(1)}', space=vmem, size = 0x200, scoped, tag = 'scoped memory for graph_tf_int_loc_forward.1']
  %s0 = inlined_call_operand.smem [shape: u32[59], index: -1, kind: input, shape index: {}]
  %s1 = sld [smem:[%s0]]
  %s2 = scalar_lea.smem %s0, 1
  %s3 = sld [smem:[%s2]]
  %s4 = scalar_lea.smem %s0, 2
  %s5 = sld [smem:[%s4]]
  %s6 = scalar_lea.smem %s0, 3
  %s7 = sld [smem:[%s6]]
  %s8 = scalar_lea.smem %s0, 4
  %s9 = sld [smem:[%s8]]
  %s10 = scalar_lea.smem %s0, 5
  %s11 = sld [smem:[%s10]]
  %s12 = scalar_lea.smem %s0, 6
  %s13 = sld [smem:[%s12]]
  %s14 = scalar_lea.smem %s0, 7
  %s15 = sld [smem:[%s14]]
  %s16 = scalar_lea.smem %s0, 8
  %s17 = sld [smem:[%s16]]
  %s18 = scalar_lea.smem %s0, 9
  %s19 = sld [smem:[%s18]]
  %s20 = scalar_lea.smem %s0, 10
  %s21 = sld [smem:[%s20]]
  %s22 = scalar_lea.smem %s0, 11
  %s23 = sld [smem:[%s22]]
  %s24 = scalar_lea.smem %s0, 12
  %s25 = sld [smem:[%s24]]
  %s26 = scalar_lea.smem %s0, 13
  %s27 = sld [smem:[%s26]]
  %s28 = scalar_lea.smem %s0, 14
  %s29 = sld [smem:[%s28]]
  %s30 = scalar_lea.smem %s0, 15
  %s31 = sld [smem:[%s30]]
  %s32 = scalar_lea.smem %s0, 16
  %s33 = sld [smem:[%s32]]
  %s34 = scalar_lea.smem %s0, 17
  %s35 = sld [smem:[%s34]]
  %s36 = scalar_lea.smem %s0, 18
  %s37 = sld [smem:[%s36]]
  %s38 = scalar_lea.smem %s0, 19
  %s39 = sld [smem:[%s38]]
  %s40 = scalar_lea.smem %s0, 20
  %s41 = sld [smem:[%s40]]
  %s42 = scalar_lea.smem %s0, 21
  %s43 = sld [smem:[%s42]]
  %s44 = scalar_lea.smem %s0, 22
  %s45 = sld [smem:[%s44]]
  %s46 = scalar_lea.smem %s0, 23
  %s47 = sld [smem:[%s46]]
  %s48 = scalar_lea.smem %s0, 24
  %s49 = sld [smem:[%s48]]
  %s50 = scalar_lea.smem %s0, 25
  %s51 = sld [smem:[%s50]]
  %s52 = scalar_lea.smem %s0, 26
  %s53 = sld [smem:[%s52]]
  %s54 = scalar_lea.smem %s0, 27
  %s55 = sld [smem:[%s54]]
  %s56 = scalar_lea.smem %s0, 28
  %s57 = sld [smem:[%s56]]
  %s58 = scalar_lea.smem %s0, 29
  %s59 = sld [smem:[%s58]]
  %s60 = scalar_lea.smem %s0, 30
  %s61 = sld [smem:[%s60]]
  %s62 = scalar_lea.smem %s0, 31
  %s63 = sld [smem:[%s62]]
  %s64 = scalar_lea.smem %s0, 32
  %s65 = sld [smem:[%s64]]
  %s66 = scalar_lea.smem %s0, 33
  %s67 = sld [smem:[%s66]]
  %s68 = scalar_lea.smem %s0, 34
  %s69 = sld [smem:[%s68]]
  %s70 = scalar_lea.smem %s0, 35
  %s71 = sld [smem:[%s70]]
  %s72 = scalar_lea.smem %s0, 36
  %s73 = sld [smem:[%s72]]
  %s74 = scalar_lea.smem %s0, 37
  %s75 = sld [smem:[%s74]]
  %s76 = scalar_lea.smem %s0, 38
  %s77 = sld [smem:[%s76]]
  %s78 = scalar_lea.smem %s0, 39
  %s79 = sld [smem:[%s78]]
  %s80 = scalar_lea.smem %s0, 40
  %s81 = sld [smem:[%s80]]
  %s82 = scalar_lea.smem %s0, 41
  %s83 = sld [smem:[%s82]]
  %s84 = scalar_lea.smem %s0, 42
  %s85 = sld [smem:[%s84]]
  %s86 = scalar_lea.smem %s0, 43
  %s87 = sld [smem:[%s86]]
  %s88 = scalar_lea.smem %s0, 44
  %s89 = sld [smem:[%s88]]
  %s90 = scalar_lea.smem %s0, 45
  %s91 = sld [smem:[%s90]]
  %s92 = scalar_lea.smem %s0, 46
  %s93 = sld [smem:[%s92]]
  %s94 = scalar_lea.smem %s0, 47
  %s95 = sld [smem:[%s94]]
  %s96 = scalar_lea.smem %s0, 48
  %s97 = sld [smem:[%s96]]
  %s98 = scalar_lea.smem %s0, 49
  %s99 = sld [smem:[%s98]]
  %s100 = scalar_lea.smem %s0, 50
  %s101 = sld [smem:[%s100]]
  %s102 = scalar_lea.smem %s0, 51
  %s103 = sld [smem:[%s102]]
  %s104 = scalar_lea.smem %s0, 52
  %s105 = sld [smem:[%s104]]
  %s106 = scalar_lea.smem %s0, 53
  %s107 = sld [smem:[%s106]]
  %s108 = scalar_lea.smem %s0, 54
  %s109 = sld [smem:[%s108]]
  %s110 = scalar_lea.smem %s0, 55
  %s111 = sld [smem:[%s110]]
  %s112 = scalar_lea.smem %s0, 56
  %s113 = sld [smem:[%s112]]
  %s114 = scalar_lea.smem %s0, 57
  %s115 = sld [smem:[%s114]]
  %s116 = scalar_lea.smem %s0, 58
  %s117 = sld [smem:[%s116]]
  %118 = xla_tuple %s113, %s115, %s117
  %s119 = sld [smem:[#allocation0]]
  $region250: #{graph_tf_int_loc_forward.1} parent=0
    _
  %s121 = ssub.s32 1, %s119
  %s122 = scalar_select 0, %s121, %s119
  %v123 = vstv %s107
  %124 = vst [vmem:[#allocation2] sm:$0x1] %v123
  $region1: #{graph_tf_int_loc_forward.1} parent=0
    #allocation3 [shape = 'u8[1024]{0}', space=vmem, size = 0x400, scoped, tag = 'output window, operand 1, single buffered']
    #allocation4 [shape = 's32[1]{0}', space=sflag, size = 0x4, scoped, tag = 'scoped memory for graph_tf_int_loc_forward.1']
    #allocation5 [shape = 's32[1]{0}', space=sflag, size = 0x4, scoped, tag = 'scoped memory for graph_tf_int_loc_forward.1']
    #allocation6 [shape = 'u8[512]{0}', space=smem, size = 0x200, scoped, tag = 'output window, operand 2, single buffered']
    %125 = vsyncpa [#allocation4], 0
    %126 = vsyncpa [#allocation5], 0
    // Predicated region
    $region2: #{graph_tf_int_loc_forward.1} parent=1 // pred_check
      _
    $region3: #{graph_tf_int_loc_forward.1} parent=1 // pred_check_branch
      %128 = sbr.rel (0) target = $region5
    $region4: #{graph_tf_int_loc_forward.1} parent=1 // pred_region
      _
    $region5: #{graph_tf_int_loc_forward.1} parent=1 // pred_fallthru
      _
    // Predicated region
    $region6: #{graph_tf_int_loc_forward.1} parent=1 // pred_check
      _
    $region7: #{graph_tf_int_loc_forward.1} parent=1 // pred_check_branch
      %130 = sbr.rel (0) target = $region9
    $region8: #{graph_tf_int_loc_forward.1} parent=1 // pred_region
      _
    $region9: #{graph_tf_int_loc_forward.1} parent=1 // pred_fallthru
      _
    // Predicated region
    $region10: #{graph_tf_int_loc_forward.1} parent=1 // pred_check
      _
    $region11: #{graph_tf_int_loc_forward.1} parent=1 // pred_check_branch
      %132 = sbr.rel (0) target = $region13
    $region12: #{graph_tf_int_loc_forward.1} parent=1 // pred_region
      _
    $region13: #{graph_tf_int_loc_forward.1} parent=1 // pred_fallthru
      _
    // Predicated region
    $region14: #{graph_tf_int_loc_forward.1} parent=1 // pred_check
      _
    $region15: #{graph_tf_int_loc_forward.1} parent=1 // pred_check_branch
      %134 = sbr.rel (0) target = $region17
    $region16: #{graph_tf_int_loc_forward.1} parent=1 // pred_region
      _
    $region17: #{graph_tf_int_loc_forward.1} parent=1 // pred_fallthru
      _
    // Predicated region
    $region18: #{graph_tf_int_loc_forward.1} parent=1 // pred_check
      _
    $region19: #{graph_tf_int_loc_forward.1} parent=1 // pred_check_branch
      %136 = sbr.rel (0) target = $region21
    $region20: #{graph_tf_int_loc_forward.1} parent=1 // pred_region
      _
    $region21: #{graph_tf_int_loc_forward.1} parent=1 // pred_fallthru
      _
    // Predicated region
    $region22: #{graph_tf_int_loc_forward.1} parent=1 // pred_check
      _
    $region23: #{graph_tf_int_loc_forward.1} parent=1 // pred_check_branch
      %138 = sbr.rel (0) target = $region25
    $region24: #{graph_tf_int_loc_forward.1} parent=1 // pred_region
      _
    $region25: #{graph_tf_int_loc_forward.1} parent=1 // pred_fallthru
      _
    // Predicated region
    $region26: #{graph_tf_int_loc_forward.1} parent=1 // pred_check
      _
    $region27: #{graph_tf_int_loc_forward.1} parent=1 // pred_check_branch
      %140 = sbr.rel (0) target = $region29
    $region28: #{graph_tf_int_loc_forward.1} parent=1 // pred_region
      _
    $region29: #{graph_tf_int_loc_forward.1} parent=1 // pred_fallthru
      _
    // Predicated region
    $region30: #{graph_tf_int_loc_forward.1} parent=1 // pred_check
      _
    $region31: #{graph_tf_int_loc_forward.1} parent=1 // pred_check_branch
      %142 = sbr.rel (0) target = $region33
    $region32: #{graph_tf_int_loc_forward.1} parent=1 // pred_region
      _
    $region33: #{graph_tf_int_loc_forward.1} parent=1 // pred_fallthru
      _
    // Predicated region
    $region34: #{graph_tf_int_loc_forward.1} parent=1 // pred_check
      _
    $region35: #{graph_tf_int_loc_forward.1} parent=1 // pred_check_branch
      %144 = sbr.rel (0) target = $region37
    $region36: #{graph_tf_int_loc_forward.1} parent=1 // pred_region
      _
    $region37: #{graph_tf_int_loc_forward.1} parent=1 // pred_fallthru
      _
    // Predicated region
    $region38: #{graph_tf_int_loc_forward.1} parent=1 // pred_check
      _
    $region39: #{graph_tf_int_loc_forward.1} parent=1 // pred_check_branch
      %146 = sbr.rel (0) target = $region41
    $region40: #{graph_tf_int_loc_forward.1} parent=1 // pred_region
      _
    $region41: #{graph_tf_int_loc_forward.1} parent=1 // pred_fallthru
      _
    // Predicated region
    $region42: #{graph_tf_int_loc_forward.1} parent=1 // pred_check
      _
    $region43: #{graph_tf_int_loc_forward.1} parent=1 // pred_check_branch
      %148 = sbr.rel (0) target = $region45
    $region44: #{graph_tf_int_loc_forward.1} parent=1 // pred_region
      _
    $region45: #{graph_tf_int_loc_forward.1} parent=1 // pred_fallthru
      _
    // Predicated region
    $region46: #{graph_tf_int_loc_forward.1} parent=1 // pred_check
      _
    $region47: #{graph_tf_int_loc_forward.1} parent=1 // pred_check_branch
      %150 = sbr.rel (0) target = $region49
    $region48: #{graph_tf_int_loc_forward.1} parent=1 // pred_region
      _
    $region49: #{graph_tf_int_loc_forward.1} parent=1 // pred_fallthru
      _
    // Predicated region
    $region50: #{graph_tf_int_loc_forward.1} parent=1 // pred_check
      _
    $region51: #{graph_tf_int_loc_forward.1} parent=1 // pred_check_branch
      %152 = sbr.rel (0) target = $region53
    $region52: #{graph_tf_int_loc_forward.1} parent=1 // pred_region
      _
    $region53: #{graph_tf_int_loc_forward.1} parent=1 // pred_fallthru
      _
    // Predicated region
    $region54: #{graph_tf_int_loc_forward.1} parent=1 // pred_check
      _
    $region55: #{graph_tf_int_loc_forward.1} parent=1 // pred_check_branch
      %154 = sbr.rel (0) target = $region57
    $region56: #{graph_tf_int_loc_forward.1} parent=1 // pred_region
      _
    $region57: #{graph_tf_int_loc_forward.1} parent=1 // pred_fallthru
      _
    // Predicated region
    $region58: #{graph_tf_int_loc_forward.1} parent=1 // pred_check
      _
    $region59: #{graph_tf_int_loc_forward.1} parent=1 // pred_check_branch
      %156 = sbr.rel (0) target = $region61
    $region60: #{graph_tf_int_loc_forward.1} parent=1 // pred_region
      _
    $region61: #{graph_tf_int_loc_forward.1} parent=1 // pred_fallthru
      _
    // Predicated region
    $region62: #{graph_tf_int_loc_forward.1} parent=1 // pred_check
      _
    $region63: #{graph_tf_int_loc_forward.1} parent=1 // pred_check_branch
      %158 = sbr.rel (0) target = $region65
    $region64: #{graph_tf_int_loc_forward.1} parent=1 // pred_region
      _
    $region65: #{graph_tf_int_loc_forward.1} parent=1 // pred_fallthru
      _
    // Predicated region
    $region66: #{graph_tf_int_loc_forward.1} parent=1 // pred_check
      _
    $region67: #{graph_tf_int_loc_forward.1} parent=1 // pred_check_branch
      %160 = sbr.rel (0) target = $region69
    $region68: #{graph_tf_int_loc_forward.1} parent=1 // pred_region
      _
    $region69: #{graph_tf_int_loc_forward.1} parent=1 // pred_fallthru
      _
    // Predicated region
    $region70: #{graph_tf_int_loc_forward.1} parent=1 // pred_check
      _
    $region71: #{graph_tf_int_loc_forward.1} parent=1 // pred_check_branch
      %162 = sbr.rel (0) target = $region73
    $region72: #{graph_tf_int_loc_forward.1} parent=1 // pred_region
      _
    $region73: #{graph_tf_int_loc_forward.1} parent=1 // pred_fallthru
      _
    // Predicated region
    $region74: #{graph_tf_int_loc_forward.1} parent=1 // pred_check
      _
    $region75: #{graph_tf_int_loc_forward.1} parent=1 // pred_check_branch
      %164 = sbr.rel (0) target = $region77
    $region76: #{graph_tf_int_loc_forward.1} parent=1 // pred_region
      _
    $region77: #{graph_tf_int_loc_forward.1} parent=1 // pred_fallthru
      _
    // Predicated region
    $region78: #{graph_tf_int_loc_forward.1} parent=1 // pred_check
      _
    $region79: #{graph_tf_int_loc_forward.1} parent=1 // pred_check_branch
      %166 = sbr.rel (0) target = $region81
    $region80: #{graph_tf_int_loc_forward.1} parent=1 // pred_region
      _
    $region81: #{graph_tf_int_loc_forward.1} parent=1 // pred_fallthru
      _
    // Predicated region
    $region82: #{graph_tf_int_loc_forward.1} parent=1 // pred_check
      _
    $region83: #{graph_tf_int_loc_forward.1} parent=1 // pred_check_branch
      %168 = sbr.rel (0) target = $region85
    $region84: #{graph_tf_int_loc_forward.1} parent=1 // pred_region
      _
    $region85: #{graph_tf_int_loc_forward.1} parent=1 // pred_fallthru
      _
    // Predicated region
    $region86: #{graph_tf_int_loc_forward.1} parent=1 // pred_check
      _
    $region87: #{graph_tf_int_loc_forward.1} parent=1 // pred_check_branch
      %170 = sbr.rel (0) target = $region89
    $region88: #{graph_tf_int_loc_forward.1} parent=1 // pred_region
      _
    $region89: #{graph_tf_int_loc_forward.1} parent=1 // pred_fallthru
      _
    // Predicated region
    $region90: #{graph_tf_int_loc_forward.1} parent=1 // pred_check
      _
    $region91: #{graph_tf_int_loc_forward.1} parent=1 // pred_check_branch
      %172 = sbr.rel (0) target = $region93
    $region92: #{graph_tf_int_loc_forward.1} parent=1 // pred_region
      _
    $region93: #{graph_tf_int_loc_forward.1} parent=1 // pred_fallthru
      _
    // Predicated region
    $region94: #{graph_tf_int_loc_forward.1} parent=1 // pred_check
      _
    $region95: #{graph_tf_int_loc_forward.1} parent=1 // pred_check_branch
      %174 = sbr.rel (0) target = $region97
    $region96: #{graph_tf_int_loc_forward.1} parent=1 // pred_region
      _
    $region97: #{graph_tf_int_loc_forward.1} parent=1 // pred_fallthru
      _
    // Predicated region
    $region98: #{graph_tf_int_loc_forward.1} parent=1 // pred_check
      _
    $region99: #{graph_tf_int_loc_forward.1} parent=1 // pred_check_branch
      %176 = sbr.rel (0) target = $region101
    $region100: #{graph_tf_int_loc_forward.1} parent=1 // pred_region
      _
    $region101: #{graph_tf_int_loc_forward.1} parent=1 // pred_fallthru
      _
    // Predicated region
    $region102: #{graph_tf_int_loc_forward.1} parent=1 // pred_check
      _
    $region103: #{graph_tf_int_loc_forward.1} parent=1 // pred_check_branch
      %178 = sbr.rel (0) target = $region105
    $region104: #{graph_tf_int_loc_forward.1} parent=1 // pred_region
      _
    $region105: #{graph_tf_int_loc_forward.1} parent=1 // pred_fallthru
      _
    // Predicated region
    $region106: #{graph_tf_int_loc_forward.1} parent=1 // pred_check
      _
    $region107: #{graph_tf_int_loc_forward.1} parent=1 // pred_check_branch
      %180 = sbr.rel (0) target = $region109
    $region108: #{graph_tf_int_loc_forward.1} parent=1 // pred_region
      _
    $region109: #{graph_tf_int_loc_forward.1} parent=1 // pred_fallthru
      _
    // Predicated region
    $region110: #{graph_tf_int_loc_forward.1} parent=1 // pred_check
      _
    $region111: #{graph_tf_int_loc_forward.1} parent=1 // pred_check_branch
      %182 = sbr.rel (0) target = $region113
    $region112: #{graph_tf_int_loc_forward.1} parent=1 // pred_region
      _
    $region113: #{graph_tf_int_loc_forward.1} parent=1 // pred_fallthru
      _
    // Predicated region
    $region114: #{graph_tf_int_loc_forward.1} parent=1 // pred_check
      _
    $region115: #{graph_tf_int_loc_forward.1} parent=1 // pred_check_branch
      %184 = sbr.rel (0) target = $region117
    $region116: #{graph_tf_int_loc_forward.1} parent=1 // pred_region
      _
    $region117: #{graph_tf_int_loc_forward.1} parent=1 // pred_fallthru
      _
    // Predicated region
    $region118: #{graph_tf_int_loc_forward.1} parent=1 // pred_check
      _
    $region119: #{graph_tf_int_loc_forward.1} parent=1 // pred_check_branch
      %186 = sbr.rel (0) target = $region121
    $region120: #{graph_tf_int_loc_forward.1} parent=1 // pred_region
      _
    $region121: #{graph_tf_int_loc_forward.1} parent=1 // pred_fallthru
      _
    // Predicated region
    $region122: #{graph_tf_int_loc_forward.1} parent=1 // pred_check
      _
    $region123: #{graph_tf_int_loc_forward.1} parent=1 // pred_check_branch
      %188 = sbr.rel (0) target = $region125
    $region124: #{graph_tf_int_loc_forward.1} parent=1 // pred_region
      _
    $region125: #{graph_tf_int_loc_forward.1} parent=1 // pred_fallthru
      _
    // Predicated region
    $region126: #{graph_tf_int_loc_forward.1} parent=1 // pred_check
      _
    $region127: #{graph_tf_int_loc_forward.1} parent=1 // pred_check_branch
      %190 = sbr.rel (0) target = $region129
    $region128: #{graph_tf_int_loc_forward.1} parent=1 // pred_region
      _
    $region129: #{graph_tf_int_loc_forward.1} parent=1 // pred_fallthru
      _
    // Predicated region
    $region130: #{graph_tf_int_loc_forward.1} parent=1 // pred_check
      _
    $region131: #{graph_tf_int_loc_forward.1} parent=1 // pred_check_branch
      %192 = sbr.rel (0) target = $region133
    $region132: #{graph_tf_int_loc_forward.1} parent=1 // pred_region
      _
    $region133: #{graph_tf_int_loc_forward.1} parent=1 // pred_fallthru
      _
    // Predicated region
    $region134: #{graph_tf_int_loc_forward.1} parent=1 // pred_check
      _
    $region135: #{graph_tf_int_loc_forward.1} parent=1 // pred_check_branch
      %194 = sbr.rel (0) target = $region137
    $region136: #{graph_tf_int_loc_forward.1} parent=1 // pred_region
      _
    $region137: #{graph_tf_int_loc_forward.1} parent=1 // pred_fallthru
      _
    // Predicated region
    $region138: #{graph_tf_int_loc_forward.1} parent=1 // pred_check
      _
    $region139: #{graph_tf_int_loc_forward.1} parent=1 // pred_check_branch
      %196 = sbr.rel (0) target = $region141
    $region140: #{graph_tf_int_loc_forward.1} parent=1 // pred_region
      _
    $region141: #{graph_tf_int_loc_forward.1} parent=1 // pred_fallthru
      _
    // Predicated region
    $region142: #{graph_tf_int_loc_forward.1} parent=1 // pred_check
      _
    $region143: #{graph_tf_int_loc_forward.1} parent=1 // pred_check_branch
      %198 = sbr.rel (0) target = $region145
    $region144: #{graph_tf_int_loc_forward.1} parent=1 // pred_region
      _
    $region145: #{graph_tf_int_loc_forward.1} parent=1 // pred_fallthru
      _
    // Predicated region
    $region146: #{graph_tf_int_loc_forward.1} parent=1 // pred_check
      _
    $region147: #{graph_tf_int_loc_forward.1} parent=1 // pred_check_branch
      %200 = sbr.rel (0) target = $region149
    $region148: #{graph_tf_int_loc_forward.1} parent=1 // pred_region
      _
    $region149: #{graph_tf_int_loc_forward.1} parent=1 // pred_fallthru
      _
    // Predicated region
    $region150: #{graph_tf_int_loc_forward.1} parent=1 // pred_check
      _
    $region151: #{graph_tf_int_loc_forward.1} parent=1 // pred_check_branch
      %202 = sbr.rel (0) target = $region153
    $region152: #{graph_tf_int_loc_forward.1} parent=1 // pred_region
      _
    $region153: #{graph_tf_int_loc_forward.1} parent=1 // pred_fallthru
      _
    // Predicated region
    $region154: #{graph_tf_int_loc_forward.1} parent=1 // pred_check
      _
    $region155: #{graph_tf_int_loc_forward.1} parent=1 // pred_check_branch
      %204 = sbr.rel (0) target = $region157
    $region156: #{graph_tf_int_loc_forward.1} parent=1 // pred_region
      _
    $region157: #{graph_tf_int_loc_forward.1} parent=1 // pred_fallthru
      _
    // Predicated region
    $region158: #{graph_tf_int_loc_forward.1} parent=1 // pred_check
      _
    $region159: #{graph_tf_int_loc_forward.1} parent=1 // pred_check_branch
      %206 = sbr.rel (0) target = $region161
    $region160: #{graph_tf_int_loc_forward.1} parent=1 // pred_region
      _
    $region161: #{graph_tf_int_loc_forward.1} parent=1 // pred_fallthru
      _
    // Predicated region
    $region162: #{graph_tf_int_loc_forward.1} parent=1 // pred_check
      _
    $region163: #{graph_tf_int_loc_forward.1} parent=1 // pred_check_branch
      %208 = sbr.rel (0) target = $region165
    $region164: #{graph_tf_int_loc_forward.1} parent=1 // pred_region
      _
    $region165: #{graph_tf_int_loc_forward.1} parent=1 // pred_fallthru
      _
    // Predicated region
    $region166: #{graph_tf_int_loc_forward.1} parent=1 // pred_check
      _
    $region167: #{graph_tf_int_loc_forward.1} parent=1 // pred_check_branch
      %210 = sbr.rel (0) target = $region169
    $region168: #{graph_tf_int_loc_forward.1} parent=1 // pred_region
      _
    $region169: #{graph_tf_int_loc_forward.1} parent=1 // pred_fallthru
      _
    // Predicated region
    $region170: #{graph_tf_int_loc_forward.1} parent=1 // pred_check
      _
    $region171: #{graph_tf_int_loc_forward.1} parent=1 // pred_check_branch
      %212 = sbr.rel (0) target = $region173
    $region172: #{graph_tf_int_loc_forward.1} parent=1 // pred_region
      _
    $region173: #{graph_tf_int_loc_forward.1} parent=1 // pred_fallthru
      _
    // Predicated region
    $region174: #{graph_tf_int_loc_forward.1} parent=1 // pred_check
      _
    $region175: #{graph_tf_int_loc_forward.1} parent=1 // pred_check_branch
      %214 = sbr.rel (0) target = $region177
    $region176: #{graph_tf_int_loc_forward.1} parent=1 // pred_region
      _
    $region177: #{graph_tf_int_loc_forward.1} parent=1 // pred_fallthru
      _
    // Predicated region
    $region178: #{graph_tf_int_loc_forward.1} parent=1 // pred_check
      _
    $region179: #{graph_tf_int_loc_forward.1} parent=1 // pred_check_branch
      %216 = sbr.rel (0) target = $region181
    $region180: #{graph_tf_int_loc_forward.1} parent=1 // pred_region
      _
    $region181: #{graph_tf_int_loc_forward.1} parent=1 // pred_fallthru
      _
    // Predicated region
    $region182: #{graph_tf_int_loc_forward.1} parent=1 // pred_check
      _
    $region183: #{graph_tf_int_loc_forward.1} parent=1 // pred_check_branch
      %218 = sbr.rel (0) target = $region185
    $region184: #{graph_tf_int_loc_forward.1} parent=1 // pred_region
      _
    $region185: #{graph_tf_int_loc_forward.1} parent=1 // pred_fallthru
      _
    // Predicated region
    $region186: #{graph_tf_int_loc_forward.1} parent=1 // pred_check
      _
    $region187: #{graph_tf_int_loc_forward.1} parent=1 // pred_check_branch
      %220 = sbr.rel (0) target = $region189
    $region188: #{graph_tf_int_loc_forward.1} parent=1 // pred_region
      _
    $region189: #{graph_tf_int_loc_forward.1} parent=1 // pred_fallthru
      _
    // Predicated region
    $region190: #{graph_tf_int_loc_forward.1} parent=1 // pred_check
      _
    $region191: #{graph_tf_int_loc_forward.1} parent=1 // pred_check_branch
      %222 = sbr.rel (0) target = $region193
    $region192: #{graph_tf_int_loc_forward.1} parent=1 // pred_region
      _
    $region193: #{graph_tf_int_loc_forward.1} parent=1 // pred_fallthru
      _
    // Predicated region
    $region194: #{graph_tf_int_loc_forward.1} parent=1 // pred_check
      _
    $region195: #{graph_tf_int_loc_forward.1} parent=1 // pred_check_branch
      %224 = sbr.rel (0) target = $region197
    $region196: #{graph_tf_int_loc_forward.1} parent=1 // pred_region
      _
    $region197: #{graph_tf_int_loc_forward.1} parent=1 // pred_fallthru
      _
    // Predicated region
    $region198: #{graph_tf_int_loc_forward.1} parent=1 // pred_check
      _
    $region199: #{graph_tf_int_loc_forward.1} parent=1 // pred_check_branch
      %226 = sbr.rel (0) target = $region201
    $region200: #{graph_tf_int_loc_forward.1} parent=1 // pred_region
      _
    $region201: #{graph_tf_int_loc_forward.1} parent=1 // pred_fallthru
      _
    // Predicated region
    $region202: #{graph_tf_int_loc_forward.1} parent=1 // pred_check
      _
    $region203: #{graph_tf_int_loc_forward.1} parent=1 // pred_check_branch
      %228 = sbr.rel (0) target = $region205
    $region204: #{graph_tf_int_loc_forward.1} parent=1 // pred_region
      _
    $region205: #{graph_tf_int_loc_forward.1} parent=1 // pred_fallthru
      _
    // Predicated region
    $region206: #{graph_tf_int_loc_forward.1} parent=1 // pred_check
      _
    $region207: #{graph_tf_int_loc_forward.1} parent=1 // pred_check_branch
      %230 = sbr.rel (0) target = $region209
    $region208: #{graph_tf_int_loc_forward.1} parent=1 // pred_region
      _
    $region209: #{graph_tf_int_loc_forward.1} parent=1 // pred_fallthru
      _
    // Predicated region
    $region210: #{graph_tf_int_loc_forward.1} parent=1 // pred_check
      _
    $region211: #{graph_tf_int_loc_forward.1} parent=1 // pred_check_branch
      %232 = sbr.rel (0) target = $region213
    $region212: #{graph_tf_int_loc_forward.1} parent=1 // pred_region
      _
    $region213: #{graph_tf_int_loc_forward.1} parent=1 // pred_fallthru
      _
    // Predicated region
    $region214: #{graph_tf_int_loc_forward.1} parent=1 // pred_check
      _
    $region215: #{graph_tf_int_loc_forward.1} parent=1 // pred_check_branch
      %234 = sbr.rel (0) target = $region217
    $region216: #{graph_tf_int_loc_forward.1} parent=1 // pred_region
      _
    $region217: #{graph_tf_int_loc_forward.1} parent=1 // pred_fallthru
      _
    // Predicated region
    $region218: #{graph_tf_int_loc_forward.1} parent=1 // pred_check
      _
    $region219: #{graph_tf_int_loc_forward.1} parent=1 // pred_check_branch
      %236 = sbr.rel (0) target = $region221
    $region220: #{graph_tf_int_loc_forward.1} parent=1 // pred_region
      _
    $region221: #{graph_tf_int_loc_forward.1} parent=1 // pred_fallthru
      _
    // Predicated region
    $region222: #{graph_tf_int_loc_forward.1} parent=1 // pred_check
      _
    $region223: #{graph_tf_int_loc_forward.1} parent=1 // pred_check_branch
      %238 = sbr.rel (0) target = $region225
    $region224: #{graph_tf_int_loc_forward.1} parent=1 // pred_region
      _
    $region225: #{graph_tf_int_loc_forward.1} parent=1 // pred_fallthru
      _
    %v239 = vld [vmem:[%s1] sm:$0xff]
    %v240 = vld [vmem:[%s1 + $0x8] sm:$0xff]
    %v241 = vld [vmem:[%s1 + $0x10] sm:$0x3]
    %v242 = vld [vmem:[%s3] sm:$0xff]
    %v243 = vld [vmem:[%s3 + $0x8] sm:$0xff]
    %v244 = vld [vmem:[%s3 + $0x10] sm:$0x3]
    %v245 = vld [vmem:[%s21] sm:$0xff]
    %v246 = vld [vmem:[%s21 + $0x8] sm:$0xff]
    %vm247 = vcmask 146432
    %v249 = vsel %vm247, %v242, 0
    %v252 = vsel %vm247, %v243, 0
    %v255 = vsel %vm247, %v244, 0
    %vm257 = vcmask 1041408
    %v259 = vsel %vm257, %v241, 0
    %261 = vmatpush.msra.mxu0 0.0
    %262 = vmatpush.msra.mxu0 0.0
    %263 = vmatpush.msra.mxu0 0.0
    %264 = vmatpush.msra.mxu0 0.0
    %265 = vmatpush.msra.mxu0 0.0
    %266 = vmatpush.msra.mxu0 0.0
    %267 = vmatpush.msra.mxu0 0.0
    %268 = vmatpush.msra.mxu0 0.0
    %269 = vmatpush.msra.mxu0 0.0
    %270 = vmatpush.msra.mxu0 0.0
    %271 = vmatpush.msra.mxu0 0.0
    %272 = vmatpush.msra.mxu0 0.0
    %273 = vmatpush.msra.mxu0 0.0
    %274 = vmatpush.msra.mxu0 %v259
    %275 = vmatpush.msra.mxu0 %v240
    %276 = vmatpush.msra.mxu0 %v239
    %277 = vmatmul.f32.gmra.mxu0 %v249
    %v278 = vpop.f32.mrf.mxu0
    %v279 = vadd.f32 0.0, %v278
    %280 = vmatmul.f32.gmra.mxu0 %v252
    %v281 = vpop.f32.mrf.mxu0
    %v282 = vadd.f32 0.0, %v281
    %283 = vmatmul.f32.gmra.mxu0 %v255
    %v284 = vpop.f32.mrf.mxu0
    %v285 = vadd.f32 0.0, %v284
    %286 = vdwg.mxu0
    %v287 = vld [vmem:[%s23] sm:$0xff]
    %v288 = vld [vmem:[%s23 + $0x8] sm:$0xff]
    %vm289 = vcmask 130048
    %v291 = vsel %vm289, %v279, 0
    %v294 = vsel %vm289, %v282, 0
    %v297 = vsel %vm289, %v285, 0
    %299 = vmatpush.msra.mxu0 0.0
    %300 = vmatpush.msra.mxu0 0.0
    %301 = vmatpush.msra.mxu0 0.0
    %302 = vmatpush.msra.mxu0 0.0
    %303 = vmatpush.msra.mxu0 0.0
    %304 = vmatpush.msra.mxu0 0.0
    %305 = vmatpush.msra.mxu0 0.0
    %306 = vmatpush.msra.mxu0 0.0
    %307 = vmatpush.msra.mxu0 0.0
    %308 = vmatpush.msra.mxu0 0.0
    %309 = vmatpush.msra.mxu0 0.0
    %310 = vmatpush.msra.mxu0 0.0
    %311 = vmatpush.msra.mxu0 0.0
    %312 = vmatpush.msra.mxu0 0.0
    %313 = vmatpush.msra.mxu0 %v288
    %314 = vmatpush.msra.mxu0 %v287
    %315 = vmatmul.f32.gmra.mxu0 %v291
    %v316 = vpop.f32.mrf.mxu0
    %v317 = vadd.f32 0.0, %v316
    %318 = vmatmul.f32.gmra.mxu0 %v294
    %v319 = vpop.f32.mrf.mxu0
    %v320 = vadd.f32 0.0, %v319
    %321 = vmatmul.f32.gmra.mxu0 %v297
    %v322 = vpop.f32.mrf.mxu0
    %v323 = vadd.f32 0.0, %v322
    %324 = vdwg.mxu0
    %v326 = vsel %vm289, %v239, 0
    %v329 = vsel %vm289, %v240, 0
    %v331 = vsel %vm289, %v241, 0
    %333 = vmatpush.msra.mxu0 0.0
    %334 = vmatpush.msra.mxu0 0.0
    %335 = vmatpush.msra.mxu0 0.0
    %336 = vmatpush.msra.mxu0 0.0
    %337 = vmatpush.msra.mxu0 0.0
    %338 = vmatpush.msra.mxu0 0.0
    %339 = vmatpush.msra.mxu0 0.0
    %340 = vmatpush.msra.mxu0 0.0
    %341 = vmatpush.msra.mxu0 0.0
    %342 = vmatpush.msra.mxu0 0.0
    %343 = vmatpush.msra.mxu0 0.0
    %344 = vmatpush.msra.mxu0 0.0
    %345 = vmatpush.msra.mxu0 0.0
    %346 = vmatpush.msra.mxu0 0.0
    %347 = vmatpush.msra.mxu0 %v246
    %348 = vmatpush.msra.mxu0 %v245
    %349 = vmatmul.f32.gmra.mxu0 %v326
    %v350 = vpop.f32.mrf.mxu0
    %v351 = vadd.f32 %v317, %v350
    %352 = vmatmul.f32.gmra.mxu0 %v329
    %v353 = vpop.f32.mrf.mxu0
    %v354 = vadd.f32 %v320, %v353
    %355 = vmatmul.f32.gmra.mxu0 %v331
    %v356 = vpop.f32.mrf.mxu0
    %v357 = vadd.f32 %v323, %v356
    %358 = vdwg.mxu0
    %v359 = vld [vmem:[%s25] sm:$0x1]
    %v361 = vperm.slane %v359, 0
    %v363 = vadd.f32 %v351, %v361
    %v364 = vadd.f32 %v354, %v361
    %v365 = vadd.f32 %v357, %v361
    %v366 = vmax.f32 %v363, 0.0
    %v367 = vmax.f32 %v364, 0.0
    %v368 = vmax.f32 %v365, 0.0
    %v369 = vld [vmem:[%s27] sm:$0xff]
    %v370 = vld [vmem:[%s27 + $0x8] sm:$0xff]
    %v372 = vsel %vm257, %v368, 0
    %374 = vmatpush.msra.mxu0 0.0
    %375 = vmatpush.msra.mxu0 0.0
    %376 = vmatpush.msra.mxu0 0.0
    %377 = vmatpush.msra.mxu0 0.0
    %378 = vmatpush.msra.mxu0 0.0
    %379 = vmatpush.msra.mxu0 0.0
    %380 = vmatpush.msra.mxu0 0.0
    %381 = vmatpush.msra.mxu0 0.0
    %382 = vmatpush.msra.mxu0 0.0
    %383 = vmatpush.msra.mxu0 0.0
    %384 = vmatpush.msra.mxu0 0.0
    %385 = vmatpush.msra.mxu0 0.0
    %386 = vmatpush.msra.mxu0 0.0
    %387 = vmatpush.msra.mxu0 %v372
    %388 = vmatpush.msra.mxu0 %v367
    %389 = vmatpush.msra.mxu0 %v366
    %390 = vmatmul.f32.gmra.mxu0 %v249
    %v391 = vpop.f32.mrf.mxu0
    %v392 = vadd.f32 0.0, %v391
    %393 = vmatmul.f32.gmra.mxu0 %v252
    %v394 = vpop.f32.mrf.mxu0
    %v395 = vadd.f32 0.0, %v394
    %396 = vmatmul.f32.gmra.mxu0 %v255
    %v397 = vpop.f32.mrf.mxu0
    %v398 = vadd.f32 0.0, %v397
    %399 = vdwg.mxu0
    %v400 = vld [vmem:[%s29] sm:$0xff]
    %v401 = vld [vmem:[%s29 + $0x8] sm:$0xff]
    %v403 = vsel %vm289, %v392, 0
    %v406 = vsel %vm289, %v395, 0
    %v409 = vsel %vm289, %v398, 0
    %411 = vmatpush.msra.mxu0 0.0
    %412 = vmatpush.msra.mxu0 0.0
    %413 = vmatpush.msra.mxu0 0.0
    %414 = vmatpush.msra.mxu0 0.0
    %415 = vmatpush.msra.mxu0 0.0
    %416 = vmatpush.msra.mxu0 0.0
    %417 = vmatpush.msra.mxu0 0.0
    %418 = vmatpush.msra.mxu0 0.0
    %419 = vmatpush.msra.mxu0 0.0
    %420 = vmatpush.msra.mxu0 0.0
    %421 = vmatpush.msra.mxu0 0.0
    %422 = vmatpush.msra.mxu0 0.0
    %423 = vmatpush.msra.mxu0 0.0
    %424 = vmatpush.msra.mxu0 0.0
    %425 = vmatpush.msra.mxu0 %v401
    %426 = vmatpush.msra.mxu0 %v400
    %427 = vmatmul.f32.gmra.mxu0 %v403
    %v428 = vpop.f32.mrf.mxu0
    %v429 = vadd.f32 0.0, %v428
    %430 = vmatmul.f32.gmra.mxu0 %v406
    %v431 = vpop.f32.mrf.mxu0
    %v432 = vadd.f32 0.0, %v431
    %433 = vmatmul.f32.gmra.mxu0 %v409
    %v434 = vpop.f32.mrf.mxu0
    %v435 = vadd.f32 0.0, %v434
    %436 = vdwg.mxu0
    %v438 = vsel %vm289, %v366, 0
    %v441 = vsel %vm289, %v367, 0
    %v443 = vsel %vm289, %v368, 0
    %445 = vmatpush.msra.mxu0 0.0
    %446 = vmatpush.msra.mxu0 0.0
    %447 = vmatpush.msra.mxu0 0.0
    %448 = vmatpush.msra.mxu0 0.0
    %449 = vmatpush.msra.mxu0 0.0
    %450 = vmatpush.msra.mxu0 0.0
    %451 = vmatpush.msra.mxu0 0.0
    %452 = vmatpush.msra.mxu0 0.0
    %453 = vmatpush.msra.mxu0 0.0
    %454 = vmatpush.msra.mxu0 0.0
    %455 = vmatpush.msra.mxu0 0.0
    %456 = vmatpush.msra.mxu0 0.0
    %457 = vmatpush.msra.mxu0 0.0
    %458 = vmatpush.msra.mxu0 0.0
    %459 = vmatpush.msra.mxu0 %v370
    %460 = vmatpush.msra.mxu0 %v369
    %461 = vmatmul.f32.gmra.mxu0 %v438
    %v462 = vpop.f32.mrf.mxu0
    %v463 = vadd.f32 %v429, %v462
    %464 = vmatmul.f32.gmra.mxu0 %v441
    %v465 = vpop.f32.mrf.mxu0
    %v466 = vadd.f32 %v432, %v465
    %467 = vmatmul.f32.gmra.mxu0 %v443
    %v468 = vpop.f32.mrf.mxu0
    %v469 = vadd.f32 %v435, %v468
    %470 = vdwg.mxu0
    %v471 = vld [vmem:[%s31] sm:$0x1]
    %v473 = vperm.slane %v471, 0
    %v475 = vadd.f32 %v463, %v473
    %v476 = vadd.f32 %v466, %v473
    %v477 = vadd.f32 %v469, %v473
    %v478 = vmax.f32 %v475, 0.0
    %v479 = vmax.f32 %v476, 0.0
    %v480 = vmax.f32 %v477, 0.0
    %v482 = vsel %vm289, %v478, 0
    %v485 = vsel %vm289, %v479, 0
    %v488 = vsel %vm289, %v480, 0
    %490 = vmatpush.xpose.msra.mxu0 0.0
    %491 = vmatpush.xpose.msra.mxu0 0.0
    %492 = vmatpush.xpose.msra.mxu0 0.0
    %493 = vmatpush.xpose.msra.mxu0 0.0
    %494 = vmatpush.xpose.msra.mxu0 0.0
    %495 = vmatpush.xpose.msra.mxu0 0.0
    %496 = vmatpush.xpose.msra.mxu0 0.0
    %497 = vmatpush.xpose.msra.mxu0 0.0
    %498 = vmatpush.xpose.msra.mxu0 0.0
    %499 = vmatpush.xpose.msra.mxu0 0.0
    %500 = vmatpush.xpose.msra.mxu0 0.0
    %501 = vmatpush.xpose.msra.mxu0 0.0
    %502 = vmatpush.xpose.msra.mxu0 0.0
    %503 = vmatpush.xpose.msra.mxu0 %v488
    %504 = vmatpush.xpose.msra.mxu0 %v485
    %505 = vmatpush.xpose.msra.mxu0 %v482
    %506 = vmatmul.f32.gmra.mxu0 %v482
    %v507 = vpop.f32.mrf.mxu0
    %v508 = vadd.f32 0.0, %v507
    %509 = vmatmul.f32.gmra.mxu0 %v485
    %v510 = vpop.f32.mrf.mxu0
    %v511 = vadd.f32 0.0, %v510
    %512 = vmatmul.f32.gmra.mxu0 %v488
    %v513 = vpop.f32.mrf.mxu0
    %v514 = vadd.f32 0.0, %v513
    %515 = vdwg.mxu0
    %516 = vst.msk [vmem:[%s113] sm:$0xff] %vm247, %v508
    %517 = vst.msk [vmem:[%s113 + $0x8] sm:$0xff] %vm247, %v511
    %vm518 = vcmask 140288
    %519 = vst.msk [vmem:[%s113 + $0x10] sm:$0x3] %vm518, %v514
    %v520 = vld [vmem:[%s5] sm:$0x3]
    %v521 = vld [vmem:[%s7] sm:$0x3]
    %v522 = vld [vmem:[%s33] sm:$0xff]
    %v523 = vld [vmem:[%s33 + $0x8] sm:$0xff]
    %v524 = vld [vmem:[%s35] sm:$0xff]
    %v525 = vld [vmem:[%s35 + $0x8] sm:$0xff]
    %v526 = vld [vmem:[%s37] sm:$0xff]
    %v527 = vld [vmem:[%s37 + $0x8] sm:$0xff]
    %v528 = vld [vmem:[%s39] sm:$0xff]
    %v529 = vld [vmem:[%s39 + $0x8] sm:$0xff]
    %v530 = vld [vmem:[%s41] sm:$0x1]
    %v532 = vsel %vm289, %v520, 0
    %534 = vmatpush.msra.mxu0 0.0
    %535 = vmatpush.msra.mxu0 0.0
    %536 = vmatpush.msra.mxu0 0.0
    %537 = vmatpush.msra.mxu0 0.0
    %538 = vmatpush.msra.mxu0 0.0
    %539 = vmatpush.msra.mxu0 0.0
    %540 = vmatpush.msra.mxu0 0.0
    %541 = vmatpush.msra.mxu0 0.0
    %542 = vmatpush.msra.mxu0 0.0
    %543 = vmatpush.msra.mxu0 0.0
    %544 = vmatpush.msra.mxu0 0.0
    %545 = vmatpush.msra.mxu0 0.0
    %546 = vmatpush.msra.mxu0 0.0
    %547 = vmatpush.msra.mxu0 0.0
    %548 = vmatpush.msra.mxu0 %v525
    %549 = vmatpush.msra.mxu0 %v524
    %550 = vmatmul.f32.gmra.mxu0 %v532
    %v551 = vpop.f32.mrf.mxu0
    %v552 = vadd.f32 0.0, %v551
    %553 = vdwg.mxu0
    %554 = vmatpush.msra.mxu0 0.0
    %555 = vmatpush.msra.mxu0 0.0
    %556 = vmatpush.msra.mxu0 0.0
    %557 = vmatpush.msra.mxu0 0.0
    %558 = vmatpush.msra.mxu0 0.0
    %559 = vmatpush.msra.mxu0 0.0
    %560 = vmatpush.msra.mxu0 0.0
    %561 = vmatpush.msra.mxu0 0.0
    %562 = vmatpush.msra.mxu0 0.0
    %563 = vmatpush.msra.mxu0 0.0
    %564 = vmatpush.msra.mxu0 0.0
    %565 = vmatpush.msra.mxu0 0.0
    %566 = vmatpush.msra.mxu0 0.0
    %567 = vmatpush.msra.mxu0 0.0
    %568 = vmatpush.msra.mxu0 %v523
    %569 = vmatpush.msra.mxu0 %v522
    %570 = vmatmul.f32.gmra.mxu0 %v482
    %v571 = vpop.f32.mrf.mxu0
    %v572 = vadd.f32 %v552, %v571
    %573 = vdwg.mxu0
    %v575 = vsel %vm289, %v521, 0
    %577 = vmatpush.msra.mxu0 0.0
    %578 = vmatpush.msra.mxu0 0.0
    %579 = vmatpush.msra.mxu0 0.0
    %580 = vmatpush.msra.mxu0 0.0
    %581 = vmatpush.msra.mxu0 0.0
    %582 = vmatpush.msra.mxu0 0.0
    %583 = vmatpush.msra.mxu0 0.0
    %584 = vmatpush.msra.mxu0 0.0
    %585 = vmatpush.msra.mxu0 0.0
    %586 = vmatpush.msra.mxu0 0.0
    %587 = vmatpush.msra.mxu0 0.0
    %588 = vmatpush.msra.mxu0 0.0
    %589 = vmatpush.msra.mxu0 0.0
    %590 = vmatpush.msra.mxu0 0.0
    %591 = vmatpush.msra.mxu0 %v527
    %592 = vmatpush.msra.mxu0 %v526
    %593 = vmatmul.f32.gmra.mxu0 %v575
    %v594 = vpop.f32.mrf.mxu0
    %v595 = vadd.f32 0.0, %v594
    %596 = vdwg.mxu0
    %v597 = vadd.f32 %v572, %v595
    %v598 = vadd.f32 %v597, %v530
    %v599 = vperm.slane %v598, 0
    %vm600 = vcmask 1046528
    %v601 = vrot.slane %v478, 1
    %v602 = vrot.slane %v479, 1
    %v603 = vsel %vm600, %v601, %v602
    %v604 = vsel %vm289, %v603, 0
    %606 = vmatpush.msra.mxu0 0.0
    %607 = vmatpush.msra.mxu0 0.0
    %608 = vmatpush.msra.mxu0 0.0
    %609 = vmatpush.msra.mxu0 0.0
    %610 = vmatpush.msra.mxu0 0.0
    %611 = vmatpush.msra.mxu0 0.0
    %612 = vmatpush.msra.mxu0 0.0
    %613 = vmatpush.msra.mxu0 0.0
    %614 = vmatpush.msra.mxu0 0.0
    %615 = vmatpush.msra.mxu0 0.0
    %616 = vmatpush.msra.mxu0 0.0
    %617 = vmatpush.msra.mxu0 0.0
    %618 = vmatpush.msra.mxu0 0.0
    %619 = vmatpush.msra.mxu0 0.0
    %620 = vmatpush.msra.mxu0 %v529
    %621 = vmatpush.msra.mxu0 %v528
    %622 = vmatmul.f32.gmra.mxu0 %v604
    %v623 = vpop.f32.mrf.mxu0
    %v624 = vadd.f32 %v599, %v623
    %625 = vdwg.mxu0
    %v626 = vrot.slane %v520, 1
    %v627 = vsel %vm289, %v626, 0
    %629 = vmatpush.msra.mxu0 0.0
    %630 = vmatpush.msra.mxu0 0.0
    %631 = vmatpush.msra.mxu0 0.0
    %632 = vmatpush.msra.mxu0 0.0
    %633 = vmatpush.msra.mxu0 0.0
    %634 = vmatpush.msra.mxu0 0.0
    %635 = vmatpush.msra.mxu0 0.0
    %636 = vmatpush.msra.mxu0 0.0
    %637 = vmatpush.msra.mxu0 0.0
    %638 = vmatpush.msra.mxu0 0.0
    %639 = vmatpush.msra.mxu0 0.0
    %640 = vmatpush.msra.mxu0 0.0
    %641 = vmatpush.msra.mxu0 0.0
    %642 = vmatpush.msra.mxu0 0.0
    %643 = vmatpush.msra.mxu0 %v525
    %644 = vmatpush.msra.mxu0 %v524
    %645 = vmatmul.f32.gmra.mxu0 %v627
    %v646 = vpop.f32.mrf.mxu0
    %v647 = vadd.f32 0.0, %v646
    %648 = vdwg.mxu0
    %v649 = vsel %vm289, %v602, 0
    %651 = vmatpush.msra.mxu0 0.0
    %652 = vmatpush.msra.mxu0 0.0
    %653 = vmatpush.msra.mxu0 0.0
    %654 = vmatpush.msra.mxu0 0.0
    %655 = vmatpush.msra.mxu0 0.0
    %656 = vmatpush.msra.mxu0 0.0
    %657 = vmatpush.msra.mxu0 0.0
    %658 = vmatpush.msra.mxu0 0.0
    %659 = vmatpush.msra.mxu0 0.0
    %660 = vmatpush.msra.mxu0 0.0
    %661 = vmatpush.msra.mxu0 0.0
    %662 = vmatpush.msra.mxu0 0.0
    %663 = vmatpush.msra.mxu0 0.0
    %664 = vmatpush.msra.mxu0 0.0
    %665 = vmatpush.msra.mxu0 %v523
    %666 = vmatpush.msra.mxu0 %v522
    %667 = vmatmul.f32.gmra.mxu0 %v649
    %v668 = vpop.f32.mrf.mxu0
    %v669 = vadd.f32 %v647, %v668
    %670 = vdwg.mxu0
    %v671 = vrot.slane %v521, 1
    %v672 = vsel %vm289, %v671, 0
    %674 = vmatpush.msra.mxu0 0.0
    %675 = vmatpush.msra.mxu0 0.0
    %676 = vmatpush.msra.mxu0 0.0
    %677 = vmatpush.msra.mxu0 0.0
    %678 = vmatpush.msra.mxu0 0.0
    %679 = vmatpush.msra.mxu0 0.0
    %680 = vmatpush.msra.mxu0 0.0
    %681 = vmatpush.msra.mxu0 0.0
    %682 = vmatpush.msra.mxu0 0.0
    %683 = vmatpush.msra.mxu0 0.0
    %684 = vmatpush.msra.mxu0 0.0
    %685 = vmatpush.msra.mxu0 0.0
    %686 = vmatpush.msra.mxu0 0.0
    %687 = vmatpush.msra.mxu0 0.0
    %688 = vmatpush.msra.mxu0 %v527
    %689 = vmatpush.msra.mxu0 %v526
    %690 = vmatmul.f32.gmra.mxu0 %v672
    %v691 = vpop.f32.mrf.mxu0
    %v692 = vadd.f32 0.0, %v691
    %693 = vdwg.mxu0
    %v694 = vadd.f32 %v669, %v692
    %v695 = vadd.f32 %v694, %v530
    %v696 = vperm.slane %v695, 0
    %vm697 = vcmask 1045504
    %v698 = vrot.slane %v479, 2
    %v699 = vrot.slane %v480, 2
    %v700 = vsel %vm697, %v698, %v699
    %v701 = vsel %vm289, %v700, 0
    %703 = vmatpush.msra.mxu0 0.0
    %704 = vmatpush.msra.mxu0 0.0
    %705 = vmatpush.msra.mxu0 0.0
    %706 = vmatpush.msra.mxu0 0.0
    %707 = vmatpush.msra.mxu0 0.0
    %708 = vmatpush.msra.mxu0 0.0
    %709 = vmatpush.msra.mxu0 0.0
    %710 = vmatpush.msra.mxu0 0.0
    %711 = vmatpush.msra.mxu0 0.0
    %712 = vmatpush.msra.mxu0 0.0
    %713 = vmatpush.msra.mxu0 0.0
    %714 = vmatpush.msra.mxu0 0.0
    %715 = vmatpush.msra.mxu0 0.0
    %716 = vmatpush.msra.mxu0 0.0
    %717 = vmatpush.msra.mxu0 %v529
    %718 = vmatpush.msra.mxu0 %v528
    %719 = vmatmul.f32.gmra.mxu0 %v701
    %v720 = vpop.f32.mrf.mxu0
    %v721 = vadd.f32 %v696, %v720
    %722 = vdwg.mxu0
    %v723 = vld [vmem:[%s15] sm:$0xff]
    %v724 = vld [vmem:[%s15 + $0x8] sm:$0xff]
    %v725 = vld [vmem:[%s15 + $0x10] sm:$0xff]
    %v726 = vld [vmem:[%s15 + $0x18] sm:$0xff]
    %v727 = vld [vmem:[%s15 + $0x20] sm:$0xff]
    %v728 = vld [vmem:[%s15 + $0x28] sm:$0xff]
    %v729 = vld [vmem:[%s15 + $0x30] sm:$0xff]
    %v730 = vld [vmem:[%s15 + $0x38] sm:$0xff]
    %v731 = vld [vmem:[%s17] sm:$0xff]
    %v732 = vld [vmem:[%s43] sm:$0xff]
    %v733 = vld [vmem:[%s43 + $0x8] sm:$0xff]
    %v734 = vld [vmem:[%s43 + $0x10] sm:$0xff]
    %v735 = vld [vmem:[%s43 + $0x18] sm:$0xff]
    %v736 = vld [vmem:[%s49] sm:$0x1]
    %v738 = vperm.slane %v736, 0
    %vm740 = vcmask 261120
    %v742 = vsel %vm740, %v624, 0
    %v745 = vsel %vm740, %v721, 0
    %747 = vmatpush.msra.mxu0 0.0
    %748 = vmatpush.msra.mxu0 0.0
    %749 = vmatpush.msra.mxu0 0.0
    %750 = vmatpush.msra.mxu0 0.0
    %751 = vmatpush.msra.mxu0 0.0
    %752 = vmatpush.msra.mxu0 0.0
    %753 = vmatpush.msra.mxu0 0.0
    %754 = vmatpush.msra.mxu0 0.0
    %755 = vmatpush.msra.mxu0 0.0
    %756 = vmatpush.msra.mxu0 0.0
    %757 = vmatpush.msra.mxu0 0.0
    %758 = vmatpush.msra.mxu0 0.0
    %759 = vmatpush.msra.mxu0 %v735
    %760 = vmatpush.msra.mxu0 %v734
    %761 = vmatpush.msra.mxu0 %v733
    %762 = vmatpush.msra.mxu0 %v732
    %763 = vmatmul.f32.gmra.mxu0 %v742
    %v764 = vpop.f32.mrf.mxu0
    %v765 = vadd.f32 %v738, %v764
    %766 = vmatmul.f32.gmra.mxu0 %v745
    %v767 = vpop.f32.mrf.mxu0
    %v768 = vadd.f32 %v738, %v767
    %769 = vdwg.mxu0
    %v770 = vld [vmem:[%s45] sm:$0xff]
    %v771 = vld [vmem:[%s45 + $0x8] sm:$0xff]
    %v772 = vld [vmem:[%s45 + $0x10] sm:$0xff]
    %v773 = vld [vmem:[%s45 + $0x18] sm:$0xff]
    %v774 = vld [vmem:[%s51] sm:$0x1]
    %v776 = vperm.slane %v774, 0
    %778 = vmatpush.msra.mxu0 0.0
    %779 = vmatpush.msra.mxu0 0.0
    %780 = vmatpush.msra.mxu0 0.0
    %781 = vmatpush.msra.mxu0 0.0
    %782 = vmatpush.msra.mxu0 0.0
    %783 = vmatpush.msra.mxu0 0.0
    %784 = vmatpush.msra.mxu0 0.0
    %785 = vmatpush.msra.mxu0 0.0
    %786 = vmatpush.msra.mxu0 0.0
    %787 = vmatpush.msra.mxu0 0.0
    %788 = vmatpush.msra.mxu0 0.0
    %789 = vmatpush.msra.mxu0 0.0
    %790 = vmatpush.msra.mxu0 %v773
    %791 = vmatpush.msra.mxu0 %v772
    %792 = vmatpush.msra.mxu0 %v771
    %793 = vmatpush.msra.mxu0 %v770
    %794 = vmatmul.f32.gmra.mxu0 %v742
    %v795 = vpop.f32.mrf.mxu0
    %v796 = vadd.f32 %v776, %v795
    %797 = vmatmul.f32.gmra.mxu0 %v745
    %v798 = vpop.f32.mrf.mxu0
    %v799 = vadd.f32 %v776, %v798
    %800 = vdwg.mxu0
    %v801 = vld [vmem:[%s47] sm:$0xff]
    %v802 = vld [vmem:[%s47 + $0x8] sm:$0xff]
    %v803 = vld [vmem:[%s47 + $0x10] sm:$0xff]
    %v804 = vld [vmem:[%s47 + $0x18] sm:$0xff]
    %v805 = vld [vmem:[%s53] sm:$0x1]
    %v807 = vperm.slane %v805, 0
    %809 = vmatpush.msra.mxu0 0.0
    %810 = vmatpush.msra.mxu0 0.0
    %811 = vmatpush.msra.mxu0 0.0
    %812 = vmatpush.msra.mxu0 0.0
    %813 = vmatpush.msra.mxu0 0.0
    %814 = vmatpush.msra.mxu0 0.0
    %815 = vmatpush.msra.mxu0 0.0
    %816 = vmatpush.msra.mxu0 0.0
    %817 = vmatpush.msra.mxu0 0.0
    %818 = vmatpush.msra.mxu0 0.0
    %819 = vmatpush.msra.mxu0 0.0
    %820 = vmatpush.msra.mxu0 0.0
    %821 = vmatpush.msra.mxu0 %v804
    %822 = vmatpush.msra.mxu0 %v803
    %823 = vmatpush.msra.mxu0 %v802
    %824 = vmatpush.msra.mxu0 %v801
    %825 = vmatmul.f32.gmra.mxu0 %v742
    %v826 = vpop.f32.mrf.mxu0
    %v827 = vadd.f32 %v807, %v826
    %828 = vmatmul.f32.gmra.mxu0 %v745
    %v829 = vpop.f32.mrf.mxu0
    %v830 = vadd.f32 %v807, %v829
    %831 = vdwg.mxu0
    %v832 = vmul.f32 %v765, %v723
    %v833 = vmul.f32 %v765, %v724
    %v834 = vmul.f32 %v765, %v725
    %v835 = vmul.f32 %v765, %v726
    %v836 = vmul.f32 %v765, %v727
    %v837 = vmul.f32 %v765, %v728
    %v838 = vmul.f32 %v765, %v729
    %v839 = vmul.f32 %v765, %v730
    %v841 = vsel %vm740, %v832, 0
    %v844 = vsel %vm740, %v833, 0
    %v847 = vsel %vm740, %v834, 0
    %v850 = vsel %vm740, %v835, 0
    %v853 = vsel %vm740, %v836, 0
    %v856 = vsel %vm740, %v837, 0
    %v859 = vsel %vm740, %v838, 0
    %v862 = vsel %vm740, %v839, 0
    %v865 = vsel %vm740, %v796, 0
    %867 = vmatpush.xpose.msra.mxu0 0.0
    %868 = vmatpush.xpose.msra.mxu0 0.0
    %869 = vmatpush.xpose.msra.mxu0 0.0
    %870 = vmatpush.xpose.msra.mxu0 0.0
    %871 = vmatpush.xpose.msra.mxu0 0.0
    %872 = vmatpush.xpose.msra.mxu0 0.0
    %873 = vmatpush.xpose.msra.mxu0 0.0
    %874 = vmatpush.xpose.msra.mxu0 0.0
    %875 = vmatpush.xpose.msra.mxu0 0.0
    %876 = vmatpush.xpose.msra.mxu0 0.0
    %877 = vmatpush.xpose.msra.mxu0 0.0
    %878 = vmatpush.xpose.msra.mxu0 0.0
    %879 = vmatpush.xpose.msra.mxu0 0.0
    %880 = vmatpush.xpose.msra.mxu0 0.0
    %881 = vmatpush.xpose.msra.mxu0 0.0
    %882 = vmatpush.xpose.msra.mxu0 %v865
    %883 = vmatmul.f32.gmra.mxu0 %v841
    %v884 = vpop.f32.mrf.mxu0
    %v885 = vadd.f32 0.0, %v884
    %886 = vmatmul.f32.gmra.mxu0 %v844
    %v887 = vpop.f32.mrf.mxu0
    %v888 = vadd.f32 0.0, %v887
    %889 = vmatmul.f32.gmra.mxu0 %v847
    %v890 = vpop.f32.mrf.mxu0
    %v891 = vadd.f32 0.0, %v890
    %892 = vmatmul.f32.gmra.mxu0 %v850
    %v893 = vpop.f32.mrf.mxu0
    %v894 = vadd.f32 0.0, %v893
    %895 = vmatmul.f32.gmra.mxu0 %v853
    %v896 = vpop.f32.mrf.mxu0
    %v897 = vadd.f32 0.0, %v896
    %898 = vmatmul.f32.gmra.mxu0 %v856
    %v899 = vpop.f32.mrf.mxu0
    %v900 = vadd.f32 0.0, %v899
    %901 = vmatmul.f32.gmra.mxu0 %v859
    %v902 = vpop.f32.mrf.mxu0
    %v903 = vadd.f32 0.0, %v902
    %904 = vmatmul.f32.gmra.mxu0 %v862
    %v905 = vpop.f32.mrf.mxu0
    %v906 = vadd.f32 0.0, %v905
    %907 = vdwg.mxu0
    %v908 = vmul.f32 %v885, 0.5
    %v909 = vmul.f32 %v888, 0.5
    %v910 = vmul.f32 %v891, 0.5
    %v911 = vmul.f32 %v894, 0.5
    %v912 = vmul.f32 %v897, 0.5
    %v913 = vmul.f32 %v900, 0.5
    %v914 = vmul.f32 %v903, 0.5
    %v915 = vmul.f32 %v906, 0.5
    %vm916 = vcmask 64512
    %v917 = vsel %vm916, %v908, -inf
    %918 = vmax.xlane.f32.xlu0 %v917
    %v919 = vpop.xlane.xlu0 %918
    %v920 = vsel %vm916, %v909, -inf
    %921 = vmax.xlane.f32.xlu0 %v920
    %v922 = vpop.xlane.xlu0 %921
    %v923 = vsel %vm916, %v910, -inf
    %924 = vmax.xlane.f32.xlu0 %v923
    %v925 = vpop.xlane.xlu0 %924
    %v926 = vsel %vm916, %v911, -inf
    %927 = vmax.xlane.f32.xlu0 %v926
    %v928 = vpop.xlane.xlu0 %927
    %v929 = vsel %vm916, %v912, -inf
    %930 = vmax.xlane.f32.xlu0 %v929
    %v931 = vpop.xlane.xlu0 %930
    %v932 = vsel %vm916, %v913, -inf
    %933 = vmax.xlane.f32.xlu0 %v932
    %v934 = vpop.xlane.xlu0 %933
    %v935 = vsel %vm916, %v914, -inf
    %936 = vmax.xlane.f32.xlu0 %v935
    %v937 = vpop.xlane.xlu0 %936
    %v938 = vsel %vm916, %v915, -inf
    %939 = vmax.xlane.f32.xlu0 %v938
    %v940 = vpop.xlane.xlu0 %939
    %v941 = vsub.f32 %v908, %v919
    %v942 = vsub.f32 %v909, %v922
    %v943 = vsub.f32 %v910, %v925
    %v944 = vsub.f32 %v911, %v928
    %v945 = vsub.f32 %v912, %v931
    %v946 = vsub.f32 %v913, %v934
    %v947 = vsub.f32 %v914, %v937
    %v948 = vsub.f32 %v915, %v940
    %v949 = vmul.f32 %v941, 1.442695
    %v950 = vpow.pop %v949
    %v951 = vmul.f32 %v942, 1.442695
    %v952 = vpow.pop %v951
    %v953 = vmul.f32 %v943, 1.442695
    %v954 = vpow.pop %v953
    %v955 = vmul.f32 %v944, 1.442695
    %v956 = vpow.pop %v955
    %v957 = vmul.f32 %v945, 1.442695
    %v958 = vpow.pop %v957
    %v959 = vmul.f32 %v946, 1.442695
    %v960 = vpow.pop %v959
    %v961 = vmul.f32 %v947, 1.442695
    %v962 = vpow.pop %v961
    %v963 = vmul.f32 %v948, 1.442695
    %v964 = vpow.pop %v963
    %v965 = vsel %vm916, %v950, 0.0
    %966 = vadd.xlane.f32.xlu0 %v965
    %v967 = vpop.xlane.xlu0 %966
    %v968 = vsel %vm916, %v952, 0.0
    %969 = vadd.xlane.f32.xlu0 %v968
    %v970 = vpop.xlane.xlu0 %969
    %v971 = vsel %vm916, %v954, 0.0
    %972 = vadd.xlane.f32.xlu0 %v971
    %v973 = vpop.xlane.xlu0 %972
    %v974 = vsel %vm916, %v956, 0.0
    %975 = vadd.xlane.f32.xlu0 %v974
    %v976 = vpop.xlane.xlu0 %975
    %v977 = vsel %vm916, %v958, 0.0
    %978 = vadd.xlane.f32.xlu0 %v977
    %v979 = vpop.xlane.xlu0 %978
    %v980 = vsel %vm916, %v960, 0.0
    %981 = vadd.xlane.f32.xlu0 %v980
    %v982 = vpop.xlane.xlu0 %981
    %v983 = vsel %vm916, %v962, 0.0
    %984 = vadd.xlane.f32.xlu0 %v983
    %v985 = vpop.xlane.xlu0 %984
    %v986 = vsel %vm916, %v964, 0.0
    %987 = vadd.xlane.f32.xlu0 %v986
    %v988 = vpop.xlane.xlu0 %987
    %v989 = vrcp.pop %v967
    %v990 = vmul.f32 %v967, %v989
    %v991 = vsub.f32 1.0, %v990
    %v992 = vmul.f32 %v989, %v991
    %v993 = vadd.f32 %v989, %v992
    %vm994 = vweird.f32 %v967
    %vm995 = vweird.f32 %v989
    %vm996 = vmor %vm994, %vm995
    %v997 = vsel %vm996, %v989, %v993
    %v998 = vand.u32 2147483647, %v967
    %vm999 = vcmp.eq.f32.partialorder %v998, 8.507059e+37
    %v1000 = vand.u32 %v967, 2147483648
    %v1001 = vor.u32 1.1754944e-38, %v1000
    %v1002 = vsel %vm999, %v1001, %v997
    %v1003 = vmul.f32 %v950, %v1002
    %v1004 = vrcp.pop %v970
    %v1005 = vmul.f32 %v970, %v1004
    %v1006 = vsub.f32 1.0, %v1005
    %v1007 = vmul.f32 %v1004, %v1006
    %v1008 = vadd.f32 %v1004, %v1007
    %vm1009 = vweird.f32 %v970
    %vm1010 = vweird.f32 %v1004
    %vm1011 = vmor %vm1009, %vm1010
    %v1012 = vsel %vm1011, %v1004, %v1008
    %v1013 = vand.u32 2147483647, %v970
    %vm1014 = vcmp.eq.f32.partialorder %v1013, 8.507059e+37
    %v1015 = vand.u32 %v970, 2147483648
    %v1016 = vor.u32 1.1754944e-38, %v1015
    %v1017 = vsel %vm1014, %v1016, %v1012
    %v1018 = vmul.f32 %v952, %v1017
    %v1019 = vrcp.pop %v973
    %v1020 = vmul.f32 %v973, %v1019
    %v1021 = vsub.f32 1.0, %v1020
    %v1022 = vmul.f32 %v1019, %v1021
    %v1023 = vadd.f32 %v1019, %v1022
    %vm1024 = vweird.f32 %v973
    %vm1025 = vweird.f32 %v1019
    %vm1026 = vmor %vm1024, %vm1025
    %v1027 = vsel %vm1026, %v1019, %v1023
    %v1028 = vand.u32 2147483647, %v973
    %vm1029 = vcmp.eq.f32.partialorder %v1028, 8.507059e+37
    %v1030 = vand.u32 %v973, 2147483648
    %v1031 = vor.u32 1.1754944e-38, %v1030
    %v1032 = vsel %vm1029, %v1031, %v1027
    %v1033 = vmul.f32 %v954, %v1032
    %v1034 = vrcp.pop %v976
    %v1035 = vmul.f32 %v976, %v1034
    %v1036 = vsub.f32 1.0, %v1035
    %v1037 = vmul.f32 %v1034, %v1036
    %v1038 = vadd.f32 %v1034, %v1037
    %vm1039 = vweird.f32 %v976
    %vm1040 = vweird.f32 %v1034
    %vm1041 = vmor %vm1039, %vm1040
    %v1042 = vsel %vm1041, %v1034, %v1038
    %v1043 = vand.u32 2147483647, %v976
    %vm1044 = vcmp.eq.f32.partialorder %v1043, 8.507059e+37
    %v1045 = vand.u32 %v976, 2147483648
    %v1046 = vor.u32 1.1754944e-38, %v1045
    %v1047 = vsel %vm1044, %v1046, %v1042
    %v1048 = vmul.f32 %v956, %v1047
    %v1049 = vrcp.pop %v979
    %v1050 = vmul.f32 %v979, %v1049
    %v1051 = vsub.f32 1.0, %v1050
    %v1052 = vmul.f32 %v1049, %v1051
    %v1053 = vadd.f32 %v1049, %v1052
    %vm1054 = vweird.f32 %v979
    %vm1055 = vweird.f32 %v1049
    %vm1056 = vmor %vm1054, %vm1055
    %v1057 = vsel %vm1056, %v1049, %v1053
    %v1058 = vand.u32 2147483647, %v979
    %vm1059 = vcmp.eq.f32.partialorder %v1058, 8.507059e+37
    %v1060 = vand.u32 %v979, 2147483648
    %v1061 = vor.u32 1.1754944e-38, %v1060
    %v1062 = vsel %vm1059, %v1061, %v1057
    %v1063 = vmul.f32 %v958, %v1062
    %v1064 = vrcp.pop %v982
    %v1065 = vmul.f32 %v982, %v1064
    %v1066 = vsub.f32 1.0, %v1065
    %v1067 = vmul.f32 %v1064, %v1066
    %v1068 = vadd.f32 %v1064, %v1067
    %vm1069 = vweird.f32 %v982
    %vm1070 = vweird.f32 %v1064
    %vm1071 = vmor %vm1069, %vm1070
    %v1072 = vsel %vm1071, %v1064, %v1068
    %v1073 = vand.u32 2147483647, %v982
    %vm1074 = vcmp.eq.f32.partialorder %v1073, 8.507059e+37
    %v1075 = vand.u32 %v982, 2147483648
    %v1076 = vor.u32 1.1754944e-38, %v1075
    %v1077 = vsel %vm1074, %v1076, %v1072
    %v1078 = vmul.f32 %v960, %v1077
    %v1079 = vrcp.pop %v985
    %v1080 = vmul.f32 %v985, %v1079
    %v1081 = vsub.f32 1.0, %v1080
    %v1082 = vmul.f32 %v1079, %v1081
    %v1083 = vadd.f32 %v1079, %v1082
    %vm1084 = vweird.f32 %v985
    %vm1085 = vweird.f32 %v1079
    %vm1086 = vmor %vm1084, %vm1085
    %v1087 = vsel %vm1086, %v1079, %v1083
    %v1088 = vand.u32 2147483647, %v985
    %vm1089 = vcmp.eq.f32.partialorder %v1088, 8.507059e+37
    %v1090 = vand.u32 %v985, 2147483648
    %v1091 = vor.u32 1.1754944e-38, %v1090
    %v1092 = vsel %vm1089, %v1091, %v1087
    %v1093 = vmul.f32 %v962, %v1092
    %v1094 = vrcp.pop %v988
    %v1095 = vmul.f32 %v988, %v1094
    %v1096 = vsub.f32 1.0, %v1095
    %v1097 = vmul.f32 %v1094, %v1096
    %v1098 = vadd.f32 %v1094, %v1097
    %vm1099 = vweird.f32 %v988
    %vm1100 = vweird.f32 %v1094
    %vm1101 = vmor %vm1099, %vm1100
    %v1102 = vsel %vm1101, %v1094, %v1098
    %v1103 = vand.u32 2147483647, %v988
    %vm1104 = vcmp.eq.f32.partialorder %v1103, 8.507059e+37
    %v1105 = vand.u32 %v988, 2147483648
    %v1106 = vor.u32 1.1754944e-38, %v1105
    %v1107 = vsel %vm1104, %v1106, %v1102
    %v1108 = vmul.f32 %v964, %v1107
    %v1110 = vsel %vm916, %v1003, 0
    %v1113 = vsel %vm916, %v1018, 0
    %v1116 = vsel %vm916, %v1033, 0
    %v1119 = vsel %vm916, %v1048, 0
    %v1122 = vsel %vm916, %v1063, 0
    %v1125 = vsel %vm916, %v1078, 0
    %v1128 = vsel %vm916, %v1093, 0
    %v1131 = vsel %vm916, %v1108, 0
    %1133 = vmatpush.msra.mxu0 0.0
    %1134 = vmatpush.msra.mxu0 0.0
    %1135 = vmatpush.msra.mxu0 0.0
    %1136 = vmatpush.msra.mxu0 0.0
    %1137 = vmatpush.msra.mxu0 0.0
    %1138 = vmatpush.msra.mxu0 0.0
    %1139 = vmatpush.msra.mxu0 0.0
    %1140 = vmatpush.msra.mxu0 0.0
    %1141 = vmatpush.msra.mxu0 0.0
    %1142 = vmatpush.msra.mxu0 0.0
    %1143 = vmatpush.msra.mxu0 0.0
    %1144 = vmatpush.msra.mxu0 0.0
    %1145 = vmatpush.msra.mxu0 0.0
    %1146 = vmatpush.msra.mxu0 0.0
    %1147 = vmatpush.msra.mxu0 0.0
    %1148 = vmatpush.msra.mxu0 %v827
    %1149 = vmatmul.f32.gmra.mxu0 %v1110
    %v1150 = vpop.f32.mrf.mxu0
    %v1151 = vadd.f32 0.0, %v1150
    %1152 = vmatmul.f32.gmra.mxu0 %v1113
    %v1153 = vpop.f32.mrf.mxu0
    %v1154 = vadd.f32 0.0, %v1153
    %1155 = vmatmul.f32.gmra.mxu0 %v1116
    %v1156 = vpop.f32.mrf.mxu0
    %v1157 = vadd.f32 0.0, %v1156
    %1158 = vmatmul.f32.gmra.mxu0 %v1119
    %v1159 = vpop.f32.mrf.mxu0
    %v1160 = vadd.f32 0.0, %v1159
    %1161 = vmatmul.f32.gmra.mxu0 %v1122
    %v1162 = vpop.f32.mrf.mxu0
    %v1163 = vadd.f32 0.0, %v1162
    %1164 = vmatmul.f32.gmra.mxu0 %v1125
    %v1165 = vpop.f32.mrf.mxu0
    %v1166 = vadd.f32 0.0, %v1165
    %1167 = vmatmul.f32.gmra.mxu0 %v1128
    %v1168 = vpop.f32.mrf.mxu0
    %v1169 = vadd.f32 0.0, %v1168
    %1170 = vmatmul.f32.gmra.mxu0 %v1131
    %v1171 = vpop.f32.mrf.mxu0
    %v1172 = vadd.f32 0.0, %v1171
    %1173 = vdwg.mxu0
    %v1174 = vmul.f32 %v1151, %v723
    %v1175 = vmul.f32 %v1154, %v724
    %v1176 = vmul.f32 %v1157, %v725
    %v1177 = vmul.f32 %v1160, %v726
    %v1178 = vmul.f32 %v1163, %v727
    %v1179 = vmul.f32 %v1166, %v728
    %v1180 = vmul.f32 %v1169, %v729
    %v1181 = vmul.f32 %v1172, %v730
    %vm1182 = vcmask 523264
    %v1184 = vsel %vm1182, %v731, 0
    %1186 = vmatpush.msra.mxu0 0.0
    %1187 = vmatpush.msra.mxu0 0.0
    %1188 = vmatpush.msra.mxu0 0.0
    %1189 = vmatpush.msra.mxu0 0.0
    %1190 = vmatpush.msra.mxu0 0.0
    %1191 = vmatpush.msra.mxu0 0.0
    %1192 = vmatpush.msra.mxu0 0.0
    %1193 = vmatpush.msra.mxu0 0.0
    %1194 = vmatpush.msra.mxu0 %v1181
    %1195 = vmatpush.msra.mxu0 %v1180
    %1196 = vmatpush.msra.mxu0 %v1179
    %1197 = vmatpush.msra.mxu0 %v1178
    %1198 = vmatpush.msra.mxu0 %v1177
    %1199 = vmatpush.msra.mxu0 %v1176
    %1200 = vmatpush.msra.mxu0 %v1175
    %1201 = vmatpush.msra.mxu0 %v1174
    %1202 = vmatmul.f32.gmra.mxu0 %v1184
    %v1203 = vpop.f32.mrf.mxu0
    %v1204 = vadd.f32 0.0, %v1203
    %1205 = vdwg.mxu0
    %v1206 = vmul.f32 %v768, %v723
    %v1207 = vmul.f32 %v768, %v724
    %v1208 = vmul.f32 %v768, %v725
    %v1209 = vmul.f32 %v768, %v726
    %v1210 = vmul.f32 %v768, %v727
    %v1211 = vmul.f32 %v768, %v728
    %v1212 = vmul.f32 %v768, %v729
    %v1213 = vmul.f32 %v768, %v730
    %v1215 = vsel %vm740, %v1206, 0
    %v1218 = vsel %vm740, %v1207, 0
    %v1221 = vsel %vm740, %v1208, 0
    %v1224 = vsel %vm740, %v1209, 0
    %v1227 = vsel %vm740, %v1210, 0
    %v1230 = vsel %vm740, %v1211, 0
    %v1233 = vsel %vm740, %v1212, 0
    %v1236 = vsel %vm740, %v1213, 0
    %v1239 = vsel %vm740, %v799, 0
    %1241 = vmatpush.xpose.msra.mxu0 0.0
    %1242 = vmatpush.xpose.msra.mxu0 0.0
    %1243 = vmatpush.xpose.msra.mxu0 0.0
    %1244 = vmatpush.xpose.msra.mxu0 0.0
    %1245 = vmatpush.xpose.msra.mxu0 0.0
    %1246 = vmatpush.xpose.msra.mxu0 0.0
    %1247 = vmatpush.xpose.msra.mxu0 0.0
    %1248 = vmatpush.xpose.msra.mxu0 0.0
    %1249 = vmatpush.xpose.msra.mxu0 0.0
    %1250 = vmatpush.xpose.msra.mxu0 0.0
    %1251 = vmatpush.xpose.msra.mxu0 0.0
    %1252 = vmatpush.xpose.msra.mxu0 0.0
    %1253 = vmatpush.xpose.msra.mxu0 0.0
    %1254 = vmatpush.xpose.msra.mxu0 0.0
    %1255 = vmatpush.xpose.msra.mxu0 0.0
    %1256 = vmatpush.xpose.msra.mxu0 %v1239
    %1257 = vmatmul.f32.gmra.mxu0 %v1215
    %v1258 = vpop.f32.mrf.mxu0
    %v1259 = vadd.f32 0.0, %v1258
    %1260 = vmatmul.f32.gmra.mxu0 %v1218
    %v1261 = vpop.f32.mrf.mxu0
    %v1262 = vadd.f32 0.0, %v1261
    %1263 = vmatmul.f32.gmra.mxu0 %v1221
    %v1264 = vpop.f32.mrf.mxu0
    %v1265 = vadd.f32 0.0, %v1264
    %1266 = vmatmul.f32.gmra.mxu0 %v1224
    %v1267 = vpop.f32.mrf.mxu0
    %v1268 = vadd.f32 0.0, %v1267
    %1269 = vmatmul.f32.gmra.mxu0 %v1227
    %v1270 = vpop.f32.mrf.mxu0
    %v1271 = vadd.f32 0.0, %v1270
    %1272 = vmatmul.f32.gmra.mxu0 %v1230
    %v1273 = vpop.f32.mrf.mxu0
    %v1274 = vadd.f32 0.0, %v1273
    %1275 = vmatmul.f32.gmra.mxu0 %v1233
    %v1276 = vpop.f32.mrf.mxu0
    %v1277 = vadd.f32 0.0, %v1276
    %1278 = vmatmul.f32.gmra.mxu0 %v1236
    %v1279 = vpop.f32.mrf.mxu0
    %v1280 = vadd.f32 0.0, %v1279
    %1281 = vdwg.mxu0
    %v1282 = vmul.f32 %v1259, 0.5
    %v1283 = vmul.f32 %v1262, 0.5
    %v1284 = vmul.f32 %v1265, 0.5
    %v1285 = vmul.f32 %v1268, 0.5
    %v1286 = vmul.f32 %v1271, 0.5
    %v1287 = vmul.f32 %v1274, 0.5
    %v1288 = vmul.f32 %v1277, 0.5
    %v1289 = vmul.f32 %v1280, 0.5
    %v1290 = vsel %vm916, %v1282, -inf
    %1291 = vmax.xlane.f32.xlu0 %v1290
    %v1292 = vpop.xlane.xlu0 %1291
    %v1293 = vsel %vm916, %v1283, -inf
    %1294 = vmax.xlane.f32.xlu0 %v1293
    %v1295 = vpop.xlane.xlu0 %1294
    %v1296 = vsel %vm916, %v1284, -inf
    %1297 = vmax.xlane.f32.xlu0 %v1296
    %v1298 = vpop.xlane.xlu0 %1297
    %v1299 = vsel %vm916, %v1285, -inf
    %1300 = vmax.xlane.f32.xlu0 %v1299
    %v1301 = vpop.xlane.xlu0 %1300
    %v1302 = vsel %vm916, %v1286, -inf
    %1303 = vmax.xlane.f32.xlu0 %v1302
    %v1304 = vpop.xlane.xlu0 %1303
    %v1305 = vsel %vm916, %v1287, -inf
    %1306 = vmax.xlane.f32.xlu0 %v1305
    %v1307 = vpop.xlane.xlu0 %1306
    %v1308 = vsel %vm916, %v1288, -inf
    %1309 = vmax.xlane.f32.xlu0 %v1308
    %v1310 = vpop.xlane.xlu0 %1309
    %v1311 = vsel %vm916, %v1289, -inf
    %1312 = vmax.xlane.f32.xlu0 %v1311
    %v1313 = vpop.xlane.xlu0 %1312
    %v1314 = vsub.f32 %v1282, %v1292
    %v1315 = vsub.f32 %v1283, %v1295
    %v1316 = vsub.f32 %v1284, %v1298
    %v1317 = vsub.f32 %v1285, %v1301
    %v1318 = vsub.f32 %v1286, %v1304
    %v1319 = vsub.f32 %v1287, %v1307
    %v1320 = vsub.f32 %v1288, %v1310
    %v1321 = vsub.f32 %v1289, %v1313
    %v1322 = vmul.f32 %v1314, 1.442695
    %v1323 = vpow.pop %v1322
    %v1324 = vmul.f32 %v1315, 1.442695
    %v1325 = vpow.pop %v1324
    %v1326 = vmul.f32 %v1316, 1.442695
    %v1327 = vpow.pop %v1326
    %v1328 = vmul.f32 %v1317, 1.442695
    %v1329 = vpow.pop %v1328
    %v1330 = vmul.f32 %v1318, 1.442695
    %v1331 = vpow.pop %v1330
    %v1332 = vmul.f32 %v1319, 1.442695
    %v1333 = vpow.pop %v1332
    %v1334 = vmul.f32 %v1320, 1.442695
    %v1335 = vpow.pop %v1334
    %v1336 = vmul.f32 %v1321, 1.442695
    %v1337 = vpow.pop %v1336
    %v1338 = vsel %vm916, %v1323, 0.0
    %1339 = vadd.xlane.f32.xlu0 %v1338
    %v1340 = vpop.xlane.xlu0 %1339
    %v1341 = vsel %vm916, %v1325, 0.0
    %1342 = vadd.xlane.f32.xlu0 %v1341
    %v1343 = vpop.xlane.xlu0 %1342
    %v1344 = vsel %vm916, %v1327, 0.0
    %1345 = vadd.xlane.f32.xlu0 %v1344
    %v1346 = vpop.xlane.xlu0 %1345
    %v1347 = vsel %vm916, %v1329, 0.0
    %1348 = vadd.xlane.f32.xlu0 %v1347
    %v1349 = vpop.xlane.xlu0 %1348
    %v1350 = vsel %vm916, %v1331, 0.0
    %1351 = vadd.xlane.f32.xlu0 %v1350
    %v1352 = vpop.xlane.xlu0 %1351
    %v1353 = vsel %vm916, %v1333, 0.0
    %1354 = vadd.xlane.f32.xlu0 %v1353
    %v1355 = vpop.xlane.xlu0 %1354
    %v1356 = vsel %vm916, %v1335, 0.0
    %1357 = vadd.xlane.f32.xlu0 %v1356
    %v1358 = vpop.xlane.xlu0 %1357
    %v1359 = vsel %vm916, %v1337, 0.0
    %1360 = vadd.xlane.f32.xlu0 %v1359
    %v1361 = vpop.xlane.xlu0 %1360
    %v1362 = vrcp.pop %v1340
    %v1363 = vmul.f32 %v1340, %v1362
    %v1364 = vsub.f32 1.0, %v1363
    %v1365 = vmul.f32 %v1362, %v1364
    %v1366 = vadd.f32 %v1362, %v1365
    %vm1367 = vweird.f32 %v1340
    %vm1368 = vweird.f32 %v1362
    %vm1369 = vmor %vm1367, %vm1368
    %v1370 = vsel %vm1369, %v1362, %v1366
    %v1371 = vand.u32 2147483647, %v1340
    %vm1372 = vcmp.eq.f32.partialorder %v1371, 8.507059e+37
    %v1373 = vand.u32 %v1340, 2147483648
    %v1374 = vor.u32 1.1754944e-38, %v1373
    %v1375 = vsel %vm1372, %v1374, %v1370
    %v1376 = vmul.f32 %v1323, %v1375
    %v1377 = vrcp.pop %v1343
    %v1378 = vmul.f32 %v1343, %v1377
    %v1379 = vsub.f32 1.0, %v1378
    %v1380 = vmul.f32 %v1377, %v1379
    %v1381 = vadd.f32 %v1377, %v1380
    %vm1382 = vweird.f32 %v1343
    %vm1383 = vweird.f32 %v1377
    %vm1384 = vmor %vm1382, %vm1383
    %v1385 = vsel %vm1384, %v1377, %v1381
    %v1386 = vand.u32 2147483647, %v1343
    %vm1387 = vcmp.eq.f32.partialorder %v1386, 8.507059e+37
    %v1388 = vand.u32 %v1343, 2147483648
    %v1389 = vor.u32 1.1754944e-38, %v1388
    %v1390 = vsel %vm1387, %v1389, %v1385
    %v1391 = vmul.f32 %v1325, %v1390
    %v1392 = vrcp.pop %v1346
    %v1393 = vmul.f32 %v1346, %v1392
    %v1394 = vsub.f32 1.0, %v1393
    %v1395 = vmul.f32 %v1392, %v1394
    %v1396 = vadd.f32 %v1392, %v1395
    %vm1397 = vweird.f32 %v1346
    %vm1398 = vweird.f32 %v1392
    %vm1399 = vmor %vm1397, %vm1398
    %v1400 = vsel %vm1399, %v1392, %v1396
    %v1401 = vand.u32 2147483647, %v1346
    %vm1402 = vcmp.eq.f32.partialorder %v1401, 8.507059e+37
    %v1403 = vand.u32 %v1346, 2147483648
    %v1404 = vor.u32 1.1754944e-38, %v1403
    %v1405 = vsel %vm1402, %v1404, %v1400
    %v1406 = vmul.f32 %v1327, %v1405
    %v1407 = vrcp.pop %v1349
    %v1408 = vmul.f32 %v1349, %v1407
    %v1409 = vsub.f32 1.0, %v1408
    %v1410 = vmul.f32 %v1407, %v1409
    %v1411 = vadd.f32 %v1407, %v1410
    %vm1412 = vweird.f32 %v1349
    %vm1413 = vweird.f32 %v1407
    %vm1414 = vmor %vm1412, %vm1413
    %v1415 = vsel %vm1414, %v1407, %v1411
    %v1416 = vand.u32 2147483647, %v1349
    %vm1417 = vcmp.eq.f32.partialorder %v1416, 8.507059e+37
    %v1418 = vand.u32 %v1349, 2147483648
    %v1419 = vor.u32 1.1754944e-38, %v1418
    %v1420 = vsel %vm1417, %v1419, %v1415
    %v1421 = vmul.f32 %v1329, %v1420
    %v1422 = vrcp.pop %v1352
    %v1423 = vmul.f32 %v1352, %v1422
    %v1424 = vsub.f32 1.0, %v1423
    %v1425 = vmul.f32 %v1422, %v1424
    %v1426 = vadd.f32 %v1422, %v1425
    %vm1427 = vweird.f32 %v1352
    %vm1428 = vweird.f32 %v1422
    %vm1429 = vmor %vm1427, %vm1428
    %v1430 = vsel %vm1429, %v1422, %v1426
    %v1431 = vand.u32 2147483647, %v1352
    %vm1432 = vcmp.eq.f32.partialorder %v1431, 8.507059e+37
    %v1433 = vand.u32 %v1352, 2147483648
    %v1434 = vor.u32 1.1754944e-38, %v1433
    %v1435 = vsel %vm1432, %v1434, %v1430
    %v1436 = vmul.f32 %v1331, %v1435
    %v1437 = vrcp.pop %v1355
    %v1438 = vmul.f32 %v1355, %v1437
    %v1439 = vsub.f32 1.0, %v1438
    %v1440 = vmul.f32 %v1437, %v1439
    %v1441 = vadd.f32 %v1437, %v1440
    %vm1442 = vweird.f32 %v1355
    %vm1443 = vweird.f32 %v1437
    %vm1444 = vmor %vm1442, %vm1443
    %v1445 = vsel %vm1444, %v1437, %v1441
    %v1446 = vand.u32 2147483647, %v1355
    %vm1447 = vcmp.eq.f32.partialorder %v1446, 8.507059e+37
    %v1448 = vand.u32 %v1355, 2147483648
    %v1449 = vor.u32 1.1754944e-38, %v1448
    %v1450 = vsel %vm1447, %v1449, %v1445
    %v1451 = vmul.f32 %v1333, %v1450
    %v1452 = vrcp.pop %v1358
    %v1453 = vmul.f32 %v1358, %v1452
    %v1454 = vsub.f32 1.0, %v1453
    %v1455 = vmul.f32 %v1452, %v1454
    %v1456 = vadd.f32 %v1452, %v1455
    %vm1457 = vweird.f32 %v1358
    %vm1458 = vweird.f32 %v1452
    %vm1459 = vmor %vm1457, %vm1458
    %v1460 = vsel %vm1459, %v1452, %v1456
    %v1461 = vand.u32 2147483647, %v1358
    %vm1462 = vcmp.eq.f32.partialorder %v1461, 8.507059e+37
    %v1463 = vand.u32 %v1358, 2147483648
    %v1464 = vor.u32 1.1754944e-38, %v1463
    %v1465 = vsel %vm1462, %v1464, %v1460
    %v1466 = vmul.f32 %v1335, %v1465
    %v1467 = vrcp.pop %v1361
    %v1468 = vmul.f32 %v1361, %v1467
    %v1469 = vsub.f32 1.0, %v1468
    %v1470 = vmul.f32 %v1467, %v1469
    %v1471 = vadd.f32 %v1467, %v1470
    %vm1472 = vweird.f32 %v1361
    %vm1473 = vweird.f32 %v1467
    %vm1474 = vmor %vm1472, %vm1473
    %v1475 = vsel %vm1474, %v1467, %v1471
    %v1476 = vand.u32 2147483647, %v1361
    %vm1477 = vcmp.eq.f32.partialorder %v1476, 8.507059e+37
    %v1478 = vand.u32 %v1361, 2147483648
    %v1479 = vor.u32 1.1754944e-38, %v1478
    %v1480 = vsel %vm1477, %v1479, %v1475
    %v1481 = vmul.f32 %v1337, %v1480
    %v1483 = vsel %vm916, %v1376, 0
    %v1486 = vsel %vm916, %v1391, 0
    %v1489 = vsel %vm916, %v1406, 0
    %v1492 = vsel %vm916, %v1421, 0
    %v1495 = vsel %vm916, %v1436, 0
    %v1498 = vsel %vm916, %v1451, 0
    %v1501 = vsel %vm916, %v1466, 0
    %v1504 = vsel %vm916, %v1481, 0
    %1506 = vmatpush.msra.mxu0 0.0
    %1507 = vmatpush.msra.mxu0 0.0
    %1508 = vmatpush.msra.mxu0 0.0
    %1509 = vmatpush.msra.mxu0 0.0
    %1510 = vmatpush.msra.mxu0 0.0
    %1511 = vmatpush.msra.mxu0 0.0
    %1512 = vmatpush.msra.mxu0 0.0
    %1513 = vmatpush.msra.mxu0 0.0
    %1514 = vmatpush.msra.mxu0 0.0
    %1515 = vmatpush.msra.mxu0 0.0
    %1516 = vmatpush.msra.mxu0 0.0
    %1517 = vmatpush.msra.mxu0 0.0
    %1518 = vmatpush.msra.mxu0 0.0
    %1519 = vmatpush.msra.mxu0 0.0
    %1520 = vmatpush.msra.mxu0 0.0
    %1521 = vmatpush.msra.mxu0 %v830
    %1522 = vmatmul.f32.gmra.mxu0 %v1483
    %v1523 = vpop.f32.mrf.mxu0
    %v1524 = vadd.f32 0.0, %v1523
    %1525 = vmatmul.f32.gmra.mxu0 %v1486
    %v1526 = vpop.f32.mrf.mxu0
    %v1527 = vadd.f32 0.0, %v1526
    %1528 = vmatmul.f32.gmra.mxu0 %v1489
    %v1529 = vpop.f32.mrf.mxu0
    %v1530 = vadd.f32 0.0, %v1529
    %1531 = vmatmul.f32.gmra.mxu0 %v1492
    %v1532 = vpop.f32.mrf.mxu0
    %v1533 = vadd.f32 0.0, %v1532
    %1534 = vmatmul.f32.gmra.mxu0 %v1495
    %v1535 = vpop.f32.mrf.mxu0
    %v1536 = vadd.f32 0.0, %v1535
    %1537 = vmatmul.f32.gmra.mxu0 %v1498
    %v1538 = vpop.f32.mrf.mxu0
    %v1539 = vadd.f32 0.0, %v1538
    %1540 = vmatmul.f32.gmra.mxu0 %v1501
    %v1541 = vpop.f32.mrf.mxu0
    %v1542 = vadd.f32 0.0, %v1541
    %1543 = vmatmul.f32.gmra.mxu0 %v1504
    %v1544 = vpop.f32.mrf.mxu0
    %v1545 = vadd.f32 0.0, %v1544
    %1546 = vdwg.mxu0
    %v1547 = vmul.f32 %v1524, %v723
    %v1548 = vmul.f32 %v1527, %v724
    %v1549 = vmul.f32 %v1530, %v725
    %v1550 = vmul.f32 %v1533, %v726
    %v1551 = vmul.f32 %v1536, %v727
    %v1552 = vmul.f32 %v1539, %v728
    %v1553 = vmul.f32 %v1542, %v729
    %v1554 = vmul.f32 %v1545, %v730
    %1555 = vmatpush.msra.mxu0 0.0
    %1556 = vmatpush.msra.mxu0 0.0
    %1557 = vmatpush.msra.mxu0 0.0
    %1558 = vmatpush.msra.mxu0 0.0
    %1559 = vmatpush.msra.mxu0 0.0
    %1560 = vmatpush.msra.mxu0 0.0
    %1561 = vmatpush.msra.mxu0 0.0
    %1562 = vmatpush.msra.mxu0 0.0
    %1563 = vmatpush.msra.mxu0 %v1554
    %1564 = vmatpush.msra.mxu0 %v1553
    %1565 = vmatpush.msra.mxu0 %v1552
    %1566 = vmatpush.msra.mxu0 %v1551
    %1567 = vmatpush.msra.mxu0 %v1550
    %1568 = vmatpush.msra.mxu0 %v1549
    %1569 = vmatpush.msra.mxu0 %v1548
    %1570 = vmatpush.msra.mxu0 %v1547
    %1571 = vmatmul.f32.gmra.mxu0 %v1184
    %v1572 = vpop.f32.mrf.mxu0
    %v1573 = vadd.f32 0.0, %v1572
    %1574 = vdwg.mxu0
    %v1575 = vld [vmem:[%s55] sm:$0xff]
    %v1576 = vld [vmem:[%s55 + $0x8] sm:$0xff]
    %v1577 = vld [vmem:[%s55 + $0x10] sm:$0xff]
    %v1578 = vld [vmem:[%s55 + $0x18] sm:$0xff]
    %v1579 = vld [vmem:[%s57] sm:$0x1]
    %v1581 = vperm.slane %v1579, 0
    %v1584 = vsel %vm740, %v1204, 0
    %v1587 = vsel %vm740, %v1573, 0
    %1589 = vmatpush.msra.mxu0 0.0
    %1590 = vmatpush.msra.mxu0 0.0
    %1591 = vmatpush.msra.mxu0 0.0
    %1592 = vmatpush.msra.mxu0 0.0
    %1593 = vmatpush.msra.mxu0 0.0
    %1594 = vmatpush.msra.mxu0 0.0
    %1595 = vmatpush.msra.mxu0 0.0
    %1596 = vmatpush.msra.mxu0 0.0
    %1597 = vmatpush.msra.mxu0 0.0
    %1598 = vmatpush.msra.mxu0 0.0
    %1599 = vmatpush.msra.mxu0 0.0
    %1600 = vmatpush.msra.mxu0 0.0
    %1601 = vmatpush.msra.mxu0 %v1578
    %1602 = vmatpush.msra.mxu0 %v1577
    %1603 = vmatpush.msra.mxu0 %v1576
    %1604 = vmatpush.msra.mxu0 %v1575
    %1605 = vmatmul.f32.gmra.mxu0 %v1584
    %v1606 = vpop.f32.mrf.mxu0
    %v1607 = vadd.f32 %v1581, %v1606
    %1608 = vmatmul.f32.gmra.mxu0 %v1587
    %v1609 = vpop.f32.mrf.mxu0
    %v1610 = vadd.f32 %v1581, %v1609
    %1611 = vdwg.mxu0
    %v1612 = vadd.f32 %v624, %v1607
    %v1613 = vadd.f32 %v721, %v1610
    %v1614 = vld [vmem:[%s67] sm:$0x1]
    %v1615 = vld [vmem:[%s69] sm:$0x1]
    %v1616 = vsel %vm740, %v1612, 0.0
    %1617 = vadd.xlane.f32.xlu0 %v1616
    %v1618 = vpop.xlane.xlu0 %1617
    %v1619 = vsel %vm740, %v1613, 0.0
    %1620 = vadd.xlane.f32.xlu0 %v1619
    %v1621 = vpop.xlane.xlu0 %1620
    %v1622 = vrcp.pop 32.0
    %v1623 = vmul.f32 32.0, %v1622
    %v1624 = vsub.f32 1.0, %v1623
    %v1625 = vmul.f32 %v1622, %v1624
    %v1626 = vadd.f32 %v1622, %v1625
    %vm1627 = vweird.f32 %v1622
    %v1628 = vsel %vm1627, %v1622, %v1626
    %v1629 = vmul.f32 %v1618, %v1628
    %v1630 = vmul.f32 %v1621, %v1628
    %v1631 = vsub.f32 %v1612, %v1629
    %v1632 = vsub.f32 %v1613, %v1630
    %v1633 = vmul.f32 %v1631, %v1631
    %v1634 = vmul.f32 %v1632, %v1632
    %v1635 = vsel %vm740, %v1633, 0.0
    %1636 = vadd.xlane.f32.xlu0 %v1635
    %v1637 = vpop.xlane.xlu0 %1636
    %v1638 = vsel %vm740, %v1634, 0.0
    %1639 = vadd.xlane.f32.xlu0 %v1638
    %v1640 = vpop.xlane.xlu0 %1639
    %v1641 = vmul.f32 %v1637, %v1628
    %v1642 = vmul.f32 %v1640, %v1628
    %v1643 = vadd.f32 %v1641, 1e-05
    %v1644 = vadd.f32 %v1642, 1e-05
    %v1645 = vrsqrt.pop %v1643
    %v1646 = vmul.f32 %v1645, %v1643
    %v1647 = vmul.f32 %v1646, %v1645
    %v1648 = vmul.f32 0.5, %v1647
    %v1649 = vsub.f32 1.5, %v1648
    %v1650 = vmul.f32 %v1645, %v1649
    %vm1651 = vweird.f32 %v1643
    %vm1652 = vweird.f32 %v1645
    %vm1653 = vmor %vm1651, %vm1652
    %v1654 = vsel %vm1653, %v1645, %v1650
    %v1655 = vrsqrt.pop %v1644
    %v1656 = vmul.f32 %v1655, %v1644
    %v1657 = vmul.f32 %v1656, %v1655
    %v1658 = vmul.f32 0.5, %v1657
    %v1659 = vsub.f32 1.5, %v1658
    %v1660 = vmul.f32 %v1655, %v1659
    %vm1661 = vweird.f32 %v1644
    %vm1662 = vweird.f32 %v1655
    %vm1663 = vmor %vm1661, %vm1662
    %v1664 = vsel %vm1663, %v1655, %v1660
    %v1665 = vmul.f32 %v1631, %v1654
    %v1666 = vmul.f32 %v1632, %v1664
    %v1668 = vperm.slane %v1614, 0
    %v1670 = vmul.f32 %v1665, %v1668
    %v1671 = vmul.f32 %v1666, %v1668
    %v1673 = vperm.slane %v1615, 0
    %v1675 = vadd.f32 %v1670, %v1673
    %v1676 = vadd.f32 %v1671, %v1673
    %v1677 = vld [vmem:[%s59] sm:$0xff]
    %v1678 = vld [vmem:[%s59 + $0x8] sm:$0xff]
    %v1679 = vld [vmem:[%s59 + $0x10] sm:$0xff]
    %v1680 = vld [vmem:[%s59 + $0x18] sm:$0xff]
    %v1681 = vld [vmem:[%s59 + $0x20] sm:$0xff]
    %v1682 = vld [vmem:[%s59 + $0x28] sm:$0xff]
    %v1683 = vld [vmem:[%s59 + $0x30] sm:$0xff]
    %v1684 = vld [vmem:[%s59 + $0x38] sm:$0xff]
    %v1685 = vld [vmem:[%s59 + $0x40] sm:$0xff]
    %v1686 = vld [vmem:[%s59 + $0x48] sm:$0xff]
    %v1687 = vld [vmem:[%s59 + $0x50] sm:$0xff]
    %v1688 = vld [vmem:[%s59 + $0x58] sm:$0xff]
    %v1689 = vld [vmem:[%s59 + $0x60] sm:$0xff]
    %v1690 = vld [vmem:[%s59 + $0x68] sm:$0xff]
    %v1691 = vld [vmem:[%s59 + $0x70] sm:$0xff]
    %v1692 = vld [vmem:[%s59 + $0x78] sm:$0xff]
    %v1693 = vld [vmem:[%s59 + $0x80] sm:$0xff]
    %v1694 = vld [vmem:[%s59 + $0x88] sm:$0xff]
    %v1695 = vld [vmem:[%s59 + $0x90] sm:$0xff]
    %v1696 = vld [vmem:[%s59 + $0x98] sm:$0xff]
    %v1697 = vld [vmem:[%s59 + $0xa0] sm:$0xff]
    %v1698 = vld [vmem:[%s59 + $0xa8] sm:$0xff]
    %v1699 = vld [vmem:[%s59 + $0xb0] sm:$0xff]
    %v1700 = vld [vmem:[%s59 + $0xb8] sm:$0xff]
    %v1701 = vld [vmem:[%s59 + $0xc0] sm:$0xff]
    %v1702 = vld [vmem:[%s59 + $0xc8] sm:$0xff]
    %v1703 = vld [vmem:[%s59 + $0xd0] sm:$0xff]
    %v1704 = vld [vmem:[%s59 + $0xd8] sm:$0xff]
    %v1705 = vld [vmem:[%s59 + $0xe0] sm:$0xff]
    %v1706 = vld [vmem:[%s59 + $0xe8] sm:$0xff]
    %v1707 = vld [vmem:[%s59 + $0xf0] sm:$0xff]
    %v1708 = vld [vmem:[%s59 + $0xf8] sm:$0xff]
    %v1709 = vld [vmem:[%s59 + $0x100] sm:$0xff]
    %v1710 = vld [vmem:[%s59 + $0x108] sm:$0xff]
    %v1711 = vld [vmem:[%s59 + $0x110] sm:$0xff]
    %v1712 = vld [vmem:[%s59 + $0x118] sm:$0xff]
    %v1713 = vld [vmem:[%s59 + $0x120] sm:$0xff]
    %v1714 = vld [vmem:[%s59 + $0x128] sm:$0xff]
    %v1715 = vld [vmem:[%s59 + $0x130] sm:$0xff]
    %v1716 = vld [vmem:[%s59 + $0x138] sm:$0xff]
    %v1717 = vld [vmem:[%s59 + $0x140] sm:$0xff]
    %v1718 = vld [vmem:[%s59 + $0x148] sm:$0xff]
    %v1719 = vld [vmem:[%s59 + $0x150] sm:$0xff]
    %v1720 = vld [vmem:[%s59 + $0x158] sm:$0xff]
    %v1721 = vld [vmem:[%s59 + $0x160] sm:$0xff]
    %v1722 = vld [vmem:[%s59 + $0x168] sm:$0xff]
    %v1723 = vld [vmem:[%s59 + $0x170] sm:$0xff]
    %v1724 = vld [vmem:[%s59 + $0x178] sm:$0xff]
    %v1725 = vld [vmem:[%s59 + $0x180] sm:$0xff]
    %v1726 = vld [vmem:[%s59 + $0x188] sm:$0xff]
    %v1727 = vld [vmem:[%s59 + $0x190] sm:$0xff]
    %v1728 = vld [vmem:[%s59 + $0x198] sm:$0xff]
    %v1729 = vld [vmem:[%s59 + $0x1a0] sm:$0xff]
    %v1730 = vld [vmem:[%s59 + $0x1a8] sm:$0xff]
    %v1731 = vld [vmem:[%s59 + $0x1b0] sm:$0xff]
    %v1732 = vld [vmem:[%s59 + $0x1b8] sm:$0xff]
    %v1733 = vld [vmem:[%s59 + $0x1c0] sm:$0xff]
    %v1734 = vld [vmem:[%s59 + $0x1c8] sm:$0xff]
    %v1735 = vld [vmem:[%s59 + $0x1d0] sm:$0xff]
    %v1736 = vld [vmem:[%s59 + $0x1d8] sm:$0xff]
    %v1737 = vld [vmem:[%s59 + $0x1e0] sm:$0xff]
    %v1738 = vld [vmem:[%s59 + $0x1e8] sm:$0xff]
    %v1739 = vld [vmem:[%s59 + $0x1f0] sm:$0xff]
    %v1740 = vld [vmem:[%s59 + $0x1f8] sm:$0xff]
    %v1741 = vld [vmem:[%s61] sm:$0xff]
    %v1742 = vld [vmem:[%s61 + $0x8] sm:$0xff]
    %v1745 = vperm.slane %v1741, 0
    %v1746 = vperm.slane %v1741, 1
    %v1747 = vperm.slane %v1741, 2
    %v1748 = vperm.slane %v1741, 3
    %v1749 = vperm.slane %v1741, 4
    %v1750 = vperm.slane %v1741, 5
    %v1751 = vperm.slane %v1741, 6
    %v1752 = vperm.slane %v1741, 7
    %v1753 = vperm.slane %v1742, 0
    %v1754 = vperm.slane %v1742, 1
    %v1755 = vperm.slane %v1742, 2
    %v1756 = vperm.slane %v1742, 3
    %v1757 = vperm.slane %v1742, 4
    %v1758 = vperm.slane %v1742, 5
    %v1759 = vperm.slane %v1742, 6
    %v1760 = vperm.slane %v1742, 7
    %v1778 = vsel %vm740, %v1675, 0
    %v1781 = vsel %vm740, %v1676, 0
    %1783 = vmatpush.msra.mxu0 0.0
    %1784 = vmatpush.msra.mxu0 0.0
    %1785 = vmatpush.msra.mxu0 0.0
    %1786 = vmatpush.msra.mxu0 0.0
    %1787 = vmatpush.msra.mxu0 0.0
    %1788 = vmatpush.msra.mxu0 0.0
    %1789 = vmatpush.msra.mxu0 0.0
    %1790 = vmatpush.msra.mxu0 0.0
    %1791 = vmatpush.msra.mxu0 0.0
    %1792 = vmatpush.msra.mxu0 0.0
    %1793 = vmatpush.msra.mxu0 0.0
    %1794 = vmatpush.msra.mxu0 0.0
    %1795 = vmatpush.msra.mxu0 %v1725
    %1796 = vmatpush.msra.mxu0 %v1709
    %1797 = vmatpush.msra.mxu0 %v1693
    %1798 = vmatpush.msra.mxu0 %v1677
    %1799 = vmatmul.f32.gmra.mxu0 %v1778
    %v1800 = vpop.f32.mrf.mxu0
    %v1801 = vadd.f32 %v1745, %v1800
    %1802 = vmatmul.f32.gmra.mxu0 %v1781
    %v1803 = vpop.f32.mrf.mxu0
    %v1804 = vadd.f32 %v1745, %v1803
    %1805 = vdwg.mxu0
    %1806 = vmatpush.msra.mxu0 0.0
    %1807 = vmatpush.msra.mxu0 0.0
    %1808 = vmatpush.msra.mxu0 0.0
    %1809 = vmatpush.msra.mxu0 0.0
    %1810 = vmatpush.msra.mxu0 0.0
    %1811 = vmatpush.msra.mxu0 0.0
    %1812 = vmatpush.msra.mxu0 0.0
    %1813 = vmatpush.msra.mxu0 0.0
    %1814 = vmatpush.msra.mxu0 0.0
    %1815 = vmatpush.msra.mxu0 0.0
    %1816 = vmatpush.msra.mxu0 0.0
    %1817 = vmatpush.msra.mxu0 0.0
    %1818 = vmatpush.msra.mxu0 %v1726
    %1819 = vmatpush.msra.mxu0 %v1710
    %1820 = vmatpush.msra.mxu0 %v1694
    %1821 = vmatpush.msra.mxu0 %v1678
    %1822 = vmatmul.f32.gmra.mxu0 %v1778
    %v1823 = vpop.f32.mrf.mxu0
    %v1824 = vadd.f32 %v1746, %v1823
    %1825 = vmatmul.f32.gmra.mxu0 %v1781
    %v1826 = vpop.f32.mrf.mxu0
    %v1827 = vadd.f32 %v1746, %v1826
    %1828 = vdwg.mxu0
    %1829 = vmatpush.msra.mxu0 0.0
    %1830 = vmatpush.msra.mxu0 0.0
    %1831 = vmatpush.msra.mxu0 0.0
    %1832 = vmatpush.msra.mxu0 0.0
    %1833 = vmatpush.msra.mxu0 0.0
    %1834 = vmatpush.msra.mxu0 0.0
    %1835 = vmatpush.msra.mxu0 0.0
    %1836 = vmatpush.msra.mxu0 0.0
    %1837 = vmatpush.msra.mxu0 0.0
    %1838 = vmatpush.msra.mxu0 0.0
    %1839 = vmatpush.msra.mxu0 0.0
    %1840 = vmatpush.msra.mxu0 0.0
    %1841 = vmatpush.msra.mxu0 %v1727
    %1842 = vmatpush.msra.mxu0 %v1711
    %1843 = vmatpush.msra.mxu0 %v1695
    %1844 = vmatpush.msra.mxu0 %v1679
    %1845 = vmatmul.f32.gmra.mxu0 %v1778
    %v1846 = vpop.f32.mrf.mxu0
    %v1847 = vadd.f32 %v1747, %v1846
    %1848 = vmatmul.f32.gmra.mxu0 %v1781
    %v1849 = vpop.f32.mrf.mxu0
    %v1850 = vadd.f32 %v1747, %v1849
    %1851 = vdwg.mxu0
    %1852 = vmatpush.msra.mxu0 0.0
    %1853 = vmatpush.msra.mxu0 0.0
    %1854 = vmatpush.msra.mxu0 0.0
    %1855 = vmatpush.msra.mxu0 0.0
    %1856 = vmatpush.msra.mxu0 0.0
    %1857 = vmatpush.msra.mxu0 0.0
    %1858 = vmatpush.msra.mxu0 0.0
    %1859 = vmatpush.msra.mxu0 0.0
    %1860 = vmatpush.msra.mxu0 0.0
    %1861 = vmatpush.msra.mxu0 0.0
    %1862 = vmatpush.msra.mxu0 0.0
    %1863 = vmatpush.msra.mxu0 0.0
    %1864 = vmatpush.msra.mxu0 %v1728
    %1865 = vmatpush.msra.mxu0 %v1712
    %1866 = vmatpush.msra.mxu0 %v1696
    %1867 = vmatpush.msra.mxu0 %v1680
    %1868 = vmatmul.f32.gmra.mxu0 %v1778
    %v1869 = vpop.f32.mrf.mxu0
    %v1870 = vadd.f32 %v1748, %v1869
    %1871 = vmatmul.f32.gmra.mxu0 %v1781
    %v1872 = vpop.f32.mrf.mxu0
    %v1873 = vadd.f32 %v1748, %v1872
    %1874 = vdwg.mxu0
    %1875 = vmatpush.msra.mxu0 0.0
    %1876 = vmatpush.msra.mxu0 0.0
    %1877 = vmatpush.msra.mxu0 0.0
    %1878 = vmatpush.msra.mxu0 0.0
    %1879 = vmatpush.msra.mxu0 0.0
    %1880 = vmatpush.msra.mxu0 0.0
    %1881 = vmatpush.msra.mxu0 0.0
    %1882 = vmatpush.msra.mxu0 0.0
    %1883 = vmatpush.msra.mxu0 0.0
    %1884 = vmatpush.msra.mxu0 0.0
    %1885 = vmatpush.msra.mxu0 0.0
    %1886 = vmatpush.msra.mxu0 0.0
    %1887 = vmatpush.msra.mxu0 %v1729
    %1888 = vmatpush.msra.mxu0 %v1713
    %1889 = vmatpush.msra.mxu0 %v1697
    %1890 = vmatpush.msra.mxu0 %v1681
    %1891 = vmatmul.f32.gmra.mxu0 %v1778
    %v1892 = vpop.f32.mrf.mxu0
    %v1893 = vadd.f32 %v1749, %v1892
    %1894 = vmatmul.f32.gmra.mxu0 %v1781
    %v1895 = vpop.f32.mrf.mxu0
    %v1896 = vadd.f32 %v1749, %v1895
    %1897 = vdwg.mxu0
    %1898 = vmatpush.msra.mxu0 0.0
    %1899 = vmatpush.msra.mxu0 0.0
    %1900 = vmatpush.msra.mxu0 0.0
    %1901 = vmatpush.msra.mxu0 0.0
    %1902 = vmatpush.msra.mxu0 0.0
    %1903 = vmatpush.msra.mxu0 0.0
    %1904 = vmatpush.msra.mxu0 0.0
    %1905 = vmatpush.msra.mxu0 0.0
    %1906 = vmatpush.msra.mxu0 0.0
    %1907 = vmatpush.msra.mxu0 0.0
    %1908 = vmatpush.msra.mxu0 0.0
    %1909 = vmatpush.msra.mxu0 0.0
    %1910 = vmatpush.msra.mxu0 %v1730
    %1911 = vmatpush.msra.mxu0 %v1714
    %1912 = vmatpush.msra.mxu0 %v1698
    %1913 = vmatpush.msra.mxu0 %v1682
    %1914 = vmatmul.f32.gmra.mxu0 %v1778
    %v1915 = vpop.f32.mrf.mxu0
    %v1916 = vadd.f32 %v1750, %v1915
    %1917 = vmatmul.f32.gmra.mxu0 %v1781
    %v1918 = vpop.f32.mrf.mxu0
    %v1919 = vadd.f32 %v1750, %v1918
    %1920 = vdwg.mxu0
    %1921 = vmatpush.msra.mxu0 0.0
    %1922 = vmatpush.msra.mxu0 0.0
    %1923 = vmatpush.msra.mxu0 0.0
    %1924 = vmatpush.msra.mxu0 0.0
    %1925 = vmatpush.msra.mxu0 0.0
    %1926 = vmatpush.msra.mxu0 0.0
    %1927 = vmatpush.msra.mxu0 0.0
    %1928 = vmatpush.msra.mxu0 0.0
    %1929 = vmatpush.msra.mxu0 0.0
    %1930 = vmatpush.msra.mxu0 0.0
    %1931 = vmatpush.msra.mxu0 0.0
    %1932 = vmatpush.msra.mxu0 0.0
    %1933 = vmatpush.msra.mxu0 %v1731
    %1934 = vmatpush.msra.mxu0 %v1715
    %1935 = vmatpush.msra.mxu0 %v1699
    %1936 = vmatpush.msra.mxu0 %v1683
    %1937 = vmatmul.f32.gmra.mxu0 %v1778
    %v1938 = vpop.f32.mrf.mxu0
    %v1939 = vadd.f32 %v1751, %v1938
    %1940 = vmatmul.f32.gmra.mxu0 %v1781
    %v1941 = vpop.f32.mrf.mxu0
    %v1942 = vadd.f32 %v1751, %v1941
    %1943 = vdwg.mxu0
    %1944 = vmatpush.msra.mxu0 0.0
    %1945 = vmatpush.msra.mxu0 0.0
    %1946 = vmatpush.msra.mxu0 0.0
    %1947 = vmatpush.msra.mxu0 0.0
    %1948 = vmatpush.msra.mxu0 0.0
    %1949 = vmatpush.msra.mxu0 0.0
    %1950 = vmatpush.msra.mxu0 0.0
    %1951 = vmatpush.msra.mxu0 0.0
    %1952 = vmatpush.msra.mxu0 0.0
    %1953 = vmatpush.msra.mxu0 0.0
    %1954 = vmatpush.msra.mxu0 0.0
    %1955 = vmatpush.msra.mxu0 0.0
    %1956 = vmatpush.msra.mxu0 %v1732
    %1957 = vmatpush.msra.mxu0 %v1716
    %1958 = vmatpush.msra.mxu0 %v1700
    %1959 = vmatpush.msra.mxu0 %v1684
    %1960 = vmatmul.f32.gmra.mxu0 %v1778
    %v1961 = vpop.f32.mrf.mxu0
    %v1962 = vadd.f32 %v1752, %v1961
    %1963 = vmatmul.f32.gmra.mxu0 %v1781
    %v1964 = vpop.f32.mrf.mxu0
    %v1965 = vadd.f32 %v1752, %v1964
    %1966 = vdwg.mxu0
    %1967 = vmatpush.msra.mxu0 0.0
    %1968 = vmatpush.msra.mxu0 0.0
    %1969 = vmatpush.msra.mxu0 0.0
    %1970 = vmatpush.msra.mxu0 0.0
    %1971 = vmatpush.msra.mxu0 0.0
    %1972 = vmatpush.msra.mxu0 0.0
    %1973 = vmatpush.msra.mxu0 0.0
    %1974 = vmatpush.msra.mxu0 0.0
    %1975 = vmatpush.msra.mxu0 0.0
    %1976 = vmatpush.msra.mxu0 0.0
    %1977 = vmatpush.msra.mxu0 0.0
    %1978 = vmatpush.msra.mxu0 0.0
    %1979 = vmatpush.msra.mxu0 %v1733
    %1980 = vmatpush.msra.mxu0 %v1717
    %1981 = vmatpush.msra.mxu0 %v1701
    %1982 = vmatpush.msra.mxu0 %v1685
    %1983 = vmatmul.f32.gmra.mxu0 %v1778
    %v1984 = vpop.f32.mrf.mxu0
    %v1985 = vadd.f32 %v1753, %v1984
    %1986 = vmatmul.f32.gmra.mxu0 %v1781
    %v1987 = vpop.f32.mrf.mxu0
    %v1988 = vadd.f32 %v1753, %v1987
    %1989 = vdwg.mxu0
    %1990 = vmatpush.msra.mxu0 0.0
    %1991 = vmatpush.msra.mxu0 0.0
    %1992 = vmatpush.msra.mxu0 0.0
    %1993 = vmatpush.msra.mxu0 0.0
    %1994 = vmatpush.msra.mxu0 0.0
    %1995 = vmatpush.msra.mxu0 0.0
    %1996 = vmatpush.msra.mxu0 0.0
    %1997 = vmatpush.msra.mxu0 0.0
    %1998 = vmatpush.msra.mxu0 0.0
    %1999 = vmatpush.msra.mxu0 0.0
    %2000 = vmatpush.msra.mxu0 0.0
    %2001 = vmatpush.msra.mxu0 0.0
    %2002 = vmatpush.msra.mxu0 %v1734
    %2003 = vmatpush.msra.mxu0 %v1718
    %2004 = vmatpush.msra.mxu0 %v1702
    %2005 = vmatpush.msra.mxu0 %v1686
    %2006 = vmatmul.f32.gmra.mxu0 %v1778
    %v2007 = vpop.f32.mrf.mxu0
    %v2008 = vadd.f32 %v1754, %v2007
    %2009 = vmatmul.f32.gmra.mxu0 %v1781
    %v2010 = vpop.f32.mrf.mxu0
    %v2011 = vadd.f32 %v1754, %v2010
    %2012 = vdwg.mxu0
    %2013 = vmatpush.msra.mxu0 0.0
    %2014 = vmatpush.msra.mxu0 0.0
    %2015 = vmatpush.msra.mxu0 0.0
    %2016 = vmatpush.msra.mxu0 0.0
    %2017 = vmatpush.msra.mxu0 0.0
    %2018 = vmatpush.msra.mxu0 0.0
    %2019 = vmatpush.msra.mxu0 0.0
    %2020 = vmatpush.msra.mxu0 0.0
    %2021 = vmatpush.msra.mxu0 0.0
    %2022 = vmatpush.msra.mxu0 0.0
    %2023 = vmatpush.msra.mxu0 0.0
    %2024 = vmatpush.msra.mxu0 0.0
    %2025 = vmatpush.msra.mxu0 %v1735
    %2026 = vmatpush.msra.mxu0 %v1719
    %2027 = vmatpush.msra.mxu0 %v1703
    %2028 = vmatpush.msra.mxu0 %v1687
    %2029 = vmatmul.f32.gmra.mxu0 %v1778
    %v2030 = vpop.f32.mrf.mxu0
    %v2031 = vadd.f32 %v1755, %v2030
    %2032 = vmatmul.f32.gmra.mxu0 %v1781
    %v2033 = vpop.f32.mrf.mxu0
    %v2034 = vadd.f32 %v1755, %v2033
    %2035 = vdwg.mxu0
    %2036 = vmatpush.msra.mxu0 0.0
    %2037 = vmatpush.msra.mxu0 0.0
    %2038 = vmatpush.msra.mxu0 0.0
    %2039 = vmatpush.msra.mxu0 0.0
    %2040 = vmatpush.msra.mxu0 0.0
    %2041 = vmatpush.msra.mxu0 0.0
    %2042 = vmatpush.msra.mxu0 0.0
    %2043 = vmatpush.msra.mxu0 0.0
    %2044 = vmatpush.msra.mxu0 0.0
    %2045 = vmatpush.msra.mxu0 0.0
    %2046 = vmatpush.msra.mxu0 0.0
    %2047 = vmatpush.msra.mxu0 0.0
    %2048 = vmatpush.msra.mxu0 %v1736
    %2049 = vmatpush.msra.mxu0 %v1720
    %2050 = vmatpush.msra.mxu0 %v1704
    %2051 = vmatpush.msra.mxu0 %v1688
    %2052 = vmatmul.f32.gmra.mxu0 %v1778
    %v2053 = vpop.f32.mrf.mxu0
    %v2054 = vadd.f32 %v1756, %v2053
    %2055 = vmatmul.f32.gmra.mxu0 %v1781
    %v2056 = vpop.f32.mrf.mxu0
    %v2057 = vadd.f32 %v1756, %v2056
    %2058 = vdwg.mxu0
    %2059 = vmatpush.msra.mxu0 0.0
    %2060 = vmatpush.msra.mxu0 0.0
    %2061 = vmatpush.msra.mxu0 0.0
    %2062 = vmatpush.msra.mxu0 0.0
    %2063 = vmatpush.msra.mxu0 0.0
    %2064 = vmatpush.msra.mxu0 0.0
    %2065 = vmatpush.msra.mxu0 0.0
    %2066 = vmatpush.msra.mxu0 0.0
    %2067 = vmatpush.msra.mxu0 0.0
    %2068 = vmatpush.msra.mxu0 0.0
    %2069 = vmatpush.msra.mxu0 0.0
    %2070 = vmatpush.msra.mxu0 0.0
    %2071 = vmatpush.msra.mxu0 %v1737
    %2072 = vmatpush.msra.mxu0 %v1721
    %2073 = vmatpush.msra.mxu0 %v1705
    %2074 = vmatpush.msra.mxu0 %v1689
    %2075 = vmatmul.f32.gmra.mxu0 %v1778
    %v2076 = vpop.f32.mrf.mxu0
    %v2077 = vadd.f32 %v1757, %v2076
    %2078 = vmatmul.f32.gmra.mxu0 %v1781
    %v2079 = vpop.f32.mrf.mxu0
    %v2080 = vadd.f32 %v1757, %v2079
    %2081 = vdwg.mxu0
    %2082 = vmatpush.msra.mxu0 0.0
    %2083 = vmatpush.msra.mxu0 0.0
    %2084 = vmatpush.msra.mxu0 0.0
    %2085 = vmatpush.msra.mxu0 0.0
    %2086 = vmatpush.msra.mxu0 0.0
    %2087 = vmatpush.msra.mxu0 0.0
    %2088 = vmatpush.msra.mxu0 0.0
    %2089 = vmatpush.msra.mxu0 0.0
    %2090 = vmatpush.msra.mxu0 0.0
    %2091 = vmatpush.msra.mxu0 0.0
    %2092 = vmatpush.msra.mxu0 0.0
    %2093 = vmatpush.msra.mxu0 0.0
    %2094 = vmatpush.msra.mxu0 %v1738
    %2095 = vmatpush.msra.mxu0 %v1722
    %2096 = vmatpush.msra.mxu0 %v1706
    %2097 = vmatpush.msra.mxu0 %v1690
    %2098 = vmatmul.f32.gmra.mxu0 %v1778
    %v2099 = vpop.f32.mrf.mxu0
    %v2100 = vadd.f32 %v1758, %v2099
    %2101 = vmatmul.f32.gmra.mxu0 %v1781
    %v2102 = vpop.f32.mrf.mxu0
    %v2103 = vadd.f32 %v1758, %v2102
    %2104 = vdwg.mxu0
    %2105 = vmatpush.msra.mxu0 0.0
    %2106 = vmatpush.msra.mxu0 0.0
    %2107 = vmatpush.msra.mxu0 0.0
    %2108 = vmatpush.msra.mxu0 0.0
    %2109 = vmatpush.msra.mxu0 0.0
    %2110 = vmatpush.msra.mxu0 0.0
    %2111 = vmatpush.msra.mxu0 0.0
    %2112 = vmatpush.msra.mxu0 0.0
    %2113 = vmatpush.msra.mxu0 0.0
    %2114 = vmatpush.msra.mxu0 0.0
    %2115 = vmatpush.msra.mxu0 0.0
    %2116 = vmatpush.msra.mxu0 0.0
    %2117 = vmatpush.msra.mxu0 %v1739
    %2118 = vmatpush.msra.mxu0 %v1723
    %2119 = vmatpush.msra.mxu0 %v1707
    %2120 = vmatpush.msra.mxu0 %v1691
    %2121 = vmatmul.f32.gmra.mxu0 %v1778
    %v2122 = vpop.f32.mrf.mxu0
    %v2123 = vadd.f32 %v1759, %v2122
    %2124 = vmatmul.f32.gmra.mxu0 %v1781
    %v2125 = vpop.f32.mrf.mxu0
    %v2126 = vadd.f32 %v1759, %v2125
    %2127 = vdwg.mxu0
    %2128 = vmatpush.msra.mxu0 0.0
    %2129 = vmatpush.msra.mxu0 0.0
    %2130 = vmatpush.msra.mxu0 0.0
    %2131 = vmatpush.msra.mxu0 0.0
    %2132 = vmatpush.msra.mxu0 0.0
    %2133 = vmatpush.msra.mxu0 0.0
    %2134 = vmatpush.msra.mxu0 0.0
    %2135 = vmatpush.msra.mxu0 0.0
    %2136 = vmatpush.msra.mxu0 0.0
    %2137 = vmatpush.msra.mxu0 0.0
    %2138 = vmatpush.msra.mxu0 0.0
    %2139 = vmatpush.msra.mxu0 0.0
    %2140 = vmatpush.msra.mxu0 %v1740
    %2141 = vmatpush.msra.mxu0 %v1724
    %2142 = vmatpush.msra.mxu0 %v1708
    %2143 = vmatpush.msra.mxu0 %v1692
    %2144 = vmatmul.f32.gmra.mxu0 %v1778
    %v2145 = vpop.f32.mrf.mxu0
    %v2146 = vadd.f32 %v1760, %v2145
    %2147 = vmatmul.f32.gmra.mxu0 %v1781
    %v2148 = vpop.f32.mrf.mxu0
    %v2149 = vadd.f32 %v1760, %v2148
    %2150 = vdwg.mxu0
    %v2151 = vmax.f32 %v1801, 0.0
    %v2152 = vmax.f32 %v1824, 0.0
    %v2153 = vmax.f32 %v1847, 0.0
    %v2154 = vmax.f32 %v1870, 0.0
    %v2155 = vmax.f32 %v1893, 0.0
    %v2156 = vmax.f32 %v1916, 0.0
    %v2157 = vmax.f32 %v1939, 0.0
    %v2158 = vmax.f32 %v1962, 0.0
    %v2159 = vmax.f32 %v1985, 0.0
    %v2160 = vmax.f32 %v2008, 0.0
    %v2161 = vmax.f32 %v2031, 0.0
    %v2162 = vmax.f32 %v2054, 0.0
    %v2163 = vmax.f32 %v2077, 0.0
    %v2164 = vmax.f32 %v2100, 0.0
    %v2165 = vmax.f32 %v2123, 0.0
    %v2166 = vmax.f32 %v2146, 0.0
    %v2167 = vmax.f32 %v1804, 0.0
    %v2168 = vmax.f32 %v1827, 0.0
    %v2169 = vmax.f32 %v1850, 0.0
    %v2170 = vmax.f32 %v1873, 0.0
    %v2171 = vmax.f32 %v1896, 0.0
    %v2172 = vmax.f32 %v1919, 0.0
    %v2173 = vmax.f32 %v1942, 0.0
    %v2174 = vmax.f32 %v1965, 0.0
    %v2175 = vmax.f32 %v1988, 0.0
    %v2176 = vmax.f32 %v2011, 0.0
    %v2177 = vmax.f32 %v2034, 0.0
    %v2178 = vmax.f32 %v2057, 0.0
    %v2179 = vmax.f32 %v2080, 0.0
    %v2180 = vmax.f32 %v2103, 0.0
    %v2181 = vmax.f32 %v2126, 0.0
    %v2182 = vmax.f32 %v2149, 0.0
    %v2183 = vld [vmem:[%s63] sm:$0xff]
    %v2184 = vld [vmem:[%s63 + $0x8] sm:$0xff]
    %v2185 = vld [vmem:[%s63 + $0x10] sm:$0xff]
    %v2186 = vld [vmem:[%s63 + $0x18] sm:$0xff]
    %v2187 = vld [vmem:[%s63 + $0x20] sm:$0xff]
    %v2188 = vld [vmem:[%s63 + $0x28] sm:$0xff]
    %v2189 = vld [vmem:[%s63 + $0x30] sm:$0xff]
    %v2190 = vld [vmem:[%s63 + $0x38] sm:$0xff]
    %v2191 = vld [vmem:[%s63 + $0x40] sm:$0xff]
    %v2192 = vld [vmem:[%s63 + $0x48] sm:$0xff]
    %v2193 = vld [vmem:[%s63 + $0x50] sm:$0xff]
    %v2194 = vld [vmem:[%s63 + $0x58] sm:$0xff]
    %v2195 = vld [vmem:[%s63 + $0x60] sm:$0xff]
    %v2196 = vld [vmem:[%s63 + $0x68] sm:$0xff]
    %v2197 = vld [vmem:[%s63 + $0x70] sm:$0xff]
    %v2198 = vld [vmem:[%s63 + $0x78] sm:$0xff]
    %v2199 = vld [vmem:[%s63 + $0x80] sm:$0xff]
    %v2200 = vld [vmem:[%s63 + $0x88] sm:$0xff]
    %v2201 = vld [vmem:[%s63 + $0x90] sm:$0xff]
    %v2202 = vld [vmem:[%s63 + $0x98] sm:$0xff]
    %v2203 = vld [vmem:[%s63 + $0xa0] sm:$0xff]
    %v2204 = vld [vmem:[%s63 + $0xa8] sm:$0xff]
    %v2205 = vld [vmem:[%s63 + $0xb0] sm:$0xff]
    %v2206 = vld [vmem:[%s63 + $0xb8] sm:$0xff]
    %v2207 = vld [vmem:[%s63 + $0xc0] sm:$0xff]
    %v2208 = vld [vmem:[%s63 + $0xc8] sm:$0xff]
    %v2209 = vld [vmem:[%s63 + $0xd0] sm:$0xff]
    %v2210 = vld [vmem:[%s63 + $0xd8] sm:$0xff]
    %v2211 = vld [vmem:[%s63 + $0xe0] sm:$0xff]
    %v2212 = vld [vmem:[%s63 + $0xe8] sm:$0xff]
    %v2213 = vld [vmem:[%s63 + $0xf0] sm:$0xff]
    %v2214 = vld [vmem:[%s63 + $0xf8] sm:$0xff]
    %v2215 = vld [vmem:[%s63 + $0x100] sm:$0xff]
    %v2216 = vld [vmem:[%s63 + $0x108] sm:$0xff]
    %v2217 = vld [vmem:[%s63 + $0x110] sm:$0xff]
    %v2218 = vld [vmem:[%s63 + $0x118] sm:$0xff]
    %v2219 = vld [vmem:[%s63 + $0x120] sm:$0xff]
    %v2220 = vld [vmem:[%s63 + $0x128] sm:$0xff]
    %v2221 = vld [vmem:[%s63 + $0x130] sm:$0xff]
    %v2222 = vld [vmem:[%s63 + $0x138] sm:$0xff]
    %v2223 = vld [vmem:[%s63 + $0x140] sm:$0xff]
    %v2224 = vld [vmem:[%s63 + $0x148] sm:$0xff]
    %v2225 = vld [vmem:[%s63 + $0x150] sm:$0xff]
    %v2226 = vld [vmem:[%s63 + $0x158] sm:$0xff]
    %v2227 = vld [vmem:[%s63 + $0x160] sm:$0xff]
    %v2228 = vld [vmem:[%s63 + $0x168] sm:$0xff]
    %v2229 = vld [vmem:[%s63 + $0x170] sm:$0xff]
    %v2230 = vld [vmem:[%s63 + $0x178] sm:$0xff]
    %v2231 = vld [vmem:[%s63 + $0x180] sm:$0xff]
    %v2232 = vld [vmem:[%s63 + $0x188] sm:$0xff]
    %v2233 = vld [vmem:[%s63 + $0x190] sm:$0xff]
    %v2234 = vld [vmem:[%s63 + $0x198] sm:$0xff]
    %v2235 = vld [vmem:[%s63 + $0x1a0] sm:$0xff]
    %v2236 = vld [vmem:[%s63 + $0x1a8] sm:$0xff]
    %v2237 = vld [vmem:[%s63 + $0x1b0] sm:$0xff]
    %v2238 = vld [vmem:[%s63 + $0x1b8] sm:$0xff]
    %v2239 = vld [vmem:[%s63 + $0x1c0] sm:$0xff]
    %v2240 = vld [vmem:[%s63 + $0x1c8] sm:$0xff]
    %v2241 = vld [vmem:[%s63 + $0x1d0] sm:$0xff]
    %v2242 = vld [vmem:[%s63 + $0x1d8] sm:$0xff]
    %v2243 = vld [vmem:[%s63 + $0x1e0] sm:$0xff]
    %v2244 = vld [vmem:[%s63 + $0x1e8] sm:$0xff]
    %v2245 = vld [vmem:[%s63 + $0x1f0] sm:$0xff]
    %v2246 = vld [vmem:[%s63 + $0x1f8] sm:$0xff]
    %v2247 = vld [vmem:[%s63 + $0x200] sm:$0xff]
    %v2248 = vld [vmem:[%s63 + $0x208] sm:$0xff]
    %v2249 = vld [vmem:[%s63 + $0x210] sm:$0xff]
    %v2250 = vld [vmem:[%s63 + $0x218] sm:$0xff]
    %v2251 = vld [vmem:[%s63 + $0x220] sm:$0xff]
    %v2252 = vld [vmem:[%s63 + $0x228] sm:$0xff]
    %v2253 = vld [vmem:[%s63 + $0x230] sm:$0xff]
    %v2254 = vld [vmem:[%s63 + $0x238] sm:$0xff]
    %v2255 = vld [vmem:[%s63 + $0x240] sm:$0xff]
    %v2256 = vld [vmem:[%s63 + $0x248] sm:$0xff]
    %v2257 = vld [vmem:[%s63 + $0x250] sm:$0xff]
    %v2258 = vld [vmem:[%s63 + $0x258] sm:$0xff]
    %v2259 = vld [vmem:[%s63 + $0x260] sm:$0xff]
    %v2260 = vld [vmem:[%s63 + $0x268] sm:$0xff]
    %v2261 = vld [vmem:[%s63 + $0x270] sm:$0xff]
    %v2262 = vld [vmem:[%s63 + $0x278] sm:$0xff]
    %v2263 = vld [vmem:[%s63 + $0x280] sm:$0xff]
    %v2264 = vld [vmem:[%s63 + $0x288] sm:$0xff]
    %v2265 = vld [vmem:[%s63 + $0x290] sm:$0xff]
    %v2266 = vld [vmem:[%s63 + $0x298] sm:$0xff]
    %v2267 = vld [vmem:[%s63 + $0x2a0] sm:$0xff]
    %v2268 = vld [vmem:[%s63 + $0x2a8] sm:$0xff]
    %v2269 = vld [vmem:[%s63 + $0x2b0] sm:$0xff]
    %v2270 = vld [vmem:[%s63 + $0x2b8] sm:$0xff]
    %v2271 = vld [vmem:[%s63 + $0x2c0] sm:$0xff]
    %v2272 = vld [vmem:[%s63 + $0x2c8] sm:$0xff]
    %v2273 = vld [vmem:[%s63 + $0x2d0] sm:$0xff]
    %v2274 = vld [vmem:[%s63 + $0x2d8] sm:$0xff]
    %v2275 = vld [vmem:[%s63 + $0x2e0] sm:$0xff]
    %v2276 = vld [vmem:[%s63 + $0x2e8] sm:$0xff]
    %v2277 = vld [vmem:[%s63 + $0x2f0] sm:$0xff]
    %v2278 = vld [vmem:[%s63 + $0x2f8] sm:$0xff]
    %v2279 = vld [vmem:[%s63 + $0x300] sm:$0xff]
    %v2280 = vld [vmem:[%s63 + $0x308] sm:$0xff]
    %v2281 = vld [vmem:[%s63 + $0x310] sm:$0xff]
    %v2282 = vld [vmem:[%s63 + $0x318] sm:$0xff]
    %v2283 = vld [vmem:[%s63 + $0x320] sm:$0xff]
    %v2284 = vld [vmem:[%s63 + $0x328] sm:$0xff]
    %v2285 = vld [vmem:[%s63 + $0x330] sm:$0xff]
    %v2286 = vld [vmem:[%s63 + $0x338] sm:$0xff]
    %v2287 = vld [vmem:[%s63 + $0x340] sm:$0xff]
    %v2288 = vld [vmem:[%s63 + $0x348] sm:$0xff]
    %v2289 = vld [vmem:[%s63 + $0x350] sm:$0xff]
    %v2290 = vld [vmem:[%s63 + $0x358] sm:$0xff]
    %v2291 = vld [vmem:[%s63 + $0x360] sm:$0xff]
    %v2292 = vld [vmem:[%s63 + $0x368] sm:$0xff]
    %v2293 = vld [vmem:[%s63 + $0x370] sm:$0xff]
    %v2294 = vld [vmem:[%s63 + $0x378] sm:$0xff]
    %v2295 = vld [vmem:[%s63 + $0x380] sm:$0xff]
    %v2296 = vld [vmem:[%s63 + $0x388] sm:$0xff]
    %v2297 = vld [vmem:[%s63 + $0x390] sm:$0xff]
    %v2298 = vld [vmem:[%s63 + $0x398] sm:$0xff]
    %v2299 = vld [vmem:[%s63 + $0x3a0] sm:$0xff]
    %v2300 = vld [vmem:[%s63 + $0x3a8] sm:$0xff]
    %v2301 = vld [vmem:[%s63 + $0x3b0] sm:$0xff]
    %v2302 = vld [vmem:[%s63 + $0x3b8] sm:$0xff]
    %v2303 = vld [vmem:[%s63 + $0x3c0] sm:$0xff]
    %v2304 = vld [vmem:[%s63 + $0x3c8] sm:$0xff]
    %v2305 = vld [vmem:[%s63 + $0x3d0] sm:$0xff]
    %v2306 = vld [vmem:[%s63 + $0x3d8] sm:$0xff]
    %v2307 = vld [vmem:[%s63 + $0x3e0] sm:$0xff]
    %v2308 = vld [vmem:[%s63 + $0x3e8] sm:$0xff]
    %v2309 = vld [vmem:[%s63 + $0x3f0] sm:$0xff]
    %v2310 = vld [vmem:[%s63 + $0x3f8] sm:$0xff]
    %v2311 = vld [vmem:[%s63 + $0x400] sm:$0xff]
    %v2312 = vld [vmem:[%s63 + $0x408] sm:$0xff]
    %v2313 = vld [vmem:[%s63 + $0x410] sm:$0xff]
    %v2314 = vld [vmem:[%s63 + $0x418] sm:$0xff]
    %v2315 = vld [vmem:[%s63 + $0x420] sm:$0xff]
    %v2316 = vld [vmem:[%s63 + $0x428] sm:$0xff]
    %v2317 = vld [vmem:[%s63 + $0x430] sm:$0xff]
    %v2318 = vld [vmem:[%s63 + $0x438] sm:$0xff]
    %v2319 = vld [vmem:[%s63 + $0x440] sm:$0xff]
    %v2320 = vld [vmem:[%s63 + $0x448] sm:$0xff]
    %v2321 = vld [vmem:[%s63 + $0x450] sm:$0xff]
    %v2322 = vld [vmem:[%s63 + $0x458] sm:$0xff]
    %v2323 = vld [vmem:[%s63 + $0x460] sm:$0xff]
    %v2324 = vld [vmem:[%s63 + $0x468] sm:$0xff]
    %v2325 = vld [vmem:[%s63 + $0x470] sm:$0xff]
    %v2326 = vld [vmem:[%s63 + $0x478] sm:$0xff]
    %v2327 = vld [vmem:[%s63 + $0x480] sm:$0xff]
    %v2328 = vld [vmem:[%s63 + $0x488] sm:$0xff]
    %v2329 = vld [vmem:[%s63 + $0x490] sm:$0xff]
    %v2330 = vld [vmem:[%s63 + $0x498] sm:$0xff]
    %v2331 = vld [vmem:[%s63 + $0x4a0] sm:$0xff]
    %v2332 = vld [vmem:[%s63 + $0x4a8] sm:$0xff]
    %v2333 = vld [vmem:[%s63 + $0x4b0] sm:$0xff]
    %v2334 = vld [vmem:[%s63 + $0x4b8] sm:$0xff]
    %v2335 = vld [vmem:[%s63 + $0x4c0] sm:$0xff]
    %v2336 = vld [vmem:[%s63 + $0x4c8] sm:$0xff]
    %v2337 = vld [vmem:[%s63 + $0x4d0] sm:$0xff]
    %v2338 = vld [vmem:[%s63 + $0x4d8] sm:$0xff]
    %v2339 = vld [vmem:[%s63 + $0x4e0] sm:$0xff]
    %v2340 = vld [vmem:[%s63 + $0x4e8] sm:$0xff]
    %v2341 = vld [vmem:[%s63 + $0x4f0] sm:$0xff]
    %v2342 = vld [vmem:[%s63 + $0x4f8] sm:$0xff]
    %v2343 = vld [vmem:[%s63 + $0x500] sm:$0xff]
    %v2344 = vld [vmem:[%s63 + $0x508] sm:$0xff]
    %v2345 = vld [vmem:[%s63 + $0x510] sm:$0xff]
    %v2346 = vld [vmem:[%s63 + $0x518] sm:$0xff]
    %v2347 = vld [vmem:[%s63 + $0x520] sm:$0xff]
    %v2348 = vld [vmem:[%s63 + $0x528] sm:$0xff]
    %v2349 = vld [vmem:[%s63 + $0x530] sm:$0xff]
    %v2350 = vld [vmem:[%s63 + $0x538] sm:$0xff]
    %v2351 = vld [vmem:[%s63 + $0x540] sm:$0xff]
    %v2352 = vld [vmem:[%s63 + $0x548] sm:$0xff]
    %v2353 = vld [vmem:[%s63 + $0x550] sm:$0xff]
    %v2354 = vld [vmem:[%s63 + $0x558] sm:$0xff]
    %v2355 = vld [vmem:[%s63 + $0x560] sm:$0xff]
    %v2356 = vld [vmem:[%s63 + $0x568] sm:$0xff]
    %v2357 = vld [vmem:[%s63 + $0x570] sm:$0xff]
    %v2358 = vld [vmem:[%s63 + $0x578] sm:$0xff]
    %v2359 = vld [vmem:[%s63 + $0x580] sm:$0xff]
    %v2360 = vld [vmem:[%s63 + $0x588] sm:$0xff]
    %v2361 = vld [vmem:[%s63 + $0x590] sm:$0xff]
    %v2362 = vld [vmem:[%s63 + $0x598] sm:$0xff]
    %v2363 = vld [vmem:[%s63 + $0x5a0] sm:$0xff]
    %v2364 = vld [vmem:[%s63 + $0x5a8] sm:$0xff]
    %v2365 = vld [vmem:[%s63 + $0x5b0] sm:$0xff]
    %v2366 = vld [vmem:[%s63 + $0x5b8] sm:$0xff]
    %v2367 = vld [vmem:[%s63 + $0x5c0] sm:$0xff]
    %v2368 = vld [vmem:[%s63 + $0x5c8] sm:$0xff]
    %v2369 = vld [vmem:[%s63 + $0x5d0] sm:$0xff]
    %v2370 = vld [vmem:[%s63 + $0x5d8] sm:$0xff]
    %v2371 = vld [vmem:[%s63 + $0x5e0] sm:$0xff]
    %v2372 = vld [vmem:[%s63 + $0x5e8] sm:$0xff]
    %v2373 = vld [vmem:[%s63 + $0x5f0] sm:$0xff]
    %v2374 = vld [vmem:[%s63 + $0x5f8] sm:$0xff]
    %v2375 = vld [vmem:[%s63 + $0x600] sm:$0xff]
    %v2376 = vld [vmem:[%s63 + $0x608] sm:$0xff]
    %v2377 = vld [vmem:[%s63 + $0x610] sm:$0xff]
    %v2378 = vld [vmem:[%s63 + $0x618] sm:$0xff]
    %v2379 = vld [vmem:[%s63 + $0x620] sm:$0xff]
    %v2380 = vld [vmem:[%s63 + $0x628] sm:$0xff]
    %v2381 = vld [vmem:[%s63 + $0x630] sm:$0xff]
    %v2382 = vld [vmem:[%s63 + $0x638] sm:$0xff]
    %v2383 = vld [vmem:[%s63 + $0x640] sm:$0xff]
    %v2384 = vld [vmem:[%s63 + $0x648] sm:$0xff]
    %v2385 = vld [vmem:[%s63 + $0x650] sm:$0xff]
    %v2386 = vld [vmem:[%s63 + $0x658] sm:$0xff]
    %v2387 = vld [vmem:[%s63 + $0x660] sm:$0xff]
    %v2388 = vld [vmem:[%s63 + $0x668] sm:$0xff]
    %v2389 = vld [vmem:[%s63 + $0x670] sm:$0xff]
    %v2390 = vld [vmem:[%s63 + $0x678] sm:$0xff]
    %v2391 = vld [vmem:[%s63 + $0x680] sm:$0xff]
    %v2392 = vld [vmem:[%s63 + $0x688] sm:$0xff]
    %v2393 = vld [vmem:[%s63 + $0x690] sm:$0xff]
    %v2394 = vld [vmem:[%s63 + $0x698] sm:$0xff]
    %v2395 = vld [vmem:[%s63 + $0x6a0] sm:$0xff]
    %v2396 = vld [vmem:[%s63 + $0x6a8] sm:$0xff]
    %v2397 = vld [vmem:[%s63 + $0x6b0] sm:$0xff]
    %v2398 = vld [vmem:[%s63 + $0x6b8] sm:$0xff]
    %v2399 = vld [vmem:[%s63 + $0x6c0] sm:$0xff]
    %v2400 = vld [vmem:[%s63 + $0x6c8] sm:$0xff]
    %v2401 = vld [vmem:[%s63 + $0x6d0] sm:$0xff]
    %v2402 = vld [vmem:[%s63 + $0x6d8] sm:$0xff]
    %v2403 = vld [vmem:[%s63 + $0x6e0] sm:$0xff]
    %v2404 = vld [vmem:[%s63 + $0x6e8] sm:$0xff]
    %v2405 = vld [vmem:[%s63 + $0x6f0] sm:$0xff]
    %v2406 = vld [vmem:[%s63 + $0x6f8] sm:$0xff]
    %v2407 = vld [vmem:[%s63 + $0x700] sm:$0xff]
    %v2408 = vld [vmem:[%s63 + $0x708] sm:$0xff]
    %v2409 = vld [vmem:[%s63 + $0x710] sm:$0xff]
    %v2410 = vld [vmem:[%s63 + $0x718] sm:$0xff]
    %v2411 = vld [vmem:[%s63 + $0x720] sm:$0xff]
    %v2412 = vld [vmem:[%s63 + $0x728] sm:$0xff]
    %v2413 = vld [vmem:[%s63 + $0x730] sm:$0xff]
    %v2414 = vld [vmem:[%s63 + $0x738] sm:$0xff]
    %v2415 = vld [vmem:[%s63 + $0x740] sm:$0xff]
    %v2416 = vld [vmem:[%s63 + $0x748] sm:$0xff]
    %v2417 = vld [vmem:[%s63 + $0x750] sm:$0xff]
    %v2418 = vld [vmem:[%s63 + $0x758] sm:$0xff]
    %v2419 = vld [vmem:[%s63 + $0x760] sm:$0xff]
    %v2420 = vld [vmem:[%s63 + $0x768] sm:$0xff]
    %v2421 = vld [vmem:[%s63 + $0x770] sm:$0xff]
    %v2422 = vld [vmem:[%s63 + $0x778] sm:$0xff]
    %v2423 = vld [vmem:[%s63 + $0x780] sm:$0xff]
    %v2424 = vld [vmem:[%s63 + $0x788] sm:$0xff]
    %v2425 = vld [vmem:[%s63 + $0x790] sm:$0xff]
    %v2426 = vld [vmem:[%s63 + $0x798] sm:$0xff]
    %v2427 = vld [vmem:[%s63 + $0x7a0] sm:$0xff]
    %v2428 = vld [vmem:[%s63 + $0x7a8] sm:$0xff]
    %v2429 = vld [vmem:[%s63 + $0x7b0] sm:$0xff]
    %v2430 = vld [vmem:[%s63 + $0x7b8] sm:$0xff]
    %v2431 = vld [vmem:[%s63 + $0x7c0] sm:$0xff]
    %v2432 = vld [vmem:[%s63 + $0x7c8] sm:$0xff]
    %v2433 = vld [vmem:[%s63 + $0x7d0] sm:$0xff]
    %v2434 = vld [vmem:[%s63 + $0x7d8] sm:$0xff]
    %v2435 = vld [vmem:[%s63 + $0x7e0] sm:$0xff]
    %v2436 = vld [vmem:[%s63 + $0x7e8] sm:$0xff]
    %v2437 = vld [vmem:[%s63 + $0x7f0] sm:$0xff]
    %v2438 = vld [vmem:[%s63 + $0x7f8] sm:$0xff]
    %v2439 = vld [vmem:[%s65] sm:$0x1]
    %v2441 = vperm.slane %v2439, 0
    %2443 = vmatpush.msra.mxu0 %v2198
    %2444 = vmatpush.msra.mxu0 %v2197
    %2445 = vmatpush.msra.mxu0 %v2196
    %2446 = vmatpush.msra.mxu0 %v2195
    %2447 = vmatpush.msra.mxu0 %v2194
    %2448 = vmatpush.msra.mxu0 %v2193
    %2449 = vmatpush.msra.mxu0 %v2192
    %2450 = vmatpush.msra.mxu0 %v2191
    %2451 = vmatpush.msra.mxu0 %v2190
    %2452 = vmatpush.msra.mxu0 %v2189
    %2453 = vmatpush.msra.mxu0 %v2188
    %2454 = vmatpush.msra.mxu0 %v2187
    %2455 = vmatpush.msra.mxu0 %v2186
    %2456 = vmatpush.msra.mxu0 %v2185
    %2457 = vmatpush.msra.mxu0 %v2184
    %2458 = vmatpush.msra.mxu0 %v2183
    %2459 = vmatmul.f32.gmra.mxu0 %v2151
    %v2460 = vpop.f32.mrf.mxu0
    %v2461 = vadd.f32 %v2441, %v2460
    %2462 = vmatmul.f32.gmra.mxu0 %v2167
    %v2463 = vpop.f32.mrf.mxu0
    %v2464 = vadd.f32 %v2441, %v2463
    %2465 = vdwg.mxu0
    %2466 = vmatpush.msra.mxu0 %v2214
    %2467 = vmatpush.msra.mxu0 %v2213
    %2468 = vmatpush.msra.mxu0 %v2212
    %2469 = vmatpush.msra.mxu0 %v2211
    %2470 = vmatpush.msra.mxu0 %v2210
    %2471 = vmatpush.msra.mxu0 %v2209
    %2472 = vmatpush.msra.mxu0 %v2208
    %2473 = vmatpush.msra.mxu0 %v2207
    %2474 = vmatpush.msra.mxu0 %v2206
    %2475 = vmatpush.msra.mxu0 %v2205
    %2476 = vmatpush.msra.mxu0 %v2204
    %2477 = vmatpush.msra.mxu0 %v2203
    %2478 = vmatpush.msra.mxu0 %v2202
    %2479 = vmatpush.msra.mxu0 %v2201
    %2480 = vmatpush.msra.mxu0 %v2200
    %2481 = vmatpush.msra.mxu0 %v2199
    %2482 = vmatmul.f32.gmra.mxu0 %v2152
    %v2483 = vpop.f32.mrf.mxu0
    %v2484 = vadd.f32 %v2461, %v2483
    %2485 = vmatmul.f32.gmra.mxu0 %v2168
    %v2486 = vpop.f32.mrf.mxu0
    %v2487 = vadd.f32 %v2464, %v2486
    %2488 = vdwg.mxu0
    %2489 = vmatpush.msra.mxu0 %v2230
    %2490 = vmatpush.msra.mxu0 %v2229
    %2491 = vmatpush.msra.mxu0 %v2228
    %2492 = vmatpush.msra.mxu0 %v2227
    %2493 = vmatpush.msra.mxu0 %v2226
    %2494 = vmatpush.msra.mxu0 %v2225
    %2495 = vmatpush.msra.mxu0 %v2224
    %2496 = vmatpush.msra.mxu0 %v2223
    %2497 = vmatpush.msra.mxu0 %v2222
    %2498 = vmatpush.msra.mxu0 %v2221
    %2499 = vmatpush.msra.mxu0 %v2220
    %2500 = vmatpush.msra.mxu0 %v2219
    %2501 = vmatpush.msra.mxu0 %v2218
    %2502 = vmatpush.msra.mxu0 %v2217
    %2503 = vmatpush.msra.mxu0 %v2216
    %2504 = vmatpush.msra.mxu0 %v2215
    %2505 = vmatmul.f32.gmra.mxu0 %v2153
    %v2506 = vpop.f32.mrf.mxu0
    %v2507 = vadd.f32 %v2484, %v2506
    %2508 = vmatmul.f32.gmra.mxu0 %v2169
    %v2509 = vpop.f32.mrf.mxu0
    %v2510 = vadd.f32 %v2487, %v2509
    %2511 = vdwg.mxu0
    %2512 = vmatpush.msra.mxu0 %v2246
    %2513 = vmatpush.msra.mxu0 %v2245
    %2514 = vmatpush.msra.mxu0 %v2244
    %2515 = vmatpush.msra.mxu0 %v2243
    %2516 = vmatpush.msra.mxu0 %v2242
    %2517 = vmatpush.msra.mxu0 %v2241
    %2518 = vmatpush.msra.mxu0 %v2240
    %2519 = vmatpush.msra.mxu0 %v2239
    %2520 = vmatpush.msra.mxu0 %v2238
    %2521 = vmatpush.msra.mxu0 %v2237
    %2522 = vmatpush.msra.mxu0 %v2236
    %2523 = vmatpush.msra.mxu0 %v2235
    %2524 = vmatpush.msra.mxu0 %v2234
    %2525 = vmatpush.msra.mxu0 %v2233
    %2526 = vmatpush.msra.mxu0 %v2232
    %2527 = vmatpush.msra.mxu0 %v2231
    %2528 = vmatmul.f32.gmra.mxu0 %v2154
    %v2529 = vpop.f32.mrf.mxu0
    %v2530 = vadd.f32 %v2507, %v2529
    %2531 = vmatmul.f32.gmra.mxu0 %v2170
    %v2532 = vpop.f32.mrf.mxu0
    %v2533 = vadd.f32 %v2510, %v2532
    %2534 = vdwg.mxu0
    %2535 = vmatpush.msra.mxu0 %v2262
    %2536 = vmatpush.msra.mxu0 %v2261
    %2537 = vmatpush.msra.mxu0 %v2260
    %2538 = vmatpush.msra.mxu0 %v2259
    %2539 = vmatpush.msra.mxu0 %v2258
    %2540 = vmatpush.msra.mxu0 %v2257
    %2541 = vmatpush.msra.mxu0 %v2256
    %2542 = vmatpush.msra.mxu0 %v2255
    %2543 = vmatpush.msra.mxu0 %v2254
    %2544 = vmatpush.msra.mxu0 %v2253
    %2545 = vmatpush.msra.mxu0 %v2252
    %2546 = vmatpush.msra.mxu0 %v2251
    %2547 = vmatpush.msra.mxu0 %v2250
    %2548 = vmatpush.msra.mxu0 %v2249
    %2549 = vmatpush.msra.mxu0 %v2248
    %2550 = vmatpush.msra.mxu0 %v2247
    %2551 = vmatmul.f32.gmra.mxu0 %v2155
    %v2552 = vpop.f32.mrf.mxu0
    %v2553 = vadd.f32 %v2530, %v2552
    %2554 = vmatmul.f32.gmra.mxu0 %v2171
    %v2555 = vpop.f32.mrf.mxu0
    %v2556 = vadd.f32 %v2533, %v2555
    %2557 = vdwg.mxu0
    %2558 = vmatpush.msra.mxu0 %v2278
    %2559 = vmatpush.msra.mxu0 %v2277
    %2560 = vmatpush.msra.mxu0 %v2276
    %2561 = vmatpush.msra.mxu0 %v2275
    %2562 = vmatpush.msra.mxu0 %v2274
    %2563 = vmatpush.msra.mxu0 %v2273
    %2564 = vmatpush.msra.mxu0 %v2272
    %2565 = vmatpush.msra.mxu0 %v2271
    %2566 = vmatpush.msra.mxu0 %v2270
    %2567 = vmatpush.msra.mxu0 %v2269
    %2568 = vmatpush.msra.mxu0 %v2268
    %2569 = vmatpush.msra.mxu0 %v2267
    %2570 = vmatpush.msra.mxu0 %v2266
    %2571 = vmatpush.msra.mxu0 %v2265
    %2572 = vmatpush.msra.mxu0 %v2264
    %2573 = vmatpush.msra.mxu0 %v2263
    %2574 = vmatmul.f32.gmra.mxu0 %v2156
    %v2575 = vpop.f32.mrf.mxu0
    %v2576 = vadd.f32 %v2553, %v2575
    %2577 = vmatmul.f32.gmra.mxu0 %v2172
    %v2578 = vpop.f32.mrf.mxu0
    %v2579 = vadd.f32 %v2556, %v2578
    %2580 = vdwg.mxu0
    %2581 = vmatpush.msra.mxu0 %v2294
    %2582 = vmatpush.msra.mxu0 %v2293
    %2583 = vmatpush.msra.mxu0 %v2292
    %2584 = vmatpush.msra.mxu0 %v2291
    %2585 = vmatpush.msra.mxu0 %v2290
    %2586 = vmatpush.msra.mxu0 %v2289
    %2587 = vmatpush.msra.mxu0 %v2288
    %2588 = vmatpush.msra.mxu0 %v2287
    %2589 = vmatpush.msra.mxu0 %v2286
    %2590 = vmatpush.msra.mxu0 %v2285
    %2591 = vmatpush.msra.mxu0 %v2284
    %2592 = vmatpush.msra.mxu0 %v2283
    %2593 = vmatpush.msra.mxu0 %v2282
    %2594 = vmatpush.msra.mxu0 %v2281
    %2595 = vmatpush.msra.mxu0 %v2280
    %2596 = vmatpush.msra.mxu0 %v2279
    %2597 = vmatmul.f32.gmra.mxu0 %v2157
    %v2598 = vpop.f32.mrf.mxu0
    %v2599 = vadd.f32 %v2576, %v2598
    %2600 = vmatmul.f32.gmra.mxu0 %v2173
    %v2601 = vpop.f32.mrf.mxu0
    %v2602 = vadd.f32 %v2579, %v2601
    %2603 = vdwg.mxu0
    %2604 = vmatpush.msra.mxu0 %v2310
    %2605 = vmatpush.msra.mxu0 %v2309
    %2606 = vmatpush.msra.mxu0 %v2308
    %2607 = vmatpush.msra.mxu0 %v2307
    %2608 = vmatpush.msra.mxu0 %v2306
    %2609 = vmatpush.msra.mxu0 %v2305
    %2610 = vmatpush.msra.mxu0 %v2304
    %2611 = vmatpush.msra.mxu0 %v2303
    %2612 = vmatpush.msra.mxu0 %v2302
    %2613 = vmatpush.msra.mxu0 %v2301
    %2614 = vmatpush.msra.mxu0 %v2300
    %2615 = vmatpush.msra.mxu0 %v2299
    %2616 = vmatpush.msra.mxu0 %v2298
    %2617 = vmatpush.msra.mxu0 %v2297
    %2618 = vmatpush.msra.mxu0 %v2296
    %2619 = vmatpush.msra.mxu0 %v2295
    %2620 = vmatmul.f32.gmra.mxu0 %v2158
    %v2621 = vpop.f32.mrf.mxu0
    %v2622 = vadd.f32 %v2599, %v2621
    %2623 = vmatmul.f32.gmra.mxu0 %v2174
    %v2624 = vpop.f32.mrf.mxu0
    %v2625 = vadd.f32 %v2602, %v2624
    %2626 = vdwg.mxu0
    %2627 = vmatpush.msra.mxu0 %v2326
    %2628 = vmatpush.msra.mxu0 %v2325
    %2629 = vmatpush.msra.mxu0 %v2324
    %2630 = vmatpush.msra.mxu0 %v2323
    %2631 = vmatpush.msra.mxu0 %v2322
    %2632 = vmatpush.msra.mxu0 %v2321
    %2633 = vmatpush.msra.mxu0 %v2320
    %2634 = vmatpush.msra.mxu0 %v2319
    %2635 = vmatpush.msra.mxu0 %v2318
    %2636 = vmatpush.msra.mxu0 %v2317
    %2637 = vmatpush.msra.mxu0 %v2316
    %2638 = vmatpush.msra.mxu0 %v2315
    %2639 = vmatpush.msra.mxu0 %v2314
    %2640 = vmatpush.msra.mxu0 %v2313
    %2641 = vmatpush.msra.mxu0 %v2312
    %2642 = vmatpush.msra.mxu0 %v2311
    %2643 = vmatmul.f32.gmra.mxu0 %v2159
    %v2644 = vpop.f32.mrf.mxu0
    %v2645 = vadd.f32 %v2622, %v2644
    %2646 = vmatmul.f32.gmra.mxu0 %v2175
    %v2647 = vpop.f32.mrf.mxu0
    %v2648 = vadd.f32 %v2625, %v2647
    %2649 = vdwg.mxu0
    %2650 = vmatpush.msra.mxu0 %v2342
    %2651 = vmatpush.msra.mxu0 %v2341
    %2652 = vmatpush.msra.mxu0 %v2340
    %2653 = vmatpush.msra.mxu0 %v2339
    %2654 = vmatpush.msra.mxu0 %v2338
    %2655 = vmatpush.msra.mxu0 %v2337
    %2656 = vmatpush.msra.mxu0 %v2336
    %2657 = vmatpush.msra.mxu0 %v2335
    %2658 = vmatpush.msra.mxu0 %v2334
    %2659 = vmatpush.msra.mxu0 %v2333
    %2660 = vmatpush.msra.mxu0 %v2332
    %2661 = vmatpush.msra.mxu0 %v2331
    %2662 = vmatpush.msra.mxu0 %v2330
    %2663 = vmatpush.msra.mxu0 %v2329
    %2664 = vmatpush.msra.mxu0 %v2328
    %2665 = vmatpush.msra.mxu0 %v2327
    %2666 = vmatmul.f32.gmra.mxu0 %v2160
    %v2667 = vpop.f32.mrf.mxu0
    %v2668 = vadd.f32 %v2645, %v2667
    %2669 = vmatmul.f32.gmra.mxu0 %v2176
    %v2670 = vpop.f32.mrf.mxu0
    %v2671 = vadd.f32 %v2648, %v2670
    %2672 = vdwg.mxu0
    %2673 = vmatpush.msra.mxu0 %v2358
    %2674 = vmatpush.msra.mxu0 %v2357
    %2675 = vmatpush.msra.mxu0 %v2356
    %2676 = vmatpush.msra.mxu0 %v2355
    %2677 = vmatpush.msra.mxu0 %v2354
    %2678 = vmatpush.msra.mxu0 %v2353
    %2679 = vmatpush.msra.mxu0 %v2352
    %2680 = vmatpush.msra.mxu0 %v2351
    %2681 = vmatpush.msra.mxu0 %v2350
    %2682 = vmatpush.msra.mxu0 %v2349
    %2683 = vmatpush.msra.mxu0 %v2348
    %2684 = vmatpush.msra.mxu0 %v2347
    %2685 = vmatpush.msra.mxu0 %v2346
    %2686 = vmatpush.msra.mxu0 %v2345
    %2687 = vmatpush.msra.mxu0 %v2344
    %2688 = vmatpush.msra.mxu0 %v2343
    %2689 = vmatmul.f32.gmra.mxu0 %v2161
    %v2690 = vpop.f32.mrf.mxu0
    %v2691 = vadd.f32 %v2668, %v2690
    %2692 = vmatmul.f32.gmra.mxu0 %v2177
    %v2693 = vpop.f32.mrf.mxu0
    %v2694 = vadd.f32 %v2671, %v2693
    %2695 = vdwg.mxu0
    %2696 = vmatpush.msra.mxu0 %v2374
    %2697 = vmatpush.msra.mxu0 %v2373
    %2698 = vmatpush.msra.mxu0 %v2372
    %2699 = vmatpush.msra.mxu0 %v2371
    %2700 = vmatpush.msra.mxu0 %v2370
    %2701 = vmatpush.msra.mxu0 %v2369
    %2702 = vmatpush.msra.mxu0 %v2368
    %2703 = vmatpush.msra.mxu0 %v2367
    %2704 = vmatpush.msra.mxu0 %v2366
    %2705 = vmatpush.msra.mxu0 %v2365
    %2706 = vmatpush.msra.mxu0 %v2364
    %2707 = vmatpush.msra.mxu0 %v2363
    %2708 = vmatpush.msra.mxu0 %v2362
    %2709 = vmatpush.msra.mxu0 %v2361
    %2710 = vmatpush.msra.mxu0 %v2360
    %2711 = vmatpush.msra.mxu0 %v2359
    %2712 = vmatmul.f32.gmra.mxu0 %v2162
    %v2713 = vpop.f32.mrf.mxu0
    %v2714 = vadd.f32 %v2691, %v2713
    %2715 = vmatmul.f32.gmra.mxu0 %v2178
    %v2716 = vpop.f32.mrf.mxu0
    %v2717 = vadd.f32 %v2694, %v2716
    %2718 = vdwg.mxu0
    %2719 = vmatpush.msra.mxu0 %v2390
    %2720 = vmatpush.msra.mxu0 %v2389
    %2721 = vmatpush.msra.mxu0 %v2388
    %2722 = vmatpush.msra.mxu0 %v2387
    %2723 = vmatpush.msra.mxu0 %v2386
    %2724 = vmatpush.msra.mxu0 %v2385
    %2725 = vmatpush.msra.mxu0 %v2384
    %2726 = vmatpush.msra.mxu0 %v2383
    %2727 = vmatpush.msra.mxu0 %v2382
    %2728 = vmatpush.msra.mxu0 %v2381
    %2729 = vmatpush.msra.mxu0 %v2380
    %2730 = vmatpush.msra.mxu0 %v2379
    %2731 = vmatpush.msra.mxu0 %v2378
    %2732 = vmatpush.msra.mxu0 %v2377
    %2733 = vmatpush.msra.mxu0 %v2376
    %2734 = vmatpush.msra.mxu0 %v2375
    %2735 = vmatmul.f32.gmra.mxu0 %v2163
    %v2736 = vpop.f32.mrf.mxu0
    %v2737 = vadd.f32 %v2714, %v2736
    %2738 = vmatmul.f32.gmra.mxu0 %v2179
    %v2739 = vpop.f32.mrf.mxu0
    %v2740 = vadd.f32 %v2717, %v2739
    %2741 = vdwg.mxu0
    %2742 = vmatpush.msra.mxu0 %v2406
    %2743 = vmatpush.msra.mxu0 %v2405
    %2744 = vmatpush.msra.mxu0 %v2404
    %2745 = vmatpush.msra.mxu0 %v2403
    %2746 = vmatpush.msra.mxu0 %v2402
    %2747 = vmatpush.msra.mxu0 %v2401
    %2748 = vmatpush.msra.mxu0 %v2400
    %2749 = vmatpush.msra.mxu0 %v2399
    %2750 = vmatpush.msra.mxu0 %v2398
    %2751 = vmatpush.msra.mxu0 %v2397
    %2752 = vmatpush.msra.mxu0 %v2396
    %2753 = vmatpush.msra.mxu0 %v2395
    %2754 = vmatpush.msra.mxu0 %v2394
    %2755 = vmatpush.msra.mxu0 %v2393
    %2756 = vmatpush.msra.mxu0 %v2392
    %2757 = vmatpush.msra.mxu0 %v2391
    %2758 = vmatmul.f32.gmra.mxu0 %v2164
    %v2759 = vpop.f32.mrf.mxu0
    %v2760 = vadd.f32 %v2737, %v2759
    %2761 = vmatmul.f32.gmra.mxu0 %v2180
    %v2762 = vpop.f32.mrf.mxu0
    %v2763 = vadd.f32 %v2740, %v2762
    %2764 = vdwg.mxu0
    %2765 = vmatpush.msra.mxu0 %v2422
    %2766 = vmatpush.msra.mxu0 %v2421
    %2767 = vmatpush.msra.mxu0 %v2420
    %2768 = vmatpush.msra.mxu0 %v2419
    %2769 = vmatpush.msra.mxu0 %v2418
    %2770 = vmatpush.msra.mxu0 %v2417
    %2771 = vmatpush.msra.mxu0 %v2416
    %2772 = vmatpush.msra.mxu0 %v2415
    %2773 = vmatpush.msra.mxu0 %v2414
    %2774 = vmatpush.msra.mxu0 %v2413
    %2775 = vmatpush.msra.mxu0 %v2412
    %2776 = vmatpush.msra.mxu0 %v2411
    %2777 = vmatpush.msra.mxu0 %v2410
    %2778 = vmatpush.msra.mxu0 %v2409
    %2779 = vmatpush.msra.mxu0 %v2408
    %2780 = vmatpush.msra.mxu0 %v2407
    %2781 = vmatmul.f32.gmra.mxu0 %v2165
    %v2782 = vpop.f32.mrf.mxu0
    %v2783 = vadd.f32 %v2760, %v2782
    %2784 = vmatmul.f32.gmra.mxu0 %v2181
    %v2785 = vpop.f32.mrf.mxu0
    %v2786 = vadd.f32 %v2763, %v2785
    %2787 = vdwg.mxu0
    %2788 = vmatpush.msra.mxu0 %v2438
    %2789 = vmatpush.msra.mxu0 %v2437
    %2790 = vmatpush.msra.mxu0 %v2436
    %2791 = vmatpush.msra.mxu0 %v2435
    %2792 = vmatpush.msra.mxu0 %v2434
    %2793 = vmatpush.msra.mxu0 %v2433
    %2794 = vmatpush.msra.mxu0 %v2432
    %2795 = vmatpush.msra.mxu0 %v2431
    %2796 = vmatpush.msra.mxu0 %v2430
    %2797 = vmatpush.msra.mxu0 %v2429
    %2798 = vmatpush.msra.mxu0 %v2428
    %2799 = vmatpush.msra.mxu0 %v2427
    %2800 = vmatpush.msra.mxu0 %v2426
    %2801 = vmatpush.msra.mxu0 %v2425
    %2802 = vmatpush.msra.mxu0 %v2424
    %2803 = vmatpush.msra.mxu0 %v2423
    %2804 = vmatmul.f32.gmra.mxu0 %v2166
    %v2805 = vpop.f32.mrf.mxu0
    %v2806 = vadd.f32 %v2783, %v2805
    %2807 = vmatmul.f32.gmra.mxu0 %v2182
    %v2808 = vpop.f32.mrf.mxu0
    %v2809 = vadd.f32 %v2786, %v2808
    %2810 = vdwg.mxu0
    %v2811 = vadd.f32 %v1675, %v2806
    %v2812 = vadd.f32 %v1676, %v2809
    %v2813 = vld [vmem:[%s71] sm:$0x1]
    %v2814 = vld [vmem:[%s73] sm:$0x1]
    %v2815 = vsel %vm740, %v2811, 0.0
    %2816 = vadd.xlane.f32.xlu0 %v2815
    %v2817 = vpop.xlane.xlu0 %2816
    %v2818 = vsel %vm740, %v2812, 0.0
    %2819 = vadd.xlane.f32.xlu0 %v2818
    %v2820 = vpop.xlane.xlu0 %2819
    %v2821 = vmul.f32 %v2817, %v1628
    %v2822 = vmul.f32 %v2820, %v1628
    %v2823 = vsub.f32 %v2811, %v2821
    %v2824 = vsub.f32 %v2812, %v2822
    %v2825 = vmul.f32 %v2823, %v2823
    %v2826 = vmul.f32 %v2824, %v2824
    %v2827 = vsel %vm740, %v2825, 0.0
    %2828 = vadd.xlane.f32.xlu0 %v2827
    %v2829 = vpop.xlane.xlu0 %2828
    %v2830 = vsel %vm740, %v2826, 0.0
    %2831 = vadd.xlane.f32.xlu0 %v2830
    %v2832 = vpop.xlane.xlu0 %2831
    %v2833 = vmul.f32 %v2829, %v1628
    %v2834 = vmul.f32 %v2832, %v1628
    %v2835 = vadd.f32 %v2833, 1e-05
    %v2836 = vadd.f32 %v2834, 1e-05
    %v2837 = vrsqrt.pop %v2835
    %v2838 = vmul.f32 %v2837, %v2835
    %v2839 = vmul.f32 %v2838, %v2837
    %v2840 = vmul.f32 0.5, %v2839
    %v2841 = vsub.f32 1.5, %v2840
    %v2842 = vmul.f32 %v2837, %v2841
    %vm2843 = vweird.f32 %v2835
    %vm2844 = vweird.f32 %v2837
    %vm2845 = vmor %vm2843, %vm2844
    %v2846 = vsel %vm2845, %v2837, %v2842
    %v2847 = vrsqrt.pop %v2836
    %v2848 = vmul.f32 %v2847, %v2836
    %v2849 = vmul.f32 %v2848, %v2847
    %v2850 = vmul.f32 0.5, %v2849
    %v2851 = vsub.f32 1.5, %v2850
    %v2852 = vmul.f32 %v2847, %v2851
    %vm2853 = vweird.f32 %v2836
    %vm2854 = vweird.f32 %v2847
    %vm2855 = vmor %vm2853, %vm2854
    %v2856 = vsel %vm2855, %v2847, %v2852
    %v2857 = vmul.f32 %v2823, %v2846
    %v2858 = vmul.f32 %v2824, %v2856
    %v2860 = vperm.slane %v2813, 0
    %v2862 = vmul.f32 %v2857, %v2860
    %v2863 = vmul.f32 %v2858, %v2860
    %v2865 = vperm.slane %v2814, 0
    %v2867 = vadd.f32 %v2862, %v2865
    %v2868 = vadd.f32 %v2863, %v2865
    %v2869 = vld [vmem:[%s75] sm:$0xff]
    %v2870 = vld [vmem:[%s77] sm:$0xff]
    %v2871 = vld [vmem:[%s79] sm:$0xff]
    %v2872 = vld [vmem:[%s81] sm:$0x1]
    %v2873 = vld [vmem:[%s83] sm:$0x1]
    %v2874 = vld [vmem:[%s85] sm:$0x1]
    %v2875 = vld [vmem:[%s87] sm:$0xff]
    %v2876 = vld [vmem:[%s89] sm:$0x1]
    %v2877 = vld [vmem:[%s91] sm:$0xff]
    %v2878 = vld [vmem:[%s93] sm:$0x1]
    %v2879 = vld [vmem:[%s95] sm:$0xff]
    %v2880 = vld [vmem:[%s97] sm:$0x1]
    %v2881 = vld [vmem:[%s99] sm:$0x1]
    %v2882 = vld [vmem:[%s101] sm:$0x1]
    %v2883 = vld [vmem:[%s103] sm:$0x1]
    %v2884 = vld [vmem:[%s105] sm:$0x1]
    %2885 = vxpose.xlu0.b32.start [1/16] %v2867, 128
    %2886 = vxpose.xlu0.b32.cont [2/16] 0.0, 128
    %2887 = vxpose.xlu0.b32.cont [3/16] 0.0, 128
    %2888 = vxpose.xlu0.b32.cont [4/16] 0.0, 128
    %2889 = vxpose.xlu0.b32.cont [5/16] 0.0, 128
    %2890 = vxpose.xlu0.b32.cont [6/16] 0.0, 128
    %2891 = vxpose.xlu0.b32.cont [7/16] 0.0, 128
    %2892 = vxpose.xlu0.b32.cont [8/16] 0.0, 128
    %2893 = vxpose.xlu0.b32.cont [9/16] 0.0, 128
    %2894 = vxpose.xlu0.b32.cont [10/16] 0.0, 128
    %2895 = vxpose.xlu0.b32.cont [11/16] 0.0, 128
    %2896 = vxpose.xlu0.b32.cont [12/16] 0.0, 128
    %2897 = vxpose.xlu0.b32.cont [13/16] 0.0, 128
    %2898 = vxpose.xlu0.b32.cont [14/16] 0.0, 128
    %2899 = vxpose.xlu0.b32.cont [15/16] 0.0, 128
    %2900 = vxpose.xlu0.b32.end [16/16] 0.0, 128
    %v2901 = vpop.trf.xlu0
    %v2902 = vpop.trf.xlu0
    %v2903 = vpop.trf.xlu0
    %v2904 = vpop.trf.xlu0
    %v2905 = vpop.trf.xlu0
    %v2906 = vpop.trf.xlu0
    %v2907 = vpop.trf.xlu0
    %v2908 = vpop.trf.xlu0
    %v2909 = vpop.trf.xlu0
    %v2910 = vpop.trf.xlu0
    %v2911 = vpop.trf.xlu0
    %v2912 = vpop.trf.xlu0
    %v2913 = vpop.trf.xlu0
    %v2914 = vpop.trf.xlu0
    %v2915 = vpop.trf.xlu0
    %v2916 = vpop.trf.xlu0
    %v2918 = vperm.slane %v2872, 0
    %v2921 = vsel %vm916, %v2901, 0
    %v2924 = vsel %vm916, %v2902, 0
    %v2927 = vsel %vm916, %v2903, 0
    %v2930 = vsel %vm916, %v2904, 0
    %2932 = vmatpush.msra.mxu0 0.0
    %2933 = vmatpush.msra.mxu0 0.0
    %2934 = vmatpush.msra.mxu0 0.0
    %2935 = vmatpush.msra.mxu0 0.0
    %2936 = vmatpush.msra.mxu0 0.0
    %2937 = vmatpush.msra.mxu0 0.0
    %2938 = vmatpush.msra.mxu0 0.0
    %2939 = vmatpush.msra.mxu0 0.0
    %2940 = vmatpush.msra.mxu0 0.0
    %2941 = vmatpush.msra.mxu0 0.0
    %2942 = vmatpush.msra.mxu0 0.0
    %2943 = vmatpush.msra.mxu0 0.0
    %2944 = vmatpush.msra.mxu0 0.0
    %2945 = vmatpush.msra.mxu0 0.0
    %2946 = vmatpush.msra.mxu0 0.0
    %2947 = vmatpush.msra.mxu0 %v2869
    %2948 = vmatmul.f32.gmra.mxu0 %v2921
    %v2949 = vpop.f32.mrf.mxu0
    %v2950 = vadd.f32 %v2918, %v2949
    %2951 = vmatmul.f32.gmra.mxu0 %v2924
    %v2952 = vpop.f32.mrf.mxu0
    %v2953 = vadd.f32 %v2918, %v2952
    %2954 = vmatmul.f32.gmra.mxu0 %v2927
    %v2955 = vpop.f32.mrf.mxu0
    %v2956 = vadd.f32 %v2918, %v2955
    %2957 = vmatmul.f32.gmra.mxu0 %v2930
    %v2958 = vpop.f32.mrf.mxu0
    %v2959 = vadd.f32 %v2918, %v2958
    %2960 = vdwg.mxu0
    %v2962 = vperm.slane %v2873, 0
    %2964 = vmatpush.msra.mxu0 0.0
    %2965 = vmatpush.msra.mxu0 0.0
    %2966 = vmatpush.msra.mxu0 0.0
    %2967 = vmatpush.msra.mxu0 0.0
    %2968 = vmatpush.msra.mxu0 0.0
    %2969 = vmatpush.msra.mxu0 0.0
    %2970 = vmatpush.msra.mxu0 0.0
    %2971 = vmatpush.msra.mxu0 0.0
    %2972 = vmatpush.msra.mxu0 0.0
    %2973 = vmatpush.msra.mxu0 0.0
    %2974 = vmatpush.msra.mxu0 0.0
    %2975 = vmatpush.msra.mxu0 0.0
    %2976 = vmatpush.msra.mxu0 0.0
    %2977 = vmatpush.msra.mxu0 0.0
    %2978 = vmatpush.msra.mxu0 0.0
    %2979 = vmatpush.msra.mxu0 %v2870
    %2980 = vmatmul.f32.gmra.mxu0 %v2921
    %v2981 = vpop.f32.mrf.mxu0
    %v2982 = vadd.f32 %v2962, %v2981
    %2983 = vmatmul.f32.gmra.mxu0 %v2924
    %v2984 = vpop.f32.mrf.mxu0
    %v2985 = vadd.f32 %v2962, %v2984
    %2986 = vmatmul.f32.gmra.mxu0 %v2927
    %v2987 = vpop.f32.mrf.mxu0
    %v2988 = vadd.f32 %v2962, %v2987
    %2989 = vmatmul.f32.gmra.mxu0 %v2930
    %v2990 = vpop.f32.mrf.mxu0
    %v2991 = vadd.f32 %v2962, %v2990
    %2992 = vdwg.mxu0
    %v2994 = vperm.slane %v2874, 0
    %2996 = vmatpush.msra.mxu0 0.0
    %2997 = vmatpush.msra.mxu0 0.0
    %2998 = vmatpush.msra.mxu0 0.0
    %2999 = vmatpush.msra.mxu0 0.0
    %3000 = vmatpush.msra.mxu0 0.0
    %3001 = vmatpush.msra.mxu0 0.0
    %3002 = vmatpush.msra.mxu0 0.0
    %3003 = vmatpush.msra.mxu0 0.0
    %3004 = vmatpush.msra.mxu0 0.0
    %3005 = vmatpush.msra.mxu0 0.0
    %3006 = vmatpush.msra.mxu0 0.0
    %3007 = vmatpush.msra.mxu0 0.0
    %3008 = vmatpush.msra.mxu0 0.0
    %3009 = vmatpush.msra.mxu0 0.0
    %3010 = vmatpush.msra.mxu0 0.0
    %3011 = vmatpush.msra.mxu0 %v2871
    %3012 = vmatmul.f32.gmra.mxu0 %v2921
    %v3013 = vpop.f32.mrf.mxu0
    %v3014 = vadd.f32 %v2994, %v3013
    %3015 = vmatmul.f32.gmra.mxu0 %v2924
    %v3016 = vpop.f32.mrf.mxu0
    %v3017 = vadd.f32 %v2994, %v3016
    %3018 = vmatmul.f32.gmra.mxu0 %v2927
    %v3019 = vpop.f32.mrf.mxu0
    %v3020 = vadd.f32 %v2994, %v3019
    %3021 = vmatmul.f32.gmra.mxu0 %v2930
    %v3022 = vpop.f32.mrf.mxu0
    %v3023 = vadd.f32 %v2994, %v3022
    %3024 = vdwg.mxu0
    %v3026 = vsel %vm916, %v2950, 0
    %v3029 = vsel %vm916, %v2953, 0
    %v3032 = vsel %vm916, %v2956, 0
    %v3035 = vsel %vm916, %v2959, 0
    %v3038 = vsel %vm916, %v2982, 0
    %v3041 = vsel %vm916, %v2985, 0
    %v3044 = vsel %vm916, %v2988, 0
    %v3047 = vsel %vm916, %v2991, 0
    %3049 = vmatpush.xpose.msra.mxu0 0.0
    %3050 = vmatpush.xpose.msra.mxu0 0.0
    %3051 = vmatpush.xpose.msra.mxu0 0.0
    %3052 = vmatpush.xpose.msra.mxu0 0.0
    %3053 = vmatpush.xpose.msra.mxu0 0.0
    %3054 = vmatpush.xpose.msra.mxu0 0.0
    %3055 = vmatpush.xpose.msra.mxu0 0.0
    %3056 = vmatpush.xpose.msra.mxu0 0.0
    %3057 = vmatpush.xpose.msra.mxu0 0.0
    %3058 = vmatpush.xpose.msra.mxu0 0.0
    %3059 = vmatpush.xpose.msra.mxu0 0.0
    %3060 = vmatpush.xpose.msra.mxu0 0.0
    %3061 = vmatpush.xpose.msra.mxu0 %v3047
    %3062 = vmatpush.xpose.msra.mxu0 %v3044
    %3063 = vmatpush.xpose.msra.mxu0 %v3041
    %3064 = vmatpush.xpose.msra.mxu0 %v3038
    %3065 = vmatmul.f32.gmra.mxu0 %v3026
    %v3066 = vpop.f32.mrf.mxu0
    %v3067 = vadd.f32 0.0, %v3066
    %3068 = vmatmul.f32.gmra.mxu0 %v3029
    %v3069 = vpop.f32.mrf.mxu0
    %v3070 = vadd.f32 0.0, %v3069
    %3071 = vmatmul.f32.gmra.mxu0 %v3032
    %v3072 = vpop.f32.mrf.mxu0
    %v3073 = vadd.f32 0.0, %v3072
    %3074 = vmatmul.f32.gmra.mxu0 %v3035
    %v3075 = vpop.f32.mrf.mxu0
    %v3076 = vadd.f32 0.0, %v3075
    %3077 = vdwg.mxu0
    %v3078 = vmul.f32 %v3067, 0.35355338
    %v3079 = vmul.f32 %v3070, 0.35355338
    %v3080 = vmul.f32 %v3073, 0.35355338
    %v3081 = vmul.f32 %v3076, 0.35355338
    %v3082 = vsel %vm740, %v3078, -inf
    %3083 = vmax.xlane.f32.xlu0 %v3082
    %v3084 = vpop.xlane.xlu0 %3083
    %v3085 = vsel %vm740, %v3079, -inf
    %3086 = vmax.xlane.f32.xlu0 %v3085
    %v3087 = vpop.xlane.xlu0 %3086
    %v3088 = vsel %vm740, %v3080, -inf
    %3089 = vmax.xlane.f32.xlu0 %v3088
    %v3090 = vpop.xlane.xlu0 %3089
    %v3091 = vsel %vm740, %v3081, -inf
    %3092 = vmax.xlane.f32.xlu0 %v3091
    %v3093 = vpop.xlane.xlu0 %3092
    %v3094 = vsub.f32 %v3078, %v3084
    %v3095 = vsub.f32 %v3079, %v3087
    %v3096 = vsub.f32 %v3080, %v3090
    %v3097 = vsub.f32 %v3081, %v3093
    %v3098 = vmul.f32 %v3094, 1.442695
    %v3099 = vpow.pop %v3098
    %v3100 = vmul.f32 %v3095, 1.442695
    %v3101 = vpow.pop %v3100
    %v3102 = vmul.f32 %v3096, 1.442695
    %v3103 = vpow.pop %v3102
    %v3104 = vmul.f32 %v3097, 1.442695
    %v3105 = vpow.pop %v3104
    %v3106 = vsel %vm740, %v3099, 0.0
    %3107 = vadd.xlane.f32.xlu0 %v3106
    %v3108 = vpop.xlane.xlu0 %3107
    %v3109 = vsel %vm740, %v3101, 0.0
    %3110 = vadd.xlane.f32.xlu0 %v3109
    %v3111 = vpop.xlane.xlu0 %3110
    %v3112 = vsel %vm740, %v3103, 0.0
    %3113 = vadd.xlane.f32.xlu0 %v3112
    %v3114 = vpop.xlane.xlu0 %3113
    %v3115 = vsel %vm740, %v3105, 0.0
    %3116 = vadd.xlane.f32.xlu0 %v3115
    %v3117 = vpop.xlane.xlu0 %3116
    %v3118 = vrcp.pop %v3108
    %v3119 = vmul.f32 %v3108, %v3118
    %v3120 = vsub.f32 1.0, %v3119
    %v3121 = vmul.f32 %v3118, %v3120
    %v3122 = vadd.f32 %v3118, %v3121
    %vm3123 = vweird.f32 %v3108
    %vm3124 = vweird.f32 %v3118
    %vm3125 = vmor %vm3123, %vm3124
    %v3126 = vsel %vm3125, %v3118, %v3122
    %v3127 = vand.u32 2147483647, %v3108
    %vm3128 = vcmp.eq.f32.partialorder %v3127, 8.507059e+37
    %v3129 = vand.u32 %v3108, 2147483648
    %v3130 = vor.u32 1.1754944e-38, %v3129
    %v3131 = vsel %vm3128, %v3130, %v3126
    %v3132 = vmul.f32 %v3099, %v3131
    %v3133 = vrcp.pop %v3111
    %v3134 = vmul.f32 %v3111, %v3133
    %v3135 = vsub.f32 1.0, %v3134
    %v3136 = vmul.f32 %v3133, %v3135
    %v3137 = vadd.f32 %v3133, %v3136
    %vm3138 = vweird.f32 %v3111
    %vm3139 = vweird.f32 %v3133
    %vm3140 = vmor %vm3138, %vm3139
    %v3141 = vsel %vm3140, %v3133, %v3137
    %v3142 = vand.u32 2147483647, %v3111
    %vm3143 = vcmp.eq.f32.partialorder %v3142, 8.507059e+37
    %v3144 = vand.u32 %v3111, 2147483648
    %v3145 = vor.u32 1.1754944e-38, %v3144
    %v3146 = vsel %vm3143, %v3145, %v3141
    %v3147 = vmul.f32 %v3101, %v3146
    %v3148 = vrcp.pop %v3114
    %v3149 = vmul.f32 %v3114, %v3148
    %v3150 = vsub.f32 1.0, %v3149
    %v3151 = vmul.f32 %v3148, %v3150
    %v3152 = vadd.f32 %v3148, %v3151
    %vm3153 = vweird.f32 %v3114
    %vm3154 = vweird.f32 %v3148
    %vm3155 = vmor %vm3153, %vm3154
    %v3156 = vsel %vm3155, %v3148, %v3152
    %v3157 = vand.u32 2147483647, %v3114
    %vm3158 = vcmp.eq.f32.partialorder %v3157, 8.507059e+37
    %v3159 = vand.u32 %v3114, 2147483648
    %v3160 = vor.u32 1.1754944e-38, %v3159
    %v3161 = vsel %vm3158, %v3160, %v3156
    %v3162 = vmul.f32 %v3103, %v3161
    %v3163 = vrcp.pop %v3117
    %v3164 = vmul.f32 %v3117, %v3163
    %v3165 = vsub.f32 1.0, %v3164
    %v3166 = vmul.f32 %v3163, %v3165
    %v3167 = vadd.f32 %v3163, %v3166
    %vm3168 = vweird.f32 %v3117
    %vm3169 = vweird.f32 %v3163
    %vm3170 = vmor %vm3168, %vm3169
    %v3171 = vsel %vm3170, %v3163, %v3167
    %v3172 = vand.u32 2147483647, %v3117
    %vm3173 = vcmp.eq.f32.partialorder %v3172, 8.507059e+37
    %v3174 = vand.u32 %v3117, 2147483648
    %v3175 = vor.u32 1.1754944e-38, %v3174
    %v3176 = vsel %vm3173, %v3175, %v3171
    %v3177 = vmul.f32 %v3105, %v3176
    %v3179 = vsel %vm740, %v3132, 0
    %v3182 = vsel %vm740, %v3147, 0
    %v3185 = vsel %vm740, %v3162, 0
    %v3188 = vsel %vm740, %v3177, 0
    %3190 = vmatpush.msra.mxu0 0.0
    %3191 = vmatpush.msra.mxu0 0.0
    %3192 = vmatpush.msra.mxu0 0.0
    %3193 = vmatpush.msra.mxu0 0.0
    %3194 = vmatpush.msra.mxu0 0.0
    %3195 = vmatpush.msra.mxu0 0.0
    %3196 = vmatpush.msra.mxu0 0.0
    %3197 = vmatpush.msra.mxu0 0.0
    %3198 = vmatpush.msra.mxu0 0.0
    %3199 = vmatpush.msra.mxu0 0.0
    %3200 = vmatpush.msra.mxu0 0.0
    %3201 = vmatpush.msra.mxu0 0.0
    %3202 = vmatpush.msra.mxu0 %v3023
    %3203 = vmatpush.msra.mxu0 %v3020
    %3204 = vmatpush.msra.mxu0 %v3017
    %3205 = vmatpush.msra.mxu0 %v3014
    %3206 = vmatmul.f32.gmra.mxu0 %v3179
    %v3207 = vpop.f32.mrf.mxu0
    %v3208 = vadd.f32 0.0, %v3207
    %3209 = vmatmul.f32.gmra.mxu0 %v3182
    %v3210 = vpop.f32.mrf.mxu0
    %v3211 = vadd.f32 0.0, %v3210
    %3212 = vmatmul.f32.gmra.mxu0 %v3185
    %v3213 = vpop.f32.mrf.mxu0
    %v3214 = vadd.f32 0.0, %v3213
    %3215 = vmatmul.f32.gmra.mxu0 %v3188
    %v3216 = vpop.f32.mrf.mxu0
    %v3217 = vadd.f32 0.0, %v3216
    %3218 = vdwg.mxu0
    %v3220 = vperm.slane %v2876, 0
    %v3223 = vsel %vm916, %v3208, 0
    %v3226 = vsel %vm916, %v3211, 0
    %v3229 = vsel %vm916, %v3214, 0
    %v3232 = vsel %vm916, %v3217, 0
    %3234 = vmatpush.msra.mxu0 0.0
    %3235 = vmatpush.msra.mxu0 0.0
    %3236 = vmatpush.msra.mxu0 0.0
    %3237 = vmatpush.msra.mxu0 0.0
    %3238 = vmatpush.msra.mxu0 0.0
    %3239 = vmatpush.msra.mxu0 0.0
    %3240 = vmatpush.msra.mxu0 0.0
    %3241 = vmatpush.msra.mxu0 0.0
    %3242 = vmatpush.msra.mxu0 0.0
    %3243 = vmatpush.msra.mxu0 0.0
    %3244 = vmatpush.msra.mxu0 0.0
    %3245 = vmatpush.msra.mxu0 0.0
    %3246 = vmatpush.msra.mxu0 0.0
    %3247 = vmatpush.msra.mxu0 0.0
    %3248 = vmatpush.msra.mxu0 0.0
    %3249 = vmatpush.msra.mxu0 %v2875
    %3250 = vmatmul.f32.gmra.mxu0 %v3223
    %v3251 = vpop.f32.mrf.mxu0
    %v3252 = vadd.f32 %v3220, %v3251
    %3253 = vmatmul.f32.gmra.mxu0 %v3226
    %v3254 = vpop.f32.mrf.mxu0
    %v3255 = vadd.f32 %v3220, %v3254
    %3256 = vmatmul.f32.gmra.mxu0 %v3229
    %v3257 = vpop.f32.mrf.mxu0
    %v3258 = vadd.f32 %v3220, %v3257
    %3259 = vmatmul.f32.gmra.mxu0 %v3232
    %v3260 = vpop.f32.mrf.mxu0
    %v3261 = vadd.f32 %v3220, %v3260
    %3262 = vdwg.mxu0
    %v3263 = vadd.f32 %v2901, %v3252
    %v3264 = vadd.f32 %v2902, %v3255
    %v3265 = vadd.f32 %v2903, %v3258
    %v3266 = vadd.f32 %v2904, %v3261
    %v3267 = vsel %vm916, %v3263, 0.0
    %3268 = vadd.xlane.f32.xlu0 %v3267
    %v3269 = vpop.xlane.xlu0 %3268
    %v3270 = vsel %vm916, %v3264, 0.0
    %3271 = vadd.xlane.f32.xlu0 %v3270
    %v3272 = vpop.xlane.xlu0 %3271
    %v3273 = vsel %vm916, %v3265, 0.0
    %3274 = vadd.xlane.f32.xlu0 %v3273
    %v3275 = vpop.xlane.xlu0 %3274
    %v3276 = vsel %vm916, %v3266, 0.0
    %3277 = vadd.xlane.f32.xlu0 %v3276
    %v3278 = vpop.xlane.xlu0 %3277
    %v3279 = vrcp.pop 8.0
    %v3280 = vmul.f32 8.0, %v3279
    %v3281 = vsub.f32 1.0, %v3280
    %v3282 = vmul.f32 %v3279, %v3281
    %v3283 = vadd.f32 %v3279, %v3282
    %vm3284 = vweird.f32 %v3279
    %v3285 = vsel %vm3284, %v3279, %v3283
    %v3286 = vmul.f32 %v3269, %v3285
    %v3287 = vmul.f32 %v3272, %v3285
    %v3288 = vmul.f32 %v3275, %v3285
    %v3289 = vmul.f32 %v3278, %v3285
    %v3290 = vsub.f32 %v3263, %v3286
    %v3291 = vsub.f32 %v3264, %v3287
    %v3292 = vsub.f32 %v3265, %v3288
    %v3293 = vsub.f32 %v3266, %v3289
    %v3294 = vmul.f32 %v3290, %v3290
    %v3295 = vmul.f32 %v3291, %v3291
    %v3296 = vmul.f32 %v3292, %v3292
    %v3297 = vmul.f32 %v3293, %v3293
    %v3298 = vsel %vm916, %v3294, 0.0
    %3299 = vadd.xlane.f32.xlu0 %v3298
    %v3300 = vpop.xlane.xlu0 %3299
    %v3301 = vsel %vm916, %v3295, 0.0
    %3302 = vadd.xlane.f32.xlu0 %v3301
    %v3303 = vpop.xlane.xlu0 %3302
    %v3304 = vsel %vm916, %v3296, 0.0
    %3305 = vadd.xlane.f32.xlu0 %v3304
    %v3306 = vpop.xlane.xlu0 %3305
    %v3307 = vsel %vm916, %v3297, 0.0
    %3308 = vadd.xlane.f32.xlu0 %v3307
    %v3309 = vpop.xlane.xlu0 %3308
    %v3310 = vmul.f32 %v3300, %v3285
    %v3311 = vmul.f32 %v3303, %v3285
    %v3312 = vmul.f32 %v3306, %v3285
    %v3313 = vmul.f32 %v3309, %v3285
    %v3314 = vadd.f32 %v3310, 1e-05
    %v3315 = vadd.f32 %v3311, 1e-05
    %v3316 = vadd.f32 %v3312, 1e-05
    %v3317 = vadd.f32 %v3313, 1e-05
    %v3318 = vrsqrt.pop %v3314
    %v3319 = vmul.f32 %v3318, %v3314
    %v3320 = vmul.f32 %v3319, %v3318
    %v3321 = vmul.f32 0.5, %v3320
    %v3322 = vsub.f32 1.5, %v3321
    %v3323 = vmul.f32 %v3318, %v3322
    %vm3324 = vweird.f32 %v3314
    %vm3325 = vweird.f32 %v3318
    %vm3326 = vmor %vm3324, %vm3325
    %v3327 = vsel %vm3326, %v3318, %v3323
    %v3328 = vrsqrt.pop %v3315
    %v3329 = vmul.f32 %v3328, %v3315
    %v3330 = vmul.f32 %v3329, %v3328
    %v3331 = vmul.f32 0.5, %v3330
    %v3332 = vsub.f32 1.5, %v3331
    %v3333 = vmul.f32 %v3328, %v3332
    %vm3334 = vweird.f32 %v3315
    %vm3335 = vweird.f32 %v3328
    %vm3336 = vmor %vm3334, %vm3335
    %v3337 = vsel %vm3336, %v3328, %v3333
    %v3338 = vrsqrt.pop %v3316
    %v3339 = vmul.f32 %v3338, %v3316
    %v3340 = vmul.f32 %v3339, %v3338
    %v3341 = vmul.f32 0.5, %v3340
    %v3342 = vsub.f32 1.5, %v3341
    %v3343 = vmul.f32 %v3338, %v3342
    %vm3344 = vweird.f32 %v3316
    %vm3345 = vweird.f32 %v3338
    %vm3346 = vmor %vm3344, %vm3345
    %v3347 = vsel %vm3346, %v3338, %v3343
    %v3348 = vrsqrt.pop %v3317
    %v3349 = vmul.f32 %v3348, %v3317
    %v3350 = vmul.f32 %v3349, %v3348
    %v3351 = vmul.f32 0.5, %v3350
    %v3352 = vsub.f32 1.5, %v3351
    %v3353 = vmul.f32 %v3348, %v3352
    %vm3354 = vweird.f32 %v3317
    %vm3355 = vweird.f32 %v3348
    %vm3356 = vmor %vm3354, %vm3355
    %v3357 = vsel %vm3356, %v3348, %v3353
    %v3358 = vmul.f32 %v3290, %v3327
    %v3359 = vmul.f32 %v3291, %v3337
    %v3360 = vmul.f32 %v3292, %v3347
    %v3361 = vmul.f32 %v3293, %v3357
    %v3363 = vperm.slane %v2881, 0
    %v3365 = vmul.f32 %v3358, %v3363
    %v3366 = vmul.f32 %v3359, %v3363
    %v3367 = vmul.f32 %v3360, %v3363
    %v3368 = vmul.f32 %v3361, %v3363
    %v3370 = vperm.slane %v2882, 0
    %v3372 = vadd.f32 %v3365, %v3370
    %v3373 = vadd.f32 %v3366, %v3370
    %v3374 = vadd.f32 %v3367, %v3370
    %v3375 = vadd.f32 %v3368, %v3370
    %v3377 = vperm.slane %v2878, 0
    %v3380 = vsel %vm916, %v3372, 0
    %v3383 = vsel %vm916, %v3373, 0
    %v3386 = vsel %vm916, %v3374, 0
    %v3389 = vsel %vm916, %v3375, 0
    %3391 = vmatpush.msra.mxu0 0.0
    %3392 = vmatpush.msra.mxu0 0.0
    %3393 = vmatpush.msra.mxu0 0.0
    %3394 = vmatpush.msra.mxu0 0.0
    %3395 = vmatpush.msra.mxu0 0.0
    %3396 = vmatpush.msra.mxu0 0.0
    %3397 = vmatpush.msra.mxu0 0.0
    %3398 = vmatpush.msra.mxu0 0.0
    %3399 = vmatpush.msra.mxu0 0.0
    %3400 = vmatpush.msra.mxu0 0.0
    %3401 = vmatpush.msra.mxu0 0.0
    %3402 = vmatpush.msra.mxu0 0.0
    %3403 = vmatpush.msra.mxu0 0.0
    %3404 = vmatpush.msra.mxu0 0.0
    %3405 = vmatpush.msra.mxu0 0.0
    %3406 = vmatpush.msra.mxu0 %v2877
    %3407 = vmatmul.f32.gmra.mxu0 %v3380
    %v3408 = vpop.f32.mrf.mxu0
    %v3409 = vadd.f32 %v3377, %v3408
    %3410 = vmatmul.f32.gmra.mxu0 %v3383
    %v3411 = vpop.f32.mrf.mxu0
    %v3412 = vadd.f32 %v3377, %v3411
    %3413 = vmatmul.f32.gmra.mxu0 %v3386
    %v3414 = vpop.f32.mrf.mxu0
    %v3415 = vadd.f32 %v3377, %v3414
    %3416 = vmatmul.f32.gmra.mxu0 %v3389
    %v3417 = vpop.f32.mrf.mxu0
    %v3418 = vadd.f32 %v3377, %v3417
    %3419 = vdwg.mxu0
    %v3420 = vmax.f32 %v3409, 0.0
    %v3421 = vmax.f32 %v3412, 0.0
    %v3422 = vmax.f32 %v3415, 0.0
    %v3423 = vmax.f32 %v3418, 0.0
    %v3425 = vsel %vm916, %v3420, 0
    %v3428 = vsel %vm916, %v3421, 0
    %v3431 = vsel %vm916, %v3422, 0
    %v3434 = vsel %vm916, %v3423, 0
    %3436 = vmatpush.msra.mxu0 0.0
    %3437 = vmatpush.msra.mxu0 0.0
    %3438 = vmatpush.msra.mxu0 0.0
    %3439 = vmatpush.msra.mxu0 0.0
    %3440 = vmatpush.msra.mxu0 0.0
    %3441 = vmatpush.msra.mxu0 0.0
    %3442 = vmatpush.msra.mxu0 0.0
    %3443 = vmatpush.msra.mxu0 0.0
    %3444 = vmatpush.msra.mxu0 0.0
    %3445 = vmatpush.msra.mxu0 0.0
    %3446 = vmatpush.msra.mxu0 0.0
    %3447 = vmatpush.msra.mxu0 0.0
    %3448 = vmatpush.msra.mxu0 0.0
    %3449 = vmatpush.msra.mxu0 0.0
    %3450 = vmatpush.msra.mxu0 0.0
    %3451 = vmatpush.msra.mxu0 %v2879
    %3452 = vmatmul.f32.gmra.mxu0 %v3425
    %v3453 = vpop.f32.mrf.mxu0
    %v3454 = vadd.f32 0.0, %v3453
    %3455 = vmatmul.f32.gmra.mxu0 %v3428
    %v3456 = vpop.f32.mrf.mxu0
    %v3457 = vadd.f32 0.0, %v3456
    %3458 = vmatmul.f32.gmra.mxu0 %v3431
    %v3459 = vpop.f32.mrf.mxu0
    %v3460 = vadd.f32 0.0, %v3459
    %3461 = vmatmul.f32.gmra.mxu0 %v3434
    %v3462 = vpop.f32.mrf.mxu0
    %v3463 = vadd.f32 0.0, %v3462
    %3464 = vdwg.mxu0
    %v3465 = vadd.f32 %v3372, %v3454
    %v3466 = vadd.f32 %v3373, %v3457
    %v3467 = vadd.f32 %v3374, %v3460
    %v3468 = vadd.f32 %v3375, %v3463
    %v3470 = vperm.slane %v2880, 0
    %v3472 = vadd.f32 %v3465, %v3470
    %v3473 = vadd.f32 %v3466, %v3470
    %v3474 = vadd.f32 %v3467, %v3470
    %v3475 = vadd.f32 %v3468, %v3470
    %v3476 = vsel %vm916, %v3472, 0.0
    %3477 = vadd.xlane.f32.xlu0 %v3476
    %v3478 = vpop.xlane.xlu0 %3477
    %v3479 = vsel %vm916, %v3473, 0.0
    %3480 = vadd.xlane.f32.xlu0 %v3479
    %v3481 = vpop.xlane.xlu0 %3480
    %v3482 = vsel %vm916, %v3474, 0.0
    %3483 = vadd.xlane.f32.xlu0 %v3482
    %v3484 = vpop.xlane.xlu0 %3483
    %v3485 = vsel %vm916, %v3475, 0.0
    %3486 = vadd.xlane.f32.xlu0 %v3485
    %v3487 = vpop.xlane.xlu0 %3486
    %v3488 = vmul.f32 %v3478, %v3285
    %v3489 = vmul.f32 %v3481, %v3285
    %v3490 = vmul.f32 %v3484, %v3285
    %v3491 = vmul.f32 %v3487, %v3285
    %v3492 = vsub.f32 %v3472, %v3488
    %v3493 = vsub.f32 %v3473, %v3489
    %v3494 = vsub.f32 %v3474, %v3490
    %v3495 = vsub.f32 %v3475, %v3491
    %v3496 = vmul.f32 %v3492, %v3492
    %v3497 = vmul.f32 %v3493, %v3493
    %v3498 = vmul.f32 %v3494, %v3494
    %v3499 = vmul.f32 %v3495, %v3495
    %v3500 = vsel %vm916, %v3496, 0.0
    %3501 = vadd.xlane.f32.xlu0 %v3500
    %v3502 = vpop.xlane.xlu0 %3501
    %v3503 = vsel %vm916, %v3497, 0.0
    %3504 = vadd.xlane.f32.xlu0 %v3503
    %v3505 = vpop.xlane.xlu0 %3504
    %v3506 = vsel %vm916, %v3498, 0.0
    %3507 = vadd.xlane.f32.xlu0 %v3506
    %v3508 = vpop.xlane.xlu0 %3507
    %v3509 = vsel %vm916, %v3499, 0.0
    %3510 = vadd.xlane.f32.xlu0 %v3509
    %v3511 = vpop.xlane.xlu0 %3510
    %v3512 = vmul.f32 %v3502, %v3285
    %v3513 = vmul.f32 %v3505, %v3285
    %v3514 = vmul.f32 %v3508, %v3285
    %v3515 = vmul.f32 %v3511, %v3285
    %v3516 = vadd.f32 %v3512, 1e-05
    %v3517 = vadd.f32 %v3513, 1e-05
    %v3518 = vadd.f32 %v3514, 1e-05
    %v3519 = vadd.f32 %v3515, 1e-05
    %v3520 = vrsqrt.pop %v3516
    %v3521 = vmul.f32 %v3520, %v3516
    %v3522 = vmul.f32 %v3521, %v3520
    %v3523 = vmul.f32 0.5, %v3522
    %v3524 = vsub.f32 1.5, %v3523
    %v3525 = vmul.f32 %v3520, %v3524
    %vm3526 = vweird.f32 %v3516
    %vm3527 = vweird.f32 %v3520
    %vm3528 = vmor %vm3526, %vm3527
    %v3529 = vsel %vm3528, %v3520, %v3525
    %v3530 = vrsqrt.pop %v3517
    %v3531 = vmul.f32 %v3530, %v3517
    %v3532 = vmul.f32 %v3531, %v3530
    %v3533 = vmul.f32 0.5, %v3532
    %v3534 = vsub.f32 1.5, %v3533
    %v3535 = vmul.f32 %v3530, %v3534
    %vm3536 = vweird.f32 %v3517
    %vm3537 = vweird.f32 %v3530
    %vm3538 = vmor %vm3536, %vm3537
    %v3539 = vsel %vm3538, %v3530, %v3535
    %v3540 = vrsqrt.pop %v3518
    %v3541 = vmul.f32 %v3540, %v3518
    %v3542 = vmul.f32 %v3541, %v3540
    %v3543 = vmul.f32 0.5, %v3542
    %v3544 = vsub.f32 1.5, %v3543
    %v3545 = vmul.f32 %v3540, %v3544
    %vm3546 = vweird.f32 %v3518
    %vm3547 = vweird.f32 %v3540
    %vm3548 = vmor %vm3546, %vm3547
    %v3549 = vsel %vm3548, %v3540, %v3545
    %v3550 = vrsqrt.pop %v3519
    %v3551 = vmul.f32 %v3550, %v3519
    %v3552 = vmul.f32 %v3551, %v3550
    %v3553 = vmul.f32 0.5, %v3552
    %v3554 = vsub.f32 1.5, %v3553
    %v3555 = vmul.f32 %v3550, %v3554
    %vm3556 = vweird.f32 %v3519
    %vm3557 = vweird.f32 %v3550
    %vm3558 = vmor %vm3556, %vm3557
    %v3559 = vsel %vm3558, %v3550, %v3555
    %v3560 = vmul.f32 %v3492, %v3529
    %v3561 = vmul.f32 %v3493, %v3539
    %v3562 = vmul.f32 %v3494, %v3549
    %v3563 = vmul.f32 %v3495, %v3559
    %v3565 = vperm.slane %v2883, 0
    %v3567 = vmul.f32 %v3560, %v3565
    %v3568 = vmul.f32 %v3561, %v3565
    %v3569 = vmul.f32 %v3562, %v3565
    %v3570 = vmul.f32 %v3563, %v3565
    %v3572 = vperm.slane %v2884, 0
    %v3574 = vadd.f32 %v3567, %v3572
    %v3575 = vadd.f32 %v3568, %v3572
    %v3576 = vadd.f32 %v3569, %v3572
    %v3577 = vadd.f32 %v3570, %v3572
    %3578 = vxpose.xlu0.b32.start [1/16] %v3574, 128
    %3579 = vxpose.xlu0.b32.cont [2/16] %v3575, 128
    %3580 = vxpose.xlu0.b32.cont [3/16] %v3576, 128
    %3581 = vxpose.xlu0.b32.cont [4/16] %v3577, 128
    %3582 = vxpose.xlu0.b32.cont [5/16] 0.0, 128
    %3583 = vxpose.xlu0.b32.cont [6/16] 0.0, 128
    %3584 = vxpose.xlu0.b32.cont [7/16] 0.0, 128
    %3585 = vxpose.xlu0.b32.cont [8/16] 0.0, 128
    %3586 = vxpose.xlu0.b32.cont [9/16] 0.0, 128
    %3587 = vxpose.xlu0.b32.cont [10/16] 0.0, 128
    %3588 = vxpose.xlu0.b32.cont [11/16] 0.0, 128
    %3589 = vxpose.xlu0.b32.cont [12/16] 0.0, 128
    %3590 = vxpose.xlu0.b32.cont [13/16] 0.0, 128
    %3591 = vxpose.xlu0.b32.cont [14/16] 0.0, 128
    %3592 = vxpose.xlu0.b32.cont [15/16] 0.0, 128
    %3593 = vxpose.xlu0.b32.end [16/16] 0.0, 128
    %v3594 = vpop.trf.xlu0
    %v3595 = vpop.trf.xlu0
    %v3596 = vpop.trf.xlu0
    %v3597 = vpop.trf.xlu0
    %v3598 = vpop.trf.xlu0
    %v3599 = vpop.trf.xlu0
    %v3600 = vpop.trf.xlu0
    %v3601 = vpop.trf.xlu0
    %v3602 = vpop.trf.xlu0
    %v3603 = vpop.trf.xlu0
    %v3604 = vpop.trf.xlu0
    %v3605 = vpop.trf.xlu0
    %v3606 = vpop.trf.xlu0
    %v3607 = vpop.trf.xlu0
    %v3608 = vpop.trf.xlu0
    %v3609 = vpop.trf.xlu0
    %3610 = vxpose.xlu0.b32.start [1/16] %v2868, 128
    %3611 = vxpose.xlu0.b32.cont [2/16] 0.0, 128
    %3612 = vxpose.xlu0.b32.cont [3/16] 0.0, 128
    %3613 = vxpose.xlu0.b32.cont [4/16] 0.0, 128
    %3614 = vxpose.xlu0.b32.cont [5/16] 0.0, 128
    %3615 = vxpose.xlu0.b32.cont [6/16] 0.0, 128
    %3616 = vxpose.xlu0.b32.cont [7/16] 0.0, 128
    %3617 = vxpose.xlu0.b32.cont [8/16] 0.0, 128
    %3618 = vxpose.xlu0.b32.cont [9/16] 0.0, 128
    %3619 = vxpose.xlu0.b32.cont [10/16] 0.0, 128
    %3620 = vxpose.xlu0.b32.cont [11/16] 0.0, 128
    %3621 = vxpose.xlu0.b32.cont [12/16] 0.0, 128
    %3622 = vxpose.xlu0.b32.cont [13/16] 0.0, 128
    %3623 = vxpose.xlu0.b32.cont [14/16] 0.0, 128
    %3624 = vxpose.xlu0.b32.cont [15/16] 0.0, 128
    %3625 = vxpose.xlu0.b32.end [16/16] 0.0, 128
    %v3626 = vpop.trf.xlu0
    %v3627 = vpop.trf.xlu0
    %v3628 = vpop.trf.xlu0
    %v3629 = vpop.trf.xlu0
    %v3630 = vpop.trf.xlu0
    %v3631 = vpop.trf.xlu0
    %v3632 = vpop.trf.xlu0
    %v3633 = vpop.trf.xlu0
    %v3634 = vpop.trf.xlu0
    %v3635 = vpop.trf.xlu0
    %v3636 = vpop.trf.xlu0
    %v3637 = vpop.trf.xlu0
    %v3638 = vpop.trf.xlu0
    %v3639 = vpop.trf.xlu0
    %v3640 = vpop.trf.xlu0
    %v3641 = vpop.trf.xlu0
    %v3643 = vsel %vm916, %v3626, 0
    %v3646 = vsel %vm916, %v3627, 0
    %v3649 = vsel %vm916, %v3628, 0
    %v3652 = vsel %vm916, %v3629, 0
    %3654 = vmatpush.msra.mxu0 0.0
    %3655 = vmatpush.msra.mxu0 0.0
    %3656 = vmatpush.msra.mxu0 0.0
    %3657 = vmatpush.msra.mxu0 0.0
    %3658 = vmatpush.msra.mxu0 0.0
    %3659 = vmatpush.msra.mxu0 0.0
    %3660 = vmatpush.msra.mxu0 0.0
    %3661 = vmatpush.msra.mxu0 0.0
    %3662 = vmatpush.msra.mxu0 0.0
    %3663 = vmatpush.msra.mxu0 0.0
    %3664 = vmatpush.msra.mxu0 0.0
    %3665 = vmatpush.msra.mxu0 0.0
    %3666 = vmatpush.msra.mxu0 0.0
    %3667 = vmatpush.msra.mxu0 0.0
    %3668 = vmatpush.msra.mxu0 0.0
    %3669 = vmatpush.msra.mxu0 %v2869
    %3670 = vmatmul.f32.gmra.mxu0 %v3643
    %v3671 = vpop.f32.mrf.mxu0
    %v3672 = vadd.f32 %v2918, %v3671
    %3673 = vmatmul.f32.gmra.mxu0 %v3646
    %v3674 = vpop.f32.mrf.mxu0
    %v3675 = vadd.f32 %v2918, %v3674
    %3676 = vmatmul.f32.gmra.mxu0 %v3649
    %v3677 = vpop.f32.mrf.mxu0
    %v3678 = vadd.f32 %v2918, %v3677
    %3679 = vmatmul.f32.gmra.mxu0 %v3652
    %v3680 = vpop.f32.mrf.mxu0
    %v3681 = vadd.f32 %v2918, %v3680
    %3682 = vdwg.mxu0
    %3683 = vmatpush.msra.mxu0 0.0
    %3684 = vmatpush.msra.mxu0 0.0
    %3685 = vmatpush.msra.mxu0 0.0
    %3686 = vmatpush.msra.mxu0 0.0
    %3687 = vmatpush.msra.mxu0 0.0
    %3688 = vmatpush.msra.mxu0 0.0
    %3689 = vmatpush.msra.mxu0 0.0
    %3690 = vmatpush.msra.mxu0 0.0
    %3691 = vmatpush.msra.mxu0 0.0
    %3692 = vmatpush.msra.mxu0 0.0
    %3693 = vmatpush.msra.mxu0 0.0
    %3694 = vmatpush.msra.mxu0 0.0
    %3695 = vmatpush.msra.mxu0 0.0
    %3696 = vmatpush.msra.mxu0 0.0
    %3697 = vmatpush.msra.mxu0 0.0
    %3698 = vmatpush.msra.mxu0 %v2870
    %3699 = vmatmul.f32.gmra.mxu0 %v3643
    %v3700 = vpop.f32.mrf.mxu0
    %v3701 = vadd.f32 %v2962, %v3700
    %3702 = vmatmul.f32.gmra.mxu0 %v3646
    %v3703 = vpop.f32.mrf.mxu0
    %v3704 = vadd.f32 %v2962, %v3703
    %3705 = vmatmul.f32.gmra.mxu0 %v3649
    %v3706 = vpop.f32.mrf.mxu0
    %v3707 = vadd.f32 %v2962, %v3706
    %3708 = vmatmul.f32.gmra.mxu0 %v3652
    %v3709 = vpop.f32.mrf.mxu0
    %v3710 = vadd.f32 %v2962, %v3709
    %3711 = vdwg.mxu0
    %3712 = vmatpush.msra.mxu0 0.0
    %3713 = vmatpush.msra.mxu0 0.0
    %3714 = vmatpush.msra.mxu0 0.0
    %3715 = vmatpush.msra.mxu0 0.0
    %3716 = vmatpush.msra.mxu0 0.0
    %3717 = vmatpush.msra.mxu0 0.0
    %3718 = vmatpush.msra.mxu0 0.0
    %3719 = vmatpush.msra.mxu0 0.0
    %3720 = vmatpush.msra.mxu0 0.0
    %3721 = vmatpush.msra.mxu0 0.0
    %3722 = vmatpush.msra.mxu0 0.0
    %3723 = vmatpush.msra.mxu0 0.0
    %3724 = vmatpush.msra.mxu0 0.0
    %3725 = vmatpush.msra.mxu0 0.0
    %3726 = vmatpush.msra.mxu0 0.0
    %3727 = vmatpush.msra.mxu0 %v2871
    %3728 = vmatmul.f32.gmra.mxu0 %v3643
    %v3729 = vpop.f32.mrf.mxu0
    %v3730 = vadd.f32 %v2994, %v3729
    %3731 = vmatmul.f32.gmra.mxu0 %v3646
    %v3732 = vpop.f32.mrf.mxu0
    %v3733 = vadd.f32 %v2994, %v3732
    %3734 = vmatmul.f32.gmra.mxu0 %v3649
    %v3735 = vpop.f32.mrf.mxu0
    %v3736 = vadd.f32 %v2994, %v3735
    %3737 = vmatmul.f32.gmra.mxu0 %v3652
    %v3738 = vpop.f32.mrf.mxu0
    %v3739 = vadd.f32 %v2994, %v3738
    %3740 = vdwg.mxu0
    %v3742 = vsel %vm916, %v3672, 0
    %v3745 = vsel %vm916, %v3675, 0
    %v3748 = vsel %vm916, %v3678, 0
    %v3751 = vsel %vm916, %v3681, 0
    %v3754 = vsel %vm916, %v3701, 0
    %v3757 = vsel %vm916, %v3704, 0
    %v3760 = vsel %vm916, %v3707, 0
    %v3763 = vsel %vm916, %v3710, 0
    %3765 = vmatpush.xpose.msra.mxu0 0.0
    %3766 = vmatpush.xpose.msra.mxu0 0.0
    %3767 = vmatpush.xpose.msra.mxu0 0.0
    %3768 = vmatpush.xpose.msra.mxu0 0.0
    %3769 = vmatpush.xpose.msra.mxu0 0.0
    %3770 = vmatpush.xpose.msra.mxu0 0.0
    %3771 = vmatpush.xpose.msra.mxu0 0.0
    %3772 = vmatpush.xpose.msra.mxu0 0.0
    %3773 = vmatpush.xpose.msra.mxu0 0.0
    %3774 = vmatpush.xpose.msra.mxu0 0.0
    %3775 = vmatpush.xpose.msra.mxu0 0.0
    %3776 = vmatpush.xpose.msra.mxu0 0.0
    %3777 = vmatpush.xpose.msra.mxu0 %v3763
    %3778 = vmatpush.xpose.msra.mxu0 %v3760
    %3779 = vmatpush.xpose.msra.mxu0 %v3757
    %3780 = vmatpush.xpose.msra.mxu0 %v3754
    %3781 = vmatmul.f32.gmra.mxu0 %v3742
    %v3782 = vpop.f32.mrf.mxu0
    %v3783 = vadd.f32 0.0, %v3782
    %3784 = vmatmul.f32.gmra.mxu0 %v3745
    %v3785 = vpop.f32.mrf.mxu0
    %v3786 = vadd.f32 0.0, %v3785
    %3787 = vmatmul.f32.gmra.mxu0 %v3748
    %v3788 = vpop.f32.mrf.mxu0
    %v3789 = vadd.f32 0.0, %v3788
    %3790 = vmatmul.f32.gmra.mxu0 %v3751
    %v3791 = vpop.f32.mrf.mxu0
    %v3792 = vadd.f32 0.0, %v3791
    %3793 = vdwg.mxu0
    %v3794 = vmul.f32 %v3783, 0.35355338
    %v3795 = vmul.f32 %v3786, 0.35355338
    %v3796 = vmul.f32 %v3789, 0.35355338
    %v3797 = vmul.f32 %v3792, 0.35355338
    %v3798 = vsel %vm740, %v3794, -inf
    %3799 = vmax.xlane.f32.xlu0 %v3798
    %v3800 = vpop.xlane.xlu0 %3799
    %v3801 = vsel %vm740, %v3795, -inf
    %3802 = vmax.xlane.f32.xlu0 %v3801
    %v3803 = vpop.xlane.xlu0 %3802
    %v3804 = vsel %vm740, %v3796, -inf
    %3805 = vmax.xlane.f32.xlu0 %v3804
    %v3806 = vpop.xlane.xlu0 %3805
    %v3807 = vsel %vm740, %v3797, -inf
    %3808 = vmax.xlane.f32.xlu0 %v3807
    %v3809 = vpop.xlane.xlu0 %3808
    %v3810 = vsub.f32 %v3794, %v3800
    %v3811 = vsub.f32 %v3795, %v3803
    %v3812 = vsub.f32 %v3796, %v3806
    %v3813 = vsub.f32 %v3797, %v3809
    %v3814 = vmul.f32 %v3810, 1.442695
    %v3815 = vpow.pop %v3814
    %v3816 = vmul.f32 %v3811, 1.442695
    %v3817 = vpow.pop %v3816
    %v3818 = vmul.f32 %v3812, 1.442695
    %v3819 = vpow.pop %v3818
    %v3820 = vmul.f32 %v3813, 1.442695
    %v3821 = vpow.pop %v3820
    %v3822 = vsel %vm740, %v3815, 0.0
    %3823 = vadd.xlane.f32.xlu0 %v3822
    %v3824 = vpop.xlane.xlu0 %3823
    %v3825 = vsel %vm740, %v3817, 0.0
    %3826 = vadd.xlane.f32.xlu0 %v3825
    %v3827 = vpop.xlane.xlu0 %3826
    %v3828 = vsel %vm740, %v3819, 0.0
    %3829 = vadd.xlane.f32.xlu0 %v3828
    %v3830 = vpop.xlane.xlu0 %3829
    %v3831 = vsel %vm740, %v3821, 0.0
    %3832 = vadd.xlane.f32.xlu0 %v3831
    %v3833 = vpop.xlane.xlu0 %3832
    %v3834 = vrcp.pop %v3824
    %v3835 = vmul.f32 %v3824, %v3834
    %v3836 = vsub.f32 1.0, %v3835
    %v3837 = vmul.f32 %v3834, %v3836
    %v3838 = vadd.f32 %v3834, %v3837
    %vm3839 = vweird.f32 %v3824
    %vm3840 = vweird.f32 %v3834
    %vm3841 = vmor %vm3839, %vm3840
    %v3842 = vsel %vm3841, %v3834, %v3838
    %v3843 = vand.u32 2147483647, %v3824
    %vm3844 = vcmp.eq.f32.partialorder %v3843, 8.507059e+37
    %v3845 = vand.u32 %v3824, 2147483648
    %v3846 = vor.u32 1.1754944e-38, %v3845
    %v3847 = vsel %vm3844, %v3846, %v3842
    %v3848 = vmul.f32 %v3815, %v3847
    %v3849 = vrcp.pop %v3827
    %v3850 = vmul.f32 %v3827, %v3849
    %v3851 = vsub.f32 1.0, %v3850
    %v3852 = vmul.f32 %v3849, %v3851
    %v3853 = vadd.f32 %v3849, %v3852
    %vm3854 = vweird.f32 %v3827
    %vm3855 = vweird.f32 %v3849
    %vm3856 = vmor %vm3854, %vm3855
    %v3857 = vsel %vm3856, %v3849, %v3853
    %v3858 = vand.u32 2147483647, %v3827
    %vm3859 = vcmp.eq.f32.partialorder %v3858, 8.507059e+37
    %v3860 = vand.u32 %v3827, 2147483648
    %v3861 = vor.u32 1.1754944e-38, %v3860
    %v3862 = vsel %vm3859, %v3861, %v3857
    %v3863 = vmul.f32 %v3817, %v3862
    %v3864 = vrcp.pop %v3830
    %v3865 = vmul.f32 %v3830, %v3864
    %v3866 = vsub.f32 1.0, %v3865
    %v3867 = vmul.f32 %v3864, %v3866
    %v3868 = vadd.f32 %v3864, %v3867
    %vm3869 = vweird.f32 %v3830
    %vm3870 = vweird.f32 %v3864
    %vm3871 = vmor %vm3869, %vm3870
    %v3872 = vsel %vm3871, %v3864, %v3868
    %v3873 = vand.u32 2147483647, %v3830
    %vm3874 = vcmp.eq.f32.partialorder %v3873, 8.507059e+37
    %v3875 = vand.u32 %v3830, 2147483648
    %v3876 = vor.u32 1.1754944e-38, %v3875
    %v3877 = vsel %vm3874, %v3876, %v3872
    %v3878 = vmul.f32 %v3819, %v3877
    %v3879 = vrcp.pop %v3833
    %v3880 = vmul.f32 %v3833, %v3879
    %v3881 = vsub.f32 1.0, %v3880
    %v3882 = vmul.f32 %v3879, %v3881
    %v3883 = vadd.f32 %v3879, %v3882
    %vm3884 = vweird.f32 %v3833
    %vm3885 = vweird.f32 %v3879
    %vm3886 = vmor %vm3884, %vm3885
    %v3887 = vsel %vm3886, %v3879, %v3883
    %v3888 = vand.u32 2147483647, %v3833
    %vm3889 = vcmp.eq.f32.partialorder %v3888, 8.507059e+37
    %v3890 = vand.u32 %v3833, 2147483648
    %v3891 = vor.u32 1.1754944e-38, %v3890
    %v3892 = vsel %vm3889, %v3891, %v3887
    %v3893 = vmul.f32 %v3821, %v3892
    %v3895 = vsel %vm740, %v3848, 0
    %v3898 = vsel %vm740, %v3863, 0
    %v3901 = vsel %vm740, %v3878, 0
    %v3904 = vsel %vm740, %v3893, 0
    %3906 = vmatpush.msra.mxu0 0.0
    %3907 = vmatpush.msra.mxu0 0.0
    %3908 = vmatpush.msra.mxu0 0.0
    %3909 = vmatpush.msra.mxu0 0.0
    %3910 = vmatpush.msra.mxu0 0.0
    %3911 = vmatpush.msra.mxu0 0.0
    %3912 = vmatpush.msra.mxu0 0.0
    %3913 = vmatpush.msra.mxu0 0.0
    %3914 = vmatpush.msra.mxu0 0.0
    %3915 = vmatpush.msra.mxu0 0.0
    %3916 = vmatpush.msra.mxu0 0.0
    %3917 = vmatpush.msra.mxu0 0.0
    %3918 = vmatpush.msra.mxu0 %v3739
    %3919 = vmatpush.msra.mxu0 %v3736
    %3920 = vmatpush.msra.mxu0 %v3733
    %3921 = vmatpush.msra.mxu0 %v3730
    %3922 = vmatmul.f32.gmra.mxu0 %v3895
    %v3923 = vpop.f32.mrf.mxu0
    %v3924 = vadd.f32 0.0, %v3923
    %3925 = vmatmul.f32.gmra.mxu0 %v3898
    %v3926 = vpop.f32.mrf.mxu0
    %v3927 = vadd.f32 0.0, %v3926
    %3928 = vmatmul.f32.gmra.mxu0 %v3901
    %v3929 = vpop.f32.mrf.mxu0
    %v3930 = vadd.f32 0.0, %v3929
    %3931 = vmatmul.f32.gmra.mxu0 %v3904
    %v3932 = vpop.f32.mrf.mxu0
    %v3933 = vadd.f32 0.0, %v3932
    %3934 = vdwg.mxu0
    %v3936 = vsel %vm916, %v3924, 0
    %v3939 = vsel %vm916, %v3927, 0
    %v3942 = vsel %vm916, %v3930, 0
    %v3945 = vsel %vm916, %v3933, 0
    %3947 = vmatpush.msra.mxu0 0.0
    %3948 = vmatpush.msra.mxu0 0.0
    %3949 = vmatpush.msra.mxu0 0.0
    %3950 = vmatpush.msra.mxu0 0.0
    %3951 = vmatpush.msra.mxu0 0.0
    %3952 = vmatpush.msra.mxu0 0.0
    %3953 = vmatpush.msra.mxu0 0.0
    %3954 = vmatpush.msra.mxu0 0.0
    %3955 = vmatpush.msra.mxu0 0.0
    %3956 = vmatpush.msra.mxu0 0.0
    %3957 = vmatpush.msra.mxu0 0.0
    %3958 = vmatpush.msra.mxu0 0.0
    %3959 = vmatpush.msra.mxu0 0.0
    %3960 = vmatpush.msra.mxu0 0.0
    %3961 = vmatpush.msra.mxu0 0.0
    %3962 = vmatpush.msra.mxu0 %v2875
    %3963 = vmatmul.f32.gmra.mxu0 %v3936
    %v3964 = vpop.f32.mrf.mxu0
    %v3965 = vadd.f32 %v3220, %v3964
    %3966 = vmatmul.f32.gmra.mxu0 %v3939
    %v3967 = vpop.f32.mrf.mxu0
    %v3968 = vadd.f32 %v3220, %v3967
    %3969 = vmatmul.f32.gmra.mxu0 %v3942
    %v3970 = vpop.f32.mrf.mxu0
    %v3971 = vadd.f32 %v3220, %v3970
    %3972 = vmatmul.f32.gmra.mxu0 %v3945
    %v3973 = vpop.f32.mrf.mxu0
    %v3974 = vadd.f32 %v3220, %v3973
    %3975 = vdwg.mxu0
    %v3976 = vadd.f32 %v3626, %v3965
    %v3977 = vadd.f32 %v3627, %v3968
    %v3978 = vadd.f32 %v3628, %v3971
    %v3979 = vadd.f32 %v3629, %v3974
    %v3980 = vsel %vm916, %v3976, 0.0
    %3981 = vadd.xlane.f32.xlu0 %v3980
    %v3982 = vpop.xlane.xlu0 %3981
    %v3983 = vsel %vm916, %v3977, 0.0
    %3984 = vadd.xlane.f32.xlu0 %v3983
    %v3985 = vpop.xlane.xlu0 %3984
    %v3986 = vsel %vm916, %v3978, 0.0
    %3987 = vadd.xlane.f32.xlu0 %v3986
    %v3988 = vpop.xlane.xlu0 %3987
    %v3989 = vsel %vm916, %v3979, 0.0
    %3990 = vadd.xlane.f32.xlu0 %v3989
    %v3991 = vpop.xlane.xlu0 %3990
    %v3992 = vmul.f32 %v3982, %v3285
    %v3993 = vmul.f32 %v3985, %v3285
    %v3994 = vmul.f32 %v3988, %v3285
    %v3995 = vmul.f32 %v3991, %v3285
    %v3996 = vsub.f32 %v3976, %v3992
    %v3997 = vsub.f32 %v3977, %v3993
    %v3998 = vsub.f32 %v3978, %v3994
    %v3999 = vsub.f32 %v3979, %v3995
    %v4000 = vmul.f32 %v3996, %v3996
    %v4001 = vmul.f32 %v3997, %v3997
    %v4002 = vmul.f32 %v3998, %v3998
    %v4003 = vmul.f32 %v3999, %v3999
    %v4004 = vsel %vm916, %v4000, 0.0
    %4005 = vadd.xlane.f32.xlu0 %v4004
    %v4006 = vpop.xlane.xlu0 %4005
    %v4007 = vsel %vm916, %v4001, 0.0
    %4008 = vadd.xlane.f32.xlu0 %v4007
    %v4009 = vpop.xlane.xlu0 %4008
    %v4010 = vsel %vm916, %v4002, 0.0
    %4011 = vadd.xlane.f32.xlu0 %v4010
    %v4012 = vpop.xlane.xlu0 %4011
    %v4013 = vsel %vm916, %v4003, 0.0
    %4014 = vadd.xlane.f32.xlu0 %v4013
    %v4015 = vpop.xlane.xlu0 %4014
    %v4016 = vmul.f32 %v4006, %v3285
    %v4017 = vmul.f32 %v4009, %v3285
    %v4018 = vmul.f32 %v4012, %v3285
    %v4019 = vmul.f32 %v4015, %v3285
    %v4020 = vadd.f32 %v4016, 1e-05
    %v4021 = vadd.f32 %v4017, 1e-05
    %v4022 = vadd.f32 %v4018, 1e-05
    %v4023 = vadd.f32 %v4019, 1e-05
    %v4024 = vrsqrt.pop %v4020
    %v4025 = vmul.f32 %v4024, %v4020
    %v4026 = vmul.f32 %v4025, %v4024
    %v4027 = vmul.f32 0.5, %v4026
    %v4028 = vsub.f32 1.5, %v4027
    %v4029 = vmul.f32 %v4024, %v4028
    %vm4030 = vweird.f32 %v4020
    %vm4031 = vweird.f32 %v4024
    %vm4032 = vmor %vm4030, %vm4031
    %v4033 = vsel %vm4032, %v4024, %v4029
    %v4034 = vrsqrt.pop %v4021
    %v4035 = vmul.f32 %v4034, %v4021
    %v4036 = vmul.f32 %v4035, %v4034
    %v4037 = vmul.f32 0.5, %v4036
    %v4038 = vsub.f32 1.5, %v4037
    %v4039 = vmul.f32 %v4034, %v4038
    %vm4040 = vweird.f32 %v4021
    %vm4041 = vweird.f32 %v4034
    %vm4042 = vmor %vm4040, %vm4041
    %v4043 = vsel %vm4042, %v4034, %v4039
    %v4044 = vrsqrt.pop %v4022
    %v4045 = vmul.f32 %v4044, %v4022
    %v4046 = vmul.f32 %v4045, %v4044
    %v4047 = vmul.f32 0.5, %v4046
    %v4048 = vsub.f32 1.5, %v4047
    %v4049 = vmul.f32 %v4044, %v4048
    %vm4050 = vweird.f32 %v4022
    %vm4051 = vweird.f32 %v4044
    %vm4052 = vmor %vm4050, %vm4051
    %v4053 = vsel %vm4052, %v4044, %v4049
    %v4054 = vrsqrt.pop %v4023
    %v4055 = vmul.f32 %v4054, %v4023
    %v4056 = vmul.f32 %v4055, %v4054
    %v4057 = vmul.f32 0.5, %v4056
    %v4058 = vsub.f32 1.5, %v4057
    %v4059 = vmul.f32 %v4054, %v4058
    %vm4060 = vweird.f32 %v4023
    %vm4061 = vweird.f32 %v4054
    %vm4062 = vmor %vm4060, %vm4061
    %v4063 = vsel %vm4062, %v4054, %v4059
    %v4064 = vmul.f32 %v3996, %v4033
    %v4065 = vmul.f32 %v3997, %v4043
    %v4066 = vmul.f32 %v3998, %v4053
    %v4067 = vmul.f32 %v3999, %v4063
    %v4068 = vmul.f32 %v4064, %v3363
    %v4069 = vmul.f32 %v4065, %v3363
    %v4070 = vmul.f32 %v4066, %v3363
    %v4071 = vmul.f32 %v4067, %v3363
    %v4072 = vadd.f32 %v4068, %v3370
    %v4073 = vadd.f32 %v4069, %v3370
    %v4074 = vadd.f32 %v4070, %v3370
    %v4075 = vadd.f32 %v4071, %v3370
    %v4077 = vsel %vm916, %v4072, 0
    %v4080 = vsel %vm916, %v4073, 0
    %v4083 = vsel %vm916, %v4074, 0
    %v4086 = vsel %vm916, %v4075, 0
    %4088 = vmatpush.msra.mxu0 0.0
    %4089 = vmatpush.msra.mxu0 0.0
    %4090 = vmatpush.msra.mxu0 0.0
    %4091 = vmatpush.msra.mxu0 0.0
    %4092 = vmatpush.msra.mxu0 0.0
    %4093 = vmatpush.msra.mxu0 0.0
    %4094 = vmatpush.msra.mxu0 0.0
    %4095 = vmatpush.msra.mxu0 0.0
    %4096 = vmatpush.msra.mxu0 0.0
    %4097 = vmatpush.msra.mxu0 0.0
    %4098 = vmatpush.msra.mxu0 0.0
    %4099 = vmatpush.msra.mxu0 0.0
    %4100 = vmatpush.msra.mxu0 0.0
    %4101 = vmatpush.msra.mxu0 0.0
    %4102 = vmatpush.msra.mxu0 0.0
    %4103 = vmatpush.msra.mxu0 %v2877
    %4104 = vmatmul.f32.gmra.mxu0 %v4077
    %v4105 = vpop.f32.mrf.mxu0
    %v4106 = vadd.f32 %v3377, %v4105
    %4107 = vmatmul.f32.gmra.mxu0 %v4080
    %v4108 = vpop.f32.mrf.mxu0
    %v4109 = vadd.f32 %v3377, %v4108
    %4110 = vmatmul.f32.gmra.mxu0 %v4083
    %v4111 = vpop.f32.mrf.mxu0
    %v4112 = vadd.f32 %v3377, %v4111
    %4113 = vmatmul.f32.gmra.mxu0 %v4086
    %v4114 = vpop.f32.mrf.mxu0
    %v4115 = vadd.f32 %v3377, %v4114
    %4116 = vdwg.mxu0
    %v4117 = vmax.f32 %v4106, 0.0
    %v4118 = vmax.f32 %v4109, 0.0
    %v4119 = vmax.f32 %v4112, 0.0
    %v4120 = vmax.f32 %v4115, 0.0
    %v4122 = vsel %vm916, %v4117, 0
    %v4125 = vsel %vm916, %v4118, 0
    %v4128 = vsel %vm916, %v4119, 0
    %v4131 = vsel %vm916, %v4120, 0
    %4133 = vmatpush.msra.mxu0 0.0
    %4134 = vmatpush.msra.mxu0 0.0
    %4135 = vmatpush.msra.mxu0 0.0
    %4136 = vmatpush.msra.mxu0 0.0
    %4137 = vmatpush.msra.mxu0 0.0
    %4138 = vmatpush.msra.mxu0 0.0
    %4139 = vmatpush.msra.mxu0 0.0
    %4140 = vmatpush.msra.mxu0 0.0
    %4141 = vmatpush.msra.mxu0 0.0
    %4142 = vmatpush.msra.mxu0 0.0
    %4143 = vmatpush.msra.mxu0 0.0
    %4144 = vmatpush.msra.mxu0 0.0
    %4145 = vmatpush.msra.mxu0 0.0
    %4146 = vmatpush.msra.mxu0 0.0
    %4147 = vmatpush.msra.mxu0 0.0
    %4148 = vmatpush.msra.mxu0 %v2879
    %4149 = vmatmul.f32.gmra.mxu0 %v4122
    %v4150 = vpop.f32.mrf.mxu0
    %v4151 = vadd.f32 0.0, %v4150
    %4152 = vmatmul.f32.gmra.mxu0 %v4125
    %v4153 = vpop.f32.mrf.mxu0
    %v4154 = vadd.f32 0.0, %v4153
    %4155 = vmatmul.f32.gmra.mxu0 %v4128
    %v4156 = vpop.f32.mrf.mxu0
    %v4157 = vadd.f32 0.0, %v4156
    %4158 = vmatmul.f32.gmra.mxu0 %v4131
    %v4159 = vpop.f32.mrf.mxu0
    %v4160 = vadd.f32 0.0, %v4159
    %4161 = vdwg.mxu0
    %v4162 = vadd.f32 %v4072, %v4151
    %v4163 = vadd.f32 %v4073, %v4154
    %v4164 = vadd.f32 %v4074, %v4157
    %v4165 = vadd.f32 %v4075, %v4160
    %v4166 = vadd.f32 %v4162, %v3470
    %v4167 = vadd.f32 %v4163, %v3470
    %v4168 = vadd.f32 %v4164, %v3470
    %v4169 = vadd.f32 %v4165, %v3470
    %v4170 = vsel %vm916, %v4166, 0.0
    %4171 = vadd.xlane.f32.xlu0 %v4170
    %v4172 = vpop.xlane.xlu0 %4171
    %v4173 = vsel %vm916, %v4167, 0.0
    %4174 = vadd.xlane.f32.xlu0 %v4173
    %v4175 = vpop.xlane.xlu0 %4174
    %v4176 = vsel %vm916, %v4168, 0.0
    %4177 = vadd.xlane.f32.xlu0 %v4176
    %v4178 = vpop.xlane.xlu0 %4177
    %v4179 = vsel %vm916, %v4169, 0.0
    %4180 = vadd.xlane.f32.xlu0 %v4179
    %v4181 = vpop.xlane.xlu0 %4180
    %v4182 = vmul.f32 %v4172, %v3285
    %v4183 = vmul.f32 %v4175, %v3285
    %v4184 = vmul.f32 %v4178, %v3285
    %v4185 = vmul.f32 %v4181, %v3285
    %v4186 = vsub.f32 %v4166, %v4182
    %v4187 = vsub.f32 %v4167, %v4183
    %v4188 = vsub.f32 %v4168, %v4184
    %v4189 = vsub.f32 %v4169, %v4185
    %v4190 = vmul.f32 %v4186, %v4186
    %v4191 = vmul.f32 %v4187, %v4187
    %v4192 = vmul.f32 %v4188, %v4188
    %v4193 = vmul.f32 %v4189, %v4189
    %v4194 = vsel %vm916, %v4190, 0.0
    %4195 = vadd.xlane.f32.xlu0 %v4194
    %v4196 = vpop.xlane.xlu0 %4195
    %v4197 = vsel %vm916, %v4191, 0.0
    %4198 = vadd.xlane.f32.xlu0 %v4197
    %v4199 = vpop.xlane.xlu0 %4198
    %v4200 = vsel %vm916, %v4192, 0.0
    %4201 = vadd.xlane.f32.xlu0 %v4200
    %v4202 = vpop.xlane.xlu0 %4201
    %v4203 = vsel %vm916, %v4193, 0.0
    %4204 = vadd.xlane.f32.xlu0 %v4203
    %v4205 = vpop.xlane.xlu0 %4204
    %v4206 = vmul.f32 %v4196, %v3285
    %v4207 = vmul.f32 %v4199, %v3285
    %v4208 = vmul.f32 %v4202, %v3285
    %v4209 = vmul.f32 %v4205, %v3285
    %v4210 = vadd.f32 %v4206, 1e-05
    %v4211 = vadd.f32 %v4207, 1e-05
    %v4212 = vadd.f32 %v4208, 1e-05
    %v4213 = vadd.f32 %v4209, 1e-05
    %v4214 = vrsqrt.pop %v4210
    %v4215 = vmul.f32 %v4214, %v4210
    %v4216 = vmul.f32 %v4215, %v4214
    %v4217 = vmul.f32 0.5, %v4216
    %v4218 = vsub.f32 1.5, %v4217
    %v4219 = vmul.f32 %v4214, %v4218
    %vm4220 = vweird.f32 %v4210
    %vm4221 = vweird.f32 %v4214
    %vm4222 = vmor %vm4220, %vm4221
    %v4223 = vsel %vm4222, %v4214, %v4219
    %v4224 = vrsqrt.pop %v4211
    %v4225 = vmul.f32 %v4224, %v4211
    %v4226 = vmul.f32 %v4225, %v4224
    %v4227 = vmul.f32 0.5, %v4226
    %v4228 = vsub.f32 1.5, %v4227
    %v4229 = vmul.f32 %v4224, %v4228
    %vm4230 = vweird.f32 %v4211
    %vm4231 = vweird.f32 %v4224
    %vm4232 = vmor %vm4230, %vm4231
    %v4233 = vsel %vm4232, %v4224, %v4229
    %v4234 = vrsqrt.pop %v4212
    %v4235 = vmul.f32 %v4234, %v4212
    %v4236 = vmul.f32 %v4235, %v4234
    %v4237 = vmul.f32 0.5, %v4236
    %v4238 = vsub.f32 1.5, %v4237
    %v4239 = vmul.f32 %v4234, %v4238
    %vm4240 = vweird.f32 %v4212
    %vm4241 = vweird.f32 %v4234
    %vm4242 = vmor %vm4240, %vm4241
    %v4243 = vsel %vm4242, %v4234, %v4239
    %v4244 = vrsqrt.pop %v4213
    %v4245 = vmul.f32 %v4244, %v4213
    %v4246 = vmul.f32 %v4245, %v4244
    %v4247 = vmul.f32 0.5, %v4246
    %v4248 = vsub.f32 1.5, %v4247
    %v4249 = vmul.f32 %v4244, %v4248
    %vm4250 = vweird.f32 %v4213
    %vm4251 = vweird.f32 %v4244
    %vm4252 = vmor %vm4250, %vm4251
    %v4253 = vsel %vm4252, %v4244, %v4249
    %v4254 = vmul.f32 %v4186, %v4223
    %v4255 = vmul.f32 %v4187, %v4233
    %v4256 = vmul.f32 %v4188, %v4243
    %v4257 = vmul.f32 %v4189, %v4253
    %v4258 = vmul.f32 %v4254, %v3565
    %v4259 = vmul.f32 %v4255, %v3565
    %v4260 = vmul.f32 %v4256, %v3565
    %v4261 = vmul.f32 %v4257, %v3565
    %v4262 = vadd.f32 %v4258, %v3572
    %v4263 = vadd.f32 %v4259, %v3572
    %v4264 = vadd.f32 %v4260, %v3572
    %v4265 = vadd.f32 %v4261, %v3572
    %4266 = vxpose.xlu0.b32.start [1/16] %v4262, 128
    %4267 = vxpose.xlu0.b32.cont [2/16] %v4263, 128
    %4268 = vxpose.xlu0.b32.cont [3/16] %v4264, 128
    %4269 = vxpose.xlu0.b32.cont [4/16] %v4265, 128
    %4270 = vxpose.xlu0.b32.cont [5/16] 0.0, 128
    %4271 = vxpose.xlu0.b32.cont [6/16] 0.0, 128
    %4272 = vxpose.xlu0.b32.cont [7/16] 0.0, 128
    %4273 = vxpose.xlu0.b32.cont [8/16] 0.0, 128
    %4274 = vxpose.xlu0.b32.cont [9/16] 0.0, 128
    %4275 = vxpose.xlu0.b32.cont [10/16] 0.0, 128
    %4276 = vxpose.xlu0.b32.cont [11/16] 0.0, 128
    %4277 = vxpose.xlu0.b32.cont [12/16] 0.0, 128
    %4278 = vxpose.xlu0.b32.cont [13/16] 0.0, 128
    %4279 = vxpose.xlu0.b32.cont [14/16] 0.0, 128
    %4280 = vxpose.xlu0.b32.cont [15/16] 0.0, 128
    %4281 = vxpose.xlu0.b32.end [16/16] 0.0, 128
    %v4282 = vpop.trf.xlu0
    %v4283 = vpop.trf.xlu0
    %v4284 = vpop.trf.xlu0
    %v4285 = vpop.trf.xlu0
    %v4286 = vpop.trf.xlu0
    %v4287 = vpop.trf.xlu0
    %v4288 = vpop.trf.xlu0
    %v4289 = vpop.trf.xlu0
    %v4290 = vpop.trf.xlu0
    %v4291 = vpop.trf.xlu0
    %v4292 = vpop.trf.xlu0
    %v4293 = vpop.trf.xlu0
    %v4294 = vpop.trf.xlu0
    %v4295 = vpop.trf.xlu0
    %v4296 = vpop.trf.xlu0
    %v4297 = vpop.trf.xlu0
    %v4298 = vadd.f32 %v2867, %v3594
    %v4299 = vadd.f32 %v2868, %v4282
    %v4300 = vadd.f32 %v4298, %v624
    %v4301 = vadd.f32 %v4299, %v721
    %v4302 = vld [vmem:[%s19] sm:$0x3]
    %v4303 = vld [vmem:[#allocation2] sm:$0x1]
    %v4305 = vperm.slane %v4303, 0
    %4306 = vset.pattern.permute.xlu0 0
    %4307 = vperm.xlu0 %4306, %v4305
    %v4308 = vpop.permute.xlu0 %4307
    %v4311 = vsel %vm289, %v4302, 0
    %4313 = vmatpush.msra.mxu0 0.0
    %4314 = vmatpush.msra.mxu0 0.0
    %4315 = vmatpush.msra.mxu0 0.0
    %4316 = vmatpush.msra.mxu0 0.0
    %4317 = vmatpush.msra.mxu0 0.0
    %4318 = vmatpush.msra.mxu0 0.0
    %4319 = vmatpush.msra.mxu0 0.0
    %4320 = vmatpush.msra.mxu0 0.0
    %4321 = vmatpush.msra.mxu0 0.0
    %4322 = vmatpush.msra.mxu0 0.0
    %4323 = vmatpush.msra.mxu0 0.0
    %4324 = vmatpush.msra.mxu0 0.0
    %4325 = vmatpush.msra.mxu0 0.0
    %4326 = vmatpush.msra.mxu0 0.0
    %4327 = vmatpush.msra.mxu0 %v4301
    %4328 = vmatpush.msra.mxu0 %v4300
    %4329 = vmatmul.f32.gmra.mxu0 %v4311
    %v4330 = vpop.f32.mrf.mxu0
    %v4331 = vadd.f32 %v4308, %v4330
    %4332 = vdwg.mxu0
    %v4333 = vld [vmem:[%s109] sm:$0xff]
    %v4334 = vld [vmem:[%s109 + $0x8] sm:$0xff]
    %v4335 = vld [vmem:[%s109 + $0x10] sm:$0xff]
    %v4336 = vld [vmem:[%s109 + $0x18] sm:$0xff]
    %v4337 = vld [vmem:[%s111] sm:$0x1]
    %v4339 = vperm.slane %v4337, 0
    %v4342 = vsel %vm740, %v4331, 0
    %4344 = vmatpush.msra.mxu0 0.0
    %4345 = vmatpush.msra.mxu0 0.0
    %4346 = vmatpush.msra.mxu0 0.0
    %4347 = vmatpush.msra.mxu0 0.0
    %4348 = vmatpush.msra.mxu0 0.0
    %4349 = vmatpush.msra.mxu0 0.0
    %4350 = vmatpush.msra.mxu0 0.0
    %4351 = vmatpush.msra.mxu0 0.0
    %4352 = vmatpush.msra.mxu0 0.0
    %4353 = vmatpush.msra.mxu0 0.0
    %4354 = vmatpush.msra.mxu0 0.0
    %4355 = vmatpush.msra.mxu0 0.0
    %4356 = vmatpush.msra.mxu0 %v4336
    %4357 = vmatpush.msra.mxu0 %v4335
    %4358 = vmatpush.msra.mxu0 %v4334
    %4359 = vmatpush.msra.mxu0 %v4333
    %4360 = vmatmul.f32.gmra.mxu0 %v4342
    %v4361 = vpop.f32.mrf.mxu0
    %v4362 = vadd.f32 %v4339, %v4361
    %4363 = vdwg.mxu0
    %4364 = vst [vmem:[#allocation3] sm:$0x3] %v4362
    %v4365 = vmul.f32 %v239, %v239
    %vm4366 = vcmask 122880
    %v4367 = vsel %vm4366, %v4365, 0.0
    %4368 = vadd.xlane.f32.xlu0 %v4367
    %v4369 = vpop.xlane.xlu0 %4368
    %v4370 = vadd.f32 %v4369, 1e-12
    %v4371 = vrsqrt.pop %v4370
    %v4372 = vmul.f32 %v4371, %v4370
    %v4373 = vmul.f32 %v4372, %v4371
    %v4374 = vmul.f32 0.5, %v4373
    %v4375 = vsub.f32 1.5, %v4374
    %v4376 = vmul.f32 %v4371, %v4375
    %vm4377 = vweird.f32 %v4370
    %vm4378 = vweird.f32 %v4371
    %vm4379 = vmor %vm4377, %vm4378
    %v4380 = vsel %vm4379, %v4371, %v4376
    %v4381 = vmul.f32 %v239, %v4380
    %v4382 = vmul.f32 %v520, %v520
    %v4383 = vsel %vm4366, %v4382, 0.0
    %4384 = vadd.xlane.f32.xlu0 %v4383
    %v4385 = vpop.xlane.xlu0 %4384
    %v4386 = vadd.f32 %v4385, 1e-12
    %v4387 = vrsqrt.pop %v4386
    %v4388 = vmul.f32 %v4387, %v4386
    %v4389 = vmul.f32 %v4388, %v4387
    %v4390 = vmul.f32 0.5, %v4389
    %v4391 = vsub.f32 1.5, %v4390
    %v4392 = vmul.f32 %v4387, %v4391
    %vm4393 = vweird.f32 %v4386
    %vm4394 = vweird.f32 %v4387
    %vm4395 = vmor %vm4393, %vm4394
    %v4396 = vsel %vm4395, %v4387, %v4392
    %v4397 = vmul.f32 %v520, %v4396
    %v4398 = vmul.f32 %v521, %v521
    %v4399 = vsel %vm4366, %v4398, 0.0
    %4400 = vadd.xlane.f32.xlu0 %v4399
    %v4401 = vpop.xlane.xlu0 %4400
    %v4402 = vadd.f32 %v4401, 1e-12
    %v4403 = vrsqrt.pop %v4402
    %v4404 = vmul.f32 %v4403, %v4402
    %v4405 = vmul.f32 %v4404, %v4403
    %v4406 = vmul.f32 0.5, %v4405
    %v4407 = vsub.f32 1.5, %v4406
    %v4408 = vmul.f32 %v4403, %v4407
    %vm4409 = vweird.f32 %v4402
    %vm4410 = vweird.f32 %v4403
    %vm4411 = vmor %vm4409, %vm4410
    %v4412 = vsel %vm4411, %v4403, %v4408
    %v4413 = vmul.f32 %v521, %v4412
    %v4414 = vmul.f32 %v240, %v240
    %vm4415 = vcmask 130049
    %v4416 = vsel %vm4415, %v4365, 0.0
    %4417 = vadd.xlane.f32.xlu0 %v4416
    %v4418 = vpop.xlane.xlu0 %4417
    %v4419 = vsel %vm4366, %v4414, 0.0
    %4420 = vadd.xlane.f32.xlu0 %v4419
    %v4421 = vpop.xlane.xlu0 %4420
    %v4422 = vadd.f32 %v4418, 1e-12
    %v4423 = vadd.f32 %v4421, 1e-12
    %v4424 = vrsqrt.pop %v4422
    %v4425 = vmul.f32 %v4424, %v4422
    %v4426 = vmul.f32 %v4425, %v4424
    %v4427 = vmul.f32 0.5, %v4426
    %v4428 = vsub.f32 1.5, %v4427
    %v4429 = vmul.f32 %v4424, %v4428
    %vm4430 = vweird.f32 %v4422
    %vm4431 = vweird.f32 %v4424
    %vm4432 = vmor %vm4430, %vm4431
    %v4433 = vsel %vm4432, %v4424, %v4429
    %v4434 = vrsqrt.pop %v4423
    %v4435 = vmul.f32 %v4434, %v4423
    %v4436 = vmul.f32 %v4435, %v4434
    %v4437 = vmul.f32 0.5, %v4436
    %v4438 = vsub.f32 1.5, %v4437
    %v4439 = vmul.f32 %v4434, %v4438
    %vm4440 = vweird.f32 %v4423
    %vm4441 = vweird.f32 %v4434
    %vm4442 = vmor %vm4440, %vm4441
    %v4443 = vsel %vm4442, %v4434, %v4439
    %v4444 = vmul.f32 %v239, %v4433
    %v4445 = vmul.f32 %v240, %v4443
    %v4446 = vadd.f32 %v4381, %v4397
    %v4447 = vadd.f32 %v4446, %v4413
    %v4448 = vperm.slane %v4447, 0
    %v4449 = vadd.f32 %v4448, %v4444
    %v4450 = vadd.f32 %v4448, %v4445
    %v4451 = vmul.f32 %v4449, 0.25
    %v4452 = vmul.f32 %v4450, 0.25
    %v4453 = vmul.f32 %v4451, %v4451
    %v4454 = vmul.f32 %v4452, %v4452
    %v4455 = vsel %vm4415, %v4453, 0.0
    %4456 = vadd.xlane.f32.xlu0 %v4455
    %v4457 = vpop.xlane.xlu0 %4456
    %v4458 = vsel %vm4366, %v4454, 0.0
    %4459 = vadd.xlane.f32.xlu0 %v4458
    %v4460 = vpop.xlane.xlu0 %4459
    %v4461 = vadd.f32 %v4457, 1e-12
    %v4462 = vadd.f32 %v4460, 1e-12
    %v4463 = vrsqrt.pop %v4461
    %v4464 = vmul.f32 %v4463, %v4461
    %v4465 = vmul.f32 %v4464, %v4463
    %v4466 = vmul.f32 0.5, %v4465
    %v4467 = vsub.f32 1.5, %v4466
    %v4468 = vmul.f32 %v4463, %v4467
    %vm4469 = vweird.f32 %v4461
    %vm4470 = vweird.f32 %v4463
    %vm4471 = vmor %vm4469, %vm4470
    %v4472 = vsel %vm4471, %v4463, %v4468
    %v4473 = vrsqrt.pop %v4462
    %v4474 = vmul.f32 %v4473, %v4462
    %v4475 = vmul.f32 %v4474, %v4473
    %v4476 = vmul.f32 0.5, %v4475
    %v4477 = vsub.f32 1.5, %v4476
    %v4478 = vmul.f32 %v4473, %v4477
    %vm4479 = vweird.f32 %v4462
    %vm4480 = vweird.f32 %v4473
    %vm4481 = vmor %vm4479, %vm4480
    %v4482 = vsel %vm4481, %v4473, %v4478
    %v4483 = vmul.f32 %v4451, %v4472
    %v4484 = vmul.f32 %v4452, %v4482
    %v4485 = vperm.slane %v4381, 0
    %v4486 = vmul.f32 %v4485, %v4483
    %v4487 = vmul.f32 %v4485, %v4484
    %v4488 = vsel %vm4415, %v4486, 0.0
    %4489 = vadd.xlane.f32.xlu0 %v4488
    %v4490 = vpop.xlane.xlu0 %4489
    %v4491 = vsel %vm4366, %v4487, 0.0
    %4492 = vadd.xlane.f32.xlu0 %v4491
    %v4493 = vpop.xlane.xlu0 %4492
    %v4494 = vperm.slane %v4397, 0
    %v4495 = vmul.f32 %v4494, %v4483
    %v4496 = vmul.f32 %v4494, %v4484
    %v4497 = vsel %vm4415, %v4495, 0.0
    %4498 = vadd.xlane.f32.xlu0 %v4497
    %v4499 = vpop.xlane.xlu0 %4498
    %v4500 = vsel %vm4366, %v4496, 0.0
    %4501 = vadd.xlane.f32.xlu0 %v4500
    %v4502 = vpop.xlane.xlu0 %4501
    %v4503 = vadd.f32 %v4490, %v4499
    %v4504 = vadd.f32 %v4493, %v4502
    %v4505 = vperm.slane %v4413, 0
    %v4506 = vmul.f32 %v4505, %v4483
    %v4507 = vmul.f32 %v4505, %v4484
    %v4508 = vsel %vm4415, %v4506, 0.0
    %4509 = vadd.xlane.f32.xlu0 %v4508
    %v4510 = vpop.xlane.xlu0 %4509
    %v4511 = vsel %vm4366, %v4507, 0.0
    %4512 = vadd.xlane.f32.xlu0 %v4511
    %v4513 = vpop.xlane.xlu0 %4512
    %v4514 = vadd.f32 %v4503, %v4510
    %v4515 = vadd.f32 %v4504, %v4513
    %v4516 = vmul.f32 %v4444, %v4483
    %v4517 = vmul.f32 %v4445, %v4484
    %v4518 = vsel %vm4415, %v4516, 0.0
    %4519 = vadd.xlane.f32.xlu0 %v4518
    %v4520 = vpop.xlane.xlu0 %4519
    %v4521 = vsel %vm4366, %v4517, 0.0
    %4522 = vadd.xlane.f32.xlu0 %v4521
    %v4523 = vpop.xlane.xlu0 %4522
    %v4524 = vadd.f32 %v4514, %v4520
    %v4525 = vadd.f32 %v4515, %v4523
    %v4528 = vrot.slane %v4524, 1
    %v4529 = vrot.slane %v4525, 1
    %v4530 = vsel %vm600, %v4528, %v4529
    %vm4532 = vcmask 7168
    %v4533 = vsel %vm4532, %v4530, 0.0
    %4534 = vadd.xlane.f32.xlu0 %v4533
    %v4535 = vpop.xlane.xlu0 %4534
    %v4536 = vrot.slane %v4535, 4
    %v4537 = vadd.f32 %v4535, %v4536
    %v4538 = vrot.slane %v4537, 2
    %v4539 = vadd.f32 %v4537, %v4538
    %v4540 = vrot.slane %v4539, 1
    %v4541 = vadd.f32 %v4539, %v4540
    %s4542 = vtos %v4541
    %s4543 = sadd.f32 %s4542, 0.0
    %vm4544 = vcmask 123905
    %v4545 = vsel %vm4544, %v4414, 0.0
    %4546 = vadd.xlane.f32.xlu0 %v4545
    %v4547 = vpop.xlane.xlu0 %4546
    %v4548 = vadd.f32 %v4547, 1e-12
    %v4549 = vrsqrt.pop %v4548
    %v4550 = vmul.f32 %v4549, %v4548
    %v4551 = vmul.f32 %v4550, %v4549
    %v4552 = vmul.f32 0.5, %v4551
    %v4553 = vsub.f32 1.5, %v4552
    %v4554 = vmul.f32 %v4549, %v4553
    %vm4555 = vweird.f32 %v4548
    %vm4556 = vweird.f32 %v4549
    %vm4557 = vmor %vm4555, %vm4556
    %v4558 = vsel %vm4557, %v4549, %v4554
    %v4559 = vmul.f32 %v240, %v4558
    %v4560 = vsel %vm4544, %v4382, 0.0
    %4561 = vadd.xlane.f32.xlu0 %v4560
    %v4562 = vpop.xlane.xlu0 %4561
    %v4563 = vadd.f32 %v4562, 1e-12
    %v4564 = vrsqrt.pop %v4563
    %v4565 = vmul.f32 %v4564, %v4563
    %v4566 = vmul.f32 %v4565, %v4564
    %v4567 = vmul.f32 0.5, %v4566
    %v4568 = vsub.f32 1.5, %v4567
    %v4569 = vmul.f32 %v4564, %v4568
    %vm4570 = vweird.f32 %v4563
    %vm4571 = vweird.f32 %v4564
    %vm4572 = vmor %vm4570, %vm4571
    %v4573 = vsel %vm4572, %v4564, %v4569
    %v4574 = vmul.f32 %v520, %v4573
    %v4575 = vsel %vm4544, %v4398, 0.0
    %4576 = vadd.xlane.f32.xlu0 %v4575
    %v4577 = vpop.xlane.xlu0 %4576
    %v4578 = vadd.f32 %v4577, 1e-12
    %v4579 = vrsqrt.pop %v4578
    %v4580 = vmul.f32 %v4579, %v4578
    %v4581 = vmul.f32 %v4580, %v4579
    %v4582 = vmul.f32 0.5, %v4581
    %v4583 = vsub.f32 1.5, %v4582
    %v4584 = vmul.f32 %v4579, %v4583
    %vm4585 = vweird.f32 %v4578
    %vm4586 = vweird.f32 %v4579
    %vm4587 = vmor %vm4585, %vm4586
    %v4588 = vsel %vm4587, %v4579, %v4584
    %v4589 = vmul.f32 %v521, %v4588
    %v4590 = vmul.f32 %v241, %v241
    %vm4591 = vcmask 130050
    %v4592 = vsel %vm4591, %v4414, 0.0
    %4593 = vadd.xlane.f32.xlu0 %v4592
    %v4594 = vpop.xlane.xlu0 %4593
    %vm4595 = vcmask 123904
    %v4596 = vsel %vm4595, %v4590, 0.0
    %4597 = vadd.xlane.f32.xlu0 %v4596
    %v4598 = vpop.xlane.xlu0 %4597
    %v4599 = vadd.f32 %v4594, 1e-12
    %v4600 = vadd.f32 %v4598, 1e-12
    %v4601 = vrsqrt.pop %v4599
    %v4602 = vmul.f32 %v4601, %v4599
    %v4603 = vmul.f32 %v4602, %v4601
    %v4604 = vmul.f32 0.5, %v4603
    %v4605 = vsub.f32 1.5, %v4604
    %v4606 = vmul.f32 %v4601, %v4605
    %vm4607 = vweird.f32 %v4599
    %vm4608 = vweird.f32 %v4601
    %vm4609 = vmor %vm4607, %vm4608
    %v4610 = vsel %vm4609, %v4601, %v4606
    %v4611 = vrsqrt.pop %v4600
    %v4612 = vmul.f32 %v4611, %v4600
    %v4613 = vmul.f32 %v4612, %v4611
    %v4614 = vmul.f32 0.5, %v4613
    %v4615 = vsub.f32 1.5, %v4614
    %v4616 = vmul.f32 %v4611, %v4615
    %vm4617 = vweird.f32 %v4600
    %vm4618 = vweird.f32 %v4611
    %vm4619 = vmor %vm4617, %vm4618
    %v4620 = vsel %vm4619, %v4611, %v4616
    %v4621 = vmul.f32 %v240, %v4610
    %v4622 = vmul.f32 %v241, %v4620
    %v4623 = vadd.f32 %v4559, %v4574
    %v4624 = vadd.f32 %v4623, %v4589
    %v4625 = vperm.slane %v4624, 1
    %v4626 = vadd.f32 %v4625, %v4621
    %v4627 = vadd.f32 %v4625, %v4622
    %v4628 = vmul.f32 %v4626, 0.25
    %v4629 = vmul.f32 %v4627, 0.25
    %v4630 = vmul.f32 %v4628, %v4628
    %v4631 = vmul.f32 %v4629, %v4629
    %v4632 = vsel %vm4591, %v4630, 0.0
    %4633 = vadd.xlane.f32.xlu0 %v4632
    %v4634 = vpop.xlane.xlu0 %4633
    %v4635 = vsel %vm4595, %v4631, 0.0
    %4636 = vadd.xlane.f32.xlu0 %v4635
    %v4637 = vpop.xlane.xlu0 %4636
    %v4638 = vadd.f32 %v4634, 1e-12
    %v4639 = vadd.f32 %v4637, 1e-12
    %v4640 = vrsqrt.pop %v4638
    %v4641 = vmul.f32 %v4640, %v4638
    %v4642 = vmul.f32 %v4641, %v4640
    %v4643 = vmul.f32 0.5, %v4642
    %v4644 = vsub.f32 1.5, %v4643
    %v4645 = vmul.f32 %v4640, %v4644
    %vm4646 = vweird.f32 %v4638
    %vm4647 = vweird.f32 %v4640
    %vm4648 = vmor %vm4646, %vm4647
    %v4649 = vsel %vm4648, %v4640, %v4645
    %v4650 = vrsqrt.pop %v4639
    %v4651 = vmul.f32 %v4650, %v4639
    %v4652 = vmul.f32 %v4651, %v4650
    %v4653 = vmul.f32 0.5, %v4652
    %v4654 = vsub.f32 1.5, %v4653
    %v4655 = vmul.f32 %v4650, %v4654
    %vm4656 = vweird.f32 %v4639
    %vm4657 = vweird.f32 %v4650
    %vm4658 = vmor %vm4656, %vm4657
    %v4659 = vsel %vm4658, %v4650, %v4655
    %v4660 = vmul.f32 %v4628, %v4649
    %v4661 = vmul.f32 %v4629, %v4659
    %v4662 = vperm.slane %v4559, 1
    %v4663 = vmul.f32 %v4662, %v4660
    %v4664 = vmul.f32 %v4662, %v4661
    %v4665 = vsel %vm4591, %v4663, 0.0
    %4666 = vadd.xlane.f32.xlu0 %v4665
    %v4667 = vpop.xlane.xlu0 %4666
    %v4668 = vsel %vm4595, %v4664, 0.0
    %4669 = vadd.xlane.f32.xlu0 %v4668
    %v4670 = vpop.xlane.xlu0 %4669
    %v4671 = vperm.slane %v4574, 1
    %v4672 = vmul.f32 %v4671, %v4660
    %v4673 = vmul.f32 %v4671, %v4661
    %v4674 = vsel %vm4591, %v4672, 0.0
    %4675 = vadd.xlane.f32.xlu0 %v4674
    %v4676 = vpop.xlane.xlu0 %4675
    %v4677 = vsel %vm4595, %v4673, 0.0
    %4678 = vadd.xlane.f32.xlu0 %v4677
    %v4679 = vpop.xlane.xlu0 %4678
    %v4680 = vadd.f32 %v4667, %v4676
    %v4681 = vadd.f32 %v4670, %v4679
    %v4682 = vperm.slane %v4589, 1
    %v4683 = vmul.f32 %v4682, %v4660
    %v4684 = vmul.f32 %v4682, %v4661
    %v4685 = vsel %vm4591, %v4683, 0.0
    %4686 = vadd.xlane.f32.xlu0 %v4685
    %v4687 = vpop.xlane.xlu0 %4686
    %v4688 = vsel %vm4595, %v4684, 0.0
    %4689 = vadd.xlane.f32.xlu0 %v4688
    %v4690 = vpop.xlane.xlu0 %4689
    %v4691 = vadd.f32 %v4680, %v4687
    %v4692 = vadd.f32 %v4681, %v4690
    %v4693 = vmul.f32 %v4621, %v4660
    %v4694 = vmul.f32 %v4622, %v4661
    %v4695 = vsel %vm4591, %v4693, 0.0
    %4696 = vadd.xlane.f32.xlu0 %v4695
    %v4697 = vpop.xlane.xlu0 %4696
    %v4698 = vsel %vm4595, %v4694, 0.0
    %4699 = vadd.xlane.f32.xlu0 %v4698
    %v4700 = vpop.xlane.xlu0 %4699
    %v4701 = vadd.f32 %v4691, %v4697
    %v4702 = vadd.f32 %v4692, %v4700
    %v4705 = vrot.slane %v4701, 2
    %v4706 = vrot.slane %v4702, 2
    %v4707 = vsel %vm697, %v4705, %v4706
    %v4709 = vsel %vm4532, %v4707, 0.0
    %4710 = vadd.xlane.f32.xlu0 %v4709
    %v4711 = vpop.xlane.xlu0 %4710
    %v4712 = vrot.slane %v4711, 4
    %v4713 = vadd.f32 %v4711, %v4712
    %v4714 = vrot.slane %v4713, 2
    %v4715 = vadd.f32 %v4713, %v4714
    %v4716 = vrot.slane %v4715, 1
    %v4717 = vadd.f32 %v4715, %v4716
    %s4718 = vtos %v4717
    %s4719 = sadd.f32 %s4543, %s4718
    %s4720 = smul.f32 %s4719, 0.25
    %s4721 = scalar_lea.smem [#allocation6], 0
    %4722 = sst [smem:[%s4721]] %s4720
    %v4723 = vld [vmem:[%s9] sm:$0xff]
    %v4724 = vld [vmem:[%s9 + $0x8] sm:$0xff]
    %v4725 = vld [vmem:[%s9 + $0x10] sm:$0x3]
    %v4726 = vld [vmem:[%s11] sm:$0x3]
    %v4727 = vld [vmem:[%s13] sm:$0x3]
    %v4728 = vmul.f32 %v4723, %v4723
    %v4729 = vsel %vm4366, %v4728, 0.0
    %4730 = vadd.xlane.f32.xlu0 %v4729
    %v4731 = vpop.xlane.xlu0 %4730
    %v4732 = vadd.f32 %v4731, 1e-12
    %v4733 = vrsqrt.pop %v4732
    %v4734 = vmul.f32 %v4733, %v4732
    %v4735 = vmul.f32 %v4734, %v4733
    %v4736 = vmul.f32 0.5, %v4735
    %v4737 = vsub.f32 1.5, %v4736
    %v4738 = vmul.f32 %v4733, %v4737
    %vm4739 = vweird.f32 %v4732
    %vm4740 = vweird.f32 %v4733
    %vm4741 = vmor %vm4739, %vm4740
    %v4742 = vsel %vm4741, %v4733, %v4738
    %v4743 = vmul.f32 %v4723, %v4742
    %v4744 = vmul.f32 %v4726, %v4726
    %v4745 = vsel %vm4366, %v4744, 0.0
    %4746 = vadd.xlane.f32.xlu0 %v4745
    %v4747 = vpop.xlane.xlu0 %4746
    %v4748 = vadd.f32 %v4747, 1e-12
    %v4749 = vrsqrt.pop %v4748
    %v4750 = vmul.f32 %v4749, %v4748
    %v4751 = vmul.f32 %v4750, %v4749
    %v4752 = vmul.f32 0.5, %v4751
    %v4753 = vsub.f32 1.5, %v4752
    %v4754 = vmul.f32 %v4749, %v4753
    %vm4755 = vweird.f32 %v4748
    %vm4756 = vweird.f32 %v4749
    %vm4757 = vmor %vm4755, %vm4756
    %v4758 = vsel %vm4757, %v4749, %v4754
    %v4759 = vmul.f32 %v4726, %v4758
    %v4760 = vmul.f32 %v4727, %v4727
    %v4761 = vsel %vm4366, %v4760, 0.0
    %4762 = vadd.xlane.f32.xlu0 %v4761
    %v4763 = vpop.xlane.xlu0 %4762
    %v4764 = vadd.f32 %v4763, 1e-12
    %v4765 = vrsqrt.pop %v4764
    %v4766 = vmul.f32 %v4765, %v4764
    %v4767 = vmul.f32 %v4766, %v4765
    %v4768 = vmul.f32 0.5, %v4767
    %v4769 = vsub.f32 1.5, %v4768
    %v4770 = vmul.f32 %v4765, %v4769
    %vm4771 = vweird.f32 %v4764
    %vm4772 = vweird.f32 %v4765
    %vm4773 = vmor %vm4771, %vm4772
    %v4774 = vsel %vm4773, %v4765, %v4770
    %v4775 = vmul.f32 %v4727, %v4774
    %v4776 = vmul.f32 %v4724, %v4724
    %v4777 = vsel %vm4415, %v4728, 0.0
    %4778 = vadd.xlane.f32.xlu0 %v4777
    %v4779 = vpop.xlane.xlu0 %4778
    %v4780 = vsel %vm4366, %v4776, 0.0
    %4781 = vadd.xlane.f32.xlu0 %v4780
    %v4782 = vpop.xlane.xlu0 %4781
    %v4783 = vadd.f32 %v4779, 1e-12
    %v4784 = vadd.f32 %v4782, 1e-12
    %v4785 = vrsqrt.pop %v4783
    %v4786 = vmul.f32 %v4785, %v4783
    %v4787 = vmul.f32 %v4786, %v4785
    %v4788 = vmul.f32 0.5, %v4787
    %v4789 = vsub.f32 1.5, %v4788
    %v4790 = vmul.f32 %v4785, %v4789
    %vm4791 = vweird.f32 %v4783
    %vm4792 = vweird.f32 %v4785
    %vm4793 = vmor %vm4791, %vm4792
    %v4794 = vsel %vm4793, %v4785, %v4790
    %v4795 = vrsqrt.pop %v4784
    %v4796 = vmul.f32 %v4795, %v4784
    %v4797 = vmul.f32 %v4796, %v4795
    %v4798 = vmul.f32 0.5, %v4797
    %v4799 = vsub.f32 1.5, %v4798
    %v4800 = vmul.f32 %v4795, %v4799
    %vm4801 = vweird.f32 %v4784
    %vm4802 = vweird.f32 %v4795
    %vm4803 = vmor %vm4801, %vm4802
    %v4804 = vsel %vm4803, %v4795, %v4800
    %v4805 = vmul.f32 %v4723, %v4794
    %v4806 = vmul.f32 %v4724, %v4804
    %v4807 = vadd.f32 %v4743, %v4759
    %v4808 = vadd.f32 %v4807, %v4775
    %v4809 = vperm.slane %v4808, 0
    %v4810 = vadd.f32 %v4809, %v4805
    %v4811 = vadd.f32 %v4809, %v4806
    %v4812 = vmul.f32 %v4810, 0.25
    %v4813 = vmul.f32 %v4811, 0.25
    %v4814 = vmul.f32 %v4812, %v4812
    %v4815 = vmul.f32 %v4813, %v4813
    %v4816 = vsel %vm4415, %v4814, 0.0
    %4817 = vadd.xlane.f32.xlu0 %v4816
    %v4818 = vpop.xlane.xlu0 %4817
    %v4819 = vsel %vm4366, %v4815, 0.0
    %4820 = vadd.xlane.f32.xlu0 %v4819
    %v4821 = vpop.xlane.xlu0 %4820
    %v4822 = vadd.f32 %v4818, 1e-12
    %v4823 = vadd.f32 %v4821, 1e-12
    %v4824 = vrsqrt.pop %v4822
    %v4825 = vmul.f32 %v4824, %v4822
    %v4826 = vmul.f32 %v4825, %v4824
    %v4827 = vmul.f32 0.5, %v4826
    %v4828 = vsub.f32 1.5, %v4827
    %v4829 = vmul.f32 %v4824, %v4828
    %vm4830 = vweird.f32 %v4822
    %vm4831 = vweird.f32 %v4824
    %vm4832 = vmor %vm4830, %vm4831
    %v4833 = vsel %vm4832, %v4824, %v4829
    %v4834 = vrsqrt.pop %v4823
    %v4835 = vmul.f32 %v4834, %v4823
    %v4836 = vmul.f32 %v4835, %v4834
    %v4837 = vmul.f32 0.5, %v4836
    %v4838 = vsub.f32 1.5, %v4837
    %v4839 = vmul.f32 %v4834, %v4838
    %vm4840 = vweird.f32 %v4823
    %vm4841 = vweird.f32 %v4834
    %vm4842 = vmor %vm4840, %vm4841
    %v4843 = vsel %vm4842, %v4834, %v4839
    %v4844 = vmul.f32 %v4812, %v4833
    %v4845 = vmul.f32 %v4813, %v4843
    %v4846 = vperm.slane %v4743, 0
    %v4847 = vmul.f32 %v4846, %v4844
    %v4848 = vmul.f32 %v4846, %v4845
    %v4849 = vsel %vm4415, %v4847, 0.0
    %4850 = vadd.xlane.f32.xlu0 %v4849
    %v4851 = vpop.xlane.xlu0 %4850
    %v4852 = vsel %vm4366, %v4848, 0.0
    %4853 = vadd.xlane.f32.xlu0 %v4852
    %v4854 = vpop.xlane.xlu0 %4853
    %v4855 = vperm.slane %v4759, 0
    %v4856 = vmul.f32 %v4855, %v4844
    %v4857 = vmul.f32 %v4855, %v4845
    %v4858 = vsel %vm4415, %v4856, 0.0
    %4859 = vadd.xlane.f32.xlu0 %v4858
    %v4860 = vpop.xlane.xlu0 %4859
    %v4861 = vsel %vm4366, %v4857, 0.0
    %4862 = vadd.xlane.f32.xlu0 %v4861
    %v4863 = vpop.xlane.xlu0 %4862
    %v4864 = vadd.f32 %v4851, %v4860
    %v4865 = vadd.f32 %v4854, %v4863
    %v4866 = vperm.slane %v4775, 0
    %v4867 = vmul.f32 %v4866, %v4844
    %v4868 = vmul.f32 %v4866, %v4845
    %v4869 = vsel %vm4415, %v4867, 0.0
    %4870 = vadd.xlane.f32.xlu0 %v4869
    %v4871 = vpop.xlane.xlu0 %4870
    %v4872 = vsel %vm4366, %v4868, 0.0
    %4873 = vadd.xlane.f32.xlu0 %v4872
    %v4874 = vpop.xlane.xlu0 %4873
    %v4875 = vadd.f32 %v4864, %v4871
    %v4876 = vadd.f32 %v4865, %v4874
    %v4877 = vmul.f32 %v4805, %v4844
    %v4878 = vmul.f32 %v4806, %v4845
    %v4879 = vsel %vm4415, %v4877, 0.0
    %4880 = vadd.xlane.f32.xlu0 %v4879
    %v4881 = vpop.xlane.xlu0 %4880
    %v4882 = vsel %vm4366, %v4878, 0.0
    %4883 = vadd.xlane.f32.xlu0 %v4882
    %v4884 = vpop.xlane.xlu0 %4883
    %v4885 = vadd.f32 %v4875, %v4881
    %v4886 = vadd.f32 %v4876, %v4884
    %v4889 = vrot.slane %v4885, 1
    %v4890 = vrot.slane %v4886, 1
    %v4891 = vsel %vm600, %v4889, %v4890
    %v4893 = vsel %vm4532, %v4891, 0.0
    %4894 = vadd.xlane.f32.xlu0 %v4893
    %v4895 = vpop.xlane.xlu0 %4894
    %v4896 = vrot.slane %v4895, 4
    %v4897 = vadd.f32 %v4895, %v4896
    %v4898 = vrot.slane %v4897, 2
    %v4899 = vadd.f32 %v4897, %v4898
    %v4900 = vrot.slane %v4899, 1
    %v4901 = vadd.f32 %v4899, %v4900
    %s4902 = vtos %v4901
    %s4903 = sadd.f32 %s4902, 0.0
    %v4904 = vsel %vm4544, %v4776, 0.0
    %4905 = vadd.xlane.f32.xlu0 %v4904
    %v4906 = vpop.xlane.xlu0 %4905
    %v4907 = vadd.f32 %v4906, 1e-12
    %v4908 = vrsqrt.pop %v4907
    %v4909 = vmul.f32 %v4908, %v4907
    %v4910 = vmul.f32 %v4909, %v4908
    %v4911 = vmul.f32 0.5, %v4910
    %v4912 = vsub.f32 1.5, %v4911
    %v4913 = vmul.f32 %v4908, %v4912
    %vm4914 = vweird.f32 %v4907
    %vm4915 = vweird.f32 %v4908
    %vm4916 = vmor %vm4914, %vm4915
    %v4917 = vsel %vm4916, %v4908, %v4913
    %v4918 = vmul.f32 %v4724, %v4917
    %v4919 = vsel %vm4544, %v4744, 0.0
    %4920 = vadd.xlane.f32.xlu0 %v4919
    %v4921 = vpop.xlane.xlu0 %4920
    %v4922 = vadd.f32 %v4921, 1e-12
    %v4923 = vrsqrt.pop %v4922
    %v4924 = vmul.f32 %v4923, %v4922
    %v4925 = vmul.f32 %v4924, %v4923
    %v4926 = vmul.f32 0.5, %v4925
    %v4927 = vsub.f32 1.5, %v4926
    %v4928 = vmul.f32 %v4923, %v4927
    %vm4929 = vweird.f32 %v4922
    %vm4930 = vweird.f32 %v4923
    %vm4931 = vmor %vm4929, %vm4930
    %v4932 = vsel %vm4931, %v4923, %v4928
    %v4933 = vmul.f32 %v4726, %v4932
    %v4934 = vsel %vm4544, %v4760, 0.0
    %4935 = vadd.xlane.f32.xlu0 %v4934
    %v4936 = vpop.xlane.xlu0 %4935
    %v4937 = vadd.f32 %v4936, 1e-12
    %v4938 = vrsqrt.pop %v4937
    %v4939 = vmul.f32 %v4938, %v4937
    %v4940 = vmul.f32 %v4939, %v4938
    %v4941 = vmul.f32 0.5, %v4940
    %v4942 = vsub.f32 1.5, %v4941
    %v4943 = vmul.f32 %v4938, %v4942
    %vm4944 = vweird.f32 %v4937
    %vm4945 = vweird.f32 %v4938
    %vm4946 = vmor %vm4944, %vm4945
    %v4947 = vsel %vm4946, %v4938, %v4943
    %v4948 = vmul.f32 %v4727, %v4947
    %v4949 = vmul.f32 %v4725, %v4725
    %v4950 = vsel %vm4591, %v4776, 0.0
    %4951 = vadd.xlane.f32.xlu0 %v4950
    %v4952 = vpop.xlane.xlu0 %4951
    %v4953 = vsel %vm4595, %v4949, 0.0
    %4954 = vadd.xlane.f32.xlu0 %v4953
    %v4955 = vpop.xlane.xlu0 %4954
    %v4956 = vadd.f32 %v4952, 1e-12
    %v4957 = vadd.f32 %v4955, 1e-12
    %v4958 = vrsqrt.pop %v4956
    %v4959 = vmul.f32 %v4958, %v4956
    %v4960 = vmul.f32 %v4959, %v4958
    %v4961 = vmul.f32 0.5, %v4960
    %v4962 = vsub.f32 1.5, %v4961
    %v4963 = vmul.f32 %v4958, %v4962
    %vm4964 = vweird.f32 %v4956
    %vm4965 = vweird.f32 %v4958
    %vm4966 = vmor %vm4964, %vm4965
    %v4967 = vsel %vm4966, %v4958, %v4963
    %v4968 = vrsqrt.pop %v4957
    %v4969 = vmul.f32 %v4968, %v4957
    %v4970 = vmul.f32 %v4969, %v4968
    %v4971 = vmul.f32 0.5, %v4970
    %v4972 = vsub.f32 1.5, %v4971
    %v4973 = vmul.f32 %v4968, %v4972
    %vm4974 = vweird.f32 %v4957
    %vm4975 = vweird.f32 %v4968
    %vm4976 = vmor %vm4974, %vm4975
    %v4977 = vsel %vm4976, %v4968, %v4973
    %v4978 = vmul.f32 %v4724, %v4967
    %v4979 = vmul.f32 %v4725, %v4977
    %v4980 = vadd.f32 %v4918, %v4933
    %v4981 = vadd.f32 %v4980, %v4948
    %v4982 = vperm.slane %v4981, 1
    %v4983 = vadd.f32 %v4982, %v4978
    %v4984 = vadd.f32 %v4982, %v4979
    %v4985 = vmul.f32 %v4983, 0.25
    %v4986 = vmul.f32 %v4984, 0.25
    %v4987 = vmul.f32 %v4985, %v4985
    %v4988 = vmul.f32 %v4986, %v4986
    %v4989 = vsel %vm4591, %v4987, 0.0
    %4990 = vadd.xlane.f32.xlu0 %v4989
    %v4991 = vpop.xlane.xlu0 %4990
    %v4992 = vsel %vm4595, %v4988, 0.0
    %4993 = vadd.xlane.f32.xlu0 %v4992
    %v4994 = vpop.xlane.xlu0 %4993
    %v4995 = vadd.f32 %v4991, 1e-12
    %v4996 = vadd.f32 %v4994, 1e-12
    %v4997 = vrsqrt.pop %v4995
    %v4998 = vmul.f32 %v4997, %v4995
    %v4999 = vmul.f32 %v4998, %v4997
    %v5000 = vmul.f32 0.5, %v4999
    %v5001 = vsub.f32 1.5, %v5000
    %v5002 = vmul.f32 %v4997, %v5001
    %vm5003 = vweird.f32 %v4995
    %vm5004 = vweird.f32 %v4997
    %vm5005 = vmor %vm5003, %vm5004
    %v5006 = vsel %vm5005, %v4997, %v5002
    %v5007 = vrsqrt.pop %v4996
    %v5008 = vmul.f32 %v5007, %v4996
    %v5009 = vmul.f32 %v5008, %v5007
    %v5010 = vmul.f32 0.5, %v5009
    %v5011 = vsub.f32 1.5, %v5010
    %v5012 = vmul.f32 %v5007, %v5011
    %vm5013 = vweird.f32 %v4996
    %vm5014 = vweird.f32 %v5007
    %vm5015 = vmor %vm5013, %vm5014
    %v5016 = vsel %vm5015, %v5007, %v5012
    %v5017 = vmul.f32 %v4985, %v5006
    %v5018 = vmul.f32 %v4986, %v5016
    %v5019 = vperm.slane %v4918, 1
    %v5020 = vmul.f32 %v5019, %v5017
    %v5021 = vmul.f32 %v5019, %v5018
    %v5022 = vsel %vm4591, %v5020, 0.0
    %5023 = vadd.xlane.f32.xlu0 %v5022
    %v5024 = vpop.xlane.xlu0 %5023
    %v5025 = vsel %vm4595, %v5021, 0.0
    %5026 = vadd.xlane.f32.xlu0 %v5025
    %v5027 = vpop.xlane.xlu0 %5026
    %v5028 = vperm.slane %v4933, 1
    %v5029 = vmul.f32 %v5028, %v5017
    %v5030 = vmul.f32 %v5028, %v5018
    %v5031 = vsel %vm4591, %v5029, 0.0
    %5032 = vadd.xlane.f32.xlu0 %v5031
    %v5033 = vpop.xlane.xlu0 %5032
    %v5034 = vsel %vm4595, %v5030, 0.0
    %5035 = vadd.xlane.f32.xlu0 %v5034
    %v5036 = vpop.xlane.xlu0 %5035
    %v5037 = vadd.f32 %v5024, %v5033
    %v5038 = vadd.f32 %v5027, %v5036
    %v5039 = vperm.slane %v4948, 1
    %v5040 = vmul.f32 %v5039, %v5017
    %v5041 = vmul.f32 %v5039, %v5018
    %v5042 = vsel %vm4591, %v5040, 0.0
    %5043 = vadd.xlane.f32.xlu0 %v5042
    %v5044 = vpop.xlane.xlu0 %5043
    %v5045 = vsel %vm4595, %v5041, 0.0
    %5046 = vadd.xlane.f32.xlu0 %v5045
    %v5047 = vpop.xlane.xlu0 %5046
    %v5048 = vadd.f32 %v5037, %v5044
    %v5049 = vadd.f32 %v5038, %v5047
    %v5050 = vmul.f32 %v4978, %v5017
    %v5051 = vmul.f32 %v4979, %v5018
    %v5052 = vsel %vm4591, %v5050, 0.0
    %5053 = vadd.xlane.f32.xlu0 %v5052
    %v5054 = vpop.xlane.xlu0 %5053
    %v5055 = vsel %vm4595, %v5051, 0.0
    %5056 = vadd.xlane.f32.xlu0 %v5055
    %v5057 = vpop.xlane.xlu0 %5056
    %v5058 = vadd.f32 %v5048, %v5054
    %v5059 = vadd.f32 %v5049, %v5057
    %v5062 = vrot.slane %v5058, 2
    %v5063 = vrot.slane %v5059, 2
    %v5064 = vsel %vm697, %v5062, %v5063
    %v5066 = vsel %vm4532, %v5064, 0.0
    %5067 = vadd.xlane.f32.xlu0 %v5066
    %v5068 = vpop.xlane.xlu0 %5067
    %v5069 = vrot.slane %v5068, 4
    %v5070 = vadd.f32 %v5068, %v5069
    %v5071 = vrot.slane %v5070, 2
    %v5072 = vadd.f32 %v5070, %v5071
    %v5073 = vrot.slane %v5072, 1
    %v5074 = vadd.f32 %v5072, %v5073
    %s5075 = vtos %v5074
    %s5076 = sadd.f32 %s4903, %s5075
    %s5077 = smul.f32 %s5076, 0.25
    %s5078 = scalar_lea.smem [#allocation6], 1
    %5079 = sst [smem:[%s5078]] %s5077
    // Predicated region
    $region226: #{graph_tf_int_loc_forward.1} parent=1 // pred_check
      _
    $region227: #{graph_tf_int_loc_forward.1} parent=1 // pred_check_branch
      %5081 = sbr.rel (0) target = $region229
    $region228: #{graph_tf_int_loc_forward.1} parent=1 // pred_region
      _
    $region229: #{graph_tf_int_loc_forward.1} parent=1 // pred_fallthru
      _
    // Predicated region
    $region230: #{graph_tf_int_loc_forward.1} parent=1 // pred_check
      _
    $region231: #{graph_tf_int_loc_forward.1} parent=1 // pred_check_branch
      %5083 = sbr.rel (0) target = $region233
    $region232: #{graph_tf_int_loc_forward.1} parent=1 // pred_region
      %5085 = vsyncadd [#allocation4], 0
      %s5087 = sshll.u32 [#allocation3], 4
      %s5088 = int_to_ptr.vmem [resolvable:$true] %s5087
      %s5089 = sshll.u32 %s115, 4
      %s5090 = int_to_ptr.hbm [resolvable:$true] %s5089
      %5092 = dma.vmem_to_hbm [thread:$0]  %s5088, 32, %s5090, [#allocation4]
    $region233: #{graph_tf_int_loc_forward.1} parent=1 // pred_fallthru
      _
    // Predicated region
    $region234: #{graph_tf_int_loc_forward.1} parent=1 // pred_check
      _
    $region235: #{graph_tf_int_loc_forward.1} parent=1 // pred_check_branch
      %5094 = sbr.rel (0) target = $region237
    $region236: #{graph_tf_int_loc_forward.1} parent=1 // pred_region
      %5096 = vsyncadd [#allocation5], 0
      %s5098 = sshll.u32 %s117, 4
      %s5099 = int_to_ptr.vmem [resolvable:$true] %s5098
      %5101 = dma.smem_to_vmem [#allocation6], 16, %s5099, [#allocation5]
    $region237: #{graph_tf_int_loc_forward.1} parent=1 // pred_fallthru
      _
    // Predicated region
    $region238: #{graph_tf_int_loc_forward.1} parent=1 // pred_check
      _
    $region239: #{graph_tf_int_loc_forward.1} parent=1 // pred_check_branch
      %5103 = sbr.rel (0) target = $region241
    $region240: #{graph_tf_int_loc_forward.1} parent=1 // pred_region
      _
    $region241: #{graph_tf_int_loc_forward.1} parent=1 // pred_fallthru
      _
    // Predicated region
    $region242: #{graph_tf_int_loc_forward.1} parent=1 // pred_check
      _
    $region243: #{graph_tf_int_loc_forward.1} parent=1 // pred_check_branch
      %5105 = sbr.rel (0) target = $region245
    $region244: #{graph_tf_int_loc_forward.1} parent=1 // pred_region
      %5107 = dma.done [#allocation4], 32
    $region245: #{graph_tf_int_loc_forward.1} parent=1 // pred_fallthru
      _
    // Predicated region
    $region246: #{graph_tf_int_loc_forward.1} parent=1 // pred_check
      _
    $region247: #{graph_tf_int_loc_forward.1} parent=1 // pred_check_branch
      %5109 = sbr.rel (0) target = $region249
    $region248: #{graph_tf_int_loc_forward.1} parent=1 // pred_region
      %5111 = dma.done [#allocation5], 16
    $region249: #{graph_tf_int_loc_forward.1} parent=1 // pred_fallthru
      _
    %5112 = sfence
    %5113 = vsyncpa [#allocation4], 1
    %5114 = vsyncpa [#allocation5], 1

</llo_original>
